<compile_context>
chip_gen: v6e
topology: v6e:2x2x1
jax: 0.10.0
libtpu: 0.0.40
codegen_flags: <defaults>
</compile_context>

<pallas_src>
import numpy as np
import jax
import jax.numpy as jnp
from jax.experimental import pallas as pl
from jax.experimental.pallas import tpu as pltpu

D_IN = 4      # decoder input channels
HID = 64      # hidden conv channels
EPS = 1e-5    # BatchNorm2d eps


def _round_up(x, m):
    return (x + m - 1) // m * m


def _geom(H, W):
    Wp, Hp = W + 2, H + 2
    P = Hp * Wp                     # padded positions per sample
    Pp = _round_up(P, 16)           # keep bf16 (16,128) block tiling aligned
    r0 = Wp + 1                     # first row whose full 3x3 stencil is in range
    Rc = Pp - 2 * r0                # rows computed per sample block
    return Wp, Hp, P, Pp, r0, Rc


def _interior_mask_np(H, W):
    Wp, Hp, P, Pp, r0, Rc = _geom(H, W)
    idx = np.arange(Pp)
    h, w = idx // Wp, idx % Wp
    m = (idx < P) & (h >= 1) & (h <= H) & (w >= 1) & (w <= W)
    return m.astype(np.float32).reshape(Pp, 1)


def _vmem_limit_bytes():
    # Budget against the chip's physical VMEM (v7x: 64 MiB/TC vs 128 MiB on
    # v5e/v6e), leaving headroom for double-buffering and compiler spills.
    try:
        cap = int(pltpu.get_tpu_info().vmem_capacity_bytes)
    except Exception:
        cap = 64 * 1024 * 1024
    return max(16 * 1024 * 1024, min(int(cap * 0.4), 96 * 1024 * 1024))


def _make_kernels(Cin, C, Wp, Pp, r0, Rc):
    """Build the three per-phase kernels with the sample geometry baked in."""

    def taps(ref):
        # 9 shifted-row slices, cast to bf16 BEFORE the lane concat -> one
        # (Rc, 9*ch) operand feeding a single K=9*ch MXU matmul.
        ts = []
        for dy in (-1, 0, 1):
            for dx in (-1, 0, 1):
                off = r0 + dy * Wp + dx
                ts.append(ref[off:off + Rc, :].astype(jnp.bfloat16))
        return jnp.concatenate(ts, axis=-1)

    def finalize(v, mask):
        # Pad the computed rows back to the full block and zero every
        # non-interior position (conv zero-padding for the next stage).
        zpad = jnp.zeros((r0, v.shape[1]), jnp.float32)
        return jnp.concatenate([zpad, v, zpad], axis=0) * mask

    def stats_of(full_f32):
        s = jnp.sum(full_f32, axis=0, keepdims=True)
        sq = jnp.sum(full_f32 * full_f32, axis=0, keepdims=True)
        return jnp.concatenate([s, sq], axis=0)          # (2, C)

    # -- phase 1: conv1 + relu (+ BN1 partial stats) --------------------------
    def k_conv1(mask_ref, x_ref, w1_ref, b1_ref, act_ref, stat_ref):
        mask = mask_ref[...]
        patch = taps(x_ref)                               # (Rc, 9*Cin) bf16
        acc = jnp.dot(patch, w1_ref[...], preferred_element_type=jnp.float32)
        v = jnp.maximum(acc + b1_ref[...], 0.0)           # (Rc, C) f32
        full_b = finalize(v, mask).astype(act_ref.dtype)  # (Pp, C) bf16
        act_ref[...] = full_b
        stat_ref[...] = stats_of(full_b.astype(jnp.float32))[None]

    # -- phase 2: BN1-normalize + conv2 + relu (+ BN2 partial stats) ----------
    def k_bn_conv2(mask_ref, a_ref, sc_ref, sh_ref, w_ref, b_ref,
                   act_ref, stat_ref, buf_ref):
        mask = mask_ref[...]
        # Fused BN of the previous activations into an f32 scratch (zero at
        # padding positions so the next conv sees true zero padding).
        buf_ref[...] = (a_ref[...].astype(jnp.float32) * sc_ref[...]
                        + sh_ref[...]) * mask
        patch = taps(buf_ref)                              # (Rc, 576) bf16
        acc = jnp.dot(patch, w_ref[...], preferred_element_type=jnp.float32)
        v = jnp.maximum(acc + b_ref[...], 0.0)
        full_b = finalize(v, mask).astype(act_ref.dtype)
        act_ref[...] = full_b
        stat_ref[...] = stats_of(full_b.astype(jnp.float32))[None]

    # -- phase 3: BN2-normalize + conv3 + relu (compact 1-lane output) --------
    def k_bn_conv3(mask_ref, a_ref, sc_ref, sh_ref, w_ref, b_ref,
                   out_ref, buf_ref):
        mask = mask_ref[...]
        buf_ref[...] = (a_ref[...].astype(jnp.float32) * sc_ref[...]
                        + sh_ref[...]) * mask
        patch = taps(buf_ref)                              # (Rc, 576) bf16
        acc = jnp.dot(patch, w_ref[...], preferred_element_type=jnp.float32)
        y = jnp.maximum(acc + b_ref[...], 0.0)[:, 0:1]     # (Rc, 1) f32
        zpad = jnp.zeros((r0, 1), jnp.float32)
        out_ref[...] = jnp.concatenate([zpad, y, zpad], axis=0)

    return k_conv1, k_bn_conv2, k_bn_conv3


def _bn_scale_shift(stat, cnt, gamma, beta):
    # Reduce per-block partials -> per-channel affine (scale, shift) so the
    # next kernel applies BN as a single fused multiply-add.
    s = jnp.sum(stat[:, 0, :], axis=0)
    sq = jnp.sum(stat[:, 1, :], axis=0)
    mean = s / cnt
    var = jnp.maximum(sq / cnt - mean * mean, 0.0)   # biased var (training BN)
    inv = jax.lax.rsqrt(var + EPS)
    scale = gamma * inv
    shift = beta - mean * scale
    return scale.reshape(1, -1), shift.reshape(1, -1)


@jax.jit
def decoder_forward(x_nchw, params):
    """x_nchw: (N, D_in, H, W) float32 -> (N, 1, H, W) float32."""
    N, Cin, H, W = x_nchw.shape
    C = HID
    Wp, Hp, P, Pp, r0, Rc = _geom(H, W)
    cnt = float(N * H * W)

    # ---- input prep: NCHW -> per-sample padded row grid (N*Pp, Cin), f32 ----
    x = jnp.transpose(x_nchw, (0, 2, 3, 1))                        # NHWC
    xg = jnp.pad(x, ((0, 0), (1, 1), (1, 1), (0, 0))).reshape(N, P, Cin)
    xg = jnp.pad(xg, ((0, 0), (0, Pp - P), (0, 0))).reshape(N * Pp, Cin)

    mask = jnp.asarray(_interior_mask_np(H, W))                    # (Pp, 1) f32

    # Weights: (3,3,in,out) row-major over (ky,kx,in) matches the tap order.
    w1 = params["w1"].reshape(9 * Cin, C).astype(jnp.bfloat16)
    b1 = params["b1"].reshape(1, C)
    w2 = params["w2"].reshape(9 * C, C).astype(jnp.bfloat16)
    b2 = params["b2"].reshape(1, C)
    w3 = jnp.zeros((9 * C, 128), jnp.float32).at[:, 0].set(
        params["w3"].reshape(9 * C)).astype(jnp.bfloat16)
    b3 = jnp.zeros((1, 128), jnp.float32).at[0, 0].set(params["b3"][0])
    gamma = params["gamma"]
    beta = params["beta"]

    cparams = pltpu.CompilerParams(dimension_semantics=("parallel",),
                                   vmem_limit_bytes=_vmem_limit_bytes())
    kA, kB, kC = _make_kernels(Cin, C, Wp, Pp, r0, Rc)

    blk_rows = lambda b: (b, 0)
    resident = lambda b: (0, 0)

    # ---- phase 1: conv1 + relu, BN1 partial stats ---------------------------
    act1, stat1 = pl.pallas_call(
        kA,
        grid=(N,),
        out_shape=(jax.ShapeDtypeStruct((N * Pp, C), jnp.bfloat16),
                   jax.ShapeDtypeStruct((N, 2, C), jnp.float32)),
        in_specs=[pl.BlockSpec((Pp, 1), resident),          # interior mask
                  pl.BlockSpec((Pp, Cin), blk_rows),        # padded input grid
                  pl.BlockSpec((9 * Cin, C), resident),     # w1
                  pl.BlockSpec((1, C), resident)],          # b1
        out_specs=(pl.BlockSpec((Pp, C), blk_rows),
                   pl.BlockSpec((1, 2, C), lambda b: (b, 0, 0))),
        compiler_params=cparams,
    )(mask, xg, w1, b1)

    sc1, sh1 = _bn_scale_shift(stat1, cnt, gamma, beta)

    # ---- phase 2: BN1 + conv2 + relu, BN2 partial stats ---------------------
    act2, stat2 = pl.pallas_call(
        kB,
        grid=(N,),
        out_shape=(jax.ShapeDtypeStruct((N * Pp, C), jnp.bfloat16),
                   jax.ShapeDtypeStruct((N, 2, C), jnp.float32)),
        in_specs=[pl.BlockSpec((Pp, 1), resident),
                  pl.BlockSpec((Pp, C), blk_rows),          # act1 block (bf16)
                  pl.BlockSpec((1, C), resident),           # scale1
                  pl.BlockSpec((1, C), resident),           # shift1
                  pl.BlockSpec((9 * C, C), resident),       # w2
                  pl.BlockSpec((1, C), resident)],          # b2
        out_specs=(pl.BlockSpec((Pp, C), blk_rows),
                   pl.BlockSpec((1, 2, C), lambda b: (b, 0, 0))),
        scratch_shapes=[pltpu.VMEM((Pp, C), jnp.float32)],  # normalize scratch
        compiler_params=cparams,
    )(mask, act1, sc1, sh1, w2, b2)

    sc2, sh2 = _bn_scale_shift(stat2, cnt, gamma, beta)

    # ---- phase 3: BN2 + conv3 + relu, compact (rows, 1) output --------------
    out = pl.pallas_call(
        kC,
        grid=(N,),
        out_shape=jax.ShapeDtypeStruct((N * Pp, 1), jnp.float32),
        in_specs=[pl.BlockSpec((Pp, 1), resident),
                  pl.BlockSpec((Pp, C), blk_rows),          # act2 block (bf16)
                  pl.BlockSpec((1, C), resident),           # scale2
                  pl.BlockSpec((1, C), resident),           # shift2
                  pl.BlockSpec((9 * C, 128), resident),     # w3 (col 0 real)
                  pl.BlockSpec((1, 128), resident)],        # b3 (col 0 real)
        out_specs=pl.BlockSpec((Pp, 1), blk_rows),
        scratch_shapes=[pltpu.VMEM((Pp, C), jnp.float32)],
        compiler_params=cparams,
    )(mask, act2, sc2, sh2, w3, b3)

    # (N*Pp, 1) row-grid column -> (N, 1, H, W)
    y = out.reshape(N, Pp)[:, :P].reshape(N, Hp, Wp)[:, 1:H + 1, 1:W + 1]
    return y[:, None, :, :]


def ref_decoder(x_nchw, params, conv_dtype=None):
    """Pure-JAX reference of the PyTorch forward (training-mode BN).
    conv_dtype=jnp.bfloat16 mimics the kernel's bf16-operand / f32-accum
    matmuls AND its bf16 HBM round-trip of the pre-BN activations."""
    x = jnp.transpose(x_nchw, (0, 2, 3, 1))

    def conv(h, w, b):
        if conv_dtype is not None:
            h = h.astype(conv_dtype)
            w = w.astype(conv_dtype)
        prec = (jax.lax.Precision.HIGHEST if conv_dtype is None
                else jax.lax.Precision.DEFAULT)
        y = jax.lax.conv_general_dilated(
            h, w, (1, 1), "SAME",
            dimension_numbers=("NHWC", "HWIO", "NHWC"),
            precision=prec, preferred_element_type=jnp.float32)
        return y + b.reshape(1, 1, 1, -1)

    def store_rt(h):
        if conv_dtype is not None:
            return h.astype(conv_dtype).astype(jnp.float32)
        return h

    def bn(h):
        m = jnp.mean(h, axis=(0, 1, 2), keepdims=True)
        v = jnp.mean((h - m) ** 2, axis=(0, 1, 2), keepdims=True)
        return ((h - m) * jax.lax.rsqrt(v + EPS)
                * params["gamma"].reshape(1, 1, 1, -1)
                + params["beta"].reshape(1, 1, 1, -1))

    o = bn(store_rt(jax.nn.relu(conv(x, params["w1"], params["b1"]))))
    o = bn(store_rt(jax.nn.relu(conv(o, params["w2"], params["b2"]))))
    o = jax.nn.relu(conv(o, params["w3"], params["b3"]))
    return jnp.transpose(o, (0, 3, 1, 2))


def init_params(key, d_in):
    ks = jax.random.split(key, 6)
    return {
        "w1": 0.10 * jax.random.normal(ks[0], (3, 3, d_in, HID), jnp.float32),
        "b1": 0.05 * jax.random.normal(ks[1], (HID,), jnp.float32),
        "w2": 0.05 * jax.random.normal(ks[2], (3, 3, HID, HID), jnp.float32),
        "b2": 0.05 * jax.random.normal(ks[3], (3 * 3 * HID // (9 * HID) * HID,), jnp.float32)
              if False else 0.05 * jax.random.normal(ks[3], (HID,), jnp.float32),
        "w3": 0.05 * jax.random.normal(ks[4], (3, 3, HID, 1), jnp.float32),
        "b3": 0.05 * jax.random.normal(ks[5], (1,), jnp.float32),
        "gamma": jnp.ones((HID,), jnp.float32),   # BatchNorm2d default affine init
        "beta": jnp.zeros((HID,), jnp.float32),
    }


if __name__ == "__main__":
    key = jax.random.PRNGKey(0)
    k_x, k_p = jax.random.split(key)

    N, H, W = 2, 16, 16
    x = jax.random.normal(k_x, (N, D_IN, H, W), jnp.float32)   # NCHW like PyTorch
    params = init_params(k_p, D_IN)

    out = jax.block_until_ready(decoder_forward(x, params))
    assert out.shape == (N, 1, H, W), out.shape
    assert bool(jnp.all(jnp.isfinite(out))), "non-finite kernel output"

    # Primary check: reference with the kernel's bf16 rounding points matched
    # (catches any layout / indexing / BN-fusion bug).
    ref_b = jax.block_until_ready(ref_decoder(x, params, jnp.bfloat16))
    err_b = float(jnp.max(jnp.abs(out - ref_b)))
    assert err_b < 2e-2, f"max abs error vs bf16-matmul reference {err_b}"

    # Sanity check against the full-f32 reference (looser: kernel matmul
    # operands and HBM activations are bf16).
    ref_f = jax.block_until_ready(ref_decoder(x, params, None))
    err_f = float(jnp.max(jnp.abs(out - ref_f)))
    assert err_f < 1.5e-1, f"max abs error vs f32 reference {err_f}"

    print("KERNEL_OK")
</pallas_src>

<mosaic_0001>
module attributes {stable_mosaic.version = 11 : i64} {
  func.func @k_conv1(%arg0: i32, %arg1: memref<336x1xf32, #tpu.memory_space<vmem>>, %arg2: memref<336x4xf32, #tpu.memory_space<vmem>>, %arg3: memref<36x64xbf16, #tpu.memory_space<vmem>>, %arg4: memref<1x64xf32, #tpu.memory_space<vmem>>, %arg5: memref<336x64xbf16, #tpu.memory_space<vmem>>, %arg6: memref<1x2x64xf32, #tpu.memory_space<vmem>>) attributes {dimension_semantics = [#tpu.dimension_semantics<parallel>], iteration_bounds = array<i64: 2>, scalar_prefetch = 0 : i64, scratch_operands = 0 : i64, tpu.core_type = #tpu.core_type<tc>, window_params = [{pipeline_mode = #tpu.pipeline_mode<synchronous>, transform_indices = @transform_0, window_bounds = array<i64: 336, 1>}, {transform_indices = @transform_1, window_bounds = array<i64: 336, 4>}, {pipeline_mode = #tpu.pipeline_mode<synchronous>, transform_indices = @transform_2, window_bounds = array<i64: 36, 64>}, {pipeline_mode = #tpu.pipeline_mode<synchronous>, transform_indices = @transform_3, window_bounds = array<i64: 1, 64>}, {transform_indices = @transform_4, window_bounds = array<i64: 336, 64>}, {transform_indices = @transform_5, window_bounds = array<i64: 1, 2, 64>}]} {
    %c0 = arith.constant 0 : index
    %c0_0 = arith.constant 0 : index
    %0 = vector.load %arg1[%c0, %c0_0] : memref<336x1xf32, #tpu.memory_space<vmem>>, vector<336x1xf32>
    %c0_1 = arith.constant 0 : index
    %c0_2 = arith.constant 0 : index
    %1 = vector.load %arg2[%c0_1, %c0_2] : memref<336x4xf32, #tpu.memory_space<vmem>>, vector<298x4xf32>
    %2 = arith.truncf %1 : vector<298x4xf32> to vector<298x4xbf16>
    %c1 = arith.constant 1 : index
    %c0_3 = arith.constant 0 : index
    %3 = vector.load %arg2[%c1, %c0_3] : memref<336x4xf32, #tpu.memory_space<vmem>>, vector<298x4xf32>
    %4 = arith.truncf %3 : vector<298x4xf32> to vector<298x4xbf16>
    %c2 = arith.constant 2 : index
    %c0_4 = arith.constant 0 : index
    %5 = vector.load %arg2[%c2, %c0_4] : memref<336x4xf32, #tpu.memory_space<vmem>>, vector<298x4xf32>
    %6 = arith.truncf %5 : vector<298x4xf32> to vector<298x4xbf16>
    %c18 = arith.constant 18 : index
    %c0_5 = arith.constant 0 : index
    %7 = vector.load %arg2[%c18, %c0_5] : memref<336x4xf32, #tpu.memory_space<vmem>>, vector<298x4xf32>
    %8 = arith.truncf %7 : vector<298x4xf32> to vector<298x4xbf16>
    %c19 = arith.constant 19 : index
    %c0_6 = arith.constant 0 : index
    %9 = vector.load %arg2[%c19, %c0_6] : memref<336x4xf32, #tpu.memory_space<vmem>>, vector<298x4xf32>
    %10 = arith.truncf %9 : vector<298x4xf32> to vector<298x4xbf16>
    %c20 = arith.constant 20 : index
    %c0_7 = arith.constant 0 : index
    %11 = vector.load %arg2[%c20, %c0_7] : memref<336x4xf32, #tpu.memory_space<vmem>>, vector<298x4xf32>
    %12 = arith.truncf %11 : vector<298x4xf32> to vector<298x4xbf16>
    %c36 = arith.constant 36 : index
    %c0_8 = arith.constant 0 : index
    %13 = vector.load %arg2[%c36, %c0_8] : memref<336x4xf32, #tpu.memory_space<vmem>>, vector<298x4xf32>
    %14 = arith.truncf %13 : vector<298x4xf32> to vector<298x4xbf16>
    %c37 = arith.constant 37 : index
    %c0_9 = arith.constant 0 : index
    %15 = vector.load %arg2[%c37, %c0_9] : memref<336x4xf32, #tpu.memory_space<vmem>>, vector<298x4xf32>
    %16 = arith.truncf %15 : vector<298x4xf32> to vector<298x4xbf16>
    %c38 = arith.constant 38 : index
    %c0_10 = arith.constant 0 : index
    %17 = vector.load %arg2[%c38, %c0_10] : memref<336x4xf32, #tpu.memory_space<vmem>>, vector<298x4xf32>
    %18 = arith.truncf %17 : vector<298x4xf32> to vector<298x4xbf16>
    %19 = tpu.concatenate %2, %4, %6, %8, %10, %12, %14, %16, %18 in 1 : vector<298x4xbf16>, vector<298x4xbf16>, vector<298x4xbf16>, vector<298x4xbf16>, vector<298x4xbf16>, vector<298x4xbf16>, vector<298x4xbf16>, vector<298x4xbf16>, vector<298x4xbf16> -> vector<298x36xbf16>
    %c0_11 = arith.constant 0 : index
    %c0_12 = arith.constant 0 : index
    %20 = vector.load %arg3[%c0_11, %c0_12] : memref<36x64xbf16, #tpu.memory_space<vmem>>, vector<36x64xbf16>
    %cst = arith.constant dense<0.000000e+00> : vector<298x64xf32>
    %21 = tpu.matmul %19, %20, %cst {dimension_numbers = #tpu.dot_dimension_numbers<[1], [0], [0], [1], [0, 0, 1, 1], [], []>} : vector<298x36xbf16>, vector<36x64xbf16>, vector<298x64xf32> -> vector<298x64xf32>
    %c0_13 = arith.constant 0 : index
    %c0_14 = arith.constant 0 : index
    %22 = vector.load %arg4[%c0_13, %c0_14] : memref<1x64xf32, #tpu.memory_space<vmem>>, vector<1x64xf32>
    %23 = vector.broadcast %22 : vector<1x64xf32> to vector<298x64xf32>
    %24 = arith.addf %21, %23 : vector<298x64xf32>
    %cst_15 = arith.constant 0.000000e+00 : f32
    %25 = vector.broadcast %cst_15 : f32 to vector<298x64xf32>
    %26 = arith.maximumf %24, %25 : vector<298x64xf32>
    %cst_16 = arith.constant 0.000000e+00 : f32
    %27 = vector.broadcast %cst_16 : f32 to vector<19x64xf32>
    %28 = tpu.concatenate %27, %26, %27 in 0 : vector<19x64xf32>, vector<298x64xf32>, vector<19x64xf32> -> vector<336x64xf32>
    %29 = vector.broadcast %0 : vector<336x1xf32> to vector<336x64xf32>
    %30 = arith.mulf %28, %29 : vector<336x64xf32>
    %31 = arith.truncf %30 : vector<336x64xf32> to vector<336x64xbf16>
    %c0_17 = arith.constant 0 : index
    %c0_18 = arith.constant 0 : index
    %32 = vector.load %arg5[%c0_17, %c0_18] : memref<336x64xbf16, #tpu.memory_space<vmem>>, vector<336x64xbf16>
    tpu.vector_store %arg5[%c0_17, %c0_18], %31 {strides = array<i32>} : memref<336x64xbf16, #tpu.memory_space<vmem>>, vector<336x64xbf16>,
    %33 = arith.extf %31 : vector<336x64xbf16> to vector<336x64xf32>
    %cst_19 = arith.constant dense<0.000000e+00> : vector<64xf32>
    %34 = vector.multi_reduction <add>, %33, %cst_19 [0] : vector<336x64xf32> to vector<64xf32>
    %35 = vector.shape_cast %34 : vector<64xf32> to vector<1x64xf32>
    %36 = arith.mulf %33, %33 : vector<336x64xf32>
    %cst_20 = arith.constant dense<0.000000e+00> : vector<64xf32>
    %37 = vector.multi_reduction <add>, %36, %cst_20 [0] : vector<336x64xf32> to vector<64xf32>
    %38 = vector.shape_cast %37 : vector<64xf32> to vector<1x64xf32>
    %39 = tpu.concatenate %35, %38 in 0 : vector<1x64xf32>, vector<1x64xf32> -> vector<2x64xf32>
    %40 = vector.shape_cast %39 : vector<2x64xf32> to vector<1x2x64xf32>
    %c0_21 = arith.constant 0 : index
    %c0_22 = arith.constant 0 : index
    %c0_23 = arith.constant 0 : index
    %41 = vector.load %arg6[%c0_21, %c0_22, %c0_23] : memref<1x2x64xf32, #tpu.memory_space<vmem>>, vector<1x2x64xf32>
    tpu.vector_store %arg6[%c0_21, %c0_22, %c0_23], %40 {strides = array<i32>} : memref<1x2x64xf32, #tpu.memory_space<vmem>>, vector<1x2x64xf32>,
    return
  }
  func.func @transform_0(%arg0: i32) -> (i32, i32) {
    %c0_i32 = arith.constant 0 : i32
    %c0_i32_0 = arith.constant 0 : i32
    %c0_i32_1 = arith.constant 0 : i32
    return %c0_i32, %c0_i32_0 : i32, i32
  }
  func.func @transform_1(%arg0: i32) -> (i32, i32) {
    %c0_i32 = arith.constant 0 : i32
    %c0_i32_0 = arith.constant 0 : i32
    return %arg0, %c0_i32 : i32, i32
  }
  func.func @transform_2(%arg0: i32) -> (i32, i32) {
    %c0_i32 = arith.constant 0 : i32
    %c0_i32_0 = arith.constant 0 : i32
    %c0_i32_1 = arith.constant 0 : i32
    return %c0_i32, %c0_i32_0 : i32, i32
  }
  func.func @transform_3(%arg0: i32) -> (i32, i32) {
    %c0_i32 = arith.constant 0 : i32
    %c0_i32_0 = arith.constant 0 : i32
    %c0_i32_1 = arith.constant 0 : i32
    return %c0_i32, %c0_i32_0 : i32, i32
  }
  func.func @transform_4(%arg0: i32) -> (i32, i32) {
    %c0_i32 = arith.constant 0 : i32
    %c0_i32_0 = arith.constant 0 : i32
    return %arg0, %c0_i32 : i32, i32
  }
  func.func @transform_5(%arg0: i32) -> (i32, i32, i32) {
    %c0_i32 = arith.constant 0 : i32
    %c0_i32_0 = arith.constant 0 : i32
    %c0_i32_1 = arith.constant 0 : i32
    return %arg0, %c0_i32, %c0_i32_0 : i32, i32, i32
  }
}

module attributes {stable_mosaic.version = 11 : i64} {
  func.func @k_bn_conv2(%arg0: i32, %arg1: memref<336x1xf32, #tpu.memory_space<vmem>>, %arg2: memref<336x64xbf16, #tpu.memory_space<vmem>>, %arg3: memref<1x64xf32, #tpu.memory_space<vmem>>, %arg4: memref<1x64xf32, #tpu.memory_space<vmem>>, %arg5: memref<576x64xbf16, #tpu.memory_space<vmem>>, %arg6: memref<1x64xf32, #tpu.memory_space<vmem>>, %arg7: memref<336x64xbf16, #tpu.memory_space<vmem>>, %arg8: memref<1x2x64xf32, #tpu.memory_space<vmem>>, %arg9: memref<336x64xf32, #tpu.memory_space<vmem>>) attributes {dimension_semantics = [#tpu.dimension_semantics<parallel>], iteration_bounds = array<i64: 2>, scalar_prefetch = 0 : i64, scratch_operands = 1 : i64, tpu.core_type = #tpu.core_type<tc>, window_params = [{pipeline_mode = #tpu.pipeline_mode<synchronous>, transform_indices = @transform_0, window_bounds = array<i64: 336, 1>}, {transform_indices = @transform_1, window_bounds = array<i64: 336, 64>}, {pipeline_mode = #tpu.pipeline_mode<synchronous>, transform_indices = @transform_2, window_bounds = array<i64: 1, 64>}, {pipeline_mode = #tpu.pipeline_mode<synchronous>, transform_indices = @transform_3, window_bounds = array<i64: 1, 64>}, {pipeline_mode = #tpu.pipeline_mode<synchronous>, transform_indices = @transform_4, window_bounds = array<i64: 576, 64>}, {pipeline_mode = #tpu.pipeline_mode<synchronous>, transform_indices = @transform_5, window_bounds = array<i64: 1, 64>}, {transform_indices = @transform_6, window_bounds = array<i64: 336, 64>}, {transform_indices = @transform_7, window_bounds = array<i64: 1, 2, 64>}]} {
    %c0 = arith.constant 0 : index
    %c0_0 = arith.constant 0 : index
    %0 = vector.load %arg1[%c0, %c0_0] : memref<336x1xf32, #tpu.memory_space<vmem>>, vector<336x1xf32>
    %c0_1 = arith.constant 0 : index
    %c0_2 = arith.constant 0 : index
    %1 = vector.load %arg2[%c0_1, %c0_2] : memref<336x64xbf16, #tpu.memory_space<vmem>>, vector<336x64xbf16>
    %2 = arith.extf %1 : vector<336x64xbf16> to vector<336x64xf32>
    %c0_3 = arith.constant 0 : index
    %c0_4 = arith.constant 0 : index
    %3 = vector.load %arg3[%c0_3, %c0_4] : memref<1x64xf32, #tpu.memory_space<vmem>>, vector<1x64xf32>
    %4 = vector.broadcast %3 : vector<1x64xf32> to vector<336x64xf32>
    %5 = arith.mulf %2, %4 : vector<336x64xf32>
    %c0_5 = arith.constant 0 : index
    %c0_6 = arith.constant 0 : index
    %6 = vector.load %arg4[%c0_5, %c0_6] : memref<1x64xf32, #tpu.memory_space<vmem>>, vector<1x64xf32>
    %7 = vector.broadcast %6 : vector<1x64xf32> to vector<336x64xf32>
    %8 = arith.addf %5, %7 : vector<336x64xf32>
    %9 = vector.broadcast %0 : vector<336x1xf32> to vector<336x64xf32>
    %10 = arith.mulf %8, %9 : vector<336x64xf32>
    %c0_7 = arith.constant 0 : index
    %c0_8 = arith.constant 0 : index
    %11 = vector.load %arg9[%c0_7, %c0_8] : memref<336x64xf32, #tpu.memory_space<vmem>>, vector<336x64xf32>
    tpu.vector_store %arg9[%c0_7, %c0_8], %10 {strides = array<i32>} : memref<336x64xf32, #tpu.memory_space<vmem>>, vector<336x64xf32>,
    %c0_9 = arith.constant 0 : index
    %c0_10 = arith.constant 0 : index
    %12 = vector.load %arg9[%c0_9, %c0_10] : memref<336x64xf32, #tpu.memory_space<vmem>>, vector<298x64xf32>
    %13 = arith.truncf %12 : vector<298x64xf32> to vector<298x64xbf16>
    %c1 = arith.constant 1 : index
    %c0_11 = arith.constant 0 : index
    %14 = vector.load %arg9[%c1, %c0_11] : memref<336x64xf32, #tpu.memory_space<vmem>>, vector<298x64xf32>
    %15 = arith.truncf %14 : vector<298x64xf32> to vector<298x64xbf16>
    %c2 = arith.constant 2 : index
    %c0_12 = arith.constant 0 : index
    %16 = vector.load %arg9[%c2, %c0_12] : memref<336x64xf32, #tpu.memory_space<vmem>>, vector<298x64xf32>
    %17 = arith.truncf %16 : vector<298x64xf32> to vector<298x64xbf16>
    %c18 = arith.constant 18 : index
    %c0_13 = arith.constant 0 : index
    %18 = vector.load %arg9[%c18, %c0_13] : memref<336x64xf32, #tpu.memory_space<vmem>>, vector<298x64xf32>
    %19 = arith.truncf %18 : vector<298x64xf32> to vector<298x64xbf16>
    %c19 = arith.constant 19 : index
    %c0_14 = arith.constant 0 : index
    %20 = vector.load %arg9[%c19, %c0_14] : memref<336x64xf32, #tpu.memory_space<vmem>>, vector<298x64xf32>
    %21 = arith.truncf %20 : vector<298x64xf32> to vector<298x64xbf16>
    %c20 = arith.constant 20 : index
    %c0_15 = arith.constant 0 : index
    %22 = vector.load %arg9[%c20, %c0_15] : memref<336x64xf32, #tpu.memory_space<vmem>>, vector<298x64xf32>
    %23 = arith.truncf %22 : vector<298x64xf32> to vector<298x64xbf16>
    %c36 = arith.constant 36 : index
    %c0_16 = arith.constant 0 : index
    %24 = vector.load %arg9[%c36, %c0_16] : memref<336x64xf32, #tpu.memory_space<vmem>>, vector<298x64xf32>
    %25 = arith.truncf %24 : vector<298x64xf32> to vector<298x64xbf16>
    %c37 = arith.constant 37 : index
    %c0_17 = arith.constant 0 : index
    %26 = vector.load %arg9[%c37, %c0_17] : memref<336x64xf32, #tpu.memory_space<vmem>>, vector<298x64xf32>
    %27 = arith.truncf %26 : vector<298x64xf32> to vector<298x64xbf16>
    %c38 = arith.constant 38 : index
    %c0_18 = arith.constant 0 : index
    %28 = vector.load %arg9[%c38, %c0_18] : memref<336x64xf32, #tpu.memory_space<vmem>>, vector<298x64xf32>
    %29 = arith.truncf %28 : vector<298x64xf32> to vector<298x64xbf16>
    %30 = tpu.concatenate %13, %15, %17, %19, %21, %23, %25, %27, %29 in 1 : vector<298x64xbf16>, vector<298x64xbf16>, vector<298x64xbf16>, vector<298x64xbf16>, vector<298x64xbf16>, vector<298x64xbf16>, vector<298x64xbf16>, vector<298x64xbf16>, vector<298x64xbf16> -> vector<298x576xbf16>
    %c0_19 = arith.constant 0 : index
    %c0_20 = arith.constant 0 : index
    %31 = vector.load %arg5[%c0_19, %c0_20] : memref<576x64xbf16, #tpu.memory_space<vmem>>, vector<576x64xbf16>
    %cst = arith.constant dense<0.000000e+00> : vector<298x64xf32>
    %32 = tpu.matmul %30, %31, %cst {dimension_numbers = #tpu.dot_dimension_numbers<[1], [0], [0], [1], [0, 0, 1, 1], [], []>} : vector<298x576xbf16>, vector<576x64xbf16>, vector<298x64xf32> -> vector<298x64xf32>
    %c0_21 = arith.constant 0 : index
    %c0_22 = arith.constant 0 : index
    %33 = vector.load %arg6[%c0_21, %c0_22] : memref<1x64xf32, #tpu.memory_space<vmem>>, vector<1x64xf32>
    %34 = vector.broadcast %33 : vector<1x64xf32> to vector<298x64xf32>
    %35 = arith.addf %32, %34 : vector<298x64xf32>
    %cst_23 = arith.constant 0.000000e+00 : f32
    %36 = vector.broadcast %cst_23 : f32 to vector<298x64xf32>
    %37 = arith.maximumf %35, %36 : vector<298x64xf32>
    %cst_24 = arith.constant 0.000000e+00 : f32
    %38 = vector.broadcast %cst_24 : f32 to vector<19x64xf32>
    %39 = tpu.concatenate %38, %37, %38 in 0 : vector<19x64xf32>, vector<298x64xf32>, vector<19x64xf32> -> vector<336x64xf32>
    %40 = vector.broadcast %0 : vector<336x1xf32> to vector<336x64xf32>
    %41 = arith.mulf %39, %40 : vector<336x64xf32>
    %42 = arith.truncf %41 : vector<336x64xf32> to vector<336x64xbf16>
    %c0_25 = arith.constant 0 : index
    %c0_26 = arith.constant 0 : index
    %43 = vector.load %arg7[%c0_25, %c0_26] : memref<336x64xbf16, #tpu.memory_space<vmem>>, vector<336x64xbf16>
    tpu.vector_store %arg7[%c0_25, %c0_26], %42 {strides = array<i32>} : memref<336x64xbf16, #tpu.memory_space<vmem>>, vector<336x64xbf16>,
    %44 = arith.extf %42 : vector<336x64xbf16> to vector<336x64xf32>
    %cst_27 = arith.constant dense<0.000000e+00> : vector<64xf32>
    %45 = vector.multi_reduction <add>, %44, %cst_27 [0] : vector<336x64xf32> to vector<64xf32>
    %46 = vector.shape_cast %45 : vector<64xf32> to vector<1x64xf32>
    %47 = arith.mulf %44, %44 : vector<336x64xf32>
    %cst_28 = arith.constant dense<0.000000e+00> : vector<64xf32>
    %48 = vector.multi_reduction <add>, %47, %cst_28 [0] : vector<336x64xf32> to vector<64xf32>
    %49 = vector.shape_cast %48 : vector<64xf32> to vector<1x64xf32>
    %50 = tpu.concatenate %46, %49 in 0 : vector<1x64xf32>, vector<1x64xf32> -> vector<2x64xf32>
    %51 = vector.shape_cast %50 : vector<2x64xf32> to vector<1x2x64xf32>
    %c0_29 = arith.constant 0 : index
    %c0_30 = arith.constant 0 : index
    %c0_31 = arith.constant 0 : index
    %52 = vector.load %arg8[%c0_29, %c0_30, %c0_31] : memref<1x2x64xf32, #tpu.memory_space<vmem>>, vector<1x2x64xf32>
    tpu.vector_store %arg8[%c0_29, %c0_30, %c0_31], %51 {strides = array<i32>} : memref<1x2x64xf32, #tpu.memory_space<vmem>>, vector<1x2x64xf32>,
    return
  }
  func.func @transform_0(%arg0: i32) -> (i32, i32) {
    %c0_i32 = arith.constant 0 : i32
    %c0_i32_0 = arith.constant 0 : i32
    %c0_i32_1 = arith.constant 0 : i32
    return %c0_i32, %c0_i32_0 : i32, i32
  }
  func.func @transform_1(%arg0: i32) -> (i32, i32) {
    %c0_i32 = arith.constant 0 : i32
    %c0_i32_0 = arith.constant 0 : i32
    return %arg0, %c0_i32 : i32, i32
  }
  func.func @transform_2(%arg0: i32) -> (i32, i32) {
    %c0_i32 = arith.constant 0 : i32
    %c0_i32_0 = arith.constant 0 : i32
    %c0_i32_1 = arith.constant 0 : i32
    return %c0_i32, %c0_i32_0 : i32, i32
  }
  func.func @transform_3(%arg0: i32) -> (i32, i32) {
    %c0_i32 = arith.constant 0 : i32
    %c0_i32_0 = arith.constant 0 : i32
    %c0_i32_1 = arith.constant 0 : i32
    return %c0_i32, %c0_i32_0 : i32, i32
  }
  func.func @transform_4(%arg0: i32) -> (i32, i32) {
    %c0_i32 = arith.constant 0 : i32
    %c0_i32_0 = arith.constant 0 : i32
    %c0_i32_1 = arith.constant 0 : i32
    return %c0_i32, %c0_i32_0 : i32, i32
  }
  func.func @transform_5(%arg0: i32) -> (i32, i32) {
    %c0_i32 = arith.constant 0 : i32
    %c0_i32_0 = arith.constant 0 : i32
    %c0_i32_1 = arith.constant 0 : i32
    return %c0_i32, %c0_i32_0 : i32, i32
  }
  func.func @transform_6(%arg0: i32) -> (i32, i32) {
    %c0_i32 = arith.constant 0 : i32
    %c0_i32_0 = arith.constant 0 : i32
    return %arg0, %c0_i32 : i32, i32
  }
  func.func @transform_7(%arg0: i32) -> (i32, i32, i32) {
    %c0_i32 = arith.constant 0 : i32
    %c0_i32_0 = arith.constant 0 : i32
    %c0_i32_1 = arith.constant 0 : i32
    return %arg0, %c0_i32, %c0_i32_0 : i32, i32, i32
  }
}

module attributes {stable_mosaic.version = 11 : i64} {
  func.func @k_bn_conv3(%arg0: i32, %arg1: memref<336x1xf32, #tpu.memory_space<vmem>>, %arg2: memref<336x64xbf16, #tpu.memory_space<vmem>>, %arg3: memref<1x64xf32, #tpu.memory_space<vmem>>, %arg4: memref<1x64xf32, #tpu.memory_space<vmem>>, %arg5: memref<576x128xbf16, #tpu.memory_space<vmem>>, %arg6: memref<1x128xf32, #tpu.memory_space<vmem>>, %arg7: memref<336x1xf32, #tpu.memory_space<vmem>>, %arg8: memref<336x64xf32, #tpu.memory_space<vmem>>) attributes {dimension_semantics = [#tpu.dimension_semantics<parallel>], iteration_bounds = array<i64: 2>, scalar_prefetch = 0 : i64, scratch_operands = 1 : i64, tpu.core_type = #tpu.core_type<tc>, window_params = [{pipeline_mode = #tpu.pipeline_mode<synchronous>, transform_indices = @transform_0, window_bounds = array<i64: 336, 1>}, {transform_indices = @transform_1, window_bounds = array<i64: 336, 64>}, {pipeline_mode = #tpu.pipeline_mode<synchronous>, transform_indices = @transform_2, window_bounds = array<i64: 1, 64>}, {pipeline_mode = #tpu.pipeline_mode<synchronous>, transform_indices = @transform_3, window_bounds = array<i64: 1, 64>}, {pipeline_mode = #tpu.pipeline_mode<synchronous>, transform_indices = @transform_4, window_bounds = array<i64: 576, 128>}, {pipeline_mode = #tpu.pipeline_mode<synchronous>, transform_indices = @transform_5, window_bounds = array<i64: 1, 128>}, {transform_indices = @transform_6, window_bounds = array<i64: 336, 1>}]} {
    %c0 = arith.constant 0 : index
    %c0_0 = arith.constant 0 : index
    %0 = vector.load %arg1[%c0, %c0_0] : memref<336x1xf32, #tpu.memory_space<vmem>>, vector<336x1xf32>
    %c0_1 = arith.constant 0 : index
    %c0_2 = arith.constant 0 : index
    %1 = vector.load %arg2[%c0_1, %c0_2] : memref<336x64xbf16, #tpu.memory_space<vmem>>, vector<336x64xbf16>
    %2 = arith.extf %1 : vector<336x64xbf16> to vector<336x64xf32>
    %c0_3 = arith.constant 0 : index
    %c0_4 = arith.constant 0 : index
    %3 = vector.load %arg3[%c0_3, %c0_4] : memref<1x64xf32, #tpu.memory_space<vmem>>, vector<1x64xf32>
    %4 = vector.broadcast %3 : vector<1x64xf32> to vector<336x64xf32>
    %5 = arith.mulf %2, %4 : vector<336x64xf32>
    %c0_5 = arith.constant 0 : index
    %c0_6 = arith.constant 0 : index
    %6 = vector.load %arg4[%c0_5, %c0_6] : memref<1x64xf32, #tpu.memory_space<vmem>>, vector<1x64xf32>
    %7 = vector.broadcast %6 : vector<1x64xf32> to vector<336x64xf32>
    %8 = arith.addf %5, %7 : vector<336x64xf32>
    %9 = vector.broadcast %0 : vector<336x1xf32> to vector<336x64xf32>
    %10 = arith.mulf %8, %9 : vector<336x64xf32>
    %c0_7 = arith.constant 0 : index
    %c0_8 = arith.constant 0 : index
    %11 = vector.load %arg8[%c0_7, %c0_8] : memref<336x64xf32, #tpu.memory_space<vmem>>, vector<336x64xf32>
    tpu.vector_store %arg8[%c0_7, %c0_8], %10 {strides = array<i32>} : memref<336x64xf32, #tpu.memory_space<vmem>>, vector<336x64xf32>,
    %c0_9 = arith.constant 0 : index
    %c0_10 = arith.constant 0 : index
    %12 = vector.load %arg8[%c0_9, %c0_10] : memref<336x64xf32, #tpu.memory_space<vmem>>, vector<298x64xf32>
    %13 = arith.truncf %12 : vector<298x64xf32> to vector<298x64xbf16>
    %c1 = arith.constant 1 : index
    %c0_11 = arith.constant 0 : index
    %14 = vector.load %arg8[%c1, %c0_11] : memref<336x64xf32, #tpu.memory_space<vmem>>, vector<298x64xf32>
    %15 = arith.truncf %14 : vector<298x64xf32> to vector<298x64xbf16>
    %c2 = arith.constant 2 : index
    %c0_12 = arith.constant 0 : index
    %16 = vector.load %arg8[%c2, %c0_12] : memref<336x64xf32, #tpu.memory_space<vmem>>, vector<298x64xf32>
    %17 = arith.truncf %16 : vector<298x64xf32> to vector<298x64xbf16>
    %c18 = arith.constant 18 : index
    %c0_13 = arith.constant 0 : index
    %18 = vector.load %arg8[%c18, %c0_13] : memref<336x64xf32, #tpu.memory_space<vmem>>, vector<298x64xf32>
    %19 = arith.truncf %18 : vector<298x64xf32> to vector<298x64xbf16>
    %c19 = arith.constant 19 : index
    %c0_14 = arith.constant 0 : index
    %20 = vector.load %arg8[%c19, %c0_14] : memref<336x64xf32, #tpu.memory_space<vmem>>, vector<298x64xf32>
    %21 = arith.truncf %20 : vector<298x64xf32> to vector<298x64xbf16>
    %c20 = arith.constant 20 : index
    %c0_15 = arith.constant 0 : index
    %22 = vector.load %arg8[%c20, %c0_15] : memref<336x64xf32, #tpu.memory_space<vmem>>, vector<298x64xf32>
    %23 = arith.truncf %22 : vector<298x64xf32> to vector<298x64xbf16>
    %c36 = arith.constant 36 : index
    %c0_16 = arith.constant 0 : index
    %24 = vector.load %arg8[%c36, %c0_16] : memref<336x64xf32, #tpu.memory_space<vmem>>, vector<298x64xf32>
    %25 = arith.truncf %24 : vector<298x64xf32> to vector<298x64xbf16>
    %c37 = arith.constant 37 : index
    %c0_17 = arith.constant 0 : index
    %26 = vector.load %arg8[%c37, %c0_17] : memref<336x64xf32, #tpu.memory_space<vmem>>, vector<298x64xf32>
    %27 = arith.truncf %26 : vector<298x64xf32> to vector<298x64xbf16>
    %c38 = arith.constant 38 : index
    %c0_18 = arith.constant 0 : index
    %28 = vector.load %arg8[%c38, %c0_18] : memref<336x64xf32, #tpu.memory_space<vmem>>, vector<298x64xf32>
    %29 = arith.truncf %28 : vector<298x64xf32> to vector<298x64xbf16>
    %30 = tpu.concatenate %13, %15, %17, %19, %21, %23, %25, %27, %29 in 1 : vector<298x64xbf16>, vector<298x64xbf16>, vector<298x64xbf16>, vector<298x64xbf16>, vector<298x64xbf16>, vector<298x64xbf16>, vector<298x64xbf16>, vector<298x64xbf16>, vector<298x64xbf16> -> vector<298x576xbf16>
    %c0_19 = arith.constant 0 : index
    %c0_20 = arith.constant 0 : index
    %31 = vector.load %arg5[%c0_19, %c0_20] : memref<576x128xbf16, #tpu.memory_space<vmem>>, vector<576x128xbf16>
    %cst = arith.constant dense<0.000000e+00> : vector<298x128xf32>
    %32 = tpu.matmul %30, %31, %cst {dimension_numbers = #tpu.dot_dimension_numbers<[1], [0], [0], [1], [0, 0, 1, 1], [], []>} : vector<298x576xbf16>, vector<576x128xbf16>, vector<298x128xf32> -> vector<298x128xf32>
    %c0_21 = arith.constant 0 : index
    %c0_22 = arith.constant 0 : index
    %33 = vector.load %arg6[%c0_21, %c0_22] : memref<1x128xf32, #tpu.memory_space<vmem>>, vector<1x128xf32>
    %34 = vector.broadcast %33 : vector<1x128xf32> to vector<298x128xf32>
    %35 = arith.addf %32, %34 : vector<298x128xf32>
    %cst_23 = arith.constant 0.000000e+00 : f32
    %36 = vector.broadcast %cst_23 : f32 to vector<298x128xf32>
    %37 = arith.maximumf %35, %36 : vector<298x128xf32>
    %38 = vector.extract_strided_slice %37 {offsets = [0, 0], sizes = [298, 1], strides = [1, 1]} : vector<298x128xf32> to vector<298x1xf32>
    %cst_24 = arith.constant 0.000000e+00 : f32
    %39 = vector.broadcast %cst_24 : f32 to vector<19x1xf32>
    %40 = tpu.concatenate %39, %38, %39 in 0 : vector<19x1xf32>, vector<298x1xf32>, vector<19x1xf32> -> vector<336x1xf32>
    %c0_25 = arith.constant 0 : index
    %c0_26 = arith.constant 0 : index
    %41 = vector.load %arg7[%c0_25, %c0_26] : memref<336x1xf32, #tpu.memory_space<vmem>>, vector<336x1xf32>
    tpu.vector_store %arg7[%c0_25, %c0_26], %40 {strides = array<i32>} : memref<336x1xf32, #tpu.memory_space<vmem>>, vector<336x1xf32>,
    return
  }
  func.func @transform_0(%arg0: i32) -> (i32, i32) {
    %c0_i32 = arith.constant 0 : i32
    %c0_i32_0 = arith.constant 0 : i32
    %c0_i32_1 = arith.constant 0 : i32
    return %c0_i32, %c0_i32_0 : i32, i32
  }
  func.func @transform_1(%arg0: i32) -> (i32, i32) {
    %c0_i32 = arith.constant 0 : i32
    %c0_i32_0 = arith.constant 0 : i32
    return %arg0, %c0_i32 : i32, i32
  }
  func.func @transform_2(%arg0: i32) -> (i32, i32) {
    %c0_i32 = arith.constant 0 : i32
    %c0_i32_0 = arith.constant 0 : i32
    %c0_i32_1 = arith.constant 0 : i32
    return %c0_i32, %c0_i32_0 : i32, i32
  }
  func.func @transform_3(%arg0: i32) -> (i32, i32) {
    %c0_i32 = arith.constant 0 : i32
    %c0_i32_0 = arith.constant 0 : i32
    %c0_i32_1 = arith.constant 0 : i32
    return %c0_i32, %c0_i32_0 : i32, i32
  }
  func.func @transform_4(%arg0: i32) -> (i32, i32) {
    %c0_i32 = arith.constant 0 : i32
    %c0_i32_0 = arith.constant 0 : i32
    %c0_i32_1 = arith.constant 0 : i32
    return %c0_i32, %c0_i32_0 : i32, i32
  }
  func.func @transform_5(%arg0: i32) -> (i32, i32) {
    %c0_i32 = arith.constant 0 : i32
    %c0_i32_0 = arith.constant 0 : i32
    %c0_i32_1 = arith.constant 0 : i32
    return %c0_i32, %c0_i32_0 : i32, i32
  }
  func.func @transform_6(%arg0: i32) -> (i32, i32) {
    %c0_i32 = arith.constant 0 : i32
    %c0_i32_0 = arith.constant 0 : i32
    return %arg0, %c0_i32 : i32, i32
  }
}

</mosaic_0001>

<llo_original>
// kernel: decoder_forward.3
$region0: #{decoder_forward.3}
  #allocation0 [shape = 'u32[]', space=smem, size = 0x4, offset = 0x4, fixed_abs, tag = 'smem constant byte address 0x4 - core index']
  #allocation1 [shape = 'u32[144,128]{1,0:T(1,128)}', space=vmem, size = 0x12000, scoped, tag = 'internal scratch']
  %s0 = inlined_call_operand.vmem [shape: f32[336,1], index: 0, kind: input, shape index: {}]
  %s1 = inlined_call_operand.vmem [shape: f32[672,4], index: 1, kind: input, shape index: {}]
  %s2 = inlined_call_operand.vmem [shape: bf16[36,64], index: 2, kind: input, shape index: {}]
  %s3 = inlined_call_operand.vmem [shape: f32[1,64], index: 3, kind: input, shape index: {}]
  %s4 = inlined_call_operand.vmem [shape: bf16[672,64], index: 4, kind: output, shape index: {0}]
  %s5 = inlined_call_operand.vmem [shape: f32[2,2,64], index: 5, kind: output, shape index: {1}]
  %6 = xla_tuple %s4, %s5
  %s7 = sld [smem:[#allocation0]]
  $region57: #{decoder_forward.3} parent=0
    _
  %s9 = ssub.s32 1, %s7
  %s10 = scalar_select 0, %s9, %s7
  loop: start=0, step=1, limit=4
  $region2: #{decoder_forward.3} parent=0 // loop_pre_header
    _
  $region3: #{decoder_forward.3} parent=0 // loop_header
    %s12 = sphi 0, %s16
    %p13 = scmp.ge.s32.totalorder %s12, 4
    %s20 = sphi 0, %s20
    %s22 = sphi 0, %s20
    %s23 = sphi 0, %s22
    %s37 = sphi 0, %s23
    %s43 = sphi 0, %s45
    %s46 = sphi 0, %s43
    %s47 = sphi 0, %s46
    %s63 = sphi 0, %s47
    %s67 = sphi 0, %s67
    %s69 = sphi 0, %s67
    %s70 = sphi 0, %s69
    %s84 = sphi 0, %s70
    %s88 = sphi 0, %s88
    %s90 = sphi 0, %s88
    %s91 = sphi 0, %s90
    %s105 = sphi 0, %s91
    %s111 = sphi 0, %s113
    %s114 = sphi 0, %s111
    %s115 = sphi 0, %s114
    %s131 = sphi 0, %s115
    %s137 = sphi 0, %s139
    %s140 = sphi 0, %s137
    %s141 = sphi 0, %s140
    %s157 = sphi 0, %s141
  $region4: #{decoder_forward.3} parent=0 // loop_header_branch
    %15 = sbr.rel (%p13) target = $region8
  $region5: #{decoder_forward.3} parent=0 // loop_body
    %s17 = ssub.s32 %s12, 1
    %s18 = ssub.s32 %s12, 2
    %s19 = sadd.s32 %s12, 1
    %s21 = sadd.s32 %s20, 1
    %p24 = scmp.eq.s32.totalorder %s12, 1
    %p25 = scmp.ne.s32.totalorder %s20, %s22
    %p26 = scmp.eq.s32.totalorder %s12, 0
    %p27 = por %p25, %p26
    %p28 = scmp.ne.s32.totalorder %s20, %s22
    %p29 = scmp.eq.s32.totalorder %s17, 1
    %p30 = por %p28, %p29
    %p31 = scmp.ne.s32.totalorder %s22, %s23
    %p32 = scmp.eq.s32.totalorder %s17, 0
    %p33 = por %p31, %p32
    %p34 = scmp.ne.s32.totalorder %s22, %s23
    %p35 = scmp.eq.s32.totalorder %s18, 1
    %p36 = por %p34, %p35
    %p38 = scmp.ne.s32.totalorder %s23, %s37
    %p39 = scmp.eq.s32.totalorder %s18, 0
    %p40 = por %p38, %p39
    %s41 = ssub.s32 %s12, %s19
    %p42 = scmp.eq.s32.totalorder %s41, 0
    %s44 = sadd.s32 %s43, 1
    %s45 = scalar_select %p42, %s43, %s44
    %p48 = pneg %p42
    %p49 = scmp.eq.s32.totalorder %s12, 1
    %p50 = por %p48, %p49
    %p51 = scmp.ne.s32.totalorder %s43, %s46
    %p52 = scmp.eq.s32.totalorder %s12, 0
    %p53 = por %p51, %p52
    %p54 = scmp.ne.s32.totalorder %s43, %s46
    %p55 = scmp.eq.s32.totalorder %s17, 1
    %p56 = por %p54, %p55
    %p57 = scmp.ne.s32.totalorder %s46, %s47
    %p58 = scmp.eq.s32.totalorder %s17, 0
    %p59 = por %p57, %p58
    %p60 = scmp.ne.s32.totalorder %s46, %s47
    %p61 = scmp.eq.s32.totalorder %s18, 1
    %p62 = por %p60, %p61
    %p64 = scmp.ne.s32.totalorder %s47, %s63
    %p65 = scmp.eq.s32.totalorder %s18, 0
    %p66 = por %p64, %p65
    %s68 = sadd.s32 %s67, 1
    %p71 = scmp.eq.s32.totalorder %s12, 1
    %p72 = scmp.ne.s32.totalorder %s67, %s69
    %p73 = scmp.eq.s32.totalorder %s12, 0
    %p74 = por %p72, %p73
    %p75 = scmp.ne.s32.totalorder %s67, %s69
    %p76 = scmp.eq.s32.totalorder %s17, 1
    %p77 = por %p75, %p76
    %p78 = scmp.ne.s32.totalorder %s69, %s70
    %p79 = scmp.eq.s32.totalorder %s17, 0
    %p80 = por %p78, %p79
    %p81 = scmp.ne.s32.totalorder %s69, %s70
    %p82 = scmp.eq.s32.totalorder %s18, 1
    %p83 = por %p81, %p82
    %p85 = scmp.ne.s32.totalorder %s70, %s84
    %p86 = scmp.eq.s32.totalorder %s18, 0
    %p87 = por %p85, %p86
    %s89 = sadd.s32 %s88, 1
    %p92 = scmp.eq.s32.totalorder %s12, 1
    %p93 = scmp.ne.s32.totalorder %s88, %s90
    %p94 = scmp.eq.s32.totalorder %s12, 0
    %p95 = por %p93, %p94
    %p96 = scmp.ne.s32.totalorder %s88, %s90
    %p97 = scmp.eq.s32.totalorder %s17, 1
    %p98 = por %p96, %p97
    %p99 = scmp.ne.s32.totalorder %s90, %s91
    %p100 = scmp.eq.s32.totalorder %s17, 0
    %p101 = por %p99, %p100
    %p102 = scmp.ne.s32.totalorder %s90, %s91
    %p103 = scmp.eq.s32.totalorder %s18, 1
    %p104 = por %p102, %p103
    %p106 = scmp.ne.s32.totalorder %s91, %s105
    %p107 = scmp.eq.s32.totalorder %s18, 0
    %p108 = por %p106, %p107
    %s109 = ssub.s32 %s12, %s19
    %p110 = scmp.eq.s32.totalorder %s109, 0
    %s112 = sadd.s32 %s111, 1
    %s113 = scalar_select %p110, %s111, %s112
    %p116 = pneg %p110
    %p117 = scmp.eq.s32.totalorder %s12, 1
    %p118 = por %p116, %p117
    %p119 = scmp.ne.s32.totalorder %s111, %s114
    %p120 = scmp.eq.s32.totalorder %s12, 0
    %p121 = por %p119, %p120
    %p122 = scmp.ne.s32.totalorder %s111, %s114
    %p123 = scmp.eq.s32.totalorder %s17, 1
    %p124 = por %p122, %p123
    %p125 = scmp.ne.s32.totalorder %s114, %s115
    %p126 = scmp.eq.s32.totalorder %s17, 0
    %p127 = por %p125, %p126
    %p128 = scmp.ne.s32.totalorder %s114, %s115
    %p129 = scmp.eq.s32.totalorder %s18, 1
    %p130 = por %p128, %p129
    %p132 = scmp.ne.s32.totalorder %s115, %s131
    %p133 = scmp.eq.s32.totalorder %s18, 0
    %p134 = por %p132, %p133
    %s135 = ssub.s32 %s12, %s19
    %p136 = scmp.eq.s32.totalorder %s135, 0
    %s138 = sadd.s32 %s137, 1
    %s139 = scalar_select %p136, %s137, %s138
    %p142 = pneg %p136
    %p143 = scmp.eq.s32.totalorder %s12, 1
    %p144 = por %p142, %p143
    %p145 = scmp.ne.s32.totalorder %s137, %s140
    %p146 = scmp.eq.s32.totalorder %s12, 0
    %p147 = por %p145, %p146
    %p148 = scmp.ne.s32.totalorder %s137, %s140
    %p149 = scmp.eq.s32.totalorder %s17, 1
    %p150 = por %p148, %p149
    %p151 = scmp.ne.s32.totalorder %s140, %s141
    %p152 = scmp.eq.s32.totalorder %s17, 0
    %p153 = por %p151, %p152
    %p154 = scmp.ne.s32.totalorder %s140, %s141
    %p155 = scmp.eq.s32.totalorder %s18, 1
    %p156 = por %p154, %p155
    %p158 = scmp.ne.s32.totalorder %s141, %s157
    %p159 = scmp.eq.s32.totalorder %s18, 0
    %p160 = por %p158, %p159
    %p161 = scmp.le.s32.totalorder 1, %s12
    %p162 = scmp.lt.s32.totalorder %s12, 3
    %p163 = pnand %p161, %p162
    %p164 = pneg %p163
    // Predicated region
    $region9: #{decoder_forward.3} parent=5 // pred_check
      _
    $region10: #{decoder_forward.3} parent=5 // pred_check_branch
      %166 = sbr.rel (%p163) target = $region12
    $region11: #{decoder_forward.3} parent=5 // pred_region
      %s167 = ssub.s32 %s12, 1
      // Predicated region
      $region13: #{decoder_forward.3} parent=11 // pred_check
        %p168 = pneg %p33
      $region14: #{decoder_forward.3} parent=11 // pred_check_branch
        %170 = sbr.rel (%p168) target = $region16
      $region15: #{decoder_forward.3} parent=11 // pred_region
        _
      $region16: #{decoder_forward.3} parent=11 // pred_fallthru
        _
      // Predicated region
      $region17: #{decoder_forward.3} parent=11 // pred_check
        %p171 = pneg %p80
      $region18: #{decoder_forward.3} parent=11 // pred_check_branch
        %173 = sbr.rel (%p171) target = $region20
      $region19: #{decoder_forward.3} parent=11 // pred_region
        _
      $region20: #{decoder_forward.3} parent=11 // pred_fallthru
        _
      // Predicated region
      $region21: #{decoder_forward.3} parent=11 // pred_check
        %p174 = pneg %p101
      $region22: #{decoder_forward.3} parent=11 // pred_check_branch
        %176 = sbr.rel (%p174) target = $region24
      $region23: #{decoder_forward.3} parent=11 // pred_region
        _
      $region24: #{decoder_forward.3} parent=11 // pred_fallthru
        _
    $region12: #{decoder_forward.3} parent=5 // pred_fallthru
      _
    %p177 = scmp.lt.s32.totalorder %s12, 2
    // Predicated region
    $region25: #{decoder_forward.3} parent=5 // pred_check
      %p178 = pneg %p177
    $region26: #{decoder_forward.3} parent=5 // pred_check_branch
      %180 = sbr.rel (%p178) target = $region28
    $region27: #{decoder_forward.3} parent=5 // pred_region
      // Predicated region
      $region29: #{decoder_forward.3} parent=27 // pred_check
        %p181 = pneg %p53
      $region30: #{decoder_forward.3} parent=27 // pred_check_branch
        %183 = sbr.rel (%p181) target = $region32
      $region31: #{decoder_forward.3} parent=27 // pred_region
        %s184 = smul.u32 42, %s12
        %p185 = scmp.lt.s32.totalorder %s184, 83
        %s186 = scalar_select %p185, %s184, 83
        %s187 = smul.addr %s186, 8
        %s188 = scalar_lea.vmem %s1, %s187
        %s189 = smul.u32 42, %s12
      $region32: #{decoder_forward.3} parent=27 // pred_fallthru
        _
    $region28: #{decoder_forward.3} parent=5 // pred_fallthru
      _
    %p190 = scmp.le.s32.totalorder 1, %s12
    %p191 = scmp.lt.s32.totalorder %s12, 3
    %p192 = pnand %p190, %p191
    %p193 = pneg %p192
    // Predicated region
    $region33: #{decoder_forward.3} parent=5 // pred_check
      _
    $region34: #{decoder_forward.3} parent=5 // pred_check_branch
      %195 = sbr.rel (%p192) target = $region36
    $region35: #{decoder_forward.3} parent=5 // pred_region
      %s196 = ssub.s32 %s12, 1
      %p197 = pneg %p33
      %p198 = pneg %p30
      %s199 = smul.u32 42, %s17
      %p200 = scmp.lt.s32.totalorder %s199, 83
      %s201 = scalar_select %p200, %s199, 83
      %s202 = smul.addr %s201, 8
      %s203 = scalar_lea.vmem %s1, %s202
      %p204 = pneg %p59
      %p205 = pneg %p56
      %p206 = pneg %p80
      %p207 = pneg %p77
      %p208 = pneg %p101
      %p209 = pneg %p98
      %p210 = pneg %p127
      %p211 = pneg %p124
      %s212 = smul.u32 42, %s17
      %p213 = scmp.lt.s32.totalorder %s212, 83
      %s214 = scalar_select %p213, %s212, 83
      %s215 = smul.addr %s214, 4
      %s216 = scalar_lea.vmem %s4, %s215
      %p217 = pneg %p153
      %p218 = pneg %p150
      %p219 = scmp.lt.s32.totalorder %s17, 1
      %s220 = scalar_select %p219, %s17, 1
      %s221 = smul.addr %s220, 2
      %s222 = scalar_lea.vmem %s5, %s221
      %s223 = smul.u32 42, %s17
      %p224 = scmp.lt.s32.totalorder %s223, 83
      %s225 = scalar_select %p224, %s223, 83
      %s226 = smul.addr %s225, 8
      %s227 = scalar_lea.vmem %s1, %s226
      %s228 = smul.u32 42, %s17
      %s229 = smul.u32 42, %s17
      %p230 = scmp.lt.s32.totalorder %s229, 83
      %s231 = scalar_select %p230, %s229, 83
      %s232 = smul.addr %s231, 4
      %s233 = scalar_lea.vmem %s4, %s232
      %s234 = smul.u32 42, %s17
      %p235 = scmp.lt.s32.totalorder %s17, 1
      %s236 = scalar_select %p235, %s17, 1
      %s237 = smul.addr %s236, 2
      %s238 = scalar_lea.vmem %s5, %s237
      %v240 = vld [vmem:[%s0] sm:$0xff]
      %v241 = vld [vmem:[%s0 + $0x8] sm:$0xff]
      %v242 = vld [vmem:[%s0 + $0x10] sm:$0xff]
      %v243 = vld [vmem:[%s0 + $0x18] sm:$0xff]
      %v244 = vld [vmem:[%s0 + $0x20] sm:$0xff]
      %v245 = vld [vmem:[%s0 + $0x28] sm:$0xff]
      %v246 = vld [vmem:[%s0 + $0x30] sm:$0xff]
      %v247 = vld [vmem:[%s0 + $0x38] sm:$0xff]
      %v248 = vld [vmem:[%s0 + $0x40] sm:$0xff]
      %v249 = vld [vmem:[%s0 + $0x48] sm:$0xff]
      %v250 = vld [vmem:[%s0 + $0x50] sm:$0xff]
      %v251 = vld [vmem:[%s0 + $0x58] sm:$0xff]
      %v252 = vld [vmem:[%s0 + $0x60] sm:$0xff]
      %v253 = vld [vmem:[%s0 + $0x68] sm:$0xff]
      %v254 = vld [vmem:[%s0 + $0x70] sm:$0xff]
      %v255 = vld [vmem:[%s0 + $0x78] sm:$0xff]
      %v256 = vld [vmem:[%s0 + $0x80] sm:$0xff]
      %v257 = vld [vmem:[%s0 + $0x88] sm:$0xff]
      %v258 = vld [vmem:[%s0 + $0x90] sm:$0xff]
      %v259 = vld [vmem:[%s0 + $0x98] sm:$0xff]
      %v260 = vld [vmem:[%s0 + $0xa0] sm:$0xff]
      %v261 = vld [vmem:[%s0 + $0xa8] sm:$0xff]
      %v262 = vld [vmem:[%s0 + $0xb0] sm:$0xff]
      %v263 = vld [vmem:[%s0 + $0xb8] sm:$0xff]
      %v264 = vld [vmem:[%s0 + $0xc0] sm:$0xff]
      %v265 = vld [vmem:[%s0 + $0xc8] sm:$0xff]
      %v266 = vld [vmem:[%s0 + $0xd0] sm:$0xff]
      %v267 = vld [vmem:[%s0 + $0xd8] sm:$0xff]
      %v268 = vld [vmem:[%s0 + $0xe0] sm:$0xff]
      %v269 = vld [vmem:[%s0 + $0xe8] sm:$0xff]
      %v270 = vld [vmem:[%s0 + $0xf0] sm:$0xff]
      %v271 = vld [vmem:[%s0 + $0xf8] sm:$0xff]
      %v272 = vld [vmem:[%s0 + $0x100] sm:$0xff]
      %v273 = vld [vmem:[%s0 + $0x108] sm:$0xff]
      %v274 = vld [vmem:[%s0 + $0x110] sm:$0xff]
      %v275 = vld [vmem:[%s0 + $0x118] sm:$0xff]
      %v276 = vld [vmem:[%s0 + $0x120] sm:$0xff]
      %v277 = vld [vmem:[%s0 + $0x128] sm:$0xff]
      %v278 = vld [vmem:[%s0 + $0x130] sm:$0xff]
      %v279 = vld [vmem:[%s0 + $0x138] sm:$0xff]
      %v280 = vld [vmem:[%s0 + $0x140] sm:$0xff]
      %v281 = vld [vmem:[%s0 + $0x148] sm:$0xff]
      %v282 = vld [vmem:[%s227] sm:$0xff]
      %v283 = vld [vmem:[%s227 + $0x8] sm:$0xff]
      %v284 = vld [vmem:[%s227 + $0x10] sm:$0xff]
      %v285 = vld [vmem:[%s227 + $0x18] sm:$0xff]
      %v286 = vld [vmem:[%s227 + $0x20] sm:$0xff]
      %v287 = vld [vmem:[%s227 + $0x28] sm:$0xff]
      %v288 = vld [vmem:[%s227 + $0x30] sm:$0xff]
      %v289 = vld [vmem:[%s227 + $0x38] sm:$0xff]
      %v290 = vld [vmem:[%s227 + $0x40] sm:$0xff]
      %v291 = vld [vmem:[%s227 + $0x48] sm:$0xff]
      %v292 = vld [vmem:[%s227 + $0x50] sm:$0xff]
      %v293 = vld [vmem:[%s227 + $0x58] sm:$0xff]
      %v294 = vld [vmem:[%s227 + $0x60] sm:$0xff]
      %v295 = vld [vmem:[%s227 + $0x68] sm:$0xff]
      %v296 = vld [vmem:[%s227 + $0x70] sm:$0xff]
      %v297 = vld [vmem:[%s227 + $0x78] sm:$0xff]
      %v298 = vld [vmem:[%s227 + $0x80] sm:$0xff]
      %v299 = vld [vmem:[%s227 + $0x88] sm:$0xff]
      %v300 = vld [vmem:[%s227 + $0x90] sm:$0xff]
      %v301 = vld [vmem:[%s227 + $0x98] sm:$0xff]
      %v302 = vld [vmem:[%s227 + $0xa0] sm:$0xff]
      %v303 = vld [vmem:[%s227 + $0xa8] sm:$0xff]
      %v304 = vld [vmem:[%s227 + $0xb0] sm:$0xff]
      %v305 = vld [vmem:[%s227 + $0xb8] sm:$0xff]
      %v306 = vld [vmem:[%s227 + $0xc0] sm:$0xff]
      %v307 = vld [vmem:[%s227 + $0xc8] sm:$0xff]
      %v308 = vld [vmem:[%s227 + $0xd0] sm:$0xff]
      %v309 = vld [vmem:[%s227 + $0xd8] sm:$0xff]
      %v310 = vld [vmem:[%s227 + $0xe0] sm:$0xff]
      %v311 = vld [vmem:[%s227 + $0xe8] sm:$0xff]
      %v312 = vld [vmem:[%s227 + $0xf0] sm:$0xff]
      %v313 = vld [vmem:[%s227 + $0xf8] sm:$0xff]
      %v314 = vld [vmem:[%s227 + $0x100] sm:$0xff]
      %v315 = vld [vmem:[%s227 + $0x108] sm:$0xff]
      %v316 = vld [vmem:[%s227 + $0x110] sm:$0xff]
      %v317 = vld [vmem:[%s227 + $0x118] sm:$0xff]
      %v318 = vld [vmem:[%s227 + $0x120] sm:$0xff]
      %v319 = vld [vmem:[%s227 + $0x128] sm:$0x3]
      %v320 = vpack.c.bf16 %v283, %v282
      %v321 = vpack.c.bf16 %v285, %v284
      %v322 = vpack.c.bf16 %v287, %v286
      %v323 = vpack.c.bf16 %v289, %v288
      %v324 = vpack.c.bf16 %v291, %v290
      %v325 = vpack.c.bf16 %v293, %v292
      %v326 = vpack.c.bf16 %v295, %v294
      %v327 = vpack.c.bf16 %v297, %v296
      %v328 = vpack.c.bf16 %v299, %v298
      %v329 = vpack.c.bf16 %v301, %v300
      %v330 = vpack.c.bf16 %v303, %v302
      %v331 = vpack.c.bf16 %v305, %v304
      %v332 = vpack.c.bf16 %v307, %v306
      %v333 = vpack.c.bf16 %v309, %v308
      %v334 = vpack.c.bf16 %v311, %v310
      %v335 = vpack.c.bf16 %v313, %v312
      %v336 = vpack.c.bf16 %v315, %v314
      %v337 = vpack.c.bf16 %v317, %v316
      %v338 = vpack.c.bf16 %v319, %v318
      %v339 = vld [vmem:[%s227 + $0x1] sm:$0xff]
      %v340 = vld [vmem:[%s227 + $0x9] sm:$0xff]
      %v341 = vld [vmem:[%s227 + $0x11] sm:$0xff]
      %v342 = vld [vmem:[%s227 + $0x19] sm:$0xff]
      %v343 = vld [vmem:[%s227 + $0x21] sm:$0xff]
      %v344 = vld [vmem:[%s227 + $0x29] sm:$0xff]
      %v345 = vld [vmem:[%s227 + $0x31] sm:$0xff]
      %v346 = vld [vmem:[%s227 + $0x39] sm:$0xff]
      %v347 = vld [vmem:[%s227 + $0x41] sm:$0xff]
      %v348 = vld [vmem:[%s227 + $0x49] sm:$0xff]
      %v349 = vld [vmem:[%s227 + $0x51] sm:$0xff]
      %v350 = vld [vmem:[%s227 + $0x59] sm:$0xff]
      %v351 = vld [vmem:[%s227 + $0x61] sm:$0xff]
      %v352 = vld [vmem:[%s227 + $0x69] sm:$0xff]
      %v353 = vld [vmem:[%s227 + $0x71] sm:$0xff]
      %v354 = vld [vmem:[%s227 + $0x79] sm:$0xff]
      %v355 = vld [vmem:[%s227 + $0x81] sm:$0xff]
      %v356 = vld [vmem:[%s227 + $0x89] sm:$0xff]
      %v357 = vld [vmem:[%s227 + $0x91] sm:$0xff]
      %v358 = vld [vmem:[%s227 + $0x99] sm:$0xff]
      %v359 = vld [vmem:[%s227 + $0xa1] sm:$0xff]
      %v360 = vld [vmem:[%s227 + $0xa9] sm:$0xff]
      %v361 = vld [vmem:[%s227 + $0xb1] sm:$0xff]
      %v362 = vld [vmem:[%s227 + $0xb9] sm:$0xff]
      %v363 = vld [vmem:[%s227 + $0xc1] sm:$0xff]
      %v364 = vld [vmem:[%s227 + $0xc9] sm:$0xff]
      %v365 = vld [vmem:[%s227 + $0xd1] sm:$0xff]
      %v366 = vld [vmem:[%s227 + $0xd9] sm:$0xff]
      %v367 = vld [vmem:[%s227 + $0xe1] sm:$0xff]
      %v368 = vld [vmem:[%s227 + $0xe9] sm:$0xff]
      %v369 = vld [vmem:[%s227 + $0xf1] sm:$0xff]
      %v370 = vld [vmem:[%s227 + $0xf9] sm:$0xff]
      %v371 = vld [vmem:[%s227 + $0x101] sm:$0xff]
      %v372 = vld [vmem:[%s227 + $0x109] sm:$0xff]
      %v373 = vld [vmem:[%s227 + $0x111] sm:$0xff]
      %v374 = vld [vmem:[%s227 + $0x119] sm:$0xff]
      %v375 = vld [vmem:[%s227 + $0x121] sm:$0xff]
      %v376 = vld [vmem:[%s227 + $0x129] sm:$0x3]
      %v377 = vpack.c.bf16 %v340, %v339
      %v378 = vpack.c.bf16 %v342, %v341
      %v379 = vpack.c.bf16 %v344, %v343
      %v380 = vpack.c.bf16 %v346, %v345
      %v381 = vpack.c.bf16 %v348, %v347
      %v382 = vpack.c.bf16 %v350, %v349
      %v383 = vpack.c.bf16 %v352, %v351
      %v384 = vpack.c.bf16 %v354, %v353
      %v385 = vpack.c.bf16 %v356, %v355
      %v386 = vpack.c.bf16 %v358, %v357
      %v387 = vpack.c.bf16 %v360, %v359
      %v388 = vpack.c.bf16 %v362, %v361
      %v389 = vpack.c.bf16 %v364, %v363
      %v390 = vpack.c.bf16 %v366, %v365
      %v391 = vpack.c.bf16 %v368, %v367
      %v392 = vpack.c.bf16 %v370, %v369
      %v393 = vpack.c.bf16 %v372, %v371
      %v394 = vpack.c.bf16 %v374, %v373
      %v395 = vpack.c.bf16 %v376, %v375
      %v396 = vld [vmem:[%s227 + $0x2] sm:$0xff]
      %v397 = vld [vmem:[%s227 + $0xa] sm:$0xff]
      %v398 = vld [vmem:[%s227 + $0x12] sm:$0xff]
      %v399 = vld [vmem:[%s227 + $0x1a] sm:$0xff]
      %v400 = vld [vmem:[%s227 + $0x22] sm:$0xff]
      %v401 = vld [vmem:[%s227 + $0x2a] sm:$0xff]
      %v402 = vld [vmem:[%s227 + $0x32] sm:$0xff]
      %v403 = vld [vmem:[%s227 + $0x3a] sm:$0xff]
      %v404 = vld [vmem:[%s227 + $0x42] sm:$0xff]
      %v405 = vld [vmem:[%s227 + $0x4a] sm:$0xff]
      %v406 = vld [vmem:[%s227 + $0x52] sm:$0xff]
      %v407 = vld [vmem:[%s227 + $0x5a] sm:$0xff]
      %v408 = vld [vmem:[%s227 + $0x62] sm:$0xff]
      %v409 = vld [vmem:[%s227 + $0x6a] sm:$0xff]
      %v410 = vld [vmem:[%s227 + $0x72] sm:$0xff]
      %v411 = vld [vmem:[%s227 + $0x7a] sm:$0xff]
      %v412 = vld [vmem:[%s227 + $0x82] sm:$0xff]
      %v413 = vld [vmem:[%s227 + $0x8a] sm:$0xff]
      %v414 = vld [vmem:[%s227 + $0x92] sm:$0xff]
      %v415 = vld [vmem:[%s227 + $0x9a] sm:$0xff]
      %v416 = vld [vmem:[%s227 + $0xa2] sm:$0xff]
      %v417 = vld [vmem:[%s227 + $0xaa] sm:$0xff]
      %v418 = vld [vmem:[%s227 + $0xb2] sm:$0xff]
      %v419 = vld [vmem:[%s227 + $0xba] sm:$0xff]
      %v420 = vld [vmem:[%s227 + $0xc2] sm:$0xff]
      %v421 = vld [vmem:[%s227 + $0xca] sm:$0xff]
      %v422 = vld [vmem:[%s227 + $0xd2] sm:$0xff]
      %v423 = vld [vmem:[%s227 + $0xda] sm:$0xff]
      %v424 = vld [vmem:[%s227 + $0xe2] sm:$0xff]
      %v425 = vld [vmem:[%s227 + $0xea] sm:$0xff]
      %v426 = vld [vmem:[%s227 + $0xf2] sm:$0xff]
      %v427 = vld [vmem:[%s227 + $0xfa] sm:$0xff]
      %v428 = vld [vmem:[%s227 + $0x102] sm:$0xff]
      %v429 = vld [vmem:[%s227 + $0x10a] sm:$0xff]
      %v430 = vld [vmem:[%s227 + $0x112] sm:$0xff]
      %v431 = vld [vmem:[%s227 + $0x11a] sm:$0xff]
      %v432 = vld [vmem:[%s227 + $0x122] sm:$0xff]
      %v433 = vld [vmem:[%s227 + $0x12a] sm:$0x3]
      %v434 = vpack.c.bf16 %v397, %v396
      %v435 = vpack.c.bf16 %v399, %v398
      %v436 = vpack.c.bf16 %v401, %v400
      %v437 = vpack.c.bf16 %v403, %v402
      %v438 = vpack.c.bf16 %v405, %v404
      %v439 = vpack.c.bf16 %v407, %v406
      %v440 = vpack.c.bf16 %v409, %v408
      %v441 = vpack.c.bf16 %v411, %v410
      %v442 = vpack.c.bf16 %v413, %v412
      %v443 = vpack.c.bf16 %v415, %v414
      %v444 = vpack.c.bf16 %v417, %v416
      %v445 = vpack.c.bf16 %v419, %v418
      %v446 = vpack.c.bf16 %v421, %v420
      %v447 = vpack.c.bf16 %v423, %v422
      %v448 = vpack.c.bf16 %v425, %v424
      %v449 = vpack.c.bf16 %v427, %v426
      %v450 = vpack.c.bf16 %v429, %v428
      %v451 = vpack.c.bf16 %v431, %v430
      %v452 = vpack.c.bf16 %v433, %v432
      %v453 = vld [vmem:[%s227 + $0x12a] sm:$0xff]
      %v454 = vld [vmem:[%s227 + $0x132] sm:$0xff]
      %v455 = vld [vmem:[%s227 + $0x13a] sm:$0x3]
      %v456 = vpack.c.bf16 %v453, %v432
      %v457 = vpack.c.bf16 %v455, %v454
      %v458 = vld [vmem:[%s227 + $0x13] sm:$0xff]
      %v459 = vld [vmem:[%s227 + $0x1b] sm:$0xff]
      %v460 = vld [vmem:[%s227 + $0x23] sm:$0xff]
      %v461 = vld [vmem:[%s227 + $0x2b] sm:$0xff]
      %v462 = vld [vmem:[%s227 + $0x33] sm:$0xff]
      %v463 = vld [vmem:[%s227 + $0x3b] sm:$0xff]
      %v464 = vld [vmem:[%s227 + $0x43] sm:$0xff]
      %v465 = vld [vmem:[%s227 + $0x4b] sm:$0xff]
      %v466 = vld [vmem:[%s227 + $0x53] sm:$0xff]
      %v467 = vld [vmem:[%s227 + $0x5b] sm:$0xff]
      %v468 = vld [vmem:[%s227 + $0x63] sm:$0xff]
      %v469 = vld [vmem:[%s227 + $0x6b] sm:$0xff]
      %v470 = vld [vmem:[%s227 + $0x73] sm:$0xff]
      %v471 = vld [vmem:[%s227 + $0x7b] sm:$0xff]
      %v472 = vld [vmem:[%s227 + $0x83] sm:$0xff]
      %v473 = vld [vmem:[%s227 + $0x8b] sm:$0xff]
      %v474 = vld [vmem:[%s227 + $0x93] sm:$0xff]
      %v475 = vld [vmem:[%s227 + $0x9b] sm:$0xff]
      %v476 = vld [vmem:[%s227 + $0xa3] sm:$0xff]
      %v477 = vld [vmem:[%s227 + $0xab] sm:$0xff]
      %v478 = vld [vmem:[%s227 + $0xb3] sm:$0xff]
      %v479 = vld [vmem:[%s227 + $0xbb] sm:$0xff]
      %v480 = vld [vmem:[%s227 + $0xc3] sm:$0xff]
      %v481 = vld [vmem:[%s227 + $0xcb] sm:$0xff]
      %v482 = vld [vmem:[%s227 + $0xd3] sm:$0xff]
      %v483 = vld [vmem:[%s227 + $0xdb] sm:$0xff]
      %v484 = vld [vmem:[%s227 + $0xe3] sm:$0xff]
      %v485 = vld [vmem:[%s227 + $0xeb] sm:$0xff]
      %v486 = vld [vmem:[%s227 + $0xf3] sm:$0xff]
      %v487 = vld [vmem:[%s227 + $0xfb] sm:$0xff]
      %v488 = vld [vmem:[%s227 + $0x103] sm:$0xff]
      %v489 = vld [vmem:[%s227 + $0x10b] sm:$0xff]
      %v490 = vld [vmem:[%s227 + $0x113] sm:$0xff]
      %v491 = vld [vmem:[%s227 + $0x11b] sm:$0xff]
      %v492 = vld [vmem:[%s227 + $0x123] sm:$0xff]
      %v493 = vld [vmem:[%s227 + $0x12b] sm:$0xff]
      %v494 = vld [vmem:[%s227 + $0x133] sm:$0xff]
      %v495 = vld [vmem:[%s227 + $0x13b] sm:$0x3]
      %v496 = vpack.c.bf16 %v459, %v458
      %v497 = vpack.c.bf16 %v461, %v460
      %v498 = vpack.c.bf16 %v463, %v462
      %v499 = vpack.c.bf16 %v465, %v464
      %v500 = vpack.c.bf16 %v467, %v466
      %v501 = vpack.c.bf16 %v469, %v468
      %v502 = vpack.c.bf16 %v471, %v470
      %v503 = vpack.c.bf16 %v473, %v472
      %v504 = vpack.c.bf16 %v475, %v474
      %v505 = vpack.c.bf16 %v477, %v476
      %v506 = vpack.c.bf16 %v479, %v478
      %v507 = vpack.c.bf16 %v481, %v480
      %v508 = vpack.c.bf16 %v483, %v482
      %v509 = vpack.c.bf16 %v485, %v484
      %v510 = vpack.c.bf16 %v487, %v486
      %v511 = vpack.c.bf16 %v489, %v488
      %v512 = vpack.c.bf16 %v491, %v490
      %v513 = vpack.c.bf16 %v493, %v492
      %v514 = vpack.c.bf16 %v495, %v494
      %v515 = vld [vmem:[%s227 + $0x14] sm:$0xff]
      %v516 = vld [vmem:[%s227 + $0x1c] sm:$0xff]
      %v517 = vld [vmem:[%s227 + $0x24] sm:$0xff]
      %v518 = vld [vmem:[%s227 + $0x2c] sm:$0xff]
      %v519 = vld [vmem:[%s227 + $0x34] sm:$0xff]
      %v520 = vld [vmem:[%s227 + $0x3c] sm:$0xff]
      %v521 = vld [vmem:[%s227 + $0x44] sm:$0xff]
      %v522 = vld [vmem:[%s227 + $0x4c] sm:$0xff]
      %v523 = vld [vmem:[%s227 + $0x54] sm:$0xff]
      %v524 = vld [vmem:[%s227 + $0x5c] sm:$0xff]
      %v525 = vld [vmem:[%s227 + $0x64] sm:$0xff]
      %v526 = vld [vmem:[%s227 + $0x6c] sm:$0xff]
      %v527 = vld [vmem:[%s227 + $0x74] sm:$0xff]
      %v528 = vld [vmem:[%s227 + $0x7c] sm:$0xff]
      %v529 = vld [vmem:[%s227 + $0x84] sm:$0xff]
      %v530 = vld [vmem:[%s227 + $0x8c] sm:$0xff]
      %v531 = vld [vmem:[%s227 + $0x94] sm:$0xff]
      %v532 = vld [vmem:[%s227 + $0x9c] sm:$0xff]
      %v533 = vld [vmem:[%s227 + $0xa4] sm:$0xff]
      %v534 = vld [vmem:[%s227 + $0xac] sm:$0xff]
      %v535 = vld [vmem:[%s227 + $0xb4] sm:$0xff]
      %v536 = vld [vmem:[%s227 + $0xbc] sm:$0xff]
      %v537 = vld [vmem:[%s227 + $0xc4] sm:$0xff]
      %v538 = vld [vmem:[%s227 + $0xcc] sm:$0xff]
      %v539 = vld [vmem:[%s227 + $0xd4] sm:$0xff]
      %v540 = vld [vmem:[%s227 + $0xdc] sm:$0xff]
      %v541 = vld [vmem:[%s227 + $0xe4] sm:$0xff]
      %v542 = vld [vmem:[%s227 + $0xec] sm:$0xff]
      %v543 = vld [vmem:[%s227 + $0xf4] sm:$0xff]
      %v544 = vld [vmem:[%s227 + $0xfc] sm:$0xff]
      %v545 = vld [vmem:[%s227 + $0x104] sm:$0xff]
      %v546 = vld [vmem:[%s227 + $0x10c] sm:$0xff]
      %v547 = vld [vmem:[%s227 + $0x114] sm:$0xff]
      %v548 = vld [vmem:[%s227 + $0x11c] sm:$0xff]
      %v549 = vld [vmem:[%s227 + $0x124] sm:$0xff]
      %v550 = vld [vmem:[%s227 + $0x12c] sm:$0xff]
      %v551 = vld [vmem:[%s227 + $0x134] sm:$0xff]
      %v552 = vld [vmem:[%s227 + $0x13c] sm:$0x3]
      %v553 = vpack.c.bf16 %v516, %v515
      %v554 = vpack.c.bf16 %v518, %v517
      %v555 = vpack.c.bf16 %v520, %v519
      %v556 = vpack.c.bf16 %v522, %v521
      %v557 = vpack.c.bf16 %v524, %v523
      %v558 = vpack.c.bf16 %v526, %v525
      %v559 = vpack.c.bf16 %v528, %v527
      %v560 = vpack.c.bf16 %v530, %v529
      %v561 = vpack.c.bf16 %v532, %v531
      %v562 = vpack.c.bf16 %v534, %v533
      %v563 = vpack.c.bf16 %v536, %v535
      %v564 = vpack.c.bf16 %v538, %v537
      %v565 = vpack.c.bf16 %v540, %v539
      %v566 = vpack.c.bf16 %v542, %v541
      %v567 = vpack.c.bf16 %v544, %v543
      %v568 = vpack.c.bf16 %v546, %v545
      %v569 = vpack.c.bf16 %v548, %v547
      %v570 = vpack.c.bf16 %v550, %v549
      %v571 = vpack.c.bf16 %v552, %v551
      %v572 = vld [vmem:[%s227 + $0x13c] sm:$0xff]
      %v573 = vld [vmem:[%s227 + $0x144] sm:$0xff]
      %v574 = vld [vmem:[%s227 + $0x14c] sm:$0x3]
      %v575 = vpack.c.bf16 %v572, %v551
      %v576 = vpack.c.bf16 %v574, %v573
      %v577 = vld [vmem:[%s227 + $0x25] sm:$0xff]
      %v578 = vld [vmem:[%s227 + $0x2d] sm:$0xff]
      %v579 = vld [vmem:[%s227 + $0x35] sm:$0xff]
      %v580 = vld [vmem:[%s227 + $0x3d] sm:$0xff]
      %v581 = vld [vmem:[%s227 + $0x45] sm:$0xff]
      %v582 = vld [vmem:[%s227 + $0x4d] sm:$0xff]
      %v583 = vld [vmem:[%s227 + $0x55] sm:$0xff]
      %v584 = vld [vmem:[%s227 + $0x5d] sm:$0xff]
      %v585 = vld [vmem:[%s227 + $0x65] sm:$0xff]
      %v586 = vld [vmem:[%s227 + $0x6d] sm:$0xff]
      %v587 = vld [vmem:[%s227 + $0x75] sm:$0xff]
      %v588 = vld [vmem:[%s227 + $0x7d] sm:$0xff]
      %v589 = vld [vmem:[%s227 + $0x85] sm:$0xff]
      %v590 = vld [vmem:[%s227 + $0x8d] sm:$0xff]
      %v591 = vld [vmem:[%s227 + $0x95] sm:$0xff]
      %v592 = vld [vmem:[%s227 + $0x9d] sm:$0xff]
      %v593 = vld [vmem:[%s227 + $0xa5] sm:$0xff]
      %v594 = vld [vmem:[%s227 + $0xad] sm:$0xff]
      %v595 = vld [vmem:[%s227 + $0xb5] sm:$0xff]
      %v596 = vld [vmem:[%s227 + $0xbd] sm:$0xff]
      %v597 = vld [vmem:[%s227 + $0xc5] sm:$0xff]
      %v598 = vld [vmem:[%s227 + $0xcd] sm:$0xff]
      %v599 = vld [vmem:[%s227 + $0xd5] sm:$0xff]
      %v600 = vld [vmem:[%s227 + $0xdd] sm:$0xff]
      %v601 = vld [vmem:[%s227 + $0xe5] sm:$0xff]
      %v602 = vld [vmem:[%s227 + $0xed] sm:$0xff]
      %v603 = vld [vmem:[%s227 + $0xf5] sm:$0xff]
      %v604 = vld [vmem:[%s227 + $0xfd] sm:$0xff]
      %v605 = vld [vmem:[%s227 + $0x105] sm:$0xff]
      %v606 = vld [vmem:[%s227 + $0x10d] sm:$0xff]
      %v607 = vld [vmem:[%s227 + $0x115] sm:$0xff]
      %v608 = vld [vmem:[%s227 + $0x11d] sm:$0xff]
      %v609 = vld [vmem:[%s227 + $0x125] sm:$0xff]
      %v610 = vld [vmem:[%s227 + $0x12d] sm:$0xff]
      %v611 = vld [vmem:[%s227 + $0x135] sm:$0xff]
      %v612 = vld [vmem:[%s227 + $0x13d] sm:$0xff]
      %v613 = vld [vmem:[%s227 + $0x145] sm:$0xff]
      %v614 = vld [vmem:[%s227 + $0x14d] sm:$0x3]
      %v615 = vpack.c.bf16 %v578, %v577
      %v616 = vpack.c.bf16 %v580, %v579
      %v617 = vpack.c.bf16 %v582, %v581
      %v618 = vpack.c.bf16 %v584, %v583
      %v619 = vpack.c.bf16 %v586, %v585
      %v620 = vpack.c.bf16 %v588, %v587
      %v621 = vpack.c.bf16 %v590, %v589
      %v622 = vpack.c.bf16 %v592, %v591
      %v623 = vpack.c.bf16 %v594, %v593
      %v624 = vpack.c.bf16 %v596, %v595
      %v625 = vpack.c.bf16 %v598, %v597
      %v626 = vpack.c.bf16 %v600, %v599
      %v627 = vpack.c.bf16 %v602, %v601
      %v628 = vpack.c.bf16 %v604, %v603
      %v629 = vpack.c.bf16 %v606, %v605
      %v630 = vpack.c.bf16 %v608, %v607
      %v631 = vpack.c.bf16 %v610, %v609
      %v632 = vpack.c.bf16 %v612, %v611
      %v633 = vpack.c.bf16 %v614, %v613
      %v634 = vld [vmem:[%s227 + $0x26] sm:$0xff]
      %v635 = vld [vmem:[%s227 + $0x2e] sm:$0xff]
      %v636 = vld [vmem:[%s227 + $0x36] sm:$0xff]
      %v637 = vld [vmem:[%s227 + $0x3e] sm:$0xff]
      %v638 = vld [vmem:[%s227 + $0x46] sm:$0xff]
      %v639 = vld [vmem:[%s227 + $0x4e] sm:$0xff]
      %v640 = vld [vmem:[%s227 + $0x56] sm:$0xff]
      %v641 = vld [vmem:[%s227 + $0x5e] sm:$0xff]
      %v642 = vld [vmem:[%s227 + $0x66] sm:$0xff]
      %v643 = vld [vmem:[%s227 + $0x6e] sm:$0xff]
      %v644 = vld [vmem:[%s227 + $0x76] sm:$0xff]
      %v645 = vld [vmem:[%s227 + $0x7e] sm:$0xff]
      %v646 = vld [vmem:[%s227 + $0x86] sm:$0xff]
      %v647 = vld [vmem:[%s227 + $0x8e] sm:$0xff]
      %v648 = vld [vmem:[%s227 + $0x96] sm:$0xff]
      %v649 = vld [vmem:[%s227 + $0x9e] sm:$0xff]
      %v650 = vld [vmem:[%s227 + $0xa6] sm:$0xff]
      %v651 = vld [vmem:[%s227 + $0xae] sm:$0xff]
      %v652 = vld [vmem:[%s227 + $0xb6] sm:$0xff]
      %v653 = vld [vmem:[%s227 + $0xbe] sm:$0xff]
      %v654 = vld [vmem:[%s227 + $0xc6] sm:$0xff]
      %v655 = vld [vmem:[%s227 + $0xce] sm:$0xff]
      %v656 = vld [vmem:[%s227 + $0xd6] sm:$0xff]
      %v657 = vld [vmem:[%s227 + $0xde] sm:$0xff]
      %v658 = vld [vmem:[%s227 + $0xe6] sm:$0xff]
      %v659 = vld [vmem:[%s227 + $0xee] sm:$0xff]
      %v660 = vld [vmem:[%s227 + $0xf6] sm:$0xff]
      %v661 = vld [vmem:[%s227 + $0xfe] sm:$0xff]
      %v662 = vld [vmem:[%s227 + $0x106] sm:$0xff]
      %v663 = vld [vmem:[%s227 + $0x10e] sm:$0xff]
      %v664 = vld [vmem:[%s227 + $0x116] sm:$0xff]
      %v665 = vld [vmem:[%s227 + $0x11e] sm:$0xff]
      %v666 = vld [vmem:[%s227 + $0x126] sm:$0xff]
      %v667 = vld [vmem:[%s227 + $0x12e] sm:$0xff]
      %v668 = vld [vmem:[%s227 + $0x136] sm:$0xff]
      %v669 = vld [vmem:[%s227 + $0x13e] sm:$0xff]
      %v670 = vld [vmem:[%s227 + $0x146] sm:$0xff]
      %v671 = vld [vmem:[%s227 + $0x14e] sm:$0x3]
      %v672 = vpack.c.bf16 %v635, %v634
      %v673 = vpack.c.bf16 %v637, %v636
      %v674 = vpack.c.bf16 %v639, %v638
      %v675 = vpack.c.bf16 %v641, %v640
      %v676 = vpack.c.bf16 %v643, %v642
      %v677 = vpack.c.bf16 %v645, %v644
      %v678 = vpack.c.bf16 %v647, %v646
      %v679 = vpack.c.bf16 %v649, %v648
      %v680 = vpack.c.bf16 %v651, %v650
      %v681 = vpack.c.bf16 %v653, %v652
      %v682 = vpack.c.bf16 %v655, %v654
      %v683 = vpack.c.bf16 %v657, %v656
      %v684 = vpack.c.bf16 %v659, %v658
      %v685 = vpack.c.bf16 %v661, %v660
      %v686 = vpack.c.bf16 %v663, %v662
      %v687 = vpack.c.bf16 %v665, %v664
      %v688 = vpack.c.bf16 %v667, %v666
      %v689 = vpack.c.bf16 %v669, %v668
      %v690 = vpack.c.bf16 %v671, %v670
      %710 = vrot.lane.b32.xlu0 %v377, 4
      %v711 = vpop.permute.xlu0 %710
      %712 = vrot.lane.b32.xlu0 %v378, 4
      %v713 = vpop.permute.xlu0 %712
      %714 = vrot.lane.b32.xlu0 %v379, 4
      %v715 = vpop.permute.xlu0 %714
      %716 = vrot.lane.b32.xlu0 %v380, 4
      %v717 = vpop.permute.xlu0 %716
      %718 = vrot.lane.b32.xlu0 %v381, 4
      %v719 = vpop.permute.xlu0 %718
      %720 = vrot.lane.b32.xlu0 %v382, 4
      %v721 = vpop.permute.xlu0 %720
      %722 = vrot.lane.b32.xlu0 %v383, 4
      %v723 = vpop.permute.xlu0 %722
      %724 = vrot.lane.b32.xlu0 %v384, 4
      %v725 = vpop.permute.xlu0 %724
      %726 = vrot.lane.b32.xlu0 %v385, 4
      %v727 = vpop.permute.xlu0 %726
      %728 = vrot.lane.b32.xlu0 %v386, 4
      %v729 = vpop.permute.xlu0 %728
      %730 = vrot.lane.b32.xlu0 %v387, 4
      %v731 = vpop.permute.xlu0 %730
      %732 = vrot.lane.b32.xlu0 %v388, 4
      %v733 = vpop.permute.xlu0 %732
      %734 = vrot.lane.b32.xlu0 %v389, 4
      %v735 = vpop.permute.xlu0 %734
      %736 = vrot.lane.b32.xlu0 %v390, 4
      %v737 = vpop.permute.xlu0 %736
      %738 = vrot.lane.b32.xlu0 %v391, 4
      %v739 = vpop.permute.xlu0 %738
      %740 = vrot.lane.b32.xlu0 %v392, 4
      %v741 = vpop.permute.xlu0 %740
      %742 = vrot.lane.b32.xlu0 %v393, 4
      %v743 = vpop.permute.xlu0 %742
      %744 = vrot.lane.b32.xlu0 %v394, 4
      %v745 = vpop.permute.xlu0 %744
      %746 = vrot.lane.b32.xlu0 %v395, 4
      %v747 = vpop.permute.xlu0 %746
      %767 = vrot.lane.b32.xlu0 %v434, 8
      %v768 = vpop.permute.xlu0 %767
      %769 = vrot.lane.b32.xlu0 %v435, 8
      %v770 = vpop.permute.xlu0 %769
      %771 = vrot.lane.b32.xlu0 %v436, 8
      %v772 = vpop.permute.xlu0 %771
      %773 = vrot.lane.b32.xlu0 %v437, 8
      %v774 = vpop.permute.xlu0 %773
      %775 = vrot.lane.b32.xlu0 %v438, 8
      %v776 = vpop.permute.xlu0 %775
      %777 = vrot.lane.b32.xlu0 %v439, 8
      %v778 = vpop.permute.xlu0 %777
      %779 = vrot.lane.b32.xlu0 %v440, 8
      %v780 = vpop.permute.xlu0 %779
      %781 = vrot.lane.b32.xlu0 %v441, 8
      %v782 = vpop.permute.xlu0 %781
      %783 = vrot.lane.b32.xlu0 %v442, 8
      %v784 = vpop.permute.xlu0 %783
      %785 = vrot.lane.b32.xlu0 %v443, 8
      %v786 = vpop.permute.xlu0 %785
      %787 = vrot.lane.b32.xlu0 %v444, 8
      %v788 = vpop.permute.xlu0 %787
      %789 = vrot.lane.b32.xlu0 %v445, 8
      %v790 = vpop.permute.xlu0 %789
      %791 = vrot.lane.b32.xlu0 %v446, 8
      %v792 = vpop.permute.xlu0 %791
      %793 = vrot.lane.b32.xlu0 %v447, 8
      %v794 = vpop.permute.xlu0 %793
      %795 = vrot.lane.b32.xlu0 %v448, 8
      %v796 = vpop.permute.xlu0 %795
      %797 = vrot.lane.b32.xlu0 %v449, 8
      %v798 = vpop.permute.xlu0 %797
      %799 = vrot.lane.b32.xlu0 %v450, 8
      %v800 = vpop.permute.xlu0 %799
      %801 = vrot.lane.b32.xlu0 %v451, 8
      %v802 = vpop.permute.xlu0 %801
      %803 = vrot.lane.b32.xlu0 %v452, 8
      %v804 = vpop.permute.xlu0 %803
      %807 = vrot.lane.b32.xlu0 %v435, 12
      %v808 = vpop.permute.xlu0 %807
      %809 = vrot.lane.b32.xlu0 %v436, 12
      %v810 = vpop.permute.xlu0 %809
      %811 = vrot.lane.b32.xlu0 %v437, 12
      %v812 = vpop.permute.xlu0 %811
      %813 = vrot.lane.b32.xlu0 %v438, 12
      %v814 = vpop.permute.xlu0 %813
      %815 = vrot.lane.b32.xlu0 %v439, 12
      %v816 = vpop.permute.xlu0 %815
      %817 = vrot.lane.b32.xlu0 %v440, 12
      %v818 = vpop.permute.xlu0 %817
      %819 = vrot.lane.b32.xlu0 %v441, 12
      %v820 = vpop.permute.xlu0 %819
      %821 = vrot.lane.b32.xlu0 %v442, 12
      %v822 = vpop.permute.xlu0 %821
      %823 = vrot.lane.b32.xlu0 %v443, 12
      %v824 = vpop.permute.xlu0 %823
      %825 = vrot.lane.b32.xlu0 %v444, 12
      %v826 = vpop.permute.xlu0 %825
      %827 = vrot.lane.b32.xlu0 %v445, 12
      %v828 = vpop.permute.xlu0 %827
      %829 = vrot.lane.b32.xlu0 %v446, 12
      %v830 = vpop.permute.xlu0 %829
      %831 = vrot.lane.b32.xlu0 %v447, 12
      %v832 = vpop.permute.xlu0 %831
      %833 = vrot.lane.b32.xlu0 %v448, 12
      %v834 = vpop.permute.xlu0 %833
      %835 = vrot.lane.b32.xlu0 %v449, 12
      %v836 = vpop.permute.xlu0 %835
      %837 = vrot.lane.b32.xlu0 %v450, 12
      %v838 = vpop.permute.xlu0 %837
      %839 = vrot.lane.b32.xlu0 %v451, 12
      %v840 = vpop.permute.xlu0 %839
      %841 = vrot.lane.b32.xlu0 %v456, 12
      %v842 = vpop.permute.xlu0 %841
      %843 = vrot.lane.b32.xlu0 %v457, 12
      %v844 = vpop.permute.xlu0 %843
      %864 = vrot.lane.b32.xlu0 %v496, 16
      %v865 = vpop.permute.xlu0 %864
      %866 = vrot.lane.b32.xlu0 %v497, 16
      %v867 = vpop.permute.xlu0 %866
      %868 = vrot.lane.b32.xlu0 %v498, 16
      %v869 = vpop.permute.xlu0 %868
      %870 = vrot.lane.b32.xlu0 %v499, 16
      %v871 = vpop.permute.xlu0 %870
      %872 = vrot.lane.b32.xlu0 %v500, 16
      %v873 = vpop.permute.xlu0 %872
      %874 = vrot.lane.b32.xlu0 %v501, 16
      %v875 = vpop.permute.xlu0 %874
      %876 = vrot.lane.b32.xlu0 %v502, 16
      %v877 = vpop.permute.xlu0 %876
      %878 = vrot.lane.b32.xlu0 %v503, 16
      %v879 = vpop.permute.xlu0 %878
      %880 = vrot.lane.b32.xlu0 %v504, 16
      %v881 = vpop.permute.xlu0 %880
      %882 = vrot.lane.b32.xlu0 %v505, 16
      %v883 = vpop.permute.xlu0 %882
      %884 = vrot.lane.b32.xlu0 %v506, 16
      %v885 = vpop.permute.xlu0 %884
      %886 = vrot.lane.b32.xlu0 %v507, 16
      %v887 = vpop.permute.xlu0 %886
      %888 = vrot.lane.b32.xlu0 %v508, 16
      %v889 = vpop.permute.xlu0 %888
      %890 = vrot.lane.b32.xlu0 %v509, 16
      %v891 = vpop.permute.xlu0 %890
      %892 = vrot.lane.b32.xlu0 %v510, 16
      %v893 = vpop.permute.xlu0 %892
      %894 = vrot.lane.b32.xlu0 %v511, 16
      %v895 = vpop.permute.xlu0 %894
      %896 = vrot.lane.b32.xlu0 %v512, 16
      %v897 = vpop.permute.xlu0 %896
      %898 = vrot.lane.b32.xlu0 %v513, 16
      %v899 = vpop.permute.xlu0 %898
      %900 = vrot.lane.b32.xlu0 %v514, 16
      %v901 = vpop.permute.xlu0 %900
      %921 = vrot.lane.b32.xlu0 %v553, 20
      %v922 = vpop.permute.xlu0 %921
      %923 = vrot.lane.b32.xlu0 %v554, 20
      %v924 = vpop.permute.xlu0 %923
      %925 = vrot.lane.b32.xlu0 %v555, 20
      %v926 = vpop.permute.xlu0 %925
      %927 = vrot.lane.b32.xlu0 %v556, 20
      %v928 = vpop.permute.xlu0 %927
      %929 = vrot.lane.b32.xlu0 %v557, 20
      %v930 = vpop.permute.xlu0 %929
      %931 = vrot.lane.b32.xlu0 %v558, 20
      %v932 = vpop.permute.xlu0 %931
      %933 = vrot.lane.b32.xlu0 %v559, 20
      %v934 = vpop.permute.xlu0 %933
      %935 = vrot.lane.b32.xlu0 %v560, 20
      %v936 = vpop.permute.xlu0 %935
      %937 = vrot.lane.b32.xlu0 %v561, 20
      %v938 = vpop.permute.xlu0 %937
      %939 = vrot.lane.b32.xlu0 %v562, 20
      %v940 = vpop.permute.xlu0 %939
      %941 = vrot.lane.b32.xlu0 %v563, 20
      %v942 = vpop.permute.xlu0 %941
      %943 = vrot.lane.b32.xlu0 %v564, 20
      %v944 = vpop.permute.xlu0 %943
      %945 = vrot.lane.b32.xlu0 %v565, 20
      %v946 = vpop.permute.xlu0 %945
      %947 = vrot.lane.b32.xlu0 %v566, 20
      %v948 = vpop.permute.xlu0 %947
      %949 = vrot.lane.b32.xlu0 %v567, 20
      %v950 = vpop.permute.xlu0 %949
      %951 = vrot.lane.b32.xlu0 %v568, 20
      %v952 = vpop.permute.xlu0 %951
      %953 = vrot.lane.b32.xlu0 %v569, 20
      %v954 = vpop.permute.xlu0 %953
      %955 = vrot.lane.b32.xlu0 %v570, 20
      %v956 = vpop.permute.xlu0 %955
      %957 = vrot.lane.b32.xlu0 %v571, 20
      %v958 = vpop.permute.xlu0 %957
      %961 = vrot.lane.b32.xlu0 %v554, 24
      %v962 = vpop.permute.xlu0 %961
      %963 = vrot.lane.b32.xlu0 %v555, 24
      %v964 = vpop.permute.xlu0 %963
      %965 = vrot.lane.b32.xlu0 %v556, 24
      %v966 = vpop.permute.xlu0 %965
      %967 = vrot.lane.b32.xlu0 %v557, 24
      %v968 = vpop.permute.xlu0 %967
      %969 = vrot.lane.b32.xlu0 %v558, 24
      %v970 = vpop.permute.xlu0 %969
      %971 = vrot.lane.b32.xlu0 %v559, 24
      %v972 = vpop.permute.xlu0 %971
      %973 = vrot.lane.b32.xlu0 %v560, 24
      %v974 = vpop.permute.xlu0 %973
      %975 = vrot.lane.b32.xlu0 %v561, 24
      %v976 = vpop.permute.xlu0 %975
      %977 = vrot.lane.b32.xlu0 %v562, 24
      %v978 = vpop.permute.xlu0 %977
      %979 = vrot.lane.b32.xlu0 %v563, 24
      %v980 = vpop.permute.xlu0 %979
      %981 = vrot.lane.b32.xlu0 %v564, 24
      %v982 = vpop.permute.xlu0 %981
      %983 = vrot.lane.b32.xlu0 %v565, 24
      %v984 = vpop.permute.xlu0 %983
      %985 = vrot.lane.b32.xlu0 %v566, 24
      %v986 = vpop.permute.xlu0 %985
      %987 = vrot.lane.b32.xlu0 %v567, 24
      %v988 = vpop.permute.xlu0 %987
      %989 = vrot.lane.b32.xlu0 %v568, 24
      %v990 = vpop.permute.xlu0 %989
      %991 = vrot.lane.b32.xlu0 %v569, 24
      %v992 = vpop.permute.xlu0 %991
      %993 = vrot.lane.b32.xlu0 %v570, 24
      %v994 = vpop.permute.xlu0 %993
      %995 = vrot.lane.b32.xlu0 %v575, 24
      %v996 = vpop.permute.xlu0 %995
      %997 = vrot.lane.b32.xlu0 %v576, 24
      %v998 = vpop.permute.xlu0 %997
      %1018 = vrot.lane.b32.xlu0 %v615, 28
      %v1019 = vpop.permute.xlu0 %1018
      %1020 = vrot.lane.b32.xlu0 %v616, 28
      %v1021 = vpop.permute.xlu0 %1020
      %1022 = vrot.lane.b32.xlu0 %v617, 28
      %v1023 = vpop.permute.xlu0 %1022
      %1024 = vrot.lane.b32.xlu0 %v618, 28
      %v1025 = vpop.permute.xlu0 %1024
      %1026 = vrot.lane.b32.xlu0 %v619, 28
      %v1027 = vpop.permute.xlu0 %1026
      %1028 = vrot.lane.b32.xlu0 %v620, 28
      %v1029 = vpop.permute.xlu0 %1028
      %1030 = vrot.lane.b32.xlu0 %v621, 28
      %v1031 = vpop.permute.xlu0 %1030
      %1032 = vrot.lane.b32.xlu0 %v622, 28
      %v1033 = vpop.permute.xlu0 %1032
      %1034 = vrot.lane.b32.xlu0 %v623, 28
      %v1035 = vpop.permute.xlu0 %1034
      %1036 = vrot.lane.b32.xlu0 %v624, 28
      %v1037 = vpop.permute.xlu0 %1036
      %1038 = vrot.lane.b32.xlu0 %v625, 28
      %v1039 = vpop.permute.xlu0 %1038
      %1040 = vrot.lane.b32.xlu0 %v626, 28
      %v1041 = vpop.permute.xlu0 %1040
      %1042 = vrot.lane.b32.xlu0 %v627, 28
      %v1043 = vpop.permute.xlu0 %1042
      %1044 = vrot.lane.b32.xlu0 %v628, 28
      %v1045 = vpop.permute.xlu0 %1044
      %1046 = vrot.lane.b32.xlu0 %v629, 28
      %v1047 = vpop.permute.xlu0 %1046
      %1048 = vrot.lane.b32.xlu0 %v630, 28
      %v1049 = vpop.permute.xlu0 %1048
      %1050 = vrot.lane.b32.xlu0 %v631, 28
      %v1051 = vpop.permute.xlu0 %1050
      %1052 = vrot.lane.b32.xlu0 %v632, 28
      %v1053 = vpop.permute.xlu0 %1052
      %1054 = vrot.lane.b32.xlu0 %v633, 28
      %v1055 = vpop.permute.xlu0 %1054
      %1075 = vrot.lane.b32.xlu0 %v672, 32
      %v1076 = vpop.permute.xlu0 %1075
      %1077 = vrot.lane.b32.xlu0 %v673, 32
      %v1078 = vpop.permute.xlu0 %1077
      %1079 = vrot.lane.b32.xlu0 %v674, 32
      %v1080 = vpop.permute.xlu0 %1079
      %1081 = vrot.lane.b32.xlu0 %v675, 32
      %v1082 = vpop.permute.xlu0 %1081
      %1083 = vrot.lane.b32.xlu0 %v676, 32
      %v1084 = vpop.permute.xlu0 %1083
      %1085 = vrot.lane.b32.xlu0 %v677, 32
      %v1086 = vpop.permute.xlu0 %1085
      %1087 = vrot.lane.b32.xlu0 %v678, 32
      %v1088 = vpop.permute.xlu0 %1087
      %1089 = vrot.lane.b32.xlu0 %v679, 32
      %v1090 = vpop.permute.xlu0 %1089
      %1091 = vrot.lane.b32.xlu0 %v680, 32
      %v1092 = vpop.permute.xlu0 %1091
      %1093 = vrot.lane.b32.xlu0 %v681, 32
      %v1094 = vpop.permute.xlu0 %1093
      %1095 = vrot.lane.b32.xlu0 %v682, 32
      %v1096 = vpop.permute.xlu0 %1095
      %1097 = vrot.lane.b32.xlu0 %v683, 32
      %v1098 = vpop.permute.xlu0 %1097
      %1099 = vrot.lane.b32.xlu0 %v684, 32
      %v1100 = vpop.permute.xlu0 %1099
      %1101 = vrot.lane.b32.xlu0 %v685, 32
      %v1102 = vpop.permute.xlu0 %1101
      %1103 = vrot.lane.b32.xlu0 %v686, 32
      %v1104 = vpop.permute.xlu0 %1103
      %1105 = vrot.lane.b32.xlu0 %v687, 32
      %v1106 = vpop.permute.xlu0 %1105
      %1107 = vrot.lane.b32.xlu0 %v688, 32
      %v1108 = vpop.permute.xlu0 %1107
      %1109 = vrot.lane.b32.xlu0 %v689, 32
      %v1110 = vpop.permute.xlu0 %1109
      %1111 = vrot.lane.b32.xlu0 %v690, 32
      %v1112 = vpop.permute.xlu0 %1111
      %vm1113 = vcmask 31744
      %v1116 = vsel %vm1113, %v320, %v711
      %v1119 = vsel %vm1113, %v321, %v713
      %v1122 = vsel %vm1113, %v322, %v715
      %v1125 = vsel %vm1113, %v323, %v717
      %v1128 = vsel %vm1113, %v324, %v719
      %v1131 = vsel %vm1113, %v325, %v721
      %v1134 = vsel %vm1113, %v326, %v723
      %v1137 = vsel %vm1113, %v327, %v725
      %v1140 = vsel %vm1113, %v328, %v727
      %v1143 = vsel %vm1113, %v329, %v729
      %v1146 = vsel %vm1113, %v330, %v731
      %v1149 = vsel %vm1113, %v331, %v733
      %v1152 = vsel %vm1113, %v332, %v735
      %v1155 = vsel %vm1113, %v333, %v737
      %v1158 = vsel %vm1113, %v334, %v739
      %v1161 = vsel %vm1113, %v335, %v741
      %v1164 = vsel %vm1113, %v336, %v743
      %v1167 = vsel %vm1113, %v337, %v745
      %v1170 = vsel %vm1113, %v338, %v747
      %vm1171 = vcmask 64512
      %v1173 = vsel %vm1171, %v1116, %v768
      %v1175 = vsel %vm1171, %v1119, %v770
      %v1177 = vsel %vm1171, %v1122, %v772
      %v1179 = vsel %vm1171, %v1125, %v774
      %v1181 = vsel %vm1171, %v1128, %v776
      %v1183 = vsel %vm1171, %v1131, %v778
      %v1185 = vsel %vm1171, %v1134, %v780
      %v1187 = vsel %vm1171, %v1137, %v782
      %v1189 = vsel %vm1171, %v1140, %v784
      %v1191 = vsel %vm1171, %v1143, %v786
      %v1193 = vsel %vm1171, %v1146, %v788
      %v1195 = vsel %vm1171, %v1149, %v790
      %v1197 = vsel %vm1171, %v1152, %v792
      %v1199 = vsel %vm1171, %v1155, %v794
      %v1201 = vsel %vm1171, %v1158, %v796
      %v1203 = vsel %vm1171, %v1161, %v798
      %v1205 = vsel %vm1171, %v1164, %v800
      %v1207 = vsel %vm1171, %v1167, %v802
      %v1209 = vsel %vm1171, %v1170, %v804
      %vm1210 = vcmask 97280
      %v1212 = vsel %vm1210, %v1173, %v808
      %v1214 = vsel %vm1210, %v1175, %v810
      %v1216 = vsel %vm1210, %v1177, %v812
      %v1218 = vsel %vm1210, %v1179, %v814
      %v1220 = vsel %vm1210, %v1181, %v816
      %v1222 = vsel %vm1210, %v1183, %v818
      %v1224 = vsel %vm1210, %v1185, %v820
      %v1226 = vsel %vm1210, %v1187, %v822
      %v1228 = vsel %vm1210, %v1189, %v824
      %v1230 = vsel %vm1210, %v1191, %v826
      %v1232 = vsel %vm1210, %v1193, %v828
      %v1234 = vsel %vm1210, %v1195, %v830
      %v1236 = vsel %vm1210, %v1197, %v832
      %v1238 = vsel %vm1210, %v1199, %v834
      %v1240 = vsel %vm1210, %v1201, %v836
      %v1242 = vsel %vm1210, %v1203, %v838
      %v1244 = vsel %vm1210, %v1205, %v840
      %v1246 = vsel %vm1210, %v1207, %v842
      %v1248 = vsel %vm1210, %v1209, %v844
      %vm1249 = vcmask 130048
      %v1251 = vsel %vm1249, %v1212, %v865
      %v1253 = vsel %vm1249, %v1214, %v867
      %v1255 = vsel %vm1249, %v1216, %v869
      %v1257 = vsel %vm1249, %v1218, %v871
      %v1259 = vsel %vm1249, %v1220, %v873
      %v1261 = vsel %vm1249, %v1222, %v875
      %v1263 = vsel %vm1249, %v1224, %v877
      %v1265 = vsel %vm1249, %v1226, %v879
      %v1267 = vsel %vm1249, %v1228, %v881
      %v1269 = vsel %vm1249, %v1230, %v883
      %v1271 = vsel %vm1249, %v1232, %v885
      %v1273 = vsel %vm1249, %v1234, %v887
      %v1275 = vsel %vm1249, %v1236, %v889
      %v1277 = vsel %vm1249, %v1238, %v891
      %v1279 = vsel %vm1249, %v1240, %v893
      %v1281 = vsel %vm1249, %v1242, %v895
      %v1283 = vsel %vm1249, %v1244, %v897
      %v1285 = vsel %vm1249, %v1246, %v899
      %v1287 = vsel %vm1249, %v1248, %v901
      %vm1288 = vcmask 162816
      %v1290 = vsel %vm1288, %v1251, %v922
      %v1292 = vsel %vm1288, %v1253, %v924
      %v1294 = vsel %vm1288, %v1255, %v926
      %v1296 = vsel %vm1288, %v1257, %v928
      %v1298 = vsel %vm1288, %v1259, %v930
      %v1300 = vsel %vm1288, %v1261, %v932
      %v1302 = vsel %vm1288, %v1263, %v934
      %v1304 = vsel %vm1288, %v1265, %v936
      %v1306 = vsel %vm1288, %v1267, %v938
      %v1308 = vsel %vm1288, %v1269, %v940
      %v1310 = vsel %vm1288, %v1271, %v942
      %v1312 = vsel %vm1288, %v1273, %v944
      %v1314 = vsel %vm1288, %v1275, %v946
      %v1316 = vsel %vm1288, %v1277, %v948
      %v1318 = vsel %vm1288, %v1279, %v950
      %v1320 = vsel %vm1288, %v1281, %v952
      %v1322 = vsel %vm1288, %v1283, %v954
      %v1324 = vsel %vm1288, %v1285, %v956
      %v1326 = vsel %vm1288, %v1287, %v958
      %vm1327 = vcmask 195584
      %v1329 = vsel %vm1327, %v1290, %v962
      %v1331 = vsel %vm1327, %v1292, %v964
      %v1333 = vsel %vm1327, %v1294, %v966
      %v1335 = vsel %vm1327, %v1296, %v968
      %v1337 = vsel %vm1327, %v1298, %v970
      %v1339 = vsel %vm1327, %v1300, %v972
      %v1341 = vsel %vm1327, %v1302, %v974
      %v1343 = vsel %vm1327, %v1304, %v976
      %v1345 = vsel %vm1327, %v1306, %v978
      %v1347 = vsel %vm1327, %v1308, %v980
      %v1349 = vsel %vm1327, %v1310, %v982
      %v1351 = vsel %vm1327, %v1312, %v984
      %v1353 = vsel %vm1327, %v1314, %v986
      %v1355 = vsel %vm1327, %v1316, %v988
      %v1357 = vsel %vm1327, %v1318, %v990
      %v1359 = vsel %vm1327, %v1320, %v992
      %v1361 = vsel %vm1327, %v1322, %v994
      %v1363 = vsel %vm1327, %v1324, %v996
      %v1365 = vsel %vm1327, %v1326, %v998
      %vm1366 = vcmask 228352
      %v1368 = vsel %vm1366, %v1329, %v1019
      %v1370 = vsel %vm1366, %v1331, %v1021
      %v1372 = vsel %vm1366, %v1333, %v1023
      %v1374 = vsel %vm1366, %v1335, %v1025
      %v1376 = vsel %vm1366, %v1337, %v1027
      %v1378 = vsel %vm1366, %v1339, %v1029
      %v1380 = vsel %vm1366, %v1341, %v1031
      %v1382 = vsel %vm1366, %v1343, %v1033
      %v1384 = vsel %vm1366, %v1345, %v1035
      %v1386 = vsel %vm1366, %v1347, %v1037
      %v1388 = vsel %vm1366, %v1349, %v1039
      %v1390 = vsel %vm1366, %v1351, %v1041
      %v1392 = vsel %vm1366, %v1353, %v1043
      %v1394 = vsel %vm1366, %v1355, %v1045
      %v1396 = vsel %vm1366, %v1357, %v1047
      %v1398 = vsel %vm1366, %v1359, %v1049
      %v1400 = vsel %vm1366, %v1361, %v1051
      %v1402 = vsel %vm1366, %v1363, %v1053
      %v1404 = vsel %vm1366, %v1365, %v1055
      %vm1405 = vcmask 261120
      %v1407 = vsel %vm1405, %v1368, %v1076
      %v1409 = vsel %vm1405, %v1370, %v1078
      %v1411 = vsel %vm1405, %v1372, %v1080
      %v1413 = vsel %vm1405, %v1374, %v1082
      %v1415 = vsel %vm1405, %v1376, %v1084
      %v1417 = vsel %vm1405, %v1378, %v1086
      %v1419 = vsel %vm1405, %v1380, %v1088
      %v1421 = vsel %vm1405, %v1382, %v1090
      %v1423 = vsel %vm1405, %v1384, %v1092
      %v1425 = vsel %vm1405, %v1386, %v1094
      %v1427 = vsel %vm1405, %v1388, %v1096
      %v1429 = vsel %vm1405, %v1390, %v1098
      %v1431 = vsel %vm1405, %v1392, %v1100
      %v1433 = vsel %vm1405, %v1394, %v1102
      %v1435 = vsel %vm1405, %v1396, %v1104
      %v1437 = vsel %vm1405, %v1398, %v1106
      %v1439 = vsel %vm1405, %v1400, %v1108
      %v1441 = vsel %vm1405, %v1402, %v1110
      %v1443 = vsel %vm1405, %v1404, %v1112
      %v1444 = vld [vmem:[%s2] sm:$0xf]
      %v1445 = vld [vmem:[%s2 + $0x4] sm:$0xf]
      %v1446 = vld [vmem:[%s2 + $0x8] sm:$0xf]
      %v1447 = vld [vmem:[%s2 + $0xc] sm:$0xf]
      %v1448 = vld [vmem:[%s2 + $0x10] sm:$0x3]
      %v1449 = vld [vmem:[%s3] sm:$0x1]
      %v1451 = vlaneseq
      %v1452 = vshrl.u32 %v1451, 7
      %v1453 = vsub.s32 0, %v1452
      %v1454 = vrot.slane %v1449, %v1453
      %v1461 = vunpack.c.l.b16 %v1444
      %v1462 = vunpack.c.l.b16 %v1445
      %v1463 = vunpack.c.l.b16 %v1446
      %v1464 = vunpack.c.l.b16 %v1447
      %v1465 = vunpack.c.l.b16 %v1448
      %v1466 = vpack.c.b16 %v1462, %v1461
      %v1467 = vpack.c.b16 %v1464, %v1463
      %v1468 = vpack.c.b16 %v1465, %v1465
      %vm1471 = vcmask 293888
      %v1472 = vsel %vm1471, %v1407, 0
      %v1474 = vsel %vm1471, %v1409, 0
      %v1476 = vsel %vm1471, %v1411, 0
      %v1478 = vsel %vm1471, %v1413, 0
      %v1480 = vsel %vm1471, %v1415, 0
      %v1482 = vsel %vm1471, %v1417, 0
      %v1484 = vsel %vm1471, %v1419, 0
      %v1486 = vsel %vm1471, %v1421, 0
      %v1488 = vsel %vm1471, %v1423, 0
      %v1490 = vsel %vm1471, %v1425, 0
      %v1492 = vsel %vm1471, %v1427, 0
      %v1494 = vsel %vm1471, %v1429, 0
      %v1496 = vsel %vm1471, %v1431, 0
      %v1498 = vsel %vm1471, %v1433, 0
      %v1500 = vsel %vm1471, %v1435, 0
      %v1502 = vsel %vm1471, %v1437, 0
      %v1504 = vsel %vm1471, %v1439, 0
      %v1506 = vsel %vm1471, %v1441, 0
      %v1508 = vsel %vm1471, %v1443, 0
      %vm1510 = vcmask 1041408
      %v1512 = vsel %vm1510, %v1468, 0
      %1514 = vmatprep.subr.bf16.mxu0 0
      %1515 = vmatpush1.bf16.msra.mxu0 0
      %1516 = vmatprep.subr.bf16.mxu0 0
      %1517 = vmatpush1.bf16.msra.mxu0 0
      %1518 = vmatprep.subr.bf16.mxu0 0
      %1519 = vmatpush1.bf16.msra.mxu0 0
      %1520 = vmatprep.subr.bf16.mxu0 0
      %1521 = vmatpush1.bf16.msra.mxu0 0
      %1522 = vmatprep.subr.bf16.mxu0 0
      %1523 = vmatpush1.bf16.msra.mxu0 0
      %1524 = vmatprep.subr.bf16.mxu0 0
      %1525 = vmatpush1.bf16.msra.mxu0 %v1512
      %1526 = vmatprep.subr.bf16.mxu0 0
      %1527 = vmatpush1.bf16.msra.mxu0 %v1467
      %1528 = vmatprep.subr.bf16.mxu0 0
      %1529 = vmatpush1.bf16.msra.mxu0 %v1466
      %1530 = vmatprep.subr.bf16.mxu0 0
      %1531 = vmatpush2.bf16.msra.mxu0 0
      %1532 = vmatprep.subr.bf16.mxu0 0
      %1533 = vmatpush2.bf16.msra.mxu0 0
      %1534 = vmatprep.subr.bf16.mxu0 0
      %1535 = vmatpush2.bf16.msra.mxu0 0
      %1536 = vmatprep.subr.bf16.mxu0 0
      %1537 = vmatpush2.bf16.msra.mxu0 0
      %1538 = vmatprep.subr.bf16.mxu0 0
      %1539 = vmatpush2.bf16.msra.mxu0 0
      %1540 = vmatprep.subr.bf16.mxu0 0
      %1541 = vmatpush2.bf16.msra.mxu0 0
      %1542 = vmatprep.subr.bf16.mxu0 0
      %1543 = vmatpush2.bf16.msra.mxu0 0
      %1544 = vmatprep.subr.bf16.mxu0 0
      %1545 = vmatpush2.bf16.msra.mxu0 0
      %1546 = vmatprep.mubr.bf16.mxu0 0
      %1547 = vmatmul.mubr.bf16.gmra.mxu0 %v1472
      %v1548 = vpop.f32.mrf.mxu0
      %v1549 = vadd.f32 %v1454, %v1548
      %v1550 = vpop.f32.mrf.mxu0
      %v1551 = vpop.f32.mrf.mxu0
      %v1552 = vadd.f32 %v1454, %v1551
      %v1553 = vpop.f32.mrf.mxu0
      %1554 = vmatprep.mubr.bf16.mxu0 0
      %1555 = vmatmul.mubr.bf16.gmra.mxu0 %v1474
      %v1556 = vpop.f32.mrf.mxu0
      %v1557 = vadd.f32 %v1454, %v1556
      %v1558 = vpop.f32.mrf.mxu0
      %v1559 = vpop.f32.mrf.mxu0
      %v1560 = vadd.f32 %v1454, %v1559
      %v1561 = vpop.f32.mrf.mxu0
      %1562 = vmatprep.mubr.bf16.mxu0 0
      %1563 = vmatmul.mubr.bf16.gmra.mxu0 %v1476
      %v1564 = vpop.f32.mrf.mxu0
      %v1565 = vadd.f32 %v1454, %v1564
      %v1566 = vpop.f32.mrf.mxu0
      %v1567 = vpop.f32.mrf.mxu0
      %v1568 = vadd.f32 %v1454, %v1567
      %v1569 = vpop.f32.mrf.mxu0
      %1570 = vmatprep.mubr.bf16.mxu0 0
      %1571 = vmatmul.mubr.bf16.gmra.mxu0 %v1478
      %v1572 = vpop.f32.mrf.mxu0
      %v1573 = vadd.f32 %v1454, %v1572
      %v1574 = vpop.f32.mrf.mxu0
      %v1575 = vpop.f32.mrf.mxu0
      %v1576 = vadd.f32 %v1454, %v1575
      %v1577 = vpop.f32.mrf.mxu0
      %1578 = vmatprep.mubr.bf16.mxu0 0
      %1579 = vmatmul.mubr.bf16.gmra.mxu0 %v1480
      %v1580 = vpop.f32.mrf.mxu0
      %v1581 = vadd.f32 %v1454, %v1580
      %v1582 = vpop.f32.mrf.mxu0
      %v1583 = vpop.f32.mrf.mxu0
      %v1584 = vadd.f32 %v1454, %v1583
      %v1585 = vpop.f32.mrf.mxu0
      %1586 = vmatprep.mubr.bf16.mxu0 0
      %1587 = vmatmul.mubr.bf16.gmra.mxu0 %v1482
      %v1588 = vpop.f32.mrf.mxu0
      %v1589 = vadd.f32 %v1454, %v1588
      %v1590 = vpop.f32.mrf.mxu0
      %v1591 = vpop.f32.mrf.mxu0
      %v1592 = vadd.f32 %v1454, %v1591
      %v1593 = vpop.f32.mrf.mxu0
      %1594 = vmatprep.mubr.bf16.mxu0 0
      %1595 = vmatmul.mubr.bf16.gmra.mxu0 %v1484
      %v1596 = vpop.f32.mrf.mxu0
      %v1597 = vadd.f32 %v1454, %v1596
      %v1598 = vpop.f32.mrf.mxu0
      %v1599 = vpop.f32.mrf.mxu0
      %v1600 = vadd.f32 %v1454, %v1599
      %v1601 = vpop.f32.mrf.mxu0
      %1602 = vmatprep.mubr.bf16.mxu0 0
      %1603 = vmatmul.mubr.bf16.gmra.mxu0 %v1486
      %v1604 = vpop.f32.mrf.mxu0
      %v1605 = vadd.f32 %v1454, %v1604
      %v1606 = vpop.f32.mrf.mxu0
      %v1607 = vpop.f32.mrf.mxu0
      %v1608 = vadd.f32 %v1454, %v1607
      %v1609 = vpop.f32.mrf.mxu0
      %1610 = vmatprep.mubr.bf16.mxu0 0
      %1611 = vmatmul.mubr.bf16.gmra.mxu0 %v1488
      %v1612 = vpop.f32.mrf.mxu0
      %v1613 = vadd.f32 %v1454, %v1612
      %v1614 = vpop.f32.mrf.mxu0
      %v1615 = vpop.f32.mrf.mxu0
      %v1616 = vadd.f32 %v1454, %v1615
      %v1617 = vpop.f32.mrf.mxu0
      %1618 = vmatprep.mubr.bf16.mxu0 0
      %1619 = vmatmul.mubr.bf16.gmra.mxu0 %v1490
      %v1620 = vpop.f32.mrf.mxu0
      %v1621 = vadd.f32 %v1454, %v1620
      %v1622 = vpop.f32.mrf.mxu0
      %v1623 = vpop.f32.mrf.mxu0
      %v1624 = vadd.f32 %v1454, %v1623
      %v1625 = vpop.f32.mrf.mxu0
      %1626 = vmatprep.mubr.bf16.mxu0 0
      %1627 = vmatmul.mubr.bf16.gmra.mxu0 %v1492
      %v1628 = vpop.f32.mrf.mxu0
      %v1629 = vadd.f32 %v1454, %v1628
      %v1630 = vpop.f32.mrf.mxu0
      %v1631 = vpop.f32.mrf.mxu0
      %v1632 = vadd.f32 %v1454, %v1631
      %v1633 = vpop.f32.mrf.mxu0
      %1634 = vmatprep.mubr.bf16.mxu0 0
      %1635 = vmatmul.mubr.bf16.gmra.mxu0 %v1494
      %v1636 = vpop.f32.mrf.mxu0
      %v1637 = vadd.f32 %v1454, %v1636
      %v1638 = vpop.f32.mrf.mxu0
      %v1639 = vpop.f32.mrf.mxu0
      %v1640 = vadd.f32 %v1454, %v1639
      %v1641 = vpop.f32.mrf.mxu0
      %1642 = vmatprep.mubr.bf16.mxu0 0
      %1643 = vmatmul.mubr.bf16.gmra.mxu0 %v1496
      %v1644 = vpop.f32.mrf.mxu0
      %v1645 = vadd.f32 %v1454, %v1644
      %v1646 = vpop.f32.mrf.mxu0
      %v1647 = vpop.f32.mrf.mxu0
      %v1648 = vadd.f32 %v1454, %v1647
      %v1649 = vpop.f32.mrf.mxu0
      %1650 = vmatprep.mubr.bf16.mxu0 0
      %1651 = vmatmul.mubr.bf16.gmra.mxu0 %v1498
      %v1652 = vpop.f32.mrf.mxu0
      %v1653 = vadd.f32 %v1454, %v1652
      %v1654 = vpop.f32.mrf.mxu0
      %v1655 = vpop.f32.mrf.mxu0
      %v1656 = vadd.f32 %v1454, %v1655
      %v1657 = vpop.f32.mrf.mxu0
      %1658 = vmatprep.mubr.bf16.mxu0 0
      %1659 = vmatmul.mubr.bf16.gmra.mxu0 %v1500
      %v1660 = vpop.f32.mrf.mxu0
      %v1661 = vadd.f32 %v1454, %v1660
      %v1662 = vpop.f32.mrf.mxu0
      %v1663 = vpop.f32.mrf.mxu0
      %v1664 = vadd.f32 %v1454, %v1663
      %v1665 = vpop.f32.mrf.mxu0
      %1666 = vmatprep.mubr.bf16.mxu0 0
      %1667 = vmatmul.mubr.bf16.gmra.mxu0 %v1502
      %v1668 = vpop.f32.mrf.mxu0
      %v1669 = vadd.f32 %v1454, %v1668
      %v1670 = vpop.f32.mrf.mxu0
      %v1671 = vpop.f32.mrf.mxu0
      %v1672 = vadd.f32 %v1454, %v1671
      %v1673 = vpop.f32.mrf.mxu0
      %1674 = vmatprep.mubr.bf16.mxu0 0
      %1675 = vmatmul.mubr.bf16.gmra.mxu0 %v1504
      %v1676 = vpop.f32.mrf.mxu0
      %v1677 = vadd.f32 %v1454, %v1676
      %v1678 = vpop.f32.mrf.mxu0
      %v1679 = vpop.f32.mrf.mxu0
      %v1680 = vadd.f32 %v1454, %v1679
      %v1681 = vpop.f32.mrf.mxu0
      %1682 = vmatprep.mubr.bf16.mxu0 0
      %1683 = vmatmul.mubr.bf16.gmra.mxu0 %v1506
      %v1684 = vpop.f32.mrf.mxu0
      %v1685 = vadd.f32 %v1454, %v1684
      %v1686 = vpop.f32.mrf.mxu0
      %v1687 = vpop.f32.mrf.mxu0
      %v1688 = vadd.f32 %v1454, %v1687
      %v1689 = vpop.f32.mrf.mxu0
      %1690 = vmatprep.mubr.bf16.mxu0 0
      %1691 = vmatmul.mubr.bf16.gmra.mxu0 %v1508
      %v1692 = vpop.f32.mrf.mxu0
      %v1693 = vadd.f32 %v1454, %v1692
      %v1694 = vpop.f32.mrf.mxu0
      %v1695 = vpop.f32.mrf.mxu0
      %v1696 = vadd.f32 %v1454, %v1695
      %v1697 = vpop.f32.mrf.mxu0
      %1698 = vdwg.mxu0
      %v1699 = vmax.f32 %v1549, 0.0
      %v1700 = vmax.f32 %v1552, 0.0
      %v1701 = vmax.f32 %v1557, 0.0
      %v1702 = vmax.f32 %v1560, 0.0
      %v1703 = vmax.f32 %v1565, 0.0
      %v1704 = vmax.f32 %v1568, 0.0
      %v1705 = vmax.f32 %v1573, 0.0
      %v1706 = vmax.f32 %v1576, 0.0
      %v1707 = vmax.f32 %v1581, 0.0
      %v1708 = vmax.f32 %v1584, 0.0
      %v1709 = vmax.f32 %v1589, 0.0
      %v1710 = vmax.f32 %v1592, 0.0
      %v1711 = vmax.f32 %v1597, 0.0
      %v1712 = vmax.f32 %v1600, 0.0
      %v1713 = vmax.f32 %v1605, 0.0
      %v1714 = vmax.f32 %v1608, 0.0
      %v1715 = vmax.f32 %v1613, 0.0
      %v1716 = vmax.f32 %v1616, 0.0
      %v1717 = vmax.f32 %v1621, 0.0
      %v1718 = vmax.f32 %v1624, 0.0
      %v1719 = vmax.f32 %v1629, 0.0
      %v1720 = vmax.f32 %v1632, 0.0
      %v1721 = vmax.f32 %v1637, 0.0
      %v1722 = vmax.f32 %v1640, 0.0
      %v1723 = vmax.f32 %v1645, 0.0
      %v1724 = vmax.f32 %v1648, 0.0
      %v1725 = vmax.f32 %v1653, 0.0
      %v1726 = vmax.f32 %v1656, 0.0
      %v1727 = vmax.f32 %v1661, 0.0
      %v1728 = vmax.f32 %v1664, 0.0
      %v1729 = vmax.f32 %v1669, 0.0
      %v1730 = vmax.f32 %v1672, 0.0
      %v1731 = vmax.f32 %v1677, 0.0
      %v1732 = vmax.f32 %v1680, 0.0
      %v1733 = vmax.f32 %v1685, 0.0
      %v1734 = vmax.f32 %v1688, 0.0
      %v1735 = vmax.f32 %v1693, 0.0
      %v1736 = vmax.f32 %v1696, 0.0
      %vm1775 = vcmask 1042432
      %v1776 = vrot.slane %v1699, 5
      %v1777 = vrot.slane %v1700, 5
      %v1778 = vsel %vm1775, %v1776, %v1777
      %v1779 = vrot.slane %v1701, 5
      %v1780 = vsel %vm1775, %v1777, %v1779
      %v1781 = vrot.slane %v1702, 5
      %v1782 = vsel %vm1775, %v1779, %v1781
      %v1783 = vrot.slane %v1703, 5
      %v1784 = vsel %vm1775, %v1781, %v1783
      %v1785 = vrot.slane %v1704, 5
      %v1786 = vsel %vm1775, %v1783, %v1785
      %v1787 = vrot.slane %v1705, 5
      %v1788 = vsel %vm1775, %v1785, %v1787
      %v1789 = vrot.slane %v1706, 5
      %v1790 = vsel %vm1775, %v1787, %v1789
      %v1791 = vrot.slane %v1707, 5
      %v1792 = vsel %vm1775, %v1789, %v1791
      %v1793 = vrot.slane %v1708, 5
      %v1794 = vsel %vm1775, %v1791, %v1793
      %v1795 = vrot.slane %v1709, 5
      %v1796 = vsel %vm1775, %v1793, %v1795
      %v1797 = vrot.slane %v1710, 5
      %v1798 = vsel %vm1775, %v1795, %v1797
      %v1799 = vrot.slane %v1711, 5
      %v1800 = vsel %vm1775, %v1797, %v1799
      %v1801 = vrot.slane %v1712, 5
      %v1802 = vsel %vm1775, %v1799, %v1801
      %v1803 = vrot.slane %v1713, 5
      %v1804 = vsel %vm1775, %v1801, %v1803
      %v1805 = vrot.slane %v1714, 5
      %v1806 = vsel %vm1775, %v1803, %v1805
      %v1807 = vrot.slane %v1715, 5
      %v1808 = vsel %vm1775, %v1805, %v1807
      %v1809 = vrot.slane %v1716, 5
      %v1810 = vsel %vm1775, %v1807, %v1809
      %v1811 = vrot.slane %v1717, 5
      %v1812 = vsel %vm1775, %v1809, %v1811
      %v1813 = vrot.slane %v1718, 5
      %v1814 = vsel %vm1775, %v1811, %v1813
      %v1815 = vrot.slane %v1719, 5
      %v1816 = vsel %vm1775, %v1813, %v1815
      %v1817 = vrot.slane %v1720, 5
      %v1818 = vsel %vm1775, %v1815, %v1817
      %v1819 = vrot.slane %v1721, 5
      %v1820 = vsel %vm1775, %v1817, %v1819
      %v1821 = vrot.slane %v1722, 5
      %v1822 = vsel %vm1775, %v1819, %v1821
      %v1823 = vrot.slane %v1723, 5
      %v1824 = vsel %vm1775, %v1821, %v1823
      %v1825 = vrot.slane %v1724, 5
      %v1826 = vsel %vm1775, %v1823, %v1825
      %v1827 = vrot.slane %v1725, 5
      %v1828 = vsel %vm1775, %v1825, %v1827
      %v1829 = vrot.slane %v1726, 5
      %v1830 = vsel %vm1775, %v1827, %v1829
      %v1831 = vrot.slane %v1727, 5
      %v1832 = vsel %vm1775, %v1829, %v1831
      %v1833 = vrot.slane %v1728, 5
      %v1834 = vsel %vm1775, %v1831, %v1833
      %v1835 = vrot.slane %v1729, 5
      %v1836 = vsel %vm1775, %v1833, %v1835
      %v1837 = vrot.slane %v1730, 5
      %v1838 = vsel %vm1775, %v1835, %v1837
      %v1839 = vrot.slane %v1731, 5
      %v1840 = vsel %vm1775, %v1837, %v1839
      %v1841 = vrot.slane %v1732, 5
      %v1842 = vsel %vm1775, %v1839, %v1841
      %v1843 = vrot.slane %v1733, 5
      %v1844 = vsel %vm1775, %v1841, %v1843
      %v1845 = vrot.slane %v1734, 5
      %v1846 = vsel %vm1775, %v1843, %v1845
      %v1847 = vrot.slane %v1735, 5
      %v1848 = vsel %vm1775, %v1845, %v1847
      %v1849 = vrot.slane %v1736, 5
      %v1850 = vsel %vm1775, %v1847, %v1849
      %v1889 = vsel %vm1775, 0.0, %v1776
      %vm1890 = vcmask 1044480
      %v1891 = vsel %vm1890, %v1850, 0.0
      %1893 = vset.pattern.permute.xlu0 0
      %1894 = vperm.xlu0 %1893, %v240
      %v1895 = vpop.permute.xlu0 %1894
      %1898 = vset.pattern.permute.xlu0 0
      %1899 = vperm.xlu0 %1898, %v241
      %v1900 = vpop.permute.xlu0 %1899
      %1903 = vset.pattern.permute.xlu0 0
      %1904 = vperm.xlu0 %1903, %v242
      %v1905 = vpop.permute.xlu0 %1904
      %1908 = vset.pattern.permute.xlu0 0
      %1909 = vperm.xlu0 %1908, %v243
      %v1910 = vpop.permute.xlu0 %1909
      %1913 = vset.pattern.permute.xlu0 0
      %1914 = vperm.xlu0 %1913, %v244
      %v1915 = vpop.permute.xlu0 %1914
      %1918 = vset.pattern.permute.xlu0 0
      %1919 = vperm.xlu0 %1918, %v245
      %v1920 = vpop.permute.xlu0 %1919
      %1923 = vset.pattern.permute.xlu0 0
      %1924 = vperm.xlu0 %1923, %v246
      %v1925 = vpop.permute.xlu0 %1924
      %1928 = vset.pattern.permute.xlu0 0
      %1929 = vperm.xlu0 %1928, %v247
      %v1930 = vpop.permute.xlu0 %1929
      %1933 = vset.pattern.permute.xlu0 0
      %1934 = vperm.xlu0 %1933, %v248
      %v1935 = vpop.permute.xlu0 %1934
      %1938 = vset.pattern.permute.xlu0 0
      %1939 = vperm.xlu0 %1938, %v249
      %v1940 = vpop.permute.xlu0 %1939
      %1943 = vset.pattern.permute.xlu0 0
      %1944 = vperm.xlu0 %1943, %v250
      %v1945 = vpop.permute.xlu0 %1944
      %1948 = vset.pattern.permute.xlu0 0
      %1949 = vperm.xlu0 %1948, %v251
      %v1950 = vpop.permute.xlu0 %1949
      %1953 = vset.pattern.permute.xlu0 0
      %1954 = vperm.xlu0 %1953, %v252
      %v1955 = vpop.permute.xlu0 %1954
      %1958 = vset.pattern.permute.xlu0 0
      %1959 = vperm.xlu0 %1958, %v253
      %v1960 = vpop.permute.xlu0 %1959
      %1963 = vset.pattern.permute.xlu0 0
      %1964 = vperm.xlu0 %1963, %v254
      %v1965 = vpop.permute.xlu0 %1964
      %1968 = vset.pattern.permute.xlu0 0
      %1969 = vperm.xlu0 %1968, %v255
      %v1970 = vpop.permute.xlu0 %1969
      %1973 = vset.pattern.permute.xlu0 0
      %1974 = vperm.xlu0 %1973, %v256
      %v1975 = vpop.permute.xlu0 %1974
      %1978 = vset.pattern.permute.xlu0 0
      %1979 = vperm.xlu0 %1978, %v257
      %v1980 = vpop.permute.xlu0 %1979
      %1983 = vset.pattern.permute.xlu0 0
      %1984 = vperm.xlu0 %1983, %v258
      %v1985 = vpop.permute.xlu0 %1984
      %1988 = vset.pattern.permute.xlu0 0
      %1989 = vperm.xlu0 %1988, %v259
      %v1990 = vpop.permute.xlu0 %1989
      %1993 = vset.pattern.permute.xlu0 0
      %1994 = vperm.xlu0 %1993, %v260
      %v1995 = vpop.permute.xlu0 %1994
      %1998 = vset.pattern.permute.xlu0 0
      %1999 = vperm.xlu0 %1998, %v261
      %v2000 = vpop.permute.xlu0 %1999
      %2003 = vset.pattern.permute.xlu0 0
      %2004 = vperm.xlu0 %2003, %v262
      %v2005 = vpop.permute.xlu0 %2004
      %2008 = vset.pattern.permute.xlu0 0
      %2009 = vperm.xlu0 %2008, %v263
      %v2010 = vpop.permute.xlu0 %2009
      %2013 = vset.pattern.permute.xlu0 0
      %2014 = vperm.xlu0 %2013, %v264
      %v2015 = vpop.permute.xlu0 %2014
      %2018 = vset.pattern.permute.xlu0 0
      %2019 = vperm.xlu0 %2018, %v265
      %v2020 = vpop.permute.xlu0 %2019
      %2023 = vset.pattern.permute.xlu0 0
      %2024 = vperm.xlu0 %2023, %v266
      %v2025 = vpop.permute.xlu0 %2024
      %2028 = vset.pattern.permute.xlu0 0
      %2029 = vperm.xlu0 %2028, %v267
      %v2030 = vpop.permute.xlu0 %2029
      %2033 = vset.pattern.permute.xlu0 0
      %2034 = vperm.xlu0 %2033, %v268
      %v2035 = vpop.permute.xlu0 %2034
      %2038 = vset.pattern.permute.xlu0 0
      %2039 = vperm.xlu0 %2038, %v269
      %v2040 = vpop.permute.xlu0 %2039
      %2043 = vset.pattern.permute.xlu0 0
      %2044 = vperm.xlu0 %2043, %v270
      %v2045 = vpop.permute.xlu0 %2044
      %2048 = vset.pattern.permute.xlu0 0
      %2049 = vperm.xlu0 %2048, %v271
      %v2050 = vpop.permute.xlu0 %2049
      %2053 = vset.pattern.permute.xlu0 0
      %2054 = vperm.xlu0 %2053, %v272
      %v2055 = vpop.permute.xlu0 %2054
      %2058 = vset.pattern.permute.xlu0 0
      %2059 = vperm.xlu0 %2058, %v273
      %v2060 = vpop.permute.xlu0 %2059
      %2063 = vset.pattern.permute.xlu0 0
      %2064 = vperm.xlu0 %2063, %v274
      %v2065 = vpop.permute.xlu0 %2064
      %2068 = vset.pattern.permute.xlu0 0
      %2069 = vperm.xlu0 %2068, %v275
      %v2070 = vpop.permute.xlu0 %2069
      %2073 = vset.pattern.permute.xlu0 0
      %2074 = vperm.xlu0 %2073, %v276
      %v2075 = vpop.permute.xlu0 %2074
      %2078 = vset.pattern.permute.xlu0 0
      %2079 = vperm.xlu0 %2078, %v277
      %v2080 = vpop.permute.xlu0 %2079
      %2083 = vset.pattern.permute.xlu0 0
      %2084 = vperm.xlu0 %2083, %v278
      %v2085 = vpop.permute.xlu0 %2084
      %2088 = vset.pattern.permute.xlu0 0
      %2089 = vperm.xlu0 %2088, %v279
      %v2090 = vpop.permute.xlu0 %2089
      %2093 = vset.pattern.permute.xlu0 0
      %2094 = vperm.xlu0 %2093, %v280
      %v2095 = vpop.permute.xlu0 %2094
      %2098 = vset.pattern.permute.xlu0 0
      %2099 = vperm.xlu0 %2098, %v281
      %v2100 = vpop.permute.xlu0 %2099
      %v2102 = vmul.f32 %v1895, 0.0
      %v2103 = vmul.f32 %v1900, 0.0
      %v2104 = vmul.f32 %v1889, %v1905
      %v2105 = vmul.f32 %v1778, %v1910
      %v2106 = vmul.f32 %v1780, %v1915
      %v2107 = vmul.f32 %v1782, %v1920
      %v2108 = vmul.f32 %v1784, %v1925
      %v2109 = vmul.f32 %v1786, %v1930
      %v2110 = vmul.f32 %v1788, %v1935
      %v2111 = vmul.f32 %v1790, %v1940
      %v2112 = vmul.f32 %v1792, %v1945
      %v2113 = vmul.f32 %v1794, %v1950
      %v2114 = vmul.f32 %v1796, %v1955
      %v2115 = vmul.f32 %v1798, %v1960
      %v2116 = vmul.f32 %v1800, %v1965
      %v2117 = vmul.f32 %v1802, %v1970
      %v2118 = vmul.f32 %v1804, %v1975
      %v2119 = vmul.f32 %v1806, %v1980
      %v2120 = vmul.f32 %v1808, %v1985
      %v2121 = vmul.f32 %v1810, %v1990
      %v2122 = vmul.f32 %v1812, %v1995
      %v2123 = vmul.f32 %v1814, %v2000
      %v2124 = vmul.f32 %v1816, %v2005
      %v2125 = vmul.f32 %v1818, %v2010
      %v2126 = vmul.f32 %v1820, %v2015
      %v2127 = vmul.f32 %v1822, %v2020
      %v2128 = vmul.f32 %v1824, %v2025
      %v2129 = vmul.f32 %v1826, %v2030
      %v2130 = vmul.f32 %v1828, %v2035
      %v2131 = vmul.f32 %v1830, %v2040
      %v2132 = vmul.f32 %v1832, %v2045
      %v2133 = vmul.f32 %v1834, %v2050
      %v2134 = vmul.f32 %v1836, %v2055
      %v2135 = vmul.f32 %v1838, %v2060
      %v2136 = vmul.f32 %v1840, %v2065
      %v2137 = vmul.f32 %v1842, %v2070
      %v2138 = vmul.f32 %v1844, %v2075
      %v2139 = vmul.f32 %v1846, %v2080
      %v2140 = vmul.f32 %v1848, %v2085
      %v2141 = vmul.f32 %v1891, %v2090
      %v2142 = vmul.f32 %v2095, 0.0
      %v2143 = vmul.f32 %v2100, 0.0
      %v2144 = vpack.c.bf16 %v2103, %v2102
      %v2145 = vpack.c.bf16 %v2105, %v2104
      %v2146 = vpack.c.bf16 %v2107, %v2106
      %v2147 = vpack.c.bf16 %v2109, %v2108
      %v2148 = vpack.c.bf16 %v2111, %v2110
      %v2149 = vpack.c.bf16 %v2113, %v2112
      %v2150 = vpack.c.bf16 %v2115, %v2114
      %v2151 = vpack.c.bf16 %v2117, %v2116
      %v2152 = vpack.c.bf16 %v2119, %v2118
      %v2153 = vpack.c.bf16 %v2121, %v2120
      %v2154 = vpack.c.bf16 %v2123, %v2122
      %v2155 = vpack.c.bf16 %v2125, %v2124
      %v2156 = vpack.c.bf16 %v2127, %v2126
      %v2157 = vpack.c.bf16 %v2129, %v2128
      %v2158 = vpack.c.bf16 %v2131, %v2130
      %v2159 = vpack.c.bf16 %v2133, %v2132
      %v2160 = vpack.c.bf16 %v2135, %v2134
      %v2161 = vpack.c.bf16 %v2137, %v2136
      %v2162 = vpack.c.bf16 %v2139, %v2138
      %v2163 = vpack.c.bf16 %v2141, %v2140
      %v2164 = vpack.c.bf16 %v2143, %v2142
      %v2186 = vunpack.c.l.b16 %v2144
      %v2187 = vunpack.c.h.b16 %v2144
      %v2188 = vunpack.c.l.b16 %v2145
      %v2189 = vunpack.c.h.b16 %v2145
      %v2190 = vunpack.c.l.b16 %v2146
      %v2191 = vunpack.c.h.b16 %v2146
      %v2192 = vunpack.c.l.b16 %v2147
      %v2193 = vunpack.c.h.b16 %v2147
      %v2194 = vunpack.c.l.b16 %v2148
      %v2195 = vunpack.c.h.b16 %v2148
      %v2196 = vunpack.c.l.b16 %v2149
      %v2197 = vunpack.c.h.b16 %v2149
      %v2198 = vunpack.c.l.b16 %v2150
      %v2199 = vunpack.c.h.b16 %v2150
      %v2200 = vunpack.c.l.b16 %v2151
      %v2201 = vunpack.c.h.b16 %v2151
      %v2202 = vunpack.c.l.b16 %v2152
      %v2203 = vunpack.c.h.b16 %v2152
      %v2204 = vunpack.c.l.b16 %v2153
      %v2205 = vunpack.c.h.b16 %v2153
      %v2206 = vunpack.c.l.b16 %v2154
      %v2207 = vunpack.c.h.b16 %v2154
      %v2208 = vunpack.c.l.b16 %v2155
      %v2209 = vunpack.c.h.b16 %v2155
      %v2210 = vunpack.c.l.b16 %v2156
      %v2211 = vunpack.c.h.b16 %v2156
      %v2212 = vunpack.c.l.b16 %v2157
      %v2213 = vunpack.c.h.b16 %v2157
      %v2214 = vunpack.c.l.b16 %v2158
      %v2215 = vunpack.c.h.b16 %v2158
      %v2216 = vunpack.c.l.b16 %v2159
      %v2217 = vunpack.c.h.b16 %v2159
      %v2218 = vunpack.c.l.b16 %v2160
      %v2219 = vunpack.c.h.b16 %v2160
      %v2220 = vunpack.c.l.b16 %v2161
      %v2221 = vunpack.c.h.b16 %v2161
      %v2222 = vunpack.c.l.b16 %v2162
      %v2223 = vunpack.c.h.b16 %v2162
      %v2224 = vunpack.c.l.b16 %v2163
      %v2225 = vunpack.c.h.b16 %v2163
      %v2226 = vunpack.c.l.b16 %v2164
      %v2227 = vunpack.c.h.b16 %v2164
      %v2228 = vpack.c.b16 %v2186, %v2186
      %v2229 = vpack.c.b16 %v2187, %v2187
      %v2230 = vpack.c.b16 %v2188, %v2188
      %v2231 = vpack.c.b16 %v2189, %v2189
      %v2232 = vpack.c.b16 %v2190, %v2190
      %v2233 = vpack.c.b16 %v2191, %v2191
      %v2234 = vpack.c.b16 %v2192, %v2192
      %v2235 = vpack.c.b16 %v2193, %v2193
      %v2236 = vpack.c.b16 %v2194, %v2194
      %v2237 = vpack.c.b16 %v2195, %v2195
      %v2238 = vpack.c.b16 %v2196, %v2196
      %v2239 = vpack.c.b16 %v2197, %v2197
      %v2240 = vpack.c.b16 %v2198, %v2198
      %v2241 = vpack.c.b16 %v2199, %v2199
      %v2242 = vpack.c.b16 %v2200, %v2200
      %v2243 = vpack.c.b16 %v2201, %v2201
      %v2244 = vpack.c.b16 %v2202, %v2202
      %v2245 = vpack.c.b16 %v2203, %v2203
      %v2246 = vpack.c.b16 %v2204, %v2204
      %v2247 = vpack.c.b16 %v2205, %v2205
      %v2248 = vpack.c.b16 %v2206, %v2206
      %v2249 = vpack.c.b16 %v2207, %v2207
      %v2250 = vpack.c.b16 %v2208, %v2208
      %v2251 = vpack.c.b16 %v2209, %v2209
      %v2252 = vpack.c.b16 %v2210, %v2210
      %v2253 = vpack.c.b16 %v2211, %v2211
      %v2254 = vpack.c.b16 %v2212, %v2212
      %v2255 = vpack.c.b16 %v2213, %v2213
      %v2256 = vpack.c.b16 %v2214, %v2214
      %v2257 = vpack.c.b16 %v2215, %v2215
      %v2258 = vpack.c.b16 %v2216, %v2216
      %v2259 = vpack.c.b16 %v2217, %v2217
      %v2260 = vpack.c.b16 %v2218, %v2218
      %v2261 = vpack.c.b16 %v2219, %v2219
      %v2262 = vpack.c.b16 %v2220, %v2220
      %v2263 = vpack.c.b16 %v2221, %v2221
      %v2264 = vpack.c.b16 %v2222, %v2222
      %v2265 = vpack.c.b16 %v2223, %v2223
      %v2266 = vpack.c.b16 %v2224, %v2224
      %v2267 = vpack.c.b16 %v2225, %v2225
      %v2268 = vpack.c.b16 %v2226, %v2226
      %v2269 = vpack.c.b16 %v2227, %v2227
      %vm2312 = vcmask 519168
      %2313 = vst.msk [vmem:[%s233] sm:$0xf] %vm2312, %v2228
      %2314 = vst.msk [vmem:[%s233 + $0x4] sm:$0xf] %vm2312, %v2229
      %2315 = vst.msk [vmem:[%s233 + $0x8] sm:$0xf] %vm2312, %v2230
      %2316 = vst.msk [vmem:[%s233 + $0xc] sm:$0xf] %vm2312, %v2231
      %2317 = vst.msk [vmem:[%s233 + $0x10] sm:$0xf] %vm2312, %v2232
      %2318 = vst.msk [vmem:[%s233 + $0x14] sm:$0xf] %vm2312, %v2233
      %2319 = vst.msk [vmem:[%s233 + $0x18] sm:$0xf] %vm2312, %v2234
      %2320 = vst.msk [vmem:[%s233 + $0x1c] sm:$0xf] %vm2312, %v2235
      %2321 = vst.msk [vmem:[%s233 + $0x20] sm:$0xf] %vm2312, %v2236
      %2322 = vst.msk [vmem:[%s233 + $0x24] sm:$0xf] %vm2312, %v2237
      %2323 = vst.msk [vmem:[%s233 + $0x28] sm:$0xf] %vm2312, %v2238
      %2324 = vst.msk [vmem:[%s233 + $0x2c] sm:$0xf] %vm2312, %v2239
      %2325 = vst.msk [vmem:[%s233 + $0x30] sm:$0xf] %vm2312, %v2240
      %2326 = vst.msk [vmem:[%s233 + $0x34] sm:$0xf] %vm2312, %v2241
      %2327 = vst.msk [vmem:[%s233 + $0x38] sm:$0xf] %vm2312, %v2242
      %2328 = vst.msk [vmem:[%s233 + $0x3c] sm:$0xf] %vm2312, %v2243
      %2329 = vst.msk [vmem:[%s233 + $0x40] sm:$0xf] %vm2312, %v2244
      %2330 = vst.msk [vmem:[%s233 + $0x44] sm:$0xf] %vm2312, %v2245
      %2331 = vst.msk [vmem:[%s233 + $0x48] sm:$0xf] %vm2312, %v2246
      %2332 = vst.msk [vmem:[%s233 + $0x4c] sm:$0xf] %vm2312, %v2247
      %2333 = vst.msk [vmem:[%s233 + $0x50] sm:$0xf] %vm2312, %v2248
      %2334 = vst.msk [vmem:[%s233 + $0x54] sm:$0xf] %vm2312, %v2249
      %2335 = vst.msk [vmem:[%s233 + $0x58] sm:$0xf] %vm2312, %v2250
      %2336 = vst.msk [vmem:[%s233 + $0x5c] sm:$0xf] %vm2312, %v2251
      %2337 = vst.msk [vmem:[%s233 + $0x60] sm:$0xf] %vm2312, %v2252
      %2338 = vst.msk [vmem:[%s233 + $0x64] sm:$0xf] %vm2312, %v2253
      %2339 = vst.msk [vmem:[%s233 + $0x68] sm:$0xf] %vm2312, %v2254
      %2340 = vst.msk [vmem:[%s233 + $0x6c] sm:$0xf] %vm2312, %v2255
      %2341 = vst.msk [vmem:[%s233 + $0x70] sm:$0xf] %vm2312, %v2256
      %2342 = vst.msk [vmem:[%s233 + $0x74] sm:$0xf] %vm2312, %v2257
      %2343 = vst.msk [vmem:[%s233 + $0x78] sm:$0xf] %vm2312, %v2258
      %2344 = vst.msk [vmem:[%s233 + $0x7c] sm:$0xf] %vm2312, %v2259
      %2345 = vst.msk [vmem:[%s233 + $0x80] sm:$0xf] %vm2312, %v2260
      %2346 = vst.msk [vmem:[%s233 + $0x84] sm:$0xf] %vm2312, %v2261
      %2347 = vst.msk [vmem:[%s233 + $0x88] sm:$0xf] %vm2312, %v2262
      %2348 = vst.msk [vmem:[%s233 + $0x8c] sm:$0xf] %vm2312, %v2263
      %2349 = vst.msk [vmem:[%s233 + $0x90] sm:$0xf] %vm2312, %v2264
      %2350 = vst.msk [vmem:[%s233 + $0x94] sm:$0xf] %vm2312, %v2265
      %2351 = vst.msk [vmem:[%s233 + $0x98] sm:$0xf] %vm2312, %v2266
      %2352 = vst.msk [vmem:[%s233 + $0x9c] sm:$0xf] %vm2312, %v2267
      %2353 = vst.msk [vmem:[%s233 + $0xa0] sm:$0xf] %vm2312, %v2268
      %2354 = vst.msk [vmem:[%s233 + $0xa4] sm:$0xf] %vm2312, %v2269
      %v2355 = vunpack.c.l.bf16 %v2144
      %v2356 = vunpack.c.h.bf16 %v2144
      %v2357 = vunpack.c.l.bf16 %v2145
      %v2358 = vunpack.c.h.bf16 %v2145
      %v2359 = vunpack.c.l.bf16 %v2146
      %v2360 = vunpack.c.h.bf16 %v2146
      %v2361 = vunpack.c.l.bf16 %v2147
      %v2362 = vunpack.c.h.bf16 %v2147
      %v2363 = vunpack.c.l.bf16 %v2148
      %v2364 = vunpack.c.h.bf16 %v2148
      %v2365 = vunpack.c.l.bf16 %v2149
      %v2366 = vunpack.c.h.bf16 %v2149
      %v2367 = vunpack.c.l.bf16 %v2150
      %v2368 = vunpack.c.h.bf16 %v2150
      %v2369 = vunpack.c.l.bf16 %v2151
      %v2370 = vunpack.c.h.bf16 %v2151
      %v2371 = vunpack.c.l.bf16 %v2152
      %v2372 = vunpack.c.h.bf16 %v2152
      %v2373 = vunpack.c.l.bf16 %v2153
      %v2374 = vunpack.c.h.bf16 %v2153
      %v2375 = vunpack.c.l.bf16 %v2154
      %v2376 = vunpack.c.h.bf16 %v2154
      %v2377 = vunpack.c.l.bf16 %v2155
      %v2378 = vunpack.c.h.bf16 %v2155
      %v2379 = vunpack.c.l.bf16 %v2156
      %v2380 = vunpack.c.h.bf16 %v2156
      %v2381 = vunpack.c.l.bf16 %v2157
      %v2382 = vunpack.c.h.bf16 %v2157
      %v2383 = vunpack.c.l.bf16 %v2158
      %v2384 = vunpack.c.h.bf16 %v2158
      %v2385 = vunpack.c.l.bf16 %v2159
      %v2386 = vunpack.c.h.bf16 %v2159
      %v2387 = vunpack.c.l.bf16 %v2160
      %v2388 = vunpack.c.h.bf16 %v2160
      %v2389 = vunpack.c.l.bf16 %v2161
      %v2390 = vunpack.c.h.bf16 %v2161
      %v2391 = vunpack.c.l.bf16 %v2162
      %v2392 = vunpack.c.h.bf16 %v2162
      %v2393 = vunpack.c.l.bf16 %v2163
      %v2394 = vunpack.c.h.bf16 %v2163
      %v2395 = vunpack.c.l.bf16 %v2164
      %v2396 = vunpack.c.h.bf16 %v2164
      %vm2397 = vcmask 523264
      %v2398 = vsel %vm2397, %v2355, 0.0
      %v2399 = vsel %vm2397, %v2356, 0.0
      %v2400 = vadd.f32 %v2398, %v2399
      %v2401 = vsel %vm2397, %v2357, 0.0
      %v2402 = vadd.f32 %v2400, %v2401
      %v2403 = vsel %vm2397, %v2358, 0.0
      %v2404 = vadd.f32 %v2402, %v2403
      %v2405 = vsel %vm2397, %v2359, 0.0
      %v2406 = vadd.f32 %v2404, %v2405
      %v2407 = vsel %vm2397, %v2360, 0.0
      %v2408 = vadd.f32 %v2406, %v2407
      %v2409 = vsel %vm2397, %v2361, 0.0
      %v2410 = vadd.f32 %v2408, %v2409
      %v2411 = vsel %vm2397, %v2362, 0.0
      %v2412 = vadd.f32 %v2410, %v2411
      %v2413 = vsel %vm2397, %v2363, 0.0
      %v2414 = vadd.f32 %v2412, %v2413
      %v2415 = vsel %vm2397, %v2364, 0.0
      %v2416 = vadd.f32 %v2414, %v2415
      %v2417 = vsel %vm2397, %v2365, 0.0
      %v2418 = vadd.f32 %v2416, %v2417
      %v2419 = vsel %vm2397, %v2366, 0.0
      %v2420 = vadd.f32 %v2418, %v2419
      %v2421 = vsel %vm2397, %v2367, 0.0
      %v2422 = vadd.f32 %v2420, %v2421
      %v2423 = vsel %vm2397, %v2368, 0.0
      %v2424 = vadd.f32 %v2422, %v2423
      %v2425 = vsel %vm2397, %v2369, 0.0
      %v2426 = vadd.f32 %v2424, %v2425
      %v2427 = vsel %vm2397, %v2370, 0.0
      %v2428 = vadd.f32 %v2426, %v2427
      %v2429 = vsel %vm2397, %v2371, 0.0
      %v2430 = vadd.f32 %v2428, %v2429
      %v2431 = vsel %vm2397, %v2372, 0.0
      %v2432 = vadd.f32 %v2430, %v2431
      %v2433 = vsel %vm2397, %v2373, 0.0
      %v2434 = vadd.f32 %v2432, %v2433
      %v2435 = vsel %vm2397, %v2374, 0.0
      %v2436 = vadd.f32 %v2434, %v2435
      %v2437 = vsel %vm2397, %v2375, 0.0
      %v2438 = vadd.f32 %v2436, %v2437
      %v2439 = vsel %vm2397, %v2376, 0.0
      %v2440 = vadd.f32 %v2438, %v2439
      %v2441 = vsel %vm2397, %v2377, 0.0
      %v2442 = vadd.f32 %v2440, %v2441
      %v2443 = vsel %vm2397, %v2378, 0.0
      %v2444 = vadd.f32 %v2442, %v2443
      %v2445 = vsel %vm2397, %v2379, 0.0
      %v2446 = vadd.f32 %v2444, %v2445
      %v2447 = vsel %vm2397, %v2380, 0.0
      %v2448 = vadd.f32 %v2446, %v2447
      %v2449 = vsel %vm2397, %v2381, 0.0
      %v2450 = vadd.f32 %v2448, %v2449
      %v2451 = vsel %vm2397, %v2382, 0.0
      %v2452 = vadd.f32 %v2450, %v2451
      %v2453 = vsel %vm2397, %v2383, 0.0
      %v2454 = vadd.f32 %v2452, %v2453
      %v2455 = vsel %vm2397, %v2384, 0.0
      %v2456 = vadd.f32 %v2454, %v2455
      %v2457 = vsel %vm2397, %v2385, 0.0
      %v2458 = vadd.f32 %v2456, %v2457
      %v2459 = vsel %vm2397, %v2386, 0.0
      %v2460 = vadd.f32 %v2458, %v2459
      %v2461 = vsel %vm2397, %v2387, 0.0
      %v2462 = vadd.f32 %v2460, %v2461
      %v2463 = vsel %vm2397, %v2388, 0.0
      %v2464 = vadd.f32 %v2462, %v2463
      %v2465 = vsel %vm2397, %v2389, 0.0
      %v2466 = vadd.f32 %v2464, %v2465
      %v2467 = vsel %vm2397, %v2390, 0.0
      %v2468 = vadd.f32 %v2466, %v2467
      %v2469 = vsel %vm2397, %v2391, 0.0
      %v2470 = vadd.f32 %v2468, %v2469
      %v2471 = vsel %vm2397, %v2392, 0.0
      %v2472 = vadd.f32 %v2470, %v2471
      %v2473 = vsel %vm2397, %v2393, 0.0
      %v2474 = vadd.f32 %v2472, %v2473
      %v2475 = vsel %vm2397, %v2394, 0.0
      %v2476 = vadd.f32 %v2474, %v2475
      %v2477 = vsel %vm2397, %v2395, 0.0
      %v2478 = vadd.f32 %v2476, %v2477
      %v2479 = vsel %vm2397, %v2396, 0.0
      %v2480 = vadd.f32 %v2478, %v2479
      %v2481 = vrot.slane %v2480, 4
      %v2482 = vadd.f32 %v2480, %v2481
      %v2483 = vrot.slane %v2482, 2
      %v2484 = vadd.f32 %v2482, %v2483
      %v2485 = vrot.slane %v2484, 1
      %v2486 = vadd.f32 %v2484, %v2485
      %v2487 = vmul.f32 %v2355, %v2355
      %v2488 = vmul.f32 %v2356, %v2356
      %v2489 = vmul.f32 %v2357, %v2357
      %v2490 = vmul.f32 %v2358, %v2358
      %v2491 = vmul.f32 %v2359, %v2359
      %v2492 = vmul.f32 %v2360, %v2360
      %v2493 = vmul.f32 %v2361, %v2361
      %v2494 = vmul.f32 %v2362, %v2362
      %v2495 = vmul.f32 %v2363, %v2363
      %v2496 = vmul.f32 %v2364, %v2364
      %v2497 = vmul.f32 %v2365, %v2365
      %v2498 = vmul.f32 %v2366, %v2366
      %v2499 = vmul.f32 %v2367, %v2367
      %v2500 = vmul.f32 %v2368, %v2368
      %v2501 = vmul.f32 %v2369, %v2369
      %v2502 = vmul.f32 %v2370, %v2370
      %v2503 = vmul.f32 %v2371, %v2371
      %v2504 = vmul.f32 %v2372, %v2372
      %v2505 = vmul.f32 %v2373, %v2373
      %v2506 = vmul.f32 %v2374, %v2374
      %v2507 = vmul.f32 %v2375, %v2375
      %v2508 = vmul.f32 %v2376, %v2376
      %v2509 = vmul.f32 %v2377, %v2377
      %v2510 = vmul.f32 %v2378, %v2378
      %v2511 = vmul.f32 %v2379, %v2379
      %v2512 = vmul.f32 %v2380, %v2380
      %v2513 = vmul.f32 %v2381, %v2381
      %v2514 = vmul.f32 %v2382, %v2382
      %v2515 = vmul.f32 %v2383, %v2383
      %v2516 = vmul.f32 %v2384, %v2384
      %v2517 = vmul.f32 %v2385, %v2385
      %v2518 = vmul.f32 %v2386, %v2386
      %v2519 = vmul.f32 %v2387, %v2387
      %v2520 = vmul.f32 %v2388, %v2388
      %v2521 = vmul.f32 %v2389, %v2389
      %v2522 = vmul.f32 %v2390, %v2390
      %v2523 = vmul.f32 %v2391, %v2391
      %v2524 = vmul.f32 %v2392, %v2392
      %v2525 = vmul.f32 %v2393, %v2393
      %v2526 = vmul.f32 %v2394, %v2394
      %v2527 = vmul.f32 %v2395, %v2395
      %v2528 = vmul.f32 %v2396, %v2396
      %v2529 = vsel %vm2397, %v2487, 0.0
      %v2530 = vsel %vm2397, %v2488, 0.0
      %v2531 = vadd.f32 %v2529, %v2530
      %v2532 = vsel %vm2397, %v2489, 0.0
      %v2533 = vadd.f32 %v2531, %v2532
      %v2534 = vsel %vm2397, %v2490, 0.0
      %v2535 = vadd.f32 %v2533, %v2534
      %v2536 = vsel %vm2397, %v2491, 0.0
      %v2537 = vadd.f32 %v2535, %v2536
      %v2538 = vsel %vm2397, %v2492, 0.0
      %v2539 = vadd.f32 %v2537, %v2538
      %v2540 = vsel %vm2397, %v2493, 0.0
      %v2541 = vadd.f32 %v2539, %v2540
      %v2542 = vsel %vm2397, %v2494, 0.0
      %v2543 = vadd.f32 %v2541, %v2542
      %v2544 = vsel %vm2397, %v2495, 0.0
      %v2545 = vadd.f32 %v2543, %v2544
      %v2546 = vsel %vm2397, %v2496, 0.0
      %v2547 = vadd.f32 %v2545, %v2546
      %v2548 = vsel %vm2397, %v2497, 0.0
      %v2549 = vadd.f32 %v2547, %v2548
      %v2550 = vsel %vm2397, %v2498, 0.0
      %v2551 = vadd.f32 %v2549, %v2550
      %v2552 = vsel %vm2397, %v2499, 0.0
      %v2553 = vadd.f32 %v2551, %v2552
      %v2554 = vsel %vm2397, %v2500, 0.0
      %v2555 = vadd.f32 %v2553, %v2554
      %v2556 = vsel %vm2397, %v2501, 0.0
      %v2557 = vadd.f32 %v2555, %v2556
      %v2558 = vsel %vm2397, %v2502, 0.0
      %v2559 = vadd.f32 %v2557, %v2558
      %v2560 = vsel %vm2397, %v2503, 0.0
      %v2561 = vadd.f32 %v2559, %v2560
      %v2562 = vsel %vm2397, %v2504, 0.0
      %v2563 = vadd.f32 %v2561, %v2562
      %v2564 = vsel %vm2397, %v2505, 0.0
      %v2565 = vadd.f32 %v2563, %v2564
      %v2566 = vsel %vm2397, %v2506, 0.0
      %v2567 = vadd.f32 %v2565, %v2566
      %v2568 = vsel %vm2397, %v2507, 0.0
      %v2569 = vadd.f32 %v2567, %v2568
      %v2570 = vsel %vm2397, %v2508, 0.0
      %v2571 = vadd.f32 %v2569, %v2570
      %v2572 = vsel %vm2397, %v2509, 0.0
      %v2573 = vadd.f32 %v2571, %v2572
      %v2574 = vsel %vm2397, %v2510, 0.0
      %v2575 = vadd.f32 %v2573, %v2574
      %v2576 = vsel %vm2397, %v2511, 0.0
      %v2577 = vadd.f32 %v2575, %v2576
      %v2578 = vsel %vm2397, %v2512, 0.0
      %v2579 = vadd.f32 %v2577, %v2578
      %v2580 = vsel %vm2397, %v2513, 0.0
      %v2581 = vadd.f32 %v2579, %v2580
      %v2582 = vsel %vm2397, %v2514, 0.0
      %v2583 = vadd.f32 %v2581, %v2582
      %v2584 = vsel %vm2397, %v2515, 0.0
      %v2585 = vadd.f32 %v2583, %v2584
      %v2586 = vsel %vm2397, %v2516, 0.0
      %v2587 = vadd.f32 %v2585, %v2586
      %v2588 = vsel %vm2397, %v2517, 0.0
      %v2589 = vadd.f32 %v2587, %v2588
      %v2590 = vsel %vm2397, %v2518, 0.0
      %v2591 = vadd.f32 %v2589, %v2590
      %v2592 = vsel %vm2397, %v2519, 0.0
      %v2593 = vadd.f32 %v2591, %v2592
      %v2594 = vsel %vm2397, %v2520, 0.0
      %v2595 = vadd.f32 %v2593, %v2594
      %v2596 = vsel %vm2397, %v2521, 0.0
      %v2597 = vadd.f32 %v2595, %v2596
      %v2598 = vsel %vm2397, %v2522, 0.0
      %v2599 = vadd.f32 %v2597, %v2598
      %v2600 = vsel %vm2397, %v2523, 0.0
      %v2601 = vadd.f32 %v2599, %v2600
      %v2602 = vsel %vm2397, %v2524, 0.0
      %v2603 = vadd.f32 %v2601, %v2602
      %v2604 = vsel %vm2397, %v2525, 0.0
      %v2605 = vadd.f32 %v2603, %v2604
      %v2606 = vsel %vm2397, %v2526, 0.0
      %v2607 = vadd.f32 %v2605, %v2606
      %v2608 = vsel %vm2397, %v2527, 0.0
      %v2609 = vadd.f32 %v2607, %v2608
      %v2610 = vsel %vm2397, %v2528, 0.0
      %v2611 = vadd.f32 %v2609, %v2610
      %v2612 = vrot.slane %v2611, 4
      %v2613 = vadd.f32 %v2611, %v2612
      %v2614 = vrot.slane %v2613, 2
      %v2615 = vadd.f32 %v2613, %v2614
      %v2616 = vrot.slane %v2615, 1
      %v2617 = vadd.f32 %v2615, %v2616
      %vm2618 = vcmask 1040384
      %v2619 = vsel %vm2618, %v2486, %v2617
      %vm2620 = vcmask 517120
      %2621 = vst.msk [vmem:[%s238] sm:$0x3] %vm2620, %v2619
      %s2622 = smul.u32 42, %s17
      %p2623 = scmp.lt.s32.totalorder %s2622, 83
      %s2624 = scalar_select %p2623, %s2622, 83
      %s2625 = smul.addr %s2624, 4
      %s2626 = scalar_lea.vmem %s4, %s2625
      %p2627 = scmp.lt.s32.totalorder %s17, 1
      %s2628 = scalar_select %p2627, %s17, 1
      %s2629 = smul.addr %s2628, 2
      %s2630 = scalar_lea.vmem %s5, %s2629
      // Predicated region
      $region37: #{decoder_forward.3} parent=35 // pred_check
        %p2631 = pneg %p124
      $region38: #{decoder_forward.3} parent=35 // pred_check_branch
        %2633 = sbr.rel (%p2631) target = $region40
      $region39: #{decoder_forward.3} parent=35 // pred_region
        %s2634 = smul.u32 42, %s17
      $region40: #{decoder_forward.3} parent=35 // pred_fallthru
        _
      // Predicated region
      $region41: #{decoder_forward.3} parent=35 // pred_check
        %p2635 = pneg %p150
      $region42: #{decoder_forward.3} parent=35 // pred_check_branch
        %2637 = sbr.rel (%p2635) target = $region44
      $region43: #{decoder_forward.3} parent=35 // pred_region
        _
      $region44: #{decoder_forward.3} parent=35 // pred_fallthru
        _
    $region36: #{decoder_forward.3} parent=5 // pred_fallthru
      _
    %p2638 = scmp.le.s32.totalorder 2, %s12
    // Predicated region
    $region45: #{decoder_forward.3} parent=5 // pred_check
      %p2639 = pneg %p2638
    $region46: #{decoder_forward.3} parent=5 // pred_check_branch
      %2641 = sbr.rel (%p2639) target = $region48
    $region47: #{decoder_forward.3} parent=5 // pred_region
      %s2642 = ssub.s32 %s12, 2
      // Predicated region
      $region49: #{decoder_forward.3} parent=47 // pred_check
        %p2643 = pneg %p130
      $region50: #{decoder_forward.3} parent=47 // pred_check_branch
        %2645 = sbr.rel (%p2643) target = $region52
      $region51: #{decoder_forward.3} parent=47 // pred_region
        %s2646 = smul.u32 42, %s18
        %p2647 = scmp.lt.s32.totalorder %s2646, 83
        %s2648 = scalar_select %p2647, %s2646, 83
        %s2649 = smul.addr %s2648, 4
        %s2650 = scalar_lea.vmem %s4, %s2649
      $region52: #{decoder_forward.3} parent=47 // pred_fallthru
        _
      // Predicated region
      $region53: #{decoder_forward.3} parent=47 // pred_check
        %p2651 = pneg %p156
      $region54: #{decoder_forward.3} parent=47 // pred_check_branch
        %2653 = sbr.rel (%p2651) target = $region56
      $region55: #{decoder_forward.3} parent=47 // pred_region
        %p2654 = scmp.lt.s32.totalorder %s18, 1
        %s2655 = scalar_select %p2654, %s18, 1
        %s2656 = smul.addr %s2655, 2
        %s2657 = scalar_lea.vmem %s5, %s2656
      $region56: #{decoder_forward.3} parent=47 // pred_fallthru
        _
    $region48: #{decoder_forward.3} parent=5 // pred_fallthru
      _
  $region6: #{decoder_forward.3} parent=0 // loop_footer
    %s16 = sadd.s32 1, %s12
  $region7: #{decoder_forward.3} parent=0 // loop_footer_branch
    %11 = sbr.rel target = $region3
  $region8: #{decoder_forward.3} parent=0 // loop_exit
    _

// kernel: decoder_forward.4
$region0: #{decoder_forward.4}
  #allocation0 [shape = 'u32[]', space=smem, size = 0x4, offset = 0x4, fixed_abs, tag = 'smem constant byte address 0x4 - core index']
  #allocation1 [shape = 'u32[144,128]{1,0:T(1,128)}', space=vmem, size = 0x12000, scoped, tag = 'internal scratch']
  #allocation2 [shape = 'f32[336,64]{1,0:T(8,128)}', space=vmem, size = 0x2a000, scoped, tag = 'scratch operand']
  %s0 = inlined_call_operand.vmem [shape: f32[336,1], index: 0, kind: input, shape index: {}]
  %s1 = inlined_call_operand.vmem [shape: bf16[672,64], index: 1, kind: input, shape index: {}]
  %s2 = inlined_call_operand.vmem [shape: f32[1,64], index: 2, kind: input, shape index: {}]
  %s3 = inlined_call_operand.vmem [shape: f32[1,64], index: 3, kind: input, shape index: {}]
  %s4 = inlined_call_operand.vmem [shape: bf16[576,64], index: 4, kind: input, shape index: {}]
  %s5 = inlined_call_operand.vmem [shape: f32[1,64], index: 5, kind: input, shape index: {}]
  %s6 = inlined_call_operand.vmem [shape: bf16[672,64], index: 6, kind: output, shape index: {0}]
  %s7 = inlined_call_operand.vmem [shape: f32[2,2,64], index: 7, kind: output, shape index: {1}]
  %8 = xla_tuple %s6, %s7
  %s9 = sld [smem:[#allocation0]]
  $region65: #{decoder_forward.4} parent=0
    _
  %s11 = ssub.s32 1, %s9
  %s12 = scalar_select 0, %s11, %s9
  loop: start=0, step=1, limit=4
  $region2: #{decoder_forward.4} parent=0 // loop_pre_header
    _
  $region3: #{decoder_forward.4} parent=0 // loop_header
    %s14 = sphi 0, %s18
    %p15 = scmp.ge.s32.totalorder %s14, 4
    %s22 = sphi 0, %s22
    %s24 = sphi 0, %s22
    %s25 = sphi 0, %s24
    %s39 = sphi 0, %s25
    %s45 = sphi 0, %s47
    %s48 = sphi 0, %s45
    %s49 = sphi 0, %s48
    %s65 = sphi 0, %s49
    %s69 = sphi 0, %s69
    %s71 = sphi 0, %s69
    %s72 = sphi 0, %s71
    %s86 = sphi 0, %s72
    %s90 = sphi 0, %s90
    %s92 = sphi 0, %s90
    %s93 = sphi 0, %s92
    %s107 = sphi 0, %s93
    %s111 = sphi 0, %s111
    %s113 = sphi 0, %s111
    %s114 = sphi 0, %s113
    %s128 = sphi 0, %s114
    %s132 = sphi 0, %s132
    %s134 = sphi 0, %s132
    %s135 = sphi 0, %s134
    %s149 = sphi 0, %s135
    %s155 = sphi 0, %s157
    %s158 = sphi 0, %s155
    %s159 = sphi 0, %s158
    %s175 = sphi 0, %s159
    %s181 = sphi 0, %s183
    %s184 = sphi 0, %s181
    %s185 = sphi 0, %s184
    %s201 = sphi 0, %s185
  $region4: #{decoder_forward.4} parent=0 // loop_header_branch
    %17 = sbr.rel (%p15) target = $region8
  $region5: #{decoder_forward.4} parent=0 // loop_body
    %s19 = ssub.s32 %s14, 1
    %s20 = ssub.s32 %s14, 2
    %s21 = sadd.s32 %s14, 1
    %s23 = sadd.s32 %s22, 1
    %p26 = scmp.eq.s32.totalorder %s14, 1
    %p27 = scmp.ne.s32.totalorder %s22, %s24
    %p28 = scmp.eq.s32.totalorder %s14, 0
    %p29 = por %p27, %p28
    %p30 = scmp.ne.s32.totalorder %s22, %s24
    %p31 = scmp.eq.s32.totalorder %s19, 1
    %p32 = por %p30, %p31
    %p33 = scmp.ne.s32.totalorder %s24, %s25
    %p34 = scmp.eq.s32.totalorder %s19, 0
    %p35 = por %p33, %p34
    %p36 = scmp.ne.s32.totalorder %s24, %s25
    %p37 = scmp.eq.s32.totalorder %s20, 1
    %p38 = por %p36, %p37
    %p40 = scmp.ne.s32.totalorder %s25, %s39
    %p41 = scmp.eq.s32.totalorder %s20, 0
    %p42 = por %p40, %p41
    %s43 = ssub.s32 %s14, %s21
    %p44 = scmp.eq.s32.totalorder %s43, 0
    %s46 = sadd.s32 %s45, 1
    %s47 = scalar_select %p44, %s45, %s46
    %p50 = pneg %p44
    %p51 = scmp.eq.s32.totalorder %s14, 1
    %p52 = por %p50, %p51
    %p53 = scmp.ne.s32.totalorder %s45, %s48
    %p54 = scmp.eq.s32.totalorder %s14, 0
    %p55 = por %p53, %p54
    %p56 = scmp.ne.s32.totalorder %s45, %s48
    %p57 = scmp.eq.s32.totalorder %s19, 1
    %p58 = por %p56, %p57
    %p59 = scmp.ne.s32.totalorder %s48, %s49
    %p60 = scmp.eq.s32.totalorder %s19, 0
    %p61 = por %p59, %p60
    %p62 = scmp.ne.s32.totalorder %s48, %s49
    %p63 = scmp.eq.s32.totalorder %s20, 1
    %p64 = por %p62, %p63
    %p66 = scmp.ne.s32.totalorder %s49, %s65
    %p67 = scmp.eq.s32.totalorder %s20, 0
    %p68 = por %p66, %p67
    %s70 = sadd.s32 %s69, 1
    %p73 = scmp.eq.s32.totalorder %s14, 1
    %p74 = scmp.ne.s32.totalorder %s69, %s71
    %p75 = scmp.eq.s32.totalorder %s14, 0
    %p76 = por %p74, %p75
    %p77 = scmp.ne.s32.totalorder %s69, %s71
    %p78 = scmp.eq.s32.totalorder %s19, 1
    %p79 = por %p77, %p78
    %p80 = scmp.ne.s32.totalorder %s71, %s72
    %p81 = scmp.eq.s32.totalorder %s19, 0
    %p82 = por %p80, %p81
    %p83 = scmp.ne.s32.totalorder %s71, %s72
    %p84 = scmp.eq.s32.totalorder %s20, 1
    %p85 = por %p83, %p84
    %p87 = scmp.ne.s32.totalorder %s72, %s86
    %p88 = scmp.eq.s32.totalorder %s20, 0
    %p89 = por %p87, %p88
    %s91 = sadd.s32 %s90, 1
    %p94 = scmp.eq.s32.totalorder %s14, 1
    %p95 = scmp.ne.s32.totalorder %s90, %s92
    %p96 = scmp.eq.s32.totalorder %s14, 0
    %p97 = por %p95, %p96
    %p98 = scmp.ne.s32.totalorder %s90, %s92
    %p99 = scmp.eq.s32.totalorder %s19, 1
    %p100 = por %p98, %p99
    %p101 = scmp.ne.s32.totalorder %s92, %s93
    %p102 = scmp.eq.s32.totalorder %s19, 0
    %p103 = por %p101, %p102
    %p104 = scmp.ne.s32.totalorder %s92, %s93
    %p105 = scmp.eq.s32.totalorder %s20, 1
    %p106 = por %p104, %p105
    %p108 = scmp.ne.s32.totalorder %s93, %s107
    %p109 = scmp.eq.s32.totalorder %s20, 0
    %p110 = por %p108, %p109
    %s112 = sadd.s32 %s111, 1
    %p115 = scmp.eq.s32.totalorder %s14, 1
    %p116 = scmp.ne.s32.totalorder %s111, %s113
    %p117 = scmp.eq.s32.totalorder %s14, 0
    %p118 = por %p116, %p117
    %p119 = scmp.ne.s32.totalorder %s111, %s113
    %p120 = scmp.eq.s32.totalorder %s19, 1
    %p121 = por %p119, %p120
    %p122 = scmp.ne.s32.totalorder %s113, %s114
    %p123 = scmp.eq.s32.totalorder %s19, 0
    %p124 = por %p122, %p123
    %p125 = scmp.ne.s32.totalorder %s113, %s114
    %p126 = scmp.eq.s32.totalorder %s20, 1
    %p127 = por %p125, %p126
    %p129 = scmp.ne.s32.totalorder %s114, %s128
    %p130 = scmp.eq.s32.totalorder %s20, 0
    %p131 = por %p129, %p130
    %s133 = sadd.s32 %s132, 1
    %p136 = scmp.eq.s32.totalorder %s14, 1
    %p137 = scmp.ne.s32.totalorder %s132, %s134
    %p138 = scmp.eq.s32.totalorder %s14, 0
    %p139 = por %p137, %p138
    %p140 = scmp.ne.s32.totalorder %s132, %s134
    %p141 = scmp.eq.s32.totalorder %s19, 1
    %p142 = por %p140, %p141
    %p143 = scmp.ne.s32.totalorder %s134, %s135
    %p144 = scmp.eq.s32.totalorder %s19, 0
    %p145 = por %p143, %p144
    %p146 = scmp.ne.s32.totalorder %s134, %s135
    %p147 = scmp.eq.s32.totalorder %s20, 1
    %p148 = por %p146, %p147
    %p150 = scmp.ne.s32.totalorder %s135, %s149
    %p151 = scmp.eq.s32.totalorder %s20, 0
    %p152 = por %p150, %p151
    %s153 = ssub.s32 %s14, %s21
    %p154 = scmp.eq.s32.totalorder %s153, 0
    %s156 = sadd.s32 %s155, 1
    %s157 = scalar_select %p154, %s155, %s156
    %p160 = pneg %p154
    %p161 = scmp.eq.s32.totalorder %s14, 1
    %p162 = por %p160, %p161
    %p163 = scmp.ne.s32.totalorder %s155, %s158
    %p164 = scmp.eq.s32.totalorder %s14, 0
    %p165 = por %p163, %p164
    %p166 = scmp.ne.s32.totalorder %s155, %s158
    %p167 = scmp.eq.s32.totalorder %s19, 1
    %p168 = por %p166, %p167
    %p169 = scmp.ne.s32.totalorder %s158, %s159
    %p170 = scmp.eq.s32.totalorder %s19, 0
    %p171 = por %p169, %p170
    %p172 = scmp.ne.s32.totalorder %s158, %s159
    %p173 = scmp.eq.s32.totalorder %s20, 1
    %p174 = por %p172, %p173
    %p176 = scmp.ne.s32.totalorder %s159, %s175
    %p177 = scmp.eq.s32.totalorder %s20, 0
    %p178 = por %p176, %p177
    %s179 = ssub.s32 %s14, %s21
    %p180 = scmp.eq.s32.totalorder %s179, 0
    %s182 = sadd.s32 %s181, 1
    %s183 = scalar_select %p180, %s181, %s182
    %p186 = pneg %p180
    %p187 = scmp.eq.s32.totalorder %s14, 1
    %p188 = por %p186, %p187
    %p189 = scmp.ne.s32.totalorder %s181, %s184
    %p190 = scmp.eq.s32.totalorder %s14, 0
    %p191 = por %p189, %p190
    %p192 = scmp.ne.s32.totalorder %s181, %s184
    %p193 = scmp.eq.s32.totalorder %s19, 1
    %p194 = por %p192, %p193
    %p195 = scmp.ne.s32.totalorder %s184, %s185
    %p196 = scmp.eq.s32.totalorder %s19, 0
    %p197 = por %p195, %p196
    %p198 = scmp.ne.s32.totalorder %s184, %s185
    %p199 = scmp.eq.s32.totalorder %s20, 1
    %p200 = por %p198, %p199
    %p202 = scmp.ne.s32.totalorder %s185, %s201
    %p203 = scmp.eq.s32.totalorder %s20, 0
    %p204 = por %p202, %p203
    %p205 = scmp.le.s32.totalorder 1, %s14
    %p206 = scmp.lt.s32.totalorder %s14, 3
    %p207 = pnand %p205, %p206
    %p208 = pneg %p207
    // Predicated region
    $region9: #{decoder_forward.4} parent=5 // pred_check
      _
    $region10: #{decoder_forward.4} parent=5 // pred_check_branch
      %210 = sbr.rel (%p207) target = $region12
    $region11: #{decoder_forward.4} parent=5 // pred_region
      %s211 = ssub.s32 %s14, 1
      // Predicated region
      $region13: #{decoder_forward.4} parent=11 // pred_check
        %p212 = pneg %p35
      $region14: #{decoder_forward.4} parent=11 // pred_check_branch
        %214 = sbr.rel (%p212) target = $region16
      $region15: #{decoder_forward.4} parent=11 // pred_region
        _
      $region16: #{decoder_forward.4} parent=11 // pred_fallthru
        _
      // Predicated region
      $region17: #{decoder_forward.4} parent=11 // pred_check
        %p215 = pneg %p82
      $region18: #{decoder_forward.4} parent=11 // pred_check_branch
        %217 = sbr.rel (%p215) target = $region20
      $region19: #{decoder_forward.4} parent=11 // pred_region
        _
      $region20: #{decoder_forward.4} parent=11 // pred_fallthru
        _
      // Predicated region
      $region21: #{decoder_forward.4} parent=11 // pred_check
        %p218 = pneg %p103
      $region22: #{decoder_forward.4} parent=11 // pred_check_branch
        %220 = sbr.rel (%p218) target = $region24
      $region23: #{decoder_forward.4} parent=11 // pred_region
        _
      $region24: #{decoder_forward.4} parent=11 // pred_fallthru
        _
      // Predicated region
      $region25: #{decoder_forward.4} parent=11 // pred_check
        %p221 = pneg %p124
      $region26: #{decoder_forward.4} parent=11 // pred_check_branch
        %223 = sbr.rel (%p221) target = $region28
      $region27: #{decoder_forward.4} parent=11 // pred_region
        _
      $region28: #{decoder_forward.4} parent=11 // pred_fallthru
        _
      // Predicated region
      $region29: #{decoder_forward.4} parent=11 // pred_check
        %p224 = pneg %p145
      $region30: #{decoder_forward.4} parent=11 // pred_check_branch
        %226 = sbr.rel (%p224) target = $region32
      $region31: #{decoder_forward.4} parent=11 // pred_region
        _
      $region32: #{decoder_forward.4} parent=11 // pred_fallthru
        _
    $region12: #{decoder_forward.4} parent=5 // pred_fallthru
      _
    %p227 = scmp.lt.s32.totalorder %s14, 2
    // Predicated region
    $region33: #{decoder_forward.4} parent=5 // pred_check
      %p228 = pneg %p227
    $region34: #{decoder_forward.4} parent=5 // pred_check_branch
      %230 = sbr.rel (%p228) target = $region36
    $region35: #{decoder_forward.4} parent=5 // pred_region
      // Predicated region
      $region37: #{decoder_forward.4} parent=35 // pred_check
        %p231 = pneg %p55
      $region38: #{decoder_forward.4} parent=35 // pred_check_branch
        %233 = sbr.rel (%p231) target = $region40
      $region39: #{decoder_forward.4} parent=35 // pred_region
        %s234 = smul.u32 42, %s14
        %p235 = scmp.lt.s32.totalorder %s234, 83
        %s236 = scalar_select %p235, %s234, 83
        %s237 = smul.addr %s236, 4
        %s238 = scalar_lea.vmem %s1, %s237
        %s239 = smul.u32 42, %s14
      $region40: #{decoder_forward.4} parent=35 // pred_fallthru
        _
    $region36: #{decoder_forward.4} parent=5 // pred_fallthru
      _
    %p240 = scmp.le.s32.totalorder 1, %s14
    %p241 = scmp.lt.s32.totalorder %s14, 3
    %p242 = pnand %p240, %p241
    %p243 = pneg %p242
    // Predicated region
    $region41: #{decoder_forward.4} parent=5 // pred_check
      _
    $region42: #{decoder_forward.4} parent=5 // pred_check_branch
      %245 = sbr.rel (%p242) target = $region44
    $region43: #{decoder_forward.4} parent=5 // pred_region
      %s246 = ssub.s32 %s14, 1
      %p247 = pneg %p35
      %p248 = pneg %p32
      %s249 = smul.u32 42, %s19
      %p250 = scmp.lt.s32.totalorder %s249, 83
      %s251 = scalar_select %p250, %s249, 83
      %s252 = smul.addr %s251, 4
      %s253 = scalar_lea.vmem %s1, %s252
      %p254 = pneg %p61
      %p255 = pneg %p58
      %p256 = pneg %p82
      %p257 = pneg %p79
      %p258 = pneg %p103
      %p259 = pneg %p100
      %p260 = pneg %p124
      %p261 = pneg %p121
      %p262 = pneg %p145
      %p263 = pneg %p142
      %p264 = pneg %p171
      %p265 = pneg %p168
      %s266 = smul.u32 42, %s19
      %p267 = scmp.lt.s32.totalorder %s266, 83
      %s268 = scalar_select %p267, %s266, 83
      %s269 = smul.addr %s268, 4
      %s270 = scalar_lea.vmem %s6, %s269
      %p271 = pneg %p197
      %p272 = pneg %p194
      %p273 = scmp.lt.s32.totalorder %s19, 1
      %s274 = scalar_select %p273, %s19, 1
      %s275 = smul.addr %s274, 2
      %s276 = scalar_lea.vmem %s7, %s275
      %s277 = smul.u32 42, %s19
      %p278 = scmp.lt.s32.totalorder %s277, 83
      %s279 = scalar_select %p278, %s277, 83
      %s280 = smul.addr %s279, 4
      %s281 = scalar_lea.vmem %s1, %s280
      %s282 = smul.u32 42, %s19
      %s283 = smul.u32 42, %s19
      %p284 = scmp.lt.s32.totalorder %s283, 83
      %s285 = scalar_select %p284, %s283, 83
      %s286 = smul.addr %s285, 4
      %s287 = scalar_lea.vmem %s6, %s286
      %s288 = smul.u32 42, %s19
      %p289 = scmp.lt.s32.totalorder %s19, 1
      %s290 = scalar_select %p289, %s19, 1
      %s291 = smul.addr %s290, 2
      %s292 = scalar_lea.vmem %s7, %s291
      %v294 = vld [vmem:[%s0] sm:$0xff]
      %v295 = vld [vmem:[%s0 + $0x8] sm:$0xff]
      %v296 = vld [vmem:[%s0 + $0x10] sm:$0xff]
      %v297 = vld [vmem:[%s0 + $0x18] sm:$0xff]
      %v298 = vld [vmem:[%s0 + $0x20] sm:$0xff]
      %v299 = vld [vmem:[%s0 + $0x28] sm:$0xff]
      %v300 = vld [vmem:[%s0 + $0x30] sm:$0xff]
      %v301 = vld [vmem:[%s0 + $0x38] sm:$0xff]
      %v302 = vld [vmem:[%s0 + $0x40] sm:$0xff]
      %v303 = vld [vmem:[%s0 + $0x48] sm:$0xff]
      %v304 = vld [vmem:[%s0 + $0x50] sm:$0xff]
      %v305 = vld [vmem:[%s0 + $0x58] sm:$0xff]
      %v306 = vld [vmem:[%s0 + $0x60] sm:$0xff]
      %v307 = vld [vmem:[%s0 + $0x68] sm:$0xff]
      %v308 = vld [vmem:[%s0 + $0x70] sm:$0xff]
      %v309 = vld [vmem:[%s0 + $0x78] sm:$0xff]
      %v310 = vld [vmem:[%s0 + $0x80] sm:$0xff]
      %v311 = vld [vmem:[%s0 + $0x88] sm:$0xff]
      %v312 = vld [vmem:[%s0 + $0x90] sm:$0xff]
      %v313 = vld [vmem:[%s0 + $0x98] sm:$0xff]
      %v314 = vld [vmem:[%s0 + $0xa0] sm:$0xff]
      %v315 = vld [vmem:[%s0 + $0xa8] sm:$0xff]
      %v316 = vld [vmem:[%s0 + $0xb0] sm:$0xff]
      %v317 = vld [vmem:[%s0 + $0xb8] sm:$0xff]
      %v318 = vld [vmem:[%s0 + $0xc0] sm:$0xff]
      %v319 = vld [vmem:[%s0 + $0xc8] sm:$0xff]
      %v320 = vld [vmem:[%s0 + $0xd0] sm:$0xff]
      %v321 = vld [vmem:[%s0 + $0xd8] sm:$0xff]
      %v322 = vld [vmem:[%s0 + $0xe0] sm:$0xff]
      %v323 = vld [vmem:[%s0 + $0xe8] sm:$0xff]
      %v324 = vld [vmem:[%s0 + $0xf0] sm:$0xff]
      %v325 = vld [vmem:[%s0 + $0xf8] sm:$0xff]
      %v326 = vld [vmem:[%s0 + $0x100] sm:$0xff]
      %v327 = vld [vmem:[%s0 + $0x108] sm:$0xff]
      %v328 = vld [vmem:[%s0 + $0x110] sm:$0xff]
      %v329 = vld [vmem:[%s0 + $0x118] sm:$0xff]
      %v330 = vld [vmem:[%s0 + $0x120] sm:$0xff]
      %v331 = vld [vmem:[%s0 + $0x128] sm:$0xff]
      %v332 = vld [vmem:[%s0 + $0x130] sm:$0xff]
      %v333 = vld [vmem:[%s0 + $0x138] sm:$0xff]
      %v334 = vld [vmem:[%s0 + $0x140] sm:$0xff]
      %v335 = vld [vmem:[%s0 + $0x148] sm:$0xff]
      %v336 = vld [vmem:[%s281] sm:$0xf]
      %v337 = vld [vmem:[%s281 + $0x4] sm:$0xf]
      %v338 = vld [vmem:[%s281 + $0x8] sm:$0xf]
      %v339 = vld [vmem:[%s281 + $0xc] sm:$0xf]
      %v340 = vld [vmem:[%s281 + $0x10] sm:$0xf]
      %v341 = vld [vmem:[%s281 + $0x14] sm:$0xf]
      %v342 = vld [vmem:[%s281 + $0x18] sm:$0xf]
      %v343 = vld [vmem:[%s281 + $0x1c] sm:$0xf]
      %v344 = vld [vmem:[%s281 + $0x20] sm:$0xf]
      %v345 = vld [vmem:[%s281 + $0x24] sm:$0xf]
      %v346 = vld [vmem:[%s281 + $0x28] sm:$0xf]
      %v347 = vld [vmem:[%s281 + $0x2c] sm:$0xf]
      %v348 = vld [vmem:[%s281 + $0x30] sm:$0xf]
      %v349 = vld [vmem:[%s281 + $0x34] sm:$0xf]
      %v350 = vld [vmem:[%s281 + $0x38] sm:$0xf]
      %v351 = vld [vmem:[%s281 + $0x3c] sm:$0xf]
      %v352 = vld [vmem:[%s281 + $0x40] sm:$0xf]
      %v353 = vld [vmem:[%s281 + $0x44] sm:$0xf]
      %v354 = vld [vmem:[%s281 + $0x48] sm:$0xf]
      %v355 = vld [vmem:[%s281 + $0x4c] sm:$0xf]
      %v356 = vld [vmem:[%s281 + $0x50] sm:$0xf]
      %v357 = vld [vmem:[%s281 + $0x54] sm:$0xf]
      %v358 = vld [vmem:[%s281 + $0x58] sm:$0xf]
      %v359 = vld [vmem:[%s281 + $0x5c] sm:$0xf]
      %v360 = vld [vmem:[%s281 + $0x60] sm:$0xf]
      %v361 = vld [vmem:[%s281 + $0x64] sm:$0xf]
      %v362 = vld [vmem:[%s281 + $0x68] sm:$0xf]
      %v363 = vld [vmem:[%s281 + $0x6c] sm:$0xf]
      %v364 = vld [vmem:[%s281 + $0x70] sm:$0xf]
      %v365 = vld [vmem:[%s281 + $0x74] sm:$0xf]
      %v366 = vld [vmem:[%s281 + $0x78] sm:$0xf]
      %v367 = vld [vmem:[%s281 + $0x7c] sm:$0xf]
      %v368 = vld [vmem:[%s281 + $0x80] sm:$0xf]
      %v369 = vld [vmem:[%s281 + $0x84] sm:$0xf]
      %v370 = vld [vmem:[%s281 + $0x88] sm:$0xf]
      %v371 = vld [vmem:[%s281 + $0x8c] sm:$0xf]
      %v372 = vld [vmem:[%s281 + $0x90] sm:$0xf]
      %v373 = vld [vmem:[%s281 + $0x94] sm:$0xf]
      %v374 = vld [vmem:[%s281 + $0x98] sm:$0xf]
      %v375 = vld [vmem:[%s281 + $0x9c] sm:$0xf]
      %v376 = vld [vmem:[%s281 + $0xa0] sm:$0xf]
      %v377 = vld [vmem:[%s281 + $0xa4] sm:$0xf]
      %v378 = vunpack.c.l.bf16 %v336
      %v379 = vunpack.c.l.bf16 %v337
      %v380 = vunpack.c.l.bf16 %v338
      %v381 = vunpack.c.l.bf16 %v339
      %v382 = vunpack.c.l.bf16 %v340
      %v383 = vunpack.c.l.bf16 %v341
      %v384 = vunpack.c.l.bf16 %v342
      %v385 = vunpack.c.l.bf16 %v343
      %v386 = vunpack.c.l.bf16 %v344
      %v387 = vunpack.c.l.bf16 %v345
      %v388 = vunpack.c.l.bf16 %v346
      %v389 = vunpack.c.l.bf16 %v347
      %v390 = vunpack.c.l.bf16 %v348
      %v391 = vunpack.c.l.bf16 %v349
      %v392 = vunpack.c.l.bf16 %v350
      %v393 = vunpack.c.l.bf16 %v351
      %v394 = vunpack.c.l.bf16 %v352
      %v395 = vunpack.c.l.bf16 %v353
      %v396 = vunpack.c.l.bf16 %v354
      %v397 = vunpack.c.l.bf16 %v355
      %v398 = vunpack.c.l.bf16 %v356
      %v399 = vunpack.c.l.bf16 %v357
      %v400 = vunpack.c.l.bf16 %v358
      %v401 = vunpack.c.l.bf16 %v359
      %v402 = vunpack.c.l.bf16 %v360
      %v403 = vunpack.c.l.bf16 %v361
      %v404 = vunpack.c.l.bf16 %v362
      %v405 = vunpack.c.l.bf16 %v363
      %v406 = vunpack.c.l.bf16 %v364
      %v407 = vunpack.c.l.bf16 %v365
      %v408 = vunpack.c.l.bf16 %v366
      %v409 = vunpack.c.l.bf16 %v367
      %v410 = vunpack.c.l.bf16 %v368
      %v411 = vunpack.c.l.bf16 %v369
      %v412 = vunpack.c.l.bf16 %v370
      %v413 = vunpack.c.l.bf16 %v371
      %v414 = vunpack.c.l.bf16 %v372
      %v415 = vunpack.c.l.bf16 %v373
      %v416 = vunpack.c.l.bf16 %v374
      %v417 = vunpack.c.l.bf16 %v375
      %v418 = vunpack.c.l.bf16 %v376
      %v419 = vunpack.c.l.bf16 %v377
      %v420 = vld [vmem:[%s2] sm:$0x1]
      %v422 = vlaneseq
      %v423 = vshrl.u32 %v422, 7
      %v424 = vsub.s32 0, %v423
      %v425 = vrot.slane %v420, %v424
      %v427 = vmul.f32 %v378, %v425
      %v428 = vmul.f32 %v379, %v425
      %v429 = vmul.f32 %v380, %v425
      %v430 = vmul.f32 %v381, %v425
      %v431 = vmul.f32 %v382, %v425
      %v432 = vmul.f32 %v383, %v425
      %v433 = vmul.f32 %v384, %v425
      %v434 = vmul.f32 %v385, %v425
      %v435 = vmul.f32 %v386, %v425
      %v436 = vmul.f32 %v387, %v425
      %v437 = vmul.f32 %v388, %v425
      %v438 = vmul.f32 %v389, %v425
      %v439 = vmul.f32 %v390, %v425
      %v440 = vmul.f32 %v391, %v425
      %v441 = vmul.f32 %v392, %v425
      %v442 = vmul.f32 %v393, %v425
      %v443 = vmul.f32 %v394, %v425
      %v444 = vmul.f32 %v395, %v425
      %v445 = vmul.f32 %v396, %v425
      %v446 = vmul.f32 %v397, %v425
      %v447 = vmul.f32 %v398, %v425
      %v448 = vmul.f32 %v399, %v425
      %v449 = vmul.f32 %v400, %v425
      %v450 = vmul.f32 %v401, %v425
      %v451 = vmul.f32 %v402, %v425
      %v452 = vmul.f32 %v403, %v425
      %v453 = vmul.f32 %v404, %v425
      %v454 = vmul.f32 %v405, %v425
      %v455 = vmul.f32 %v406, %v425
      %v456 = vmul.f32 %v407, %v425
      %v457 = vmul.f32 %v408, %v425
      %v458 = vmul.f32 %v409, %v425
      %v459 = vmul.f32 %v410, %v425
      %v460 = vmul.f32 %v411, %v425
      %v461 = vmul.f32 %v412, %v425
      %v462 = vmul.f32 %v413, %v425
      %v463 = vmul.f32 %v414, %v425
      %v464 = vmul.f32 %v415, %v425
      %v465 = vmul.f32 %v416, %v425
      %v466 = vmul.f32 %v417, %v425
      %v467 = vmul.f32 %v418, %v425
      %v468 = vmul.f32 %v419, %v425
      %v469 = vld [vmem:[%s3] sm:$0x1]
      %v471 = vlaneseq
      %v472 = vshrl.u32 %v471, 7
      %v473 = vsub.s32 0, %v472
      %v474 = vrot.slane %v469, %v473
      %v476 = vadd.f32 %v427, %v474
      %v477 = vadd.f32 %v428, %v474
      %v478 = vadd.f32 %v429, %v474
      %v479 = vadd.f32 %v430, %v474
      %v480 = vadd.f32 %v431, %v474
      %v481 = vadd.f32 %v432, %v474
      %v482 = vadd.f32 %v433, %v474
      %v483 = vadd.f32 %v434, %v474
      %v484 = vadd.f32 %v435, %v474
      %v485 = vadd.f32 %v436, %v474
      %v486 = vadd.f32 %v437, %v474
      %v487 = vadd.f32 %v438, %v474
      %v488 = vadd.f32 %v439, %v474
      %v489 = vadd.f32 %v440, %v474
      %v490 = vadd.f32 %v441, %v474
      %v491 = vadd.f32 %v442, %v474
      %v492 = vadd.f32 %v443, %v474
      %v493 = vadd.f32 %v444, %v474
      %v494 = vadd.f32 %v445, %v474
      %v495 = vadd.f32 %v446, %v474
      %v496 = vadd.f32 %v447, %v474
      %v497 = vadd.f32 %v448, %v474
      %v498 = vadd.f32 %v449, %v474
      %v499 = vadd.f32 %v450, %v474
      %v500 = vadd.f32 %v451, %v474
      %v501 = vadd.f32 %v452, %v474
      %v502 = vadd.f32 %v453, %v474
      %v503 = vadd.f32 %v454, %v474
      %v504 = vadd.f32 %v455, %v474
      %v505 = vadd.f32 %v456, %v474
      %v506 = vadd.f32 %v457, %v474
      %v507 = vadd.f32 %v458, %v474
      %v508 = vadd.f32 %v459, %v474
      %v509 = vadd.f32 %v460, %v474
      %v510 = vadd.f32 %v461, %v474
      %v511 = vadd.f32 %v462, %v474
      %v512 = vadd.f32 %v463, %v474
      %v513 = vadd.f32 %v464, %v474
      %v514 = vadd.f32 %v465, %v474
      %v515 = vadd.f32 %v466, %v474
      %v516 = vadd.f32 %v467, %v474
      %v517 = vadd.f32 %v468, %v474
      %519 = vset.pattern.permute.xlu0 0
      %520 = vperm.xlu0 %519, %v294
      %v521 = vpop.permute.xlu0 %520
      %524 = vset.pattern.permute.xlu0 0
      %525 = vperm.xlu0 %524, %v295
      %v526 = vpop.permute.xlu0 %525
      %529 = vset.pattern.permute.xlu0 0
      %530 = vperm.xlu0 %529, %v296
      %v531 = vpop.permute.xlu0 %530
      %534 = vset.pattern.permute.xlu0 0
      %535 = vperm.xlu0 %534, %v297
      %v536 = vpop.permute.xlu0 %535
      %539 = vset.pattern.permute.xlu0 0
      %540 = vperm.xlu0 %539, %v298
      %v541 = vpop.permute.xlu0 %540
      %544 = vset.pattern.permute.xlu0 0
      %545 = vperm.xlu0 %544, %v299
      %v546 = vpop.permute.xlu0 %545
      %549 = vset.pattern.permute.xlu0 0
      %550 = vperm.xlu0 %549, %v300
      %v551 = vpop.permute.xlu0 %550
      %554 = vset.pattern.permute.xlu0 0
      %555 = vperm.xlu0 %554, %v301
      %v556 = vpop.permute.xlu0 %555
      %559 = vset.pattern.permute.xlu0 0
      %560 = vperm.xlu0 %559, %v302
      %v561 = vpop.permute.xlu0 %560
      %564 = vset.pattern.permute.xlu0 0
      %565 = vperm.xlu0 %564, %v303
      %v566 = vpop.permute.xlu0 %565
      %569 = vset.pattern.permute.xlu0 0
      %570 = vperm.xlu0 %569, %v304
      %v571 = vpop.permute.xlu0 %570
      %574 = vset.pattern.permute.xlu0 0
      %575 = vperm.xlu0 %574, %v305
      %v576 = vpop.permute.xlu0 %575
      %579 = vset.pattern.permute.xlu0 0
      %580 = vperm.xlu0 %579, %v306
      %v581 = vpop.permute.xlu0 %580
      %584 = vset.pattern.permute.xlu0 0
      %585 = vperm.xlu0 %584, %v307
      %v586 = vpop.permute.xlu0 %585
      %589 = vset.pattern.permute.xlu0 0
      %590 = vperm.xlu0 %589, %v308
      %v591 = vpop.permute.xlu0 %590
      %594 = vset.pattern.permute.xlu0 0
      %595 = vperm.xlu0 %594, %v309
      %v596 = vpop.permute.xlu0 %595
      %599 = vset.pattern.permute.xlu0 0
      %600 = vperm.xlu0 %599, %v310
      %v601 = vpop.permute.xlu0 %600
      %604 = vset.pattern.permute.xlu0 0
      %605 = vperm.xlu0 %604, %v311
      %v606 = vpop.permute.xlu0 %605
      %609 = vset.pattern.permute.xlu0 0
      %610 = vperm.xlu0 %609, %v312
      %v611 = vpop.permute.xlu0 %610
      %614 = vset.pattern.permute.xlu0 0
      %615 = vperm.xlu0 %614, %v313
      %v616 = vpop.permute.xlu0 %615
      %619 = vset.pattern.permute.xlu0 0
      %620 = vperm.xlu0 %619, %v314
      %v621 = vpop.permute.xlu0 %620
      %624 = vset.pattern.permute.xlu0 0
      %625 = vperm.xlu0 %624, %v315
      %v626 = vpop.permute.xlu0 %625
      %629 = vset.pattern.permute.xlu0 0
      %630 = vperm.xlu0 %629, %v316
      %v631 = vpop.permute.xlu0 %630
      %634 = vset.pattern.permute.xlu0 0
      %635 = vperm.xlu0 %634, %v317
      %v636 = vpop.permute.xlu0 %635
      %639 = vset.pattern.permute.xlu0 0
      %640 = vperm.xlu0 %639, %v318
      %v641 = vpop.permute.xlu0 %640
      %644 = vset.pattern.permute.xlu0 0
      %645 = vperm.xlu0 %644, %v319
      %v646 = vpop.permute.xlu0 %645
      %649 = vset.pattern.permute.xlu0 0
      %650 = vperm.xlu0 %649, %v320
      %v651 = vpop.permute.xlu0 %650
      %654 = vset.pattern.permute.xlu0 0
      %655 = vperm.xlu0 %654, %v321
      %v656 = vpop.permute.xlu0 %655
      %659 = vset.pattern.permute.xlu0 0
      %660 = vperm.xlu0 %659, %v322
      %v661 = vpop.permute.xlu0 %660
      %664 = vset.pattern.permute.xlu0 0
      %665 = vperm.xlu0 %664, %v323
      %v666 = vpop.permute.xlu0 %665
      %669 = vset.pattern.permute.xlu0 0
      %670 = vperm.xlu0 %669, %v324
      %v671 = vpop.permute.xlu0 %670
      %674 = vset.pattern.permute.xlu0 0
      %675 = vperm.xlu0 %674, %v325
      %v676 = vpop.permute.xlu0 %675
      %679 = vset.pattern.permute.xlu0 0
      %680 = vperm.xlu0 %679, %v326
      %v681 = vpop.permute.xlu0 %680
      %684 = vset.pattern.permute.xlu0 0
      %685 = vperm.xlu0 %684, %v327
      %v686 = vpop.permute.xlu0 %685
      %689 = vset.pattern.permute.xlu0 0
      %690 = vperm.xlu0 %689, %v328
      %v691 = vpop.permute.xlu0 %690
      %694 = vset.pattern.permute.xlu0 0
      %695 = vperm.xlu0 %694, %v329
      %v696 = vpop.permute.xlu0 %695
      %699 = vset.pattern.permute.xlu0 0
      %700 = vperm.xlu0 %699, %v330
      %v701 = vpop.permute.xlu0 %700
      %704 = vset.pattern.permute.xlu0 0
      %705 = vperm.xlu0 %704, %v331
      %v706 = vpop.permute.xlu0 %705
      %709 = vset.pattern.permute.xlu0 0
      %710 = vperm.xlu0 %709, %v332
      %v711 = vpop.permute.xlu0 %710
      %714 = vset.pattern.permute.xlu0 0
      %715 = vperm.xlu0 %714, %v333
      %v716 = vpop.permute.xlu0 %715
      %719 = vset.pattern.permute.xlu0 0
      %720 = vperm.xlu0 %719, %v334
      %v721 = vpop.permute.xlu0 %720
      %724 = vset.pattern.permute.xlu0 0
      %725 = vperm.xlu0 %724, %v335
      %v726 = vpop.permute.xlu0 %725
      %v728 = vmul.f32 %v476, %v521
      %v729 = vmul.f32 %v477, %v526
      %v730 = vmul.f32 %v478, %v531
      %v731 = vmul.f32 %v479, %v536
      %v732 = vmul.f32 %v480, %v541
      %v733 = vmul.f32 %v481, %v546
      %v734 = vmul.f32 %v482, %v551
      %v735 = vmul.f32 %v483, %v556
      %v736 = vmul.f32 %v484, %v561
      %v737 = vmul.f32 %v485, %v566
      %v738 = vmul.f32 %v486, %v571
      %v739 = vmul.f32 %v487, %v576
      %v740 = vmul.f32 %v488, %v581
      %v741 = vmul.f32 %v489, %v586
      %v742 = vmul.f32 %v490, %v591
      %v743 = vmul.f32 %v491, %v596
      %v744 = vmul.f32 %v492, %v601
      %v745 = vmul.f32 %v493, %v606
      %v746 = vmul.f32 %v494, %v611
      %v747 = vmul.f32 %v495, %v616
      %v748 = vmul.f32 %v496, %v621
      %v749 = vmul.f32 %v497, %v626
      %v750 = vmul.f32 %v498, %v631
      %v751 = vmul.f32 %v499, %v636
      %v752 = vmul.f32 %v500, %v641
      %v753 = vmul.f32 %v501, %v646
      %v754 = vmul.f32 %v502, %v651
      %v755 = vmul.f32 %v503, %v656
      %v756 = vmul.f32 %v504, %v661
      %v757 = vmul.f32 %v505, %v666
      %v758 = vmul.f32 %v506, %v671
      %v759 = vmul.f32 %v507, %v676
      %v760 = vmul.f32 %v508, %v681
      %v761 = vmul.f32 %v509, %v686
      %v762 = vmul.f32 %v510, %v691
      %v763 = vmul.f32 %v511, %v696
      %v764 = vmul.f32 %v512, %v701
      %v765 = vmul.f32 %v513, %v706
      %v766 = vmul.f32 %v514, %v711
      %v767 = vmul.f32 %v515, %v716
      %v768 = vmul.f32 %v516, %v721
      %v769 = vmul.f32 %v517, %v726
      %vm770 = vcmask 523264
      %771 = vst.msk [vmem:[#allocation2] sm:$0xff] %vm770, %v728
      %772 = vst.msk [vmem:[#allocation2 + $0x8] sm:$0xff] %vm770, %v729
      %773 = vst.msk [vmem:[#allocation2 + $0x10] sm:$0xff] %vm770, %v730
      %774 = vst.msk [vmem:[#allocation2 + $0x18] sm:$0xff] %vm770, %v731
      %775 = vst.msk [vmem:[#allocation2 + $0x20] sm:$0xff] %vm770, %v732
      %776 = vst.msk [vmem:[#allocation2 + $0x28] sm:$0xff] %vm770, %v733
      %777 = vst.msk [vmem:[#allocation2 + $0x30] sm:$0xff] %vm770, %v734
      %778 = vst.msk [vmem:[#allocation2 + $0x38] sm:$0xff] %vm770, %v735
      %779 = vst.msk [vmem:[#allocation2 + $0x40] sm:$0xff] %vm770, %v736
      %780 = vst.msk [vmem:[#allocation2 + $0x48] sm:$0xff] %vm770, %v737
      %781 = vst.msk [vmem:[#allocation2 + $0x50] sm:$0xff] %vm770, %v738
      %782 = vst.msk [vmem:[#allocation2 + $0x58] sm:$0xff] %vm770, %v739
      %783 = vst.msk [vmem:[#allocation2 + $0x60] sm:$0xff] %vm770, %v740
      %784 = vst.msk [vmem:[#allocation2 + $0x68] sm:$0xff] %vm770, %v741
      %785 = vst.msk [vmem:[#allocation2 + $0x70] sm:$0xff] %vm770, %v742
      %786 = vst.msk [vmem:[#allocation2 + $0x78] sm:$0xff] %vm770, %v743
      %787 = vst.msk [vmem:[#allocation2 + $0x80] sm:$0xff] %vm770, %v744
      %788 = vst.msk [vmem:[#allocation2 + $0x88] sm:$0xff] %vm770, %v745
      %789 = vst.msk [vmem:[#allocation2 + $0x90] sm:$0xff] %vm770, %v746
      %790 = vst.msk [vmem:[#allocation2 + $0x98] sm:$0xff] %vm770, %v747
      %791 = vst.msk [vmem:[#allocation2 + $0xa0] sm:$0xff] %vm770, %v748
      %792 = vst.msk [vmem:[#allocation2 + $0xa8] sm:$0xff] %vm770, %v749
      %793 = vst.msk [vmem:[#allocation2 + $0xb0] sm:$0xff] %vm770, %v750
      %794 = vst.msk [vmem:[#allocation2 + $0xb8] sm:$0xff] %vm770, %v751
      %795 = vst.msk [vmem:[#allocation2 + $0xc0] sm:$0xff] %vm770, %v752
      %796 = vst.msk [vmem:[#allocation2 + $0xc8] sm:$0xff] %vm770, %v753
      %797 = vst.msk [vmem:[#allocation2 + $0xd0] sm:$0xff] %vm770, %v754
      %798 = vst.msk [vmem:[#allocation2 + $0xd8] sm:$0xff] %vm770, %v755
      %799 = vst.msk [vmem:[#allocation2 + $0xe0] sm:$0xff] %vm770, %v756
      %800 = vst.msk [vmem:[#allocation2 + $0xe8] sm:$0xff] %vm770, %v757
      %801 = vst.msk [vmem:[#allocation2 + $0xf0] sm:$0xff] %vm770, %v758
      %802 = vst.msk [vmem:[#allocation2 + $0xf8] sm:$0xff] %vm770, %v759
      %803 = vst.msk [vmem:[#allocation2 + $0x100] sm:$0xff] %vm770, %v760
      %804 = vst.msk [vmem:[#allocation2 + $0x108] sm:$0xff] %vm770, %v761
      %805 = vst.msk [vmem:[#allocation2 + $0x110] sm:$0xff] %vm770, %v762
      %806 = vst.msk [vmem:[#allocation2 + $0x118] sm:$0xff] %vm770, %v763
      %807 = vst.msk [vmem:[#allocation2 + $0x120] sm:$0xff] %vm770, %v764
      %808 = vst.msk [vmem:[#allocation2 + $0x128] sm:$0xff] %vm770, %v765
      %809 = vst.msk [vmem:[#allocation2 + $0x130] sm:$0xff] %vm770, %v766
      %810 = vst.msk [vmem:[#allocation2 + $0x138] sm:$0xff] %vm770, %v767
      %811 = vst.msk [vmem:[#allocation2 + $0x140] sm:$0xff] %vm770, %v768
      %812 = vst.msk [vmem:[#allocation2 + $0x148] sm:$0xff] %vm770, %v769
      %v813 = vld [vmem:[#allocation2] sm:$0xff]
      %v814 = vld [vmem:[#allocation2 + $0x8] sm:$0xff]
      %v815 = vld [vmem:[#allocation2 + $0x10] sm:$0xff]
      %v816 = vld [vmem:[#allocation2 + $0x18] sm:$0xff]
      %v817 = vld [vmem:[#allocation2 + $0x20] sm:$0xff]
      %v818 = vld [vmem:[#allocation2 + $0x28] sm:$0xff]
      %v819 = vld [vmem:[#allocation2 + $0x30] sm:$0xff]
      %v820 = vld [vmem:[#allocation2 + $0x38] sm:$0xff]
      %v821 = vld [vmem:[#allocation2 + $0x40] sm:$0xff]
      %v822 = vld [vmem:[#allocation2 + $0x48] sm:$0xff]
      %v823 = vld [vmem:[#allocation2 + $0x50] sm:$0xff]
      %v824 = vld [vmem:[#allocation2 + $0x58] sm:$0xff]
      %v825 = vld [vmem:[#allocation2 + $0x60] sm:$0xff]
      %v826 = vld [vmem:[#allocation2 + $0x68] sm:$0xff]
      %v827 = vld [vmem:[#allocation2 + $0x70] sm:$0xff]
      %v828 = vld [vmem:[#allocation2 + $0x78] sm:$0xff]
      %v829 = vld [vmem:[#allocation2 + $0x80] sm:$0xff]
      %v830 = vld [vmem:[#allocation2 + $0x88] sm:$0xff]
      %v831 = vld [vmem:[#allocation2 + $0x90] sm:$0xff]
      %v832 = vld [vmem:[#allocation2 + $0x98] sm:$0xff]
      %v833 = vld [vmem:[#allocation2 + $0xa0] sm:$0xff]
      %v834 = vld [vmem:[#allocation2 + $0xa8] sm:$0xff]
      %v835 = vld [vmem:[#allocation2 + $0xb0] sm:$0xff]
      %v836 = vld [vmem:[#allocation2 + $0xb8] sm:$0xff]
      %v837 = vld [vmem:[#allocation2 + $0xc0] sm:$0xff]
      %v838 = vld [vmem:[#allocation2 + $0xc8] sm:$0xff]
      %v839 = vld [vmem:[#allocation2 + $0xd0] sm:$0xff]
      %v840 = vld [vmem:[#allocation2 + $0xd8] sm:$0xff]
      %v841 = vld [vmem:[#allocation2 + $0xe0] sm:$0xff]
      %v842 = vld [vmem:[#allocation2 + $0xe8] sm:$0xff]
      %v843 = vld [vmem:[#allocation2 + $0xf0] sm:$0xff]
      %v844 = vld [vmem:[#allocation2 + $0xf8] sm:$0xff]
      %v845 = vld [vmem:[#allocation2 + $0x100] sm:$0xff]
      %v846 = vld [vmem:[#allocation2 + $0x108] sm:$0xff]
      %v847 = vld [vmem:[#allocation2 + $0x110] sm:$0xff]
      %v848 = vld [vmem:[#allocation2 + $0x118] sm:$0xff]
      %v849 = vld [vmem:[#allocation2 + $0x120] sm:$0xff]
      %v850 = vld [vmem:[#allocation2 + $0x128] sm:$0x3]
      %v851 = vpack.c.bf16 %v814, %v813
      %v852 = vpack.c.bf16 %v816, %v815
      %v853 = vpack.c.bf16 %v818, %v817
      %v854 = vpack.c.bf16 %v820, %v819
      %v855 = vpack.c.bf16 %v822, %v821
      %v856 = vpack.c.bf16 %v824, %v823
      %v857 = vpack.c.bf16 %v826, %v825
      %v858 = vpack.c.bf16 %v828, %v827
      %v859 = vpack.c.bf16 %v830, %v829
      %v860 = vpack.c.bf16 %v832, %v831
      %v861 = vpack.c.bf16 %v834, %v833
      %v862 = vpack.c.bf16 %v836, %v835
      %v863 = vpack.c.bf16 %v838, %v837
      %v864 = vpack.c.bf16 %v840, %v839
      %v865 = vpack.c.bf16 %v842, %v841
      %v866 = vpack.c.bf16 %v844, %v843
      %v867 = vpack.c.bf16 %v846, %v845
      %v868 = vpack.c.bf16 %v848, %v847
      %v869 = vpack.c.bf16 %v850, %v849
      %v870 = vld [vmem:[#allocation2 + $0x1] sm:$0xff]
      %v871 = vld [vmem:[#allocation2 + $0x9] sm:$0xff]
      %v872 = vld [vmem:[#allocation2 + $0x11] sm:$0xff]
      %v873 = vld [vmem:[#allocation2 + $0x19] sm:$0xff]
      %v874 = vld [vmem:[#allocation2 + $0x21] sm:$0xff]
      %v875 = vld [vmem:[#allocation2 + $0x29] sm:$0xff]
      %v876 = vld [vmem:[#allocation2 + $0x31] sm:$0xff]
      %v877 = vld [vmem:[#allocation2 + $0x39] sm:$0xff]
      %v878 = vld [vmem:[#allocation2 + $0x41] sm:$0xff]
      %v879 = vld [vmem:[#allocation2 + $0x49] sm:$0xff]
      %v880 = vld [vmem:[#allocation2 + $0x51] sm:$0xff]
      %v881 = vld [vmem:[#allocation2 + $0x59] sm:$0xff]
      %v882 = vld [vmem:[#allocation2 + $0x61] sm:$0xff]
      %v883 = vld [vmem:[#allocation2 + $0x69] sm:$0xff]
      %v884 = vld [vmem:[#allocation2 + $0x71] sm:$0xff]
      %v885 = vld [vmem:[#allocation2 + $0x79] sm:$0xff]
      %v886 = vld [vmem:[#allocation2 + $0x81] sm:$0xff]
      %v887 = vld [vmem:[#allocation2 + $0x89] sm:$0xff]
      %v888 = vld [vmem:[#allocation2 + $0x91] sm:$0xff]
      %v889 = vld [vmem:[#allocation2 + $0x99] sm:$0xff]
      %v890 = vld [vmem:[#allocation2 + $0xa1] sm:$0xff]
      %v891 = vld [vmem:[#allocation2 + $0xa9] sm:$0xff]
      %v892 = vld [vmem:[#allocation2 + $0xb1] sm:$0xff]
      %v893 = vld [vmem:[#allocation2 + $0xb9] sm:$0xff]
      %v894 = vld [vmem:[#allocation2 + $0xc1] sm:$0xff]
      %v895 = vld [vmem:[#allocation2 + $0xc9] sm:$0xff]
      %v896 = vld [vmem:[#allocation2 + $0xd1] sm:$0xff]
      %v897 = vld [vmem:[#allocation2 + $0xd9] sm:$0xff]
      %v898 = vld [vmem:[#allocation2 + $0xe1] sm:$0xff]
      %v899 = vld [vmem:[#allocation2 + $0xe9] sm:$0xff]
      %v900 = vld [vmem:[#allocation2 + $0xf1] sm:$0xff]
      %v901 = vld [vmem:[#allocation2 + $0xf9] sm:$0xff]
      %v902 = vld [vmem:[#allocation2 + $0x101] sm:$0xff]
      %v903 = vld [vmem:[#allocation2 + $0x109] sm:$0xff]
      %v904 = vld [vmem:[#allocation2 + $0x111] sm:$0xff]
      %v905 = vld [vmem:[#allocation2 + $0x119] sm:$0xff]
      %v906 = vld [vmem:[#allocation2 + $0x121] sm:$0xff]
      %v907 = vld [vmem:[#allocation2 + $0x129] sm:$0x3]
      %v908 = vpack.c.bf16 %v871, %v870
      %v909 = vpack.c.bf16 %v873, %v872
      %v910 = vpack.c.bf16 %v875, %v874
      %v911 = vpack.c.bf16 %v877, %v876
      %v912 = vpack.c.bf16 %v879, %v878
      %v913 = vpack.c.bf16 %v881, %v880
      %v914 = vpack.c.bf16 %v883, %v882
      %v915 = vpack.c.bf16 %v885, %v884
      %v916 = vpack.c.bf16 %v887, %v886
      %v917 = vpack.c.bf16 %v889, %v888
      %v918 = vpack.c.bf16 %v891, %v890
      %v919 = vpack.c.bf16 %v893, %v892
      %v920 = vpack.c.bf16 %v895, %v894
      %v921 = vpack.c.bf16 %v897, %v896
      %v922 = vpack.c.bf16 %v899, %v898
      %v923 = vpack.c.bf16 %v901, %v900
      %v924 = vpack.c.bf16 %v903, %v902
      %v925 = vpack.c.bf16 %v905, %v904
      %v926 = vpack.c.bf16 %v907, %v906
      %v927 = vld [vmem:[#allocation2 + $0x2] sm:$0xff]
      %v928 = vld [vmem:[#allocation2 + $0xa] sm:$0xff]
      %v929 = vld [vmem:[#allocation2 + $0x12] sm:$0xff]
      %v930 = vld [vmem:[#allocation2 + $0x1a] sm:$0xff]
      %v931 = vld [vmem:[#allocation2 + $0x22] sm:$0xff]
      %v932 = vld [vmem:[#allocation2 + $0x2a] sm:$0xff]
      %v933 = vld [vmem:[#allocation2 + $0x32] sm:$0xff]
      %v934 = vld [vmem:[#allocation2 + $0x3a] sm:$0xff]
      %v935 = vld [vmem:[#allocation2 + $0x42] sm:$0xff]
      %v936 = vld [vmem:[#allocation2 + $0x4a] sm:$0xff]
      %v937 = vld [vmem:[#allocation2 + $0x52] sm:$0xff]
      %v938 = vld [vmem:[#allocation2 + $0x5a] sm:$0xff]
      %v939 = vld [vmem:[#allocation2 + $0x62] sm:$0xff]
      %v940 = vld [vmem:[#allocation2 + $0x6a] sm:$0xff]
      %v941 = vld [vmem:[#allocation2 + $0x72] sm:$0xff]
      %v942 = vld [vmem:[#allocation2 + $0x7a] sm:$0xff]
      %v943 = vld [vmem:[#allocation2 + $0x82] sm:$0xff]
      %v944 = vld [vmem:[#allocation2 + $0x8a] sm:$0xff]
      %v945 = vld [vmem:[#allocation2 + $0x92] sm:$0xff]
      %v946 = vld [vmem:[#allocation2 + $0x9a] sm:$0xff]
      %v947 = vld [vmem:[#allocation2 + $0xa2] sm:$0xff]
      %v948 = vld [vmem:[#allocation2 + $0xaa] sm:$0xff]
      %v949 = vld [vmem:[#allocation2 + $0xb2] sm:$0xff]
      %v950 = vld [vmem:[#allocation2 + $0xba] sm:$0xff]
      %v951 = vld [vmem:[#allocation2 + $0xc2] sm:$0xff]
      %v952 = vld [vmem:[#allocation2 + $0xca] sm:$0xff]
      %v953 = vld [vmem:[#allocation2 + $0xd2] sm:$0xff]
      %v954 = vld [vmem:[#allocation2 + $0xda] sm:$0xff]
      %v955 = vld [vmem:[#allocation2 + $0xe2] sm:$0xff]
      %v956 = vld [vmem:[#allocation2 + $0xea] sm:$0xff]
      %v957 = vld [vmem:[#allocation2 + $0xf2] sm:$0xff]
      %v958 = vld [vmem:[#allocation2 + $0xfa] sm:$0xff]
      %v959 = vld [vmem:[#allocation2 + $0x102] sm:$0xff]
      %v960 = vld [vmem:[#allocation2 + $0x10a] sm:$0xff]
      %v961 = vld [vmem:[#allocation2 + $0x112] sm:$0xff]
      %v962 = vld [vmem:[#allocation2 + $0x11a] sm:$0xff]
      %v963 = vld [vmem:[#allocation2 + $0x122] sm:$0xff]
      %v964 = vld [vmem:[#allocation2 + $0x12a] sm:$0x3]
      %v965 = vpack.c.bf16 %v928, %v927
      %v966 = vpack.c.bf16 %v930, %v929
      %v967 = vpack.c.bf16 %v932, %v931
      %v968 = vpack.c.bf16 %v934, %v933
      %v969 = vpack.c.bf16 %v936, %v935
      %v970 = vpack.c.bf16 %v938, %v937
      %v971 = vpack.c.bf16 %v940, %v939
      %v972 = vpack.c.bf16 %v942, %v941
      %v973 = vpack.c.bf16 %v944, %v943
      %v974 = vpack.c.bf16 %v946, %v945
      %v975 = vpack.c.bf16 %v948, %v947
      %v976 = vpack.c.bf16 %v950, %v949
      %v977 = vpack.c.bf16 %v952, %v951
      %v978 = vpack.c.bf16 %v954, %v953
      %v979 = vpack.c.bf16 %v956, %v955
      %v980 = vpack.c.bf16 %v958, %v957
      %v981 = vpack.c.bf16 %v960, %v959
      %v982 = vpack.c.bf16 %v962, %v961
      %v983 = vpack.c.bf16 %v964, %v963
      %v984 = vld [vmem:[#allocation2 + $0x12a] sm:$0xff]
      %v985 = vld [vmem:[#allocation2 + $0x132] sm:$0xff]
      %v986 = vld [vmem:[#allocation2 + $0x13a] sm:$0x3]
      %v987 = vpack.c.bf16 %v984, %v963
      %v988 = vpack.c.bf16 %v986, %v985
      %v989 = vld [vmem:[#allocation2 + $0x13] sm:$0xff]
      %v990 = vld [vmem:[#allocation2 + $0x1b] sm:$0xff]
      %v991 = vld [vmem:[#allocation2 + $0x23] sm:$0xff]
      %v992 = vld [vmem:[#allocation2 + $0x2b] sm:$0xff]
      %v993 = vld [vmem:[#allocation2 + $0x33] sm:$0xff]
      %v994 = vld [vmem:[#allocation2 + $0x3b] sm:$0xff]
      %v995 = vld [vmem:[#allocation2 + $0x43] sm:$0xff]
      %v996 = vld [vmem:[#allocation2 + $0x4b] sm:$0xff]
      %v997 = vld [vmem:[#allocation2 + $0x53] sm:$0xff]
      %v998 = vld [vmem:[#allocation2 + $0x5b] sm:$0xff]
      %v999 = vld [vmem:[#allocation2 + $0x63] sm:$0xff]
      %v1000 = vld [vmem:[#allocation2 + $0x6b] sm:$0xff]
      %v1001 = vld [vmem:[#allocation2 + $0x73] sm:$0xff]
      %v1002 = vld [vmem:[#allocation2 + $0x7b] sm:$0xff]
      %v1003 = vld [vmem:[#allocation2 + $0x83] sm:$0xff]
      %v1004 = vld [vmem:[#allocation2 + $0x8b] sm:$0xff]
      %v1005 = vld [vmem:[#allocation2 + $0x93] sm:$0xff]
      %v1006 = vld [vmem:[#allocation2 + $0x9b] sm:$0xff]
      %v1007 = vld [vmem:[#allocation2 + $0xa3] sm:$0xff]
      %v1008 = vld [vmem:[#allocation2 + $0xab] sm:$0xff]
      %v1009 = vld [vmem:[#allocation2 + $0xb3] sm:$0xff]
      %v1010 = vld [vmem:[#allocation2 + $0xbb] sm:$0xff]
      %v1011 = vld [vmem:[#allocation2 + $0xc3] sm:$0xff]
      %v1012 = vld [vmem:[#allocation2 + $0xcb] sm:$0xff]
      %v1013 = vld [vmem:[#allocation2 + $0xd3] sm:$0xff]
      %v1014 = vld [vmem:[#allocation2 + $0xdb] sm:$0xff]
      %v1015 = vld [vmem:[#allocation2 + $0xe3] sm:$0xff]
      %v1016 = vld [vmem:[#allocation2 + $0xeb] sm:$0xff]
      %v1017 = vld [vmem:[#allocation2 + $0xf3] sm:$0xff]
      %v1018 = vld [vmem:[#allocation2 + $0xfb] sm:$0xff]
      %v1019 = vld [vmem:[#allocation2 + $0x103] sm:$0xff]
      %v1020 = vld [vmem:[#allocation2 + $0x10b] sm:$0xff]
      %v1021 = vld [vmem:[#allocation2 + $0x113] sm:$0xff]
      %v1022 = vld [vmem:[#allocation2 + $0x11b] sm:$0xff]
      %v1023 = vld [vmem:[#allocation2 + $0x123] sm:$0xff]
      %v1024 = vld [vmem:[#allocation2 + $0x12b] sm:$0xff]
      %v1025 = vld [vmem:[#allocation2 + $0x133] sm:$0xff]
      %v1026 = vld [vmem:[#allocation2 + $0x13b] sm:$0x3]
      %v1027 = vpack.c.bf16 %v990, %v989
      %v1028 = vpack.c.bf16 %v992, %v991
      %v1029 = vpack.c.bf16 %v994, %v993
      %v1030 = vpack.c.bf16 %v996, %v995
      %v1031 = vpack.c.bf16 %v998, %v997
      %v1032 = vpack.c.bf16 %v1000, %v999
      %v1033 = vpack.c.bf16 %v1002, %v1001
      %v1034 = vpack.c.bf16 %v1004, %v1003
      %v1035 = vpack.c.bf16 %v1006, %v1005
      %v1036 = vpack.c.bf16 %v1008, %v1007
      %v1037 = vpack.c.bf16 %v1010, %v1009
      %v1038 = vpack.c.bf16 %v1012, %v1011
      %v1039 = vpack.c.bf16 %v1014, %v1013
      %v1040 = vpack.c.bf16 %v1016, %v1015
      %v1041 = vpack.c.bf16 %v1018, %v1017
      %v1042 = vpack.c.bf16 %v1020, %v1019
      %v1043 = vpack.c.bf16 %v1022, %v1021
      %v1044 = vpack.c.bf16 %v1024, %v1023
      %v1045 = vpack.c.bf16 %v1026, %v1025
      %v1046 = vld [vmem:[#allocation2 + $0x14] sm:$0xff]
      %v1047 = vld [vmem:[#allocation2 + $0x1c] sm:$0xff]
      %v1048 = vld [vmem:[#allocation2 + $0x24] sm:$0xff]
      %v1049 = vld [vmem:[#allocation2 + $0x2c] sm:$0xff]
      %v1050 = vld [vmem:[#allocation2 + $0x34] sm:$0xff]
      %v1051 = vld [vmem:[#allocation2 + $0x3c] sm:$0xff]
      %v1052 = vld [vmem:[#allocation2 + $0x44] sm:$0xff]
      %v1053 = vld [vmem:[#allocation2 + $0x4c] sm:$0xff]
      %v1054 = vld [vmem:[#allocation2 + $0x54] sm:$0xff]
      %v1055 = vld [vmem:[#allocation2 + $0x5c] sm:$0xff]
      %v1056 = vld [vmem:[#allocation2 + $0x64] sm:$0xff]
      %v1057 = vld [vmem:[#allocation2 + $0x6c] sm:$0xff]
      %v1058 = vld [vmem:[#allocation2 + $0x74] sm:$0xff]
      %v1059 = vld [vmem:[#allocation2 + $0x7c] sm:$0xff]
      %v1060 = vld [vmem:[#allocation2 + $0x84] sm:$0xff]
      %v1061 = vld [vmem:[#allocation2 + $0x8c] sm:$0xff]
      %v1062 = vld [vmem:[#allocation2 + $0x94] sm:$0xff]
      %v1063 = vld [vmem:[#allocation2 + $0x9c] sm:$0xff]
      %v1064 = vld [vmem:[#allocation2 + $0xa4] sm:$0xff]
      %v1065 = vld [vmem:[#allocation2 + $0xac] sm:$0xff]
      %v1066 = vld [vmem:[#allocation2 + $0xb4] sm:$0xff]
      %v1067 = vld [vmem:[#allocation2 + $0xbc] sm:$0xff]
      %v1068 = vld [vmem:[#allocation2 + $0xc4] sm:$0xff]
      %v1069 = vld [vmem:[#allocation2 + $0xcc] sm:$0xff]
      %v1070 = vld [vmem:[#allocation2 + $0xd4] sm:$0xff]
      %v1071 = vld [vmem:[#allocation2 + $0xdc] sm:$0xff]
      %v1072 = vld [vmem:[#allocation2 + $0xe4] sm:$0xff]
      %v1073 = vld [vmem:[#allocation2 + $0xec] sm:$0xff]
      %v1074 = vld [vmem:[#allocation2 + $0xf4] sm:$0xff]
      %v1075 = vld [vmem:[#allocation2 + $0xfc] sm:$0xff]
      %v1076 = vld [vmem:[#allocation2 + $0x104] sm:$0xff]
      %v1077 = vld [vmem:[#allocation2 + $0x10c] sm:$0xff]
      %v1078 = vld [vmem:[#allocation2 + $0x114] sm:$0xff]
      %v1079 = vld [vmem:[#allocation2 + $0x11c] sm:$0xff]
      %v1080 = vld [vmem:[#allocation2 + $0x124] sm:$0xff]
      %v1081 = vld [vmem:[#allocation2 + $0x12c] sm:$0xff]
      %v1082 = vld [vmem:[#allocation2 + $0x134] sm:$0xff]
      %v1083 = vld [vmem:[#allocation2 + $0x13c] sm:$0x3]
      %v1084 = vpack.c.bf16 %v1047, %v1046
      %v1085 = vpack.c.bf16 %v1049, %v1048
      %v1086 = vpack.c.bf16 %v1051, %v1050
      %v1087 = vpack.c.bf16 %v1053, %v1052
      %v1088 = vpack.c.bf16 %v1055, %v1054
      %v1089 = vpack.c.bf16 %v1057, %v1056
      %v1090 = vpack.c.bf16 %v1059, %v1058
      %v1091 = vpack.c.bf16 %v1061, %v1060
      %v1092 = vpack.c.bf16 %v1063, %v1062
      %v1093 = vpack.c.bf16 %v1065, %v1064
      %v1094 = vpack.c.bf16 %v1067, %v1066
      %v1095 = vpack.c.bf16 %v1069, %v1068
      %v1096 = vpack.c.bf16 %v1071, %v1070
      %v1097 = vpack.c.bf16 %v1073, %v1072
      %v1098 = vpack.c.bf16 %v1075, %v1074
      %v1099 = vpack.c.bf16 %v1077, %v1076
      %v1100 = vpack.c.bf16 %v1079, %v1078
      %v1101 = vpack.c.bf16 %v1081, %v1080
      %v1102 = vpack.c.bf16 %v1083, %v1082
      %v1103 = vld [vmem:[#allocation2 + $0x13c] sm:$0xff]
      %v1104 = vld [vmem:[#allocation2 + $0x144] sm:$0xff]
      %v1105 = vld [vmem:[#allocation2 + $0x14c] sm:$0x3]
      %v1106 = vpack.c.bf16 %v1103, %v1082
      %v1107 = vpack.c.bf16 %v1105, %v1104
      %v1108 = vld [vmem:[#allocation2 + $0x25] sm:$0xff]
      %v1109 = vld [vmem:[#allocation2 + $0x2d] sm:$0xff]
      %v1110 = vld [vmem:[#allocation2 + $0x35] sm:$0xff]
      %v1111 = vld [vmem:[#allocation2 + $0x3d] sm:$0xff]
      %v1112 = vld [vmem:[#allocation2 + $0x45] sm:$0xff]
      %v1113 = vld [vmem:[#allocation2 + $0x4d] sm:$0xff]
      %v1114 = vld [vmem:[#allocation2 + $0x55] sm:$0xff]
      %v1115 = vld [vmem:[#allocation2 + $0x5d] sm:$0xff]
      %v1116 = vld [vmem:[#allocation2 + $0x65] sm:$0xff]
      %v1117 = vld [vmem:[#allocation2 + $0x6d] sm:$0xff]
      %v1118 = vld [vmem:[#allocation2 + $0x75] sm:$0xff]
      %v1119 = vld [vmem:[#allocation2 + $0x7d] sm:$0xff]
      %v1120 = vld [vmem:[#allocation2 + $0x85] sm:$0xff]
      %v1121 = vld [vmem:[#allocation2 + $0x8d] sm:$0xff]
      %v1122 = vld [vmem:[#allocation2 + $0x95] sm:$0xff]
      %v1123 = vld [vmem:[#allocation2 + $0x9d] sm:$0xff]
      %v1124 = vld [vmem:[#allocation2 + $0xa5] sm:$0xff]
      %v1125 = vld [vmem:[#allocation2 + $0xad] sm:$0xff]
      %v1126 = vld [vmem:[#allocation2 + $0xb5] sm:$0xff]
      %v1127 = vld [vmem:[#allocation2 + $0xbd] sm:$0xff]
      %v1128 = vld [vmem:[#allocation2 + $0xc5] sm:$0xff]
      %v1129 = vld [vmem:[#allocation2 + $0xcd] sm:$0xff]
      %v1130 = vld [vmem:[#allocation2 + $0xd5] sm:$0xff]
      %v1131 = vld [vmem:[#allocation2 + $0xdd] sm:$0xff]
      %v1132 = vld [vmem:[#allocation2 + $0xe5] sm:$0xff]
      %v1133 = vld [vmem:[#allocation2 + $0xed] sm:$0xff]
      %v1134 = vld [vmem:[#allocation2 + $0xf5] sm:$0xff]
      %v1135 = vld [vmem:[#allocation2 + $0xfd] sm:$0xff]
      %v1136 = vld [vmem:[#allocation2 + $0x105] sm:$0xff]
      %v1137 = vld [vmem:[#allocation2 + $0x10d] sm:$0xff]
      %v1138 = vld [vmem:[#allocation2 + $0x115] sm:$0xff]
      %v1139 = vld [vmem:[#allocation2 + $0x11d] sm:$0xff]
      %v1140 = vld [vmem:[#allocation2 + $0x125] sm:$0xff]
      %v1141 = vld [vmem:[#allocation2 + $0x12d] sm:$0xff]
      %v1142 = vld [vmem:[#allocation2 + $0x135] sm:$0xff]
      %v1143 = vld [vmem:[#allocation2 + $0x13d] sm:$0xff]
      %v1144 = vld [vmem:[#allocation2 + $0x145] sm:$0xff]
      %v1145 = vld [vmem:[#allocation2 + $0x14d] sm:$0x3]
      %v1146 = vpack.c.bf16 %v1109, %v1108
      %v1147 = vpack.c.bf16 %v1111, %v1110
      %v1148 = vpack.c.bf16 %v1113, %v1112
      %v1149 = vpack.c.bf16 %v1115, %v1114
      %v1150 = vpack.c.bf16 %v1117, %v1116
      %v1151 = vpack.c.bf16 %v1119, %v1118
      %v1152 = vpack.c.bf16 %v1121, %v1120
      %v1153 = vpack.c.bf16 %v1123, %v1122
      %v1154 = vpack.c.bf16 %v1125, %v1124
      %v1155 = vpack.c.bf16 %v1127, %v1126
      %v1156 = vpack.c.bf16 %v1129, %v1128
      %v1157 = vpack.c.bf16 %v1131, %v1130
      %v1158 = vpack.c.bf16 %v1133, %v1132
      %v1159 = vpack.c.bf16 %v1135, %v1134
      %v1160 = vpack.c.bf16 %v1137, %v1136
      %v1161 = vpack.c.bf16 %v1139, %v1138
      %v1162 = vpack.c.bf16 %v1141, %v1140
      %v1163 = vpack.c.bf16 %v1143, %v1142
      %v1164 = vpack.c.bf16 %v1145, %v1144
      %v1165 = vld [vmem:[#allocation2 + $0x26] sm:$0xff]
      %v1166 = vld [vmem:[#allocation2 + $0x2e] sm:$0xff]
      %v1167 = vld [vmem:[#allocation2 + $0x36] sm:$0xff]
      %v1168 = vld [vmem:[#allocation2 + $0x3e] sm:$0xff]
      %v1169 = vld [vmem:[#allocation2 + $0x46] sm:$0xff]
      %v1170 = vld [vmem:[#allocation2 + $0x4e] sm:$0xff]
      %v1171 = vld [vmem:[#allocation2 + $0x56] sm:$0xff]
      %v1172 = vld [vmem:[#allocation2 + $0x5e] sm:$0xff]
      %v1173 = vld [vmem:[#allocation2 + $0x66] sm:$0xff]
      %v1174 = vld [vmem:[#allocation2 + $0x6e] sm:$0xff]
      %v1175 = vld [vmem:[#allocation2 + $0x76] sm:$0xff]
      %v1176 = vld [vmem:[#allocation2 + $0x7e] sm:$0xff]
      %v1177 = vld [vmem:[#allocation2 + $0x86] sm:$0xff]
      %v1178 = vld [vmem:[#allocation2 + $0x8e] sm:$0xff]
      %v1179 = vld [vmem:[#allocation2 + $0x96] sm:$0xff]
      %v1180 = vld [vmem:[#allocation2 + $0x9e] sm:$0xff]
      %v1181 = vld [vmem:[#allocation2 + $0xa6] sm:$0xff]
      %v1182 = vld [vmem:[#allocation2 + $0xae] sm:$0xff]
      %v1183 = vld [vmem:[#allocation2 + $0xb6] sm:$0xff]
      %v1184 = vld [vmem:[#allocation2 + $0xbe] sm:$0xff]
      %v1185 = vld [vmem:[#allocation2 + $0xc6] sm:$0xff]
      %v1186 = vld [vmem:[#allocation2 + $0xce] sm:$0xff]
      %v1187 = vld [vmem:[#allocation2 + $0xd6] sm:$0xff]
      %v1188 = vld [vmem:[#allocation2 + $0xde] sm:$0xff]
      %v1189 = vld [vmem:[#allocation2 + $0xe6] sm:$0xff]
      %v1190 = vld [vmem:[#allocation2 + $0xee] sm:$0xff]
      %v1191 = vld [vmem:[#allocation2 + $0xf6] sm:$0xff]
      %v1192 = vld [vmem:[#allocation2 + $0xfe] sm:$0xff]
      %v1193 = vld [vmem:[#allocation2 + $0x106] sm:$0xff]
      %v1194 = vld [vmem:[#allocation2 + $0x10e] sm:$0xff]
      %v1195 = vld [vmem:[#allocation2 + $0x116] sm:$0xff]
      %v1196 = vld [vmem:[#allocation2 + $0x11e] sm:$0xff]
      %v1197 = vld [vmem:[#allocation2 + $0x126] sm:$0xff]
      %v1198 = vld [vmem:[#allocation2 + $0x12e] sm:$0xff]
      %v1199 = vld [vmem:[#allocation2 + $0x136] sm:$0xff]
      %v1200 = vld [vmem:[#allocation2 + $0x13e] sm:$0xff]
      %v1201 = vld [vmem:[#allocation2 + $0x146] sm:$0xff]
      %v1202 = vld [vmem:[#allocation2 + $0x14e] sm:$0x3]
      %v1203 = vpack.c.bf16 %v1166, %v1165
      %v1204 = vpack.c.bf16 %v1168, %v1167
      %v1205 = vpack.c.bf16 %v1170, %v1169
      %v1206 = vpack.c.bf16 %v1172, %v1171
      %v1207 = vpack.c.bf16 %v1174, %v1173
      %v1208 = vpack.c.bf16 %v1176, %v1175
      %v1209 = vpack.c.bf16 %v1178, %v1177
      %v1210 = vpack.c.bf16 %v1180, %v1179
      %v1211 = vpack.c.bf16 %v1182, %v1181
      %v1212 = vpack.c.bf16 %v1184, %v1183
      %v1213 = vpack.c.bf16 %v1186, %v1185
      %v1214 = vpack.c.bf16 %v1188, %v1187
      %v1215 = vpack.c.bf16 %v1190, %v1189
      %v1216 = vpack.c.bf16 %v1192, %v1191
      %v1217 = vpack.c.bf16 %v1194, %v1193
      %v1218 = vpack.c.bf16 %v1196, %v1195
      %v1219 = vpack.c.bf16 %v1198, %v1197
      %v1220 = vpack.c.bf16 %v1200, %v1199
      %v1221 = vpack.c.bf16 %v1202, %v1201
      %1241 = vrot.lane.b32.xlu0 %v908, 64
      %v1242 = vpop.permute.xlu0 %1241
      %1243 = vrot.lane.b32.xlu0 %v909, 64
      %v1244 = vpop.permute.xlu0 %1243
      %1245 = vrot.lane.b32.xlu0 %v910, 64
      %v1246 = vpop.permute.xlu0 %1245
      %1247 = vrot.lane.b32.xlu0 %v911, 64
      %v1248 = vpop.permute.xlu0 %1247
      %1249 = vrot.lane.b32.xlu0 %v912, 64
      %v1250 = vpop.permute.xlu0 %1249
      %1251 = vrot.lane.b32.xlu0 %v913, 64
      %v1252 = vpop.permute.xlu0 %1251
      %1253 = vrot.lane.b32.xlu0 %v914, 64
      %v1254 = vpop.permute.xlu0 %1253
      %1255 = vrot.lane.b32.xlu0 %v915, 64
      %v1256 = vpop.permute.xlu0 %1255
      %1257 = vrot.lane.b32.xlu0 %v916, 64
      %v1258 = vpop.permute.xlu0 %1257
      %1259 = vrot.lane.b32.xlu0 %v917, 64
      %v1260 = vpop.permute.xlu0 %1259
      %1261 = vrot.lane.b32.xlu0 %v918, 64
      %v1262 = vpop.permute.xlu0 %1261
      %1263 = vrot.lane.b32.xlu0 %v919, 64
      %v1264 = vpop.permute.xlu0 %1263
      %1265 = vrot.lane.b32.xlu0 %v920, 64
      %v1266 = vpop.permute.xlu0 %1265
      %1267 = vrot.lane.b32.xlu0 %v921, 64
      %v1268 = vpop.permute.xlu0 %1267
      %1269 = vrot.lane.b32.xlu0 %v922, 64
      %v1270 = vpop.permute.xlu0 %1269
      %1271 = vrot.lane.b32.xlu0 %v923, 64
      %v1272 = vpop.permute.xlu0 %1271
      %1273 = vrot.lane.b32.xlu0 %v924, 64
      %v1274 = vpop.permute.xlu0 %1273
      %1275 = vrot.lane.b32.xlu0 %v925, 64
      %v1276 = vpop.permute.xlu0 %1275
      %1277 = vrot.lane.b32.xlu0 %v926, 64
      %v1278 = vpop.permute.xlu0 %1277
      %1298 = vrot.lane.b32.xlu0 %v966, 64
      %v1299 = vpop.permute.xlu0 %1298
      %1300 = vrot.lane.b32.xlu0 %v967, 64
      %v1301 = vpop.permute.xlu0 %1300
      %1302 = vrot.lane.b32.xlu0 %v968, 64
      %v1303 = vpop.permute.xlu0 %1302
      %1304 = vrot.lane.b32.xlu0 %v969, 64
      %v1305 = vpop.permute.xlu0 %1304
      %1306 = vrot.lane.b32.xlu0 %v970, 64
      %v1307 = vpop.permute.xlu0 %1306
      %1308 = vrot.lane.b32.xlu0 %v971, 64
      %v1309 = vpop.permute.xlu0 %1308
      %1310 = vrot.lane.b32.xlu0 %v972, 64
      %v1311 = vpop.permute.xlu0 %1310
      %1312 = vrot.lane.b32.xlu0 %v973, 64
      %v1313 = vpop.permute.xlu0 %1312
      %1314 = vrot.lane.b32.xlu0 %v974, 64
      %v1315 = vpop.permute.xlu0 %1314
      %1316 = vrot.lane.b32.xlu0 %v975, 64
      %v1317 = vpop.permute.xlu0 %1316
      %1318 = vrot.lane.b32.xlu0 %v976, 64
      %v1319 = vpop.permute.xlu0 %1318
      %1320 = vrot.lane.b32.xlu0 %v977, 64
      %v1321 = vpop.permute.xlu0 %1320
      %1322 = vrot.lane.b32.xlu0 %v978, 64
      %v1323 = vpop.permute.xlu0 %1322
      %1324 = vrot.lane.b32.xlu0 %v979, 64
      %v1325 = vpop.permute.xlu0 %1324
      %1326 = vrot.lane.b32.xlu0 %v980, 64
      %v1327 = vpop.permute.xlu0 %1326
      %1328 = vrot.lane.b32.xlu0 %v981, 64
      %v1329 = vpop.permute.xlu0 %1328
      %1330 = vrot.lane.b32.xlu0 %v982, 64
      %v1331 = vpop.permute.xlu0 %1330
      %1332 = vrot.lane.b32.xlu0 %v987, 64
      %v1333 = vpop.permute.xlu0 %1332
      %1334 = vrot.lane.b32.xlu0 %v988, 64
      %v1335 = vpop.permute.xlu0 %1334
      %1355 = vrot.lane.b32.xlu0 %v1084, 64
      %v1356 = vpop.permute.xlu0 %1355
      %1357 = vrot.lane.b32.xlu0 %v1085, 64
      %v1358 = vpop.permute.xlu0 %1357
      %1359 = vrot.lane.b32.xlu0 %v1086, 64
      %v1360 = vpop.permute.xlu0 %1359
      %1361 = vrot.lane.b32.xlu0 %v1087, 64
      %v1362 = vpop.permute.xlu0 %1361
      %1363 = vrot.lane.b32.xlu0 %v1088, 64
      %v1364 = vpop.permute.xlu0 %1363
      %1365 = vrot.lane.b32.xlu0 %v1089, 64
      %v1366 = vpop.permute.xlu0 %1365
      %1367 = vrot.lane.b32.xlu0 %v1090, 64
      %v1368 = vpop.permute.xlu0 %1367
      %1369 = vrot.lane.b32.xlu0 %v1091, 64
      %v1370 = vpop.permute.xlu0 %1369
      %1371 = vrot.lane.b32.xlu0 %v1092, 64
      %v1372 = vpop.permute.xlu0 %1371
      %1373 = vrot.lane.b32.xlu0 %v1093, 64
      %v1374 = vpop.permute.xlu0 %1373
      %1375 = vrot.lane.b32.xlu0 %v1094, 64
      %v1376 = vpop.permute.xlu0 %1375
      %1377 = vrot.lane.b32.xlu0 %v1095, 64
      %v1378 = vpop.permute.xlu0 %1377
      %1379 = vrot.lane.b32.xlu0 %v1096, 64
      %v1380 = vpop.permute.xlu0 %1379
      %1381 = vrot.lane.b32.xlu0 %v1097, 64
      %v1382 = vpop.permute.xlu0 %1381
      %1383 = vrot.lane.b32.xlu0 %v1098, 64
      %v1384 = vpop.permute.xlu0 %1383
      %1385 = vrot.lane.b32.xlu0 %v1099, 64
      %v1386 = vpop.permute.xlu0 %1385
      %1387 = vrot.lane.b32.xlu0 %v1100, 64
      %v1388 = vpop.permute.xlu0 %1387
      %1389 = vrot.lane.b32.xlu0 %v1101, 64
      %v1390 = vpop.permute.xlu0 %1389
      %1391 = vrot.lane.b32.xlu0 %v1102, 64
      %v1392 = vpop.permute.xlu0 %1391
      %1412 = vrot.lane.b32.xlu0 %v1146, 64
      %v1413 = vpop.permute.xlu0 %1412
      %1414 = vrot.lane.b32.xlu0 %v1147, 64
      %v1415 = vpop.permute.xlu0 %1414
      %1416 = vrot.lane.b32.xlu0 %v1148, 64
      %v1417 = vpop.permute.xlu0 %1416
      %1418 = vrot.lane.b32.xlu0 %v1149, 64
      %v1419 = vpop.permute.xlu0 %1418
      %1420 = vrot.lane.b32.xlu0 %v1150, 64
      %v1421 = vpop.permute.xlu0 %1420
      %1422 = vrot.lane.b32.xlu0 %v1151, 64
      %v1423 = vpop.permute.xlu0 %1422
      %1424 = vrot.lane.b32.xlu0 %v1152, 64
      %v1425 = vpop.permute.xlu0 %1424
      %1426 = vrot.lane.b32.xlu0 %v1153, 64
      %v1427 = vpop.permute.xlu0 %1426
      %1428 = vrot.lane.b32.xlu0 %v1154, 64
      %v1429 = vpop.permute.xlu0 %1428
      %1430 = vrot.lane.b32.xlu0 %v1155, 64
      %v1431 = vpop.permute.xlu0 %1430
      %1432 = vrot.lane.b32.xlu0 %v1156, 64
      %v1433 = vpop.permute.xlu0 %1432
      %1434 = vrot.lane.b32.xlu0 %v1157, 64
      %v1435 = vpop.permute.xlu0 %1434
      %1436 = vrot.lane.b32.xlu0 %v1158, 64
      %v1437 = vpop.permute.xlu0 %1436
      %1438 = vrot.lane.b32.xlu0 %v1159, 64
      %v1439 = vpop.permute.xlu0 %1438
      %1440 = vrot.lane.b32.xlu0 %v1160, 64
      %v1441 = vpop.permute.xlu0 %1440
      %1442 = vrot.lane.b32.xlu0 %v1161, 64
      %v1443 = vpop.permute.xlu0 %1442
      %1444 = vrot.lane.b32.xlu0 %v1162, 64
      %v1445 = vpop.permute.xlu0 %1444
      %1446 = vrot.lane.b32.xlu0 %v1163, 64
      %v1447 = vpop.permute.xlu0 %1446
      %1448 = vrot.lane.b32.xlu0 %v1164, 64
      %v1449 = vpop.permute.xlu0 %1448
      %v1452 = vsel %vm770, %v851, %v1242
      %v1456 = vsel %vm770, %v852, %v1244
      %v1460 = vsel %vm770, %v853, %v1246
      %v1464 = vsel %vm770, %v854, %v1248
      %v1468 = vsel %vm770, %v855, %v1250
      %v1472 = vsel %vm770, %v856, %v1252
      %v1476 = vsel %vm770, %v857, %v1254
      %v1480 = vsel %vm770, %v858, %v1256
      %v1484 = vsel %vm770, %v859, %v1258
      %v1488 = vsel %vm770, %v860, %v1260
      %v1492 = vsel %vm770, %v861, %v1262
      %v1496 = vsel %vm770, %v862, %v1264
      %v1500 = vsel %vm770, %v863, %v1266
      %v1504 = vsel %vm770, %v864, %v1268
      %v1508 = vsel %vm770, %v865, %v1270
      %v1512 = vsel %vm770, %v866, %v1272
      %v1516 = vsel %vm770, %v867, %v1274
      %v1520 = vsel %vm770, %v868, %v1276
      %v1524 = vsel %vm770, %v869, %v1278
      %v1528 = vsel %vm770, %v965, %v1299
      %v1532 = vsel %vm770, %v966, %v1301
      %v1536 = vsel %vm770, %v967, %v1303
      %v1540 = vsel %vm770, %v968, %v1305
      %v1544 = vsel %vm770, %v969, %v1307
      %v1548 = vsel %vm770, %v970, %v1309
      %v1552 = vsel %vm770, %v971, %v1311
      %v1556 = vsel %vm770, %v972, %v1313
      %v1560 = vsel %vm770, %v973, %v1315
      %v1564 = vsel %vm770, %v974, %v1317
      %v1568 = vsel %vm770, %v975, %v1319
      %v1572 = vsel %vm770, %v976, %v1321
      %v1576 = vsel %vm770, %v977, %v1323
      %v1580 = vsel %vm770, %v978, %v1325
      %v1584 = vsel %vm770, %v979, %v1327
      %v1588 = vsel %vm770, %v980, %v1329
      %v1592 = vsel %vm770, %v981, %v1331
      %v1596 = vsel %vm770, %v982, %v1333
      %v1600 = vsel %vm770, %v983, %v1335
      %v1604 = vsel %vm770, %v1027, %v1356
      %v1608 = vsel %vm770, %v1028, %v1358
      %v1612 = vsel %vm770, %v1029, %v1360
      %v1616 = vsel %vm770, %v1030, %v1362
      %v1620 = vsel %vm770, %v1031, %v1364
      %v1624 = vsel %vm770, %v1032, %v1366
      %v1628 = vsel %vm770, %v1033, %v1368
      %v1632 = vsel %vm770, %v1034, %v1370
      %v1636 = vsel %vm770, %v1035, %v1372
      %v1640 = vsel %vm770, %v1036, %v1374
      %v1644 = vsel %vm770, %v1037, %v1376
      %v1648 = vsel %vm770, %v1038, %v1378
      %v1652 = vsel %vm770, %v1039, %v1380
      %v1656 = vsel %vm770, %v1040, %v1382
      %v1660 = vsel %vm770, %v1041, %v1384
      %v1664 = vsel %vm770, %v1042, %v1386
      %v1668 = vsel %vm770, %v1043, %v1388
      %v1672 = vsel %vm770, %v1044, %v1390
      %v1676 = vsel %vm770, %v1045, %v1392
      %v1680 = vsel %vm770, %v1085, %v1413
      %v1684 = vsel %vm770, %v1086, %v1415
      %v1688 = vsel %vm770, %v1087, %v1417
      %v1692 = vsel %vm770, %v1088, %v1419
      %v1696 = vsel %vm770, %v1089, %v1421
      %v1700 = vsel %vm770, %v1090, %v1423
      %v1704 = vsel %vm770, %v1091, %v1425
      %v1708 = vsel %vm770, %v1092, %v1427
      %v1712 = vsel %vm770, %v1093, %v1429
      %v1716 = vsel %vm770, %v1094, %v1431
      %v1720 = vsel %vm770, %v1095, %v1433
      %v1724 = vsel %vm770, %v1096, %v1435
      %v1728 = vsel %vm770, %v1097, %v1437
      %v1732 = vsel %vm770, %v1098, %v1439
      %v1736 = vsel %vm770, %v1099, %v1441
      %v1740 = vsel %vm770, %v1100, %v1443
      %v1744 = vsel %vm770, %v1101, %v1445
      %v1748 = vsel %vm770, %v1106, %v1447
      %v1752 = vsel %vm770, %v1107, %v1449
      %v1754 = vld [vmem:[%s4] sm:$0xf]
      %v1755 = vld [vmem:[%s4 + $0x4] sm:$0xf]
      %v1756 = vld [vmem:[%s4 + $0x8] sm:$0xf]
      %v1757 = vld [vmem:[%s4 + $0xc] sm:$0xf]
      %v1758 = vld [vmem:[%s4 + $0x10] sm:$0xf]
      %v1759 = vld [vmem:[%s4 + $0x14] sm:$0xf]
      %v1760 = vld [vmem:[%s4 + $0x18] sm:$0xf]
      %v1761 = vld [vmem:[%s4 + $0x1c] sm:$0xf]
      %v1762 = vld [vmem:[%s4 + $0x20] sm:$0xf]
      %v1763 = vld [vmem:[%s4 + $0x24] sm:$0xf]
      %v1764 = vld [vmem:[%s4 + $0x28] sm:$0xf]
      %v1765 = vld [vmem:[%s4 + $0x2c] sm:$0xf]
      %v1766 = vld [vmem:[%s4 + $0x30] sm:$0xf]
      %v1767 = vld [vmem:[%s4 + $0x34] sm:$0xf]
      %v1768 = vld [vmem:[%s4 + $0x38] sm:$0xf]
      %v1769 = vld [vmem:[%s4 + $0x3c] sm:$0xf]
      %v1770 = vld [vmem:[%s4 + $0x40] sm:$0xf]
      %v1771 = vld [vmem:[%s4 + $0x44] sm:$0xf]
      %v1772 = vld [vmem:[%s4 + $0x48] sm:$0xf]
      %v1773 = vld [vmem:[%s4 + $0x4c] sm:$0xf]
      %v1774 = vld [vmem:[%s4 + $0x50] sm:$0xf]
      %v1775 = vld [vmem:[%s4 + $0x54] sm:$0xf]
      %v1776 = vld [vmem:[%s4 + $0x58] sm:$0xf]
      %v1777 = vld [vmem:[%s4 + $0x5c] sm:$0xf]
      %v1778 = vld [vmem:[%s4 + $0x60] sm:$0xf]
      %v1779 = vld [vmem:[%s4 + $0x64] sm:$0xf]
      %v1780 = vld [vmem:[%s4 + $0x68] sm:$0xf]
      %v1781 = vld [vmem:[%s4 + $0x6c] sm:$0xf]
      %v1782 = vld [vmem:[%s4 + $0x70] sm:$0xf]
      %v1783 = vld [vmem:[%s4 + $0x74] sm:$0xf]
      %v1784 = vld [vmem:[%s4 + $0x78] sm:$0xf]
      %v1785 = vld [vmem:[%s4 + $0x7c] sm:$0xf]
      %v1786 = vld [vmem:[%s4 + $0x80] sm:$0xf]
      %v1787 = vld [vmem:[%s4 + $0x84] sm:$0xf]
      %v1788 = vld [vmem:[%s4 + $0x88] sm:$0xf]
      %v1789 = vld [vmem:[%s4 + $0x8c] sm:$0xf]
      %v1790 = vld [vmem:[%s4 + $0x90] sm:$0xf]
      %v1791 = vld [vmem:[%s4 + $0x94] sm:$0xf]
      %v1792 = vld [vmem:[%s4 + $0x98] sm:$0xf]
      %v1793 = vld [vmem:[%s4 + $0x9c] sm:$0xf]
      %v1794 = vld [vmem:[%s4 + $0xa0] sm:$0xf]
      %v1795 = vld [vmem:[%s4 + $0xa4] sm:$0xf]
      %v1796 = vld [vmem:[%s4 + $0xa8] sm:$0xf]
      %v1797 = vld [vmem:[%s4 + $0xac] sm:$0xf]
      %v1798 = vld [vmem:[%s4 + $0xb0] sm:$0xf]
      %v1799 = vld [vmem:[%s4 + $0xb4] sm:$0xf]
      %v1800 = vld [vmem:[%s4 + $0xb8] sm:$0xf]
      %v1801 = vld [vmem:[%s4 + $0xbc] sm:$0xf]
      %v1802 = vld [vmem:[%s4 + $0xc0] sm:$0xf]
      %v1803 = vld [vmem:[%s4 + $0xc4] sm:$0xf]
      %v1804 = vld [vmem:[%s4 + $0xc8] sm:$0xf]
      %v1805 = vld [vmem:[%s4 + $0xcc] sm:$0xf]
      %v1806 = vld [vmem:[%s4 + $0xd0] sm:$0xf]
      %v1807 = vld [vmem:[%s4 + $0xd4] sm:$0xf]
      %v1808 = vld [vmem:[%s4 + $0xd8] sm:$0xf]
      %v1809 = vld [vmem:[%s4 + $0xdc] sm:$0xf]
      %v1810 = vld [vmem:[%s4 + $0xe0] sm:$0xf]
      %v1811 = vld [vmem:[%s4 + $0xe4] sm:$0xf]
      %v1812 = vld [vmem:[%s4 + $0xe8] sm:$0xf]
      %v1813 = vld [vmem:[%s4 + $0xec] sm:$0xf]
      %v1814 = vld [vmem:[%s4 + $0xf0] sm:$0xf]
      %v1815 = vld [vmem:[%s4 + $0xf4] sm:$0xf]
      %v1816 = vld [vmem:[%s4 + $0xf8] sm:$0xf]
      %v1817 = vld [vmem:[%s4 + $0xfc] sm:$0xf]
      %v1818 = vld [vmem:[%s4 + $0x100] sm:$0xf]
      %v1819 = vld [vmem:[%s4 + $0x104] sm:$0xf]
      %v1820 = vld [vmem:[%s4 + $0x108] sm:$0xf]
      %v1821 = vld [vmem:[%s4 + $0x10c] sm:$0xf]
      %v1822 = vld [vmem:[%s4 + $0x110] sm:$0xf]
      %v1823 = vld [vmem:[%s4 + $0x114] sm:$0xf]
      %v1824 = vld [vmem:[%s4 + $0x118] sm:$0xf]
      %v1825 = vld [vmem:[%s4 + $0x11c] sm:$0xf]
      %v1826 = vld [vmem:[%s5] sm:$0x1]
      %v1828 = vlaneseq
      %v1829 = vshrl.u32 %v1828, 7
      %v1830 = vsub.s32 0, %v1829
      %v1831 = vrot.slane %v1826, %v1830
      %v1905 = vunpack.c.l.b16 %v1754
      %v1906 = vunpack.c.l.b16 %v1755
      %v1907 = vunpack.c.l.b16 %v1756
      %v1908 = vunpack.c.l.b16 %v1757
      %v1909 = vunpack.c.l.b16 %v1758
      %v1910 = vunpack.c.l.b16 %v1759
      %v1911 = vunpack.c.l.b16 %v1760
      %v1912 = vunpack.c.l.b16 %v1761
      %v1913 = vunpack.c.l.b16 %v1762
      %v1914 = vunpack.c.l.b16 %v1763
      %v1915 = vunpack.c.l.b16 %v1764
      %v1916 = vunpack.c.l.b16 %v1765
      %v1917 = vunpack.c.l.b16 %v1766
      %v1918 = vunpack.c.l.b16 %v1767
      %v1919 = vunpack.c.l.b16 %v1768
      %v1920 = vunpack.c.l.b16 %v1769
      %v1921 = vunpack.c.l.b16 %v1770
      %v1922 = vunpack.c.l.b16 %v1771
      %v1923 = vunpack.c.l.b16 %v1772
      %v1924 = vunpack.c.l.b16 %v1773
      %v1925 = vunpack.c.l.b16 %v1774
      %v1926 = vunpack.c.l.b16 %v1775
      %v1927 = vunpack.c.l.b16 %v1776
      %v1928 = vunpack.c.l.b16 %v1777
      %v1929 = vunpack.c.l.b16 %v1778
      %v1930 = vunpack.c.l.b16 %v1779
      %v1931 = vunpack.c.l.b16 %v1780
      %v1932 = vunpack.c.l.b16 %v1781
      %v1933 = vunpack.c.l.b16 %v1782
      %v1934 = vunpack.c.l.b16 %v1783
      %v1935 = vunpack.c.l.b16 %v1784
      %v1936 = vunpack.c.l.b16 %v1785
      %v1937 = vunpack.c.l.b16 %v1786
      %v1938 = vunpack.c.l.b16 %v1787
      %v1939 = vunpack.c.l.b16 %v1788
      %v1940 = vunpack.c.l.b16 %v1789
      %v1941 = vunpack.c.l.b16 %v1790
      %v1942 = vunpack.c.l.b16 %v1791
      %v1943 = vunpack.c.l.b16 %v1792
      %v1944 = vunpack.c.l.b16 %v1793
      %v1945 = vunpack.c.l.b16 %v1794
      %v1946 = vunpack.c.l.b16 %v1795
      %v1947 = vunpack.c.l.b16 %v1796
      %v1948 = vunpack.c.l.b16 %v1797
      %v1949 = vunpack.c.l.b16 %v1798
      %v1950 = vunpack.c.l.b16 %v1799
      %v1951 = vunpack.c.l.b16 %v1800
      %v1952 = vunpack.c.l.b16 %v1801
      %v1953 = vunpack.c.l.b16 %v1802
      %v1954 = vunpack.c.l.b16 %v1803
      %v1955 = vunpack.c.l.b16 %v1804
      %v1956 = vunpack.c.l.b16 %v1805
      %v1957 = vunpack.c.l.b16 %v1806
      %v1958 = vunpack.c.l.b16 %v1807
      %v1959 = vunpack.c.l.b16 %v1808
      %v1960 = vunpack.c.l.b16 %v1809
      %v1961 = vunpack.c.l.b16 %v1810
      %v1962 = vunpack.c.l.b16 %v1811
      %v1963 = vunpack.c.l.b16 %v1812
      %v1964 = vunpack.c.l.b16 %v1813
      %v1965 = vunpack.c.l.b16 %v1814
      %v1966 = vunpack.c.l.b16 %v1815
      %v1967 = vunpack.c.l.b16 %v1816
      %v1968 = vunpack.c.l.b16 %v1817
      %v1969 = vunpack.c.l.b16 %v1818
      %v1970 = vunpack.c.l.b16 %v1819
      %v1971 = vunpack.c.l.b16 %v1820
      %v1972 = vunpack.c.l.b16 %v1821
      %v1973 = vunpack.c.l.b16 %v1822
      %v1974 = vunpack.c.l.b16 %v1823
      %v1975 = vunpack.c.l.b16 %v1824
      %v1976 = vunpack.c.l.b16 %v1825
      %v1977 = vpack.c.b16 %v1906, %v1905
      %v1978 = vpack.c.b16 %v1908, %v1907
      %v1979 = vpack.c.b16 %v1910, %v1909
      %v1980 = vpack.c.b16 %v1912, %v1911
      %v1981 = vpack.c.b16 %v1914, %v1913
      %v1982 = vpack.c.b16 %v1916, %v1915
      %v1983 = vpack.c.b16 %v1918, %v1917
      %v1984 = vpack.c.b16 %v1920, %v1919
      %v1985 = vpack.c.b16 %v1922, %v1921
      %v1986 = vpack.c.b16 %v1924, %v1923
      %v1987 = vpack.c.b16 %v1926, %v1925
      %v1988 = vpack.c.b16 %v1928, %v1927
      %v1989 = vpack.c.b16 %v1930, %v1929
      %v1990 = vpack.c.b16 %v1932, %v1931
      %v1991 = vpack.c.b16 %v1934, %v1933
      %v1992 = vpack.c.b16 %v1936, %v1935
      %v1993 = vpack.c.b16 %v1938, %v1937
      %v1994 = vpack.c.b16 %v1940, %v1939
      %v1995 = vpack.c.b16 %v1942, %v1941
      %v1996 = vpack.c.b16 %v1944, %v1943
      %v1997 = vpack.c.b16 %v1946, %v1945
      %v1998 = vpack.c.b16 %v1948, %v1947
      %v1999 = vpack.c.b16 %v1950, %v1949
      %v2000 = vpack.c.b16 %v1952, %v1951
      %v2001 = vpack.c.b16 %v1954, %v1953
      %v2002 = vpack.c.b16 %v1956, %v1955
      %v2003 = vpack.c.b16 %v1958, %v1957
      %v2004 = vpack.c.b16 %v1960, %v1959
      %v2005 = vpack.c.b16 %v1962, %v1961
      %v2006 = vpack.c.b16 %v1964, %v1963
      %v2007 = vpack.c.b16 %v1966, %v1965
      %v2008 = vpack.c.b16 %v1968, %v1967
      %v2009 = vpack.c.b16 %v1970, %v1969
      %v2010 = vpack.c.b16 %v1972, %v1971
      %v2011 = vpack.c.b16 %v1974, %v1973
      %v2012 = vpack.c.b16 %v1976, %v1975
      %v2050 = vsel %vm770, %v1203, 0
      %v2053 = vsel %vm770, %v1204, 0
      %v2056 = vsel %vm770, %v1205, 0
      %v2059 = vsel %vm770, %v1206, 0
      %v2062 = vsel %vm770, %v1207, 0
      %v2065 = vsel %vm770, %v1208, 0
      %v2068 = vsel %vm770, %v1209, 0
      %v2071 = vsel %vm770, %v1210, 0
      %v2074 = vsel %vm770, %v1211, 0
      %v2077 = vsel %vm770, %v1212, 0
      %v2080 = vsel %vm770, %v1213, 0
      %v2083 = vsel %vm770, %v1214, 0
      %v2086 = vsel %vm770, %v1215, 0
      %v2089 = vsel %vm770, %v1216, 0
      %v2092 = vsel %vm770, %v1217, 0
      %v2095 = vsel %vm770, %v1218, 0
      %v2098 = vsel %vm770, %v1219, 0
      %v2101 = vsel %vm770, %v1220, 0
      %v2104 = vsel %vm770, %v1221, 0
      %2106 = vmatprep.subr.bf16.mxu0 0
      %2107 = vmatpush1.bf16.msra.mxu0 %v1984
      %2108 = vmatprep.subr.bf16.mxu0 0
      %2109 = vmatpush1.bf16.msra.mxu0 %v1983
      %2110 = vmatprep.subr.bf16.mxu0 0
      %2111 = vmatpush1.bf16.msra.mxu0 %v1982
      %2112 = vmatprep.subr.bf16.mxu0 0
      %2113 = vmatpush1.bf16.msra.mxu0 %v1981
      %2114 = vmatprep.subr.bf16.mxu0 0
      %2115 = vmatpush1.bf16.msra.mxu0 %v1980
      %2116 = vmatprep.subr.bf16.mxu0 0
      %2117 = vmatpush1.bf16.msra.mxu0 %v1979
      %2118 = vmatprep.subr.bf16.mxu0 0
      %2119 = vmatpush1.bf16.msra.mxu0 %v1978
      %2120 = vmatprep.subr.bf16.mxu0 0
      %2121 = vmatpush1.bf16.msra.mxu0 %v1977
      %2122 = vmatprep.subr.bf16.mxu0 0
      %2123 = vmatpush2.bf16.msra.mxu0 %v1992
      %2124 = vmatprep.subr.bf16.mxu0 0
      %2125 = vmatpush2.bf16.msra.mxu0 %v1991
      %2126 = vmatprep.subr.bf16.mxu0 0
      %2127 = vmatpush2.bf16.msra.mxu0 %v1990
      %2128 = vmatprep.subr.bf16.mxu0 0
      %2129 = vmatpush2.bf16.msra.mxu0 %v1989
      %2130 = vmatprep.subr.bf16.mxu0 0
      %2131 = vmatpush2.bf16.msra.mxu0 %v1988
      %2132 = vmatprep.subr.bf16.mxu0 0
      %2133 = vmatpush2.bf16.msra.mxu0 %v1987
      %2134 = vmatprep.subr.bf16.mxu0 0
      %2135 = vmatpush2.bf16.msra.mxu0 %v1986
      %2136 = vmatprep.subr.bf16.mxu0 0
      %2137 = vmatpush2.bf16.msra.mxu0 %v1985
      %2138 = vmatprep.mubr.bf16.mxu0 %v1528
      %2139 = vmatmul.mubr.bf16.gmra.mxu0 %v1452
      %v2140 = vpop.f32.mrf.mxu0
      %v2141 = vadd.f32 %v1831, %v2140
      %v2142 = vpop.f32.mrf.mxu0
      %v2143 = vpop.f32.mrf.mxu0
      %v2144 = vadd.f32 %v1831, %v2143
      %v2145 = vpop.f32.mrf.mxu0
      %2146 = vmatprep.mubr.bf16.mxu0 %v1532
      %2147 = vmatmul.mubr.bf16.gmra.mxu0 %v1456
      %v2148 = vpop.f32.mrf.mxu0
      %v2149 = vadd.f32 %v1831, %v2148
      %v2150 = vpop.f32.mrf.mxu0
      %v2151 = vpop.f32.mrf.mxu0
      %v2152 = vadd.f32 %v1831, %v2151
      %v2153 = vpop.f32.mrf.mxu0
      %2154 = vmatprep.mubr.bf16.mxu0 %v1536
      %2155 = vmatmul.mubr.bf16.gmra.mxu0 %v1460
      %v2156 = vpop.f32.mrf.mxu0
      %v2157 = vadd.f32 %v1831, %v2156
      %v2158 = vpop.f32.mrf.mxu0
      %v2159 = vpop.f32.mrf.mxu0
      %v2160 = vadd.f32 %v1831, %v2159
      %v2161 = vpop.f32.mrf.mxu0
      %2162 = vmatprep.mubr.bf16.mxu0 %v1540
      %2163 = vmatmul.mubr.bf16.gmra.mxu0 %v1464
      %v2164 = vpop.f32.mrf.mxu0
      %v2165 = vadd.f32 %v1831, %v2164
      %v2166 = vpop.f32.mrf.mxu0
      %v2167 = vpop.f32.mrf.mxu0
      %v2168 = vadd.f32 %v1831, %v2167
      %v2169 = vpop.f32.mrf.mxu0
      %2170 = vmatprep.mubr.bf16.mxu0 %v1544
      %2171 = vmatmul.mubr.bf16.gmra.mxu0 %v1468
      %v2172 = vpop.f32.mrf.mxu0
      %v2173 = vadd.f32 %v1831, %v2172
      %v2174 = vpop.f32.mrf.mxu0
      %v2175 = vpop.f32.mrf.mxu0
      %v2176 = vadd.f32 %v1831, %v2175
      %v2177 = vpop.f32.mrf.mxu0
      %2178 = vmatprep.mubr.bf16.mxu0 %v1548
      %2179 = vmatmul.mubr.bf16.gmra.mxu0 %v1472
      %v2180 = vpop.f32.mrf.mxu0
      %v2181 = vadd.f32 %v1831, %v2180
      %v2182 = vpop.f32.mrf.mxu0
      %v2183 = vpop.f32.mrf.mxu0
      %v2184 = vadd.f32 %v1831, %v2183
      %v2185 = vpop.f32.mrf.mxu0
      %2186 = vmatprep.mubr.bf16.mxu0 %v1552
      %2187 = vmatmul.mubr.bf16.gmra.mxu0 %v1476
      %v2188 = vpop.f32.mrf.mxu0
      %v2189 = vadd.f32 %v1831, %v2188
      %v2190 = vpop.f32.mrf.mxu0
      %v2191 = vpop.f32.mrf.mxu0
      %v2192 = vadd.f32 %v1831, %v2191
      %v2193 = vpop.f32.mrf.mxu0
      %2194 = vmatprep.mubr.bf16.mxu0 %v1556
      %2195 = vmatmul.mubr.bf16.gmra.mxu0 %v1480
      %v2196 = vpop.f32.mrf.mxu0
      %v2197 = vadd.f32 %v1831, %v2196
      %v2198 = vpop.f32.mrf.mxu0
      %v2199 = vpop.f32.mrf.mxu0
      %v2200 = vadd.f32 %v1831, %v2199
      %v2201 = vpop.f32.mrf.mxu0
      %2202 = vmatprep.mubr.bf16.mxu0 %v1560
      %2203 = vmatmul.mubr.bf16.gmra.mxu0 %v1484
      %v2204 = vpop.f32.mrf.mxu0
      %v2205 = vadd.f32 %v1831, %v2204
      %v2206 = vpop.f32.mrf.mxu0
      %v2207 = vpop.f32.mrf.mxu0
      %v2208 = vadd.f32 %v1831, %v2207
      %v2209 = vpop.f32.mrf.mxu0
      %2210 = vmatprep.mubr.bf16.mxu0 %v1564
      %2211 = vmatmul.mubr.bf16.gmra.mxu0 %v1488
      %v2212 = vpop.f32.mrf.mxu0
      %v2213 = vadd.f32 %v1831, %v2212
      %v2214 = vpop.f32.mrf.mxu0
      %v2215 = vpop.f32.mrf.mxu0
      %v2216 = vadd.f32 %v1831, %v2215
      %v2217 = vpop.f32.mrf.mxu0
      %2218 = vmatprep.mubr.bf16.mxu0 %v1568
      %2219 = vmatmul.mubr.bf16.gmra.mxu0 %v1492
      %v2220 = vpop.f32.mrf.mxu0
      %v2221 = vadd.f32 %v1831, %v2220
      %v2222 = vpop.f32.mrf.mxu0
      %v2223 = vpop.f32.mrf.mxu0
      %v2224 = vadd.f32 %v1831, %v2223
      %v2225 = vpop.f32.mrf.mxu0
      %2226 = vmatprep.mubr.bf16.mxu0 %v1572
      %2227 = vmatmul.mubr.bf16.gmra.mxu0 %v1496
      %v2228 = vpop.f32.mrf.mxu0
      %v2229 = vadd.f32 %v1831, %v2228
      %v2230 = vpop.f32.mrf.mxu0
      %v2231 = vpop.f32.mrf.mxu0
      %v2232 = vadd.f32 %v1831, %v2231
      %v2233 = vpop.f32.mrf.mxu0
      %2234 = vmatprep.mubr.bf16.mxu0 %v1576
      %2235 = vmatmul.mubr.bf16.gmra.mxu0 %v1500
      %v2236 = vpop.f32.mrf.mxu0
      %v2237 = vadd.f32 %v1831, %v2236
      %v2238 = vpop.f32.mrf.mxu0
      %v2239 = vpop.f32.mrf.mxu0
      %v2240 = vadd.f32 %v1831, %v2239
      %v2241 = vpop.f32.mrf.mxu0
      %2242 = vmatprep.mubr.bf16.mxu0 %v1580
      %2243 = vmatmul.mubr.bf16.gmra.mxu0 %v1504
      %v2244 = vpop.f32.mrf.mxu0
      %v2245 = vadd.f32 %v1831, %v2244
      %v2246 = vpop.f32.mrf.mxu0
      %v2247 = vpop.f32.mrf.mxu0
      %v2248 = vadd.f32 %v1831, %v2247
      %v2249 = vpop.f32.mrf.mxu0
      %2250 = vmatprep.mubr.bf16.mxu0 %v1584
      %2251 = vmatmul.mubr.bf16.gmra.mxu0 %v1508
      %v2252 = vpop.f32.mrf.mxu0
      %v2253 = vadd.f32 %v1831, %v2252
      %v2254 = vpop.f32.mrf.mxu0
      %v2255 = vpop.f32.mrf.mxu0
      %v2256 = vadd.f32 %v1831, %v2255
      %v2257 = vpop.f32.mrf.mxu0
      %2258 = vmatprep.mubr.bf16.mxu0 %v1588
      %2259 = vmatmul.mubr.bf16.gmra.mxu0 %v1512
      %v2260 = vpop.f32.mrf.mxu0
      %v2261 = vadd.f32 %v1831, %v2260
      %v2262 = vpop.f32.mrf.mxu0
      %v2263 = vpop.f32.mrf.mxu0
      %v2264 = vadd.f32 %v1831, %v2263
      %v2265 = vpop.f32.mrf.mxu0
      %2266 = vmatprep.mubr.bf16.mxu0 %v1592
      %2267 = vmatmul.mubr.bf16.gmra.mxu0 %v1516
      %v2268 = vpop.f32.mrf.mxu0
      %v2269 = vadd.f32 %v1831, %v2268
      %v2270 = vpop.f32.mrf.mxu0
      %v2271 = vpop.f32.mrf.mxu0
      %v2272 = vadd.f32 %v1831, %v2271
      %v2273 = vpop.f32.mrf.mxu0
      %2274 = vmatprep.mubr.bf16.mxu0 %v1596
      %2275 = vmatmul.mubr.bf16.gmra.mxu0 %v1520
      %v2276 = vpop.f32.mrf.mxu0
      %v2277 = vadd.f32 %v1831, %v2276
      %v2278 = vpop.f32.mrf.mxu0
      %v2279 = vpop.f32.mrf.mxu0
      %v2280 = vadd.f32 %v1831, %v2279
      %v2281 = vpop.f32.mrf.mxu0
      %2282 = vmatprep.mubr.bf16.mxu0 %v1600
      %2283 = vmatmul.mubr.bf16.gmra.mxu0 %v1524
      %v2284 = vpop.f32.mrf.mxu0
      %v2285 = vadd.f32 %v1831, %v2284
      %v2286 = vpop.f32.mrf.mxu0
      %v2287 = vpop.f32.mrf.mxu0
      %v2288 = vadd.f32 %v1831, %v2287
      %v2289 = vpop.f32.mrf.mxu0
      %2290 = vdwg.mxu0
      %2291 = vmatprep.subr.bf16.mxu0 0
      %2292 = vmatpush1.bf16.msra.mxu0 %v2000
      %2293 = vmatprep.subr.bf16.mxu0 0
      %2294 = vmatpush1.bf16.msra.mxu0 %v1999
      %2295 = vmatprep.subr.bf16.mxu0 0
      %2296 = vmatpush1.bf16.msra.mxu0 %v1998
      %2297 = vmatprep.subr.bf16.mxu0 0
      %2298 = vmatpush1.bf16.msra.mxu0 %v1997
      %2299 = vmatprep.subr.bf16.mxu0 0
      %2300 = vmatpush1.bf16.msra.mxu0 %v1996
      %2301 = vmatprep.subr.bf16.mxu0 0
      %2302 = vmatpush1.bf16.msra.mxu0 %v1995
      %2303 = vmatprep.subr.bf16.mxu0 0
      %2304 = vmatpush1.bf16.msra.mxu0 %v1994
      %2305 = vmatprep.subr.bf16.mxu0 0
      %2306 = vmatpush1.bf16.msra.mxu0 %v1993
      %2307 = vmatprep.subr.bf16.mxu0 0
      %2308 = vmatpush2.bf16.msra.mxu0 %v2008
      %2309 = vmatprep.subr.bf16.mxu0 0
      %2310 = vmatpush2.bf16.msra.mxu0 %v2007
      %2311 = vmatprep.subr.bf16.mxu0 0
      %2312 = vmatpush2.bf16.msra.mxu0 %v2006
      %2313 = vmatprep.subr.bf16.mxu0 0
      %2314 = vmatpush2.bf16.msra.mxu0 %v2005
      %2315 = vmatprep.subr.bf16.mxu0 0
      %2316 = vmatpush2.bf16.msra.mxu0 %v2004
      %2317 = vmatprep.subr.bf16.mxu0 0
      %2318 = vmatpush2.bf16.msra.mxu0 %v2003
      %2319 = vmatprep.subr.bf16.mxu0 0
      %2320 = vmatpush2.bf16.msra.mxu0 %v2002
      %2321 = vmatprep.subr.bf16.mxu0 0
      %2322 = vmatpush2.bf16.msra.mxu0 %v2001
      %2323 = vmatprep.mubr.bf16.mxu0 %v1680
      %2324 = vmatmul.mubr.bf16.gmra.mxu0 %v1604
      %v2325 = vpop.f32.mrf.mxu0
      %v2326 = vadd.f32 %v2141, %v2325
      %v2327 = vpop.f32.mrf.mxu0
      %v2328 = vpop.f32.mrf.mxu0
      %v2329 = vadd.f32 %v2144, %v2328
      %v2330 = vpop.f32.mrf.mxu0
      %2331 = vmatprep.mubr.bf16.mxu0 %v1684
      %2332 = vmatmul.mubr.bf16.gmra.mxu0 %v1608
      %v2333 = vpop.f32.mrf.mxu0
      %v2334 = vadd.f32 %v2149, %v2333
      %v2335 = vpop.f32.mrf.mxu0
      %v2336 = vpop.f32.mrf.mxu0
      %v2337 = vadd.f32 %v2152, %v2336
      %v2338 = vpop.f32.mrf.mxu0
      %2339 = vmatprep.mubr.bf16.mxu0 %v1688
      %2340 = vmatmul.mubr.bf16.gmra.mxu0 %v1612
      %v2341 = vpop.f32.mrf.mxu0
      %v2342 = vadd.f32 %v2157, %v2341
      %v2343 = vpop.f32.mrf.mxu0
      %v2344 = vpop.f32.mrf.mxu0
      %v2345 = vadd.f32 %v2160, %v2344
      %v2346 = vpop.f32.mrf.mxu0
      %2347 = vmatprep.mubr.bf16.mxu0 %v1692
      %2348 = vmatmul.mubr.bf16.gmra.mxu0 %v1616
      %v2349 = vpop.f32.mrf.mxu0
      %v2350 = vadd.f32 %v2165, %v2349
      %v2351 = vpop.f32.mrf.mxu0
      %v2352 = vpop.f32.mrf.mxu0
      %v2353 = vadd.f32 %v2168, %v2352
      %v2354 = vpop.f32.mrf.mxu0
      %2355 = vmatprep.mubr.bf16.mxu0 %v1696
      %2356 = vmatmul.mubr.bf16.gmra.mxu0 %v1620
      %v2357 = vpop.f32.mrf.mxu0
      %v2358 = vadd.f32 %v2173, %v2357
      %v2359 = vpop.f32.mrf.mxu0
      %v2360 = vpop.f32.mrf.mxu0
      %v2361 = vadd.f32 %v2176, %v2360
      %v2362 = vpop.f32.mrf.mxu0
      %2363 = vmatprep.mubr.bf16.mxu0 %v1700
      %2364 = vmatmul.mubr.bf16.gmra.mxu0 %v1624
      %v2365 = vpop.f32.mrf.mxu0
      %v2366 = vadd.f32 %v2181, %v2365
      %v2367 = vpop.f32.mrf.mxu0
      %v2368 = vpop.f32.mrf.mxu0
      %v2369 = vadd.f32 %v2184, %v2368
      %v2370 = vpop.f32.mrf.mxu0
      %2371 = vmatprep.mubr.bf16.mxu0 %v1704
      %2372 = vmatmul.mubr.bf16.gmra.mxu0 %v1628
      %v2373 = vpop.f32.mrf.mxu0
      %v2374 = vadd.f32 %v2189, %v2373
      %v2375 = vpop.f32.mrf.mxu0
      %v2376 = vpop.f32.mrf.mxu0
      %v2377 = vadd.f32 %v2192, %v2376
      %v2378 = vpop.f32.mrf.mxu0
      %2379 = vmatprep.mubr.bf16.mxu0 %v1708
      %2380 = vmatmul.mubr.bf16.gmra.mxu0 %v1632
      %v2381 = vpop.f32.mrf.mxu0
      %v2382 = vadd.f32 %v2197, %v2381
      %v2383 = vpop.f32.mrf.mxu0
      %v2384 = vpop.f32.mrf.mxu0
      %v2385 = vadd.f32 %v2200, %v2384
      %v2386 = vpop.f32.mrf.mxu0
      %2387 = vmatprep.mubr.bf16.mxu0 %v1712
      %2388 = vmatmul.mubr.bf16.gmra.mxu0 %v1636
      %v2389 = vpop.f32.mrf.mxu0
      %v2390 = vadd.f32 %v2205, %v2389
      %v2391 = vpop.f32.mrf.mxu0
      %v2392 = vpop.f32.mrf.mxu0
      %v2393 = vadd.f32 %v2208, %v2392
      %v2394 = vpop.f32.mrf.mxu0
      %2395 = vmatprep.mubr.bf16.mxu0 %v1716
      %2396 = vmatmul.mubr.bf16.gmra.mxu0 %v1640
      %v2397 = vpop.f32.mrf.mxu0
      %v2398 = vadd.f32 %v2213, %v2397
      %v2399 = vpop.f32.mrf.mxu0
      %v2400 = vpop.f32.mrf.mxu0
      %v2401 = vadd.f32 %v2216, %v2400
      %v2402 = vpop.f32.mrf.mxu0
      %2403 = vmatprep.mubr.bf16.mxu0 %v1720
      %2404 = vmatmul.mubr.bf16.gmra.mxu0 %v1644
      %v2405 = vpop.f32.mrf.mxu0
      %v2406 = vadd.f32 %v2221, %v2405
      %v2407 = vpop.f32.mrf.mxu0
      %v2408 = vpop.f32.mrf.mxu0
      %v2409 = vadd.f32 %v2224, %v2408
      %v2410 = vpop.f32.mrf.mxu0
      %2411 = vmatprep.mubr.bf16.mxu0 %v1724
      %2412 = vmatmul.mubr.bf16.gmra.mxu0 %v1648
      %v2413 = vpop.f32.mrf.mxu0
      %v2414 = vadd.f32 %v2229, %v2413
      %v2415 = vpop.f32.mrf.mxu0
      %v2416 = vpop.f32.mrf.mxu0
      %v2417 = vadd.f32 %v2232, %v2416
      %v2418 = vpop.f32.mrf.mxu0
      %2419 = vmatprep.mubr.bf16.mxu0 %v1728
      %2420 = vmatmul.mubr.bf16.gmra.mxu0 %v1652
      %v2421 = vpop.f32.mrf.mxu0
      %v2422 = vadd.f32 %v2237, %v2421
      %v2423 = vpop.f32.mrf.mxu0
      %v2424 = vpop.f32.mrf.mxu0
      %v2425 = vadd.f32 %v2240, %v2424
      %v2426 = vpop.f32.mrf.mxu0
      %2427 = vmatprep.mubr.bf16.mxu0 %v1732
      %2428 = vmatmul.mubr.bf16.gmra.mxu0 %v1656
      %v2429 = vpop.f32.mrf.mxu0
      %v2430 = vadd.f32 %v2245, %v2429
      %v2431 = vpop.f32.mrf.mxu0
      %v2432 = vpop.f32.mrf.mxu0
      %v2433 = vadd.f32 %v2248, %v2432
      %v2434 = vpop.f32.mrf.mxu0
      %2435 = vmatprep.mubr.bf16.mxu0 %v1736
      %2436 = vmatmul.mubr.bf16.gmra.mxu0 %v1660
      %v2437 = vpop.f32.mrf.mxu0
      %v2438 = vadd.f32 %v2253, %v2437
      %v2439 = vpop.f32.mrf.mxu0
      %v2440 = vpop.f32.mrf.mxu0
      %v2441 = vadd.f32 %v2256, %v2440
      %v2442 = vpop.f32.mrf.mxu0
      %2443 = vmatprep.mubr.bf16.mxu0 %v1740
      %2444 = vmatmul.mubr.bf16.gmra.mxu0 %v1664
      %v2445 = vpop.f32.mrf.mxu0
      %v2446 = vadd.f32 %v2261, %v2445
      %v2447 = vpop.f32.mrf.mxu0
      %v2448 = vpop.f32.mrf.mxu0
      %v2449 = vadd.f32 %v2264, %v2448
      %v2450 = vpop.f32.mrf.mxu0
      %2451 = vmatprep.mubr.bf16.mxu0 %v1744
      %2452 = vmatmul.mubr.bf16.gmra.mxu0 %v1668
      %v2453 = vpop.f32.mrf.mxu0
      %v2454 = vadd.f32 %v2269, %v2453
      %v2455 = vpop.f32.mrf.mxu0
      %v2456 = vpop.f32.mrf.mxu0
      %v2457 = vadd.f32 %v2272, %v2456
      %v2458 = vpop.f32.mrf.mxu0
      %2459 = vmatprep.mubr.bf16.mxu0 %v1748
      %2460 = vmatmul.mubr.bf16.gmra.mxu0 %v1672
      %v2461 = vpop.f32.mrf.mxu0
      %v2462 = vadd.f32 %v2277, %v2461
      %v2463 = vpop.f32.mrf.mxu0
      %v2464 = vpop.f32.mrf.mxu0
      %v2465 = vadd.f32 %v2280, %v2464
      %v2466 = vpop.f32.mrf.mxu0
      %2467 = vmatprep.mubr.bf16.mxu0 %v1752
      %2468 = vmatmul.mubr.bf16.gmra.mxu0 %v1676
      %v2469 = vpop.f32.mrf.mxu0
      %v2470 = vadd.f32 %v2285, %v2469
      %v2471 = vpop.f32.mrf.mxu0
      %v2472 = vpop.f32.mrf.mxu0
      %v2473 = vadd.f32 %v2288, %v2472
      %v2474 = vpop.f32.mrf.mxu0
      %2475 = vdwg.mxu0
      %2476 = vmatprep.subr.bf16.mxu0 0
      %2477 = vmatpush1.bf16.msra.mxu0 0
      %2478 = vmatprep.subr.bf16.mxu0 0
      %2479 = vmatpush1.bf16.msra.mxu0 0
      %2480 = vmatprep.subr.bf16.mxu0 0
      %2481 = vmatpush1.bf16.msra.mxu0 0
      %2482 = vmatprep.subr.bf16.mxu0 0
      %2483 = vmatpush1.bf16.msra.mxu0 0
      %2484 = vmatprep.subr.bf16.mxu0 0
      %2485 = vmatpush1.bf16.msra.mxu0 %v2012
      %2486 = vmatprep.subr.bf16.mxu0 0
      %2487 = vmatpush1.bf16.msra.mxu0 %v2011
      %2488 = vmatprep.subr.bf16.mxu0 0
      %2489 = vmatpush1.bf16.msra.mxu0 %v2010
      %2490 = vmatprep.subr.bf16.mxu0 0
      %2491 = vmatpush1.bf16.msra.mxu0 %v2009
      %2492 = vmatprep.subr.bf16.mxu0 0
      %2493 = vmatpush2.bf16.msra.mxu0 0
      %2494 = vmatprep.subr.bf16.mxu0 0
      %2495 = vmatpush2.bf16.msra.mxu0 0
      %2496 = vmatprep.subr.bf16.mxu0 0
      %2497 = vmatpush2.bf16.msra.mxu0 0
      %2498 = vmatprep.subr.bf16.mxu0 0
      %2499 = vmatpush2.bf16.msra.mxu0 0
      %2500 = vmatprep.subr.bf16.mxu0 0
      %2501 = vmatpush2.bf16.msra.mxu0 0
      %2502 = vmatprep.subr.bf16.mxu0 0
      %2503 = vmatpush2.bf16.msra.mxu0 0
      %2504 = vmatprep.subr.bf16.mxu0 0
      %2505 = vmatpush2.bf16.msra.mxu0 0
      %2506 = vmatprep.subr.bf16.mxu0 0
      %2507 = vmatpush2.bf16.msra.mxu0 0
      %2508 = vmatprep.mubr.bf16.mxu0 0
      %2509 = vmatmul.mubr.bf16.gmra.mxu0 %v2050
      %v2510 = vpop.f32.mrf.mxu0
      %v2511 = vadd.f32 %v2326, %v2510
      %v2512 = vpop.f32.mrf.mxu0
      %v2513 = vpop.f32.mrf.mxu0
      %v2514 = vadd.f32 %v2329, %v2513
      %v2515 = vpop.f32.mrf.mxu0
      %2516 = vmatprep.mubr.bf16.mxu0 0
      %2517 = vmatmul.mubr.bf16.gmra.mxu0 %v2053
      %v2518 = vpop.f32.mrf.mxu0
      %v2519 = vadd.f32 %v2334, %v2518
      %v2520 = vpop.f32.mrf.mxu0
      %v2521 = vpop.f32.mrf.mxu0
      %v2522 = vadd.f32 %v2337, %v2521
      %v2523 = vpop.f32.mrf.mxu0
      %2524 = vmatprep.mubr.bf16.mxu0 0
      %2525 = vmatmul.mubr.bf16.gmra.mxu0 %v2056
      %v2526 = vpop.f32.mrf.mxu0
      %v2527 = vadd.f32 %v2342, %v2526
      %v2528 = vpop.f32.mrf.mxu0
      %v2529 = vpop.f32.mrf.mxu0
      %v2530 = vadd.f32 %v2345, %v2529
      %v2531 = vpop.f32.mrf.mxu0
      %2532 = vmatprep.mubr.bf16.mxu0 0
      %2533 = vmatmul.mubr.bf16.gmra.mxu0 %v2059
      %v2534 = vpop.f32.mrf.mxu0
      %v2535 = vadd.f32 %v2350, %v2534
      %v2536 = vpop.f32.mrf.mxu0
      %v2537 = vpop.f32.mrf.mxu0
      %v2538 = vadd.f32 %v2353, %v2537
      %v2539 = vpop.f32.mrf.mxu0
      %2540 = vmatprep.mubr.bf16.mxu0 0
      %2541 = vmatmul.mubr.bf16.gmra.mxu0 %v2062
      %v2542 = vpop.f32.mrf.mxu0
      %v2543 = vadd.f32 %v2358, %v2542
      %v2544 = vpop.f32.mrf.mxu0
      %v2545 = vpop.f32.mrf.mxu0
      %v2546 = vadd.f32 %v2361, %v2545
      %v2547 = vpop.f32.mrf.mxu0
      %2548 = vmatprep.mubr.bf16.mxu0 0
      %2549 = vmatmul.mubr.bf16.gmra.mxu0 %v2065
      %v2550 = vpop.f32.mrf.mxu0
      %v2551 = vadd.f32 %v2366, %v2550
      %v2552 = vpop.f32.mrf.mxu0
      %v2553 = vpop.f32.mrf.mxu0
      %v2554 = vadd.f32 %v2369, %v2553
      %v2555 = vpop.f32.mrf.mxu0
      %2556 = vmatprep.mubr.bf16.mxu0 0
      %2557 = vmatmul.mubr.bf16.gmra.mxu0 %v2068
      %v2558 = vpop.f32.mrf.mxu0
      %v2559 = vadd.f32 %v2374, %v2558
      %v2560 = vpop.f32.mrf.mxu0
      %v2561 = vpop.f32.mrf.mxu0
      %v2562 = vadd.f32 %v2377, %v2561
      %v2563 = vpop.f32.mrf.mxu0
      %2564 = vmatprep.mubr.bf16.mxu0 0
      %2565 = vmatmul.mubr.bf16.gmra.mxu0 %v2071
      %v2566 = vpop.f32.mrf.mxu0
      %v2567 = vadd.f32 %v2382, %v2566
      %v2568 = vpop.f32.mrf.mxu0
      %v2569 = vpop.f32.mrf.mxu0
      %v2570 = vadd.f32 %v2385, %v2569
      %v2571 = vpop.f32.mrf.mxu0
      %2572 = vmatprep.mubr.bf16.mxu0 0
      %2573 = vmatmul.mubr.bf16.gmra.mxu0 %v2074
      %v2574 = vpop.f32.mrf.mxu0
      %v2575 = vadd.f32 %v2390, %v2574
      %v2576 = vpop.f32.mrf.mxu0
      %v2577 = vpop.f32.mrf.mxu0
      %v2578 = vadd.f32 %v2393, %v2577
      %v2579 = vpop.f32.mrf.mxu0
      %2580 = vmatprep.mubr.bf16.mxu0 0
      %2581 = vmatmul.mubr.bf16.gmra.mxu0 %v2077
      %v2582 = vpop.f32.mrf.mxu0
      %v2583 = vadd.f32 %v2398, %v2582
      %v2584 = vpop.f32.mrf.mxu0
      %v2585 = vpop.f32.mrf.mxu0
      %v2586 = vadd.f32 %v2401, %v2585
      %v2587 = vpop.f32.mrf.mxu0
      %2588 = vmatprep.mubr.bf16.mxu0 0
      %2589 = vmatmul.mubr.bf16.gmra.mxu0 %v2080
      %v2590 = vpop.f32.mrf.mxu0
      %v2591 = vadd.f32 %v2406, %v2590
      %v2592 = vpop.f32.mrf.mxu0
      %v2593 = vpop.f32.mrf.mxu0
      %v2594 = vadd.f32 %v2409, %v2593
      %v2595 = vpop.f32.mrf.mxu0
      %2596 = vmatprep.mubr.bf16.mxu0 0
      %2597 = vmatmul.mubr.bf16.gmra.mxu0 %v2083
      %v2598 = vpop.f32.mrf.mxu0
      %v2599 = vadd.f32 %v2414, %v2598
      %v2600 = vpop.f32.mrf.mxu0
      %v2601 = vpop.f32.mrf.mxu0
      %v2602 = vadd.f32 %v2417, %v2601
      %v2603 = vpop.f32.mrf.mxu0
      %2604 = vmatprep.mubr.bf16.mxu0 0
      %2605 = vmatmul.mubr.bf16.gmra.mxu0 %v2086
      %v2606 = vpop.f32.mrf.mxu0
      %v2607 = vadd.f32 %v2422, %v2606
      %v2608 = vpop.f32.mrf.mxu0
      %v2609 = vpop.f32.mrf.mxu0
      %v2610 = vadd.f32 %v2425, %v2609
      %v2611 = vpop.f32.mrf.mxu0
      %2612 = vmatprep.mubr.bf16.mxu0 0
      %2613 = vmatmul.mubr.bf16.gmra.mxu0 %v2089
      %v2614 = vpop.f32.mrf.mxu0
      %v2615 = vadd.f32 %v2430, %v2614
      %v2616 = vpop.f32.mrf.mxu0
      %v2617 = vpop.f32.mrf.mxu0
      %v2618 = vadd.f32 %v2433, %v2617
      %v2619 = vpop.f32.mrf.mxu0
      %2620 = vmatprep.mubr.bf16.mxu0 0
      %2621 = vmatmul.mubr.bf16.gmra.mxu0 %v2092
      %v2622 = vpop.f32.mrf.mxu0
      %v2623 = vadd.f32 %v2438, %v2622
      %v2624 = vpop.f32.mrf.mxu0
      %v2625 = vpop.f32.mrf.mxu0
      %v2626 = vadd.f32 %v2441, %v2625
      %v2627 = vpop.f32.mrf.mxu0
      %2628 = vmatprep.mubr.bf16.mxu0 0
      %2629 = vmatmul.mubr.bf16.gmra.mxu0 %v2095
      %v2630 = vpop.f32.mrf.mxu0
      %v2631 = vadd.f32 %v2446, %v2630
      %v2632 = vpop.f32.mrf.mxu0
      %v2633 = vpop.f32.mrf.mxu0
      %v2634 = vadd.f32 %v2449, %v2633
      %v2635 = vpop.f32.mrf.mxu0
      %2636 = vmatprep.mubr.bf16.mxu0 0
      %2637 = vmatmul.mubr.bf16.gmra.mxu0 %v2098
      %v2638 = vpop.f32.mrf.mxu0
      %v2639 = vadd.f32 %v2454, %v2638
      %v2640 = vpop.f32.mrf.mxu0
      %v2641 = vpop.f32.mrf.mxu0
      %v2642 = vadd.f32 %v2457, %v2641
      %v2643 = vpop.f32.mrf.mxu0
      %2644 = vmatprep.mubr.bf16.mxu0 0
      %2645 = vmatmul.mubr.bf16.gmra.mxu0 %v2101
      %v2646 = vpop.f32.mrf.mxu0
      %v2647 = vadd.f32 %v2462, %v2646
      %v2648 = vpop.f32.mrf.mxu0
      %v2649 = vpop.f32.mrf.mxu0
      %v2650 = vadd.f32 %v2465, %v2649
      %v2651 = vpop.f32.mrf.mxu0
      %2652 = vmatprep.mubr.bf16.mxu0 0
      %2653 = vmatmul.mubr.bf16.gmra.mxu0 %v2104
      %v2654 = vpop.f32.mrf.mxu0
      %v2655 = vadd.f32 %v2470, %v2654
      %v2656 = vpop.f32.mrf.mxu0
      %v2657 = vpop.f32.mrf.mxu0
      %v2658 = vadd.f32 %v2473, %v2657
      %v2659 = vpop.f32.mrf.mxu0
      %2660 = vdwg.mxu0
      %v2661 = vmax.f32 %v2511, 0.0
      %v2662 = vmax.f32 %v2514, 0.0
      %v2663 = vmax.f32 %v2519, 0.0
      %v2664 = vmax.f32 %v2522, 0.0
      %v2665 = vmax.f32 %v2527, 0.0
      %v2666 = vmax.f32 %v2530, 0.0
      %v2667 = vmax.f32 %v2535, 0.0
      %v2668 = vmax.f32 %v2538, 0.0
      %v2669 = vmax.f32 %v2543, 0.0
      %v2670 = vmax.f32 %v2546, 0.0
      %v2671 = vmax.f32 %v2551, 0.0
      %v2672 = vmax.f32 %v2554, 0.0
      %v2673 = vmax.f32 %v2559, 0.0
      %v2674 = vmax.f32 %v2562, 0.0
      %v2675 = vmax.f32 %v2567, 0.0
      %v2676 = vmax.f32 %v2570, 0.0
      %v2677 = vmax.f32 %v2575, 0.0
      %v2678 = vmax.f32 %v2578, 0.0
      %v2679 = vmax.f32 %v2583, 0.0
      %v2680 = vmax.f32 %v2586, 0.0
      %v2681 = vmax.f32 %v2591, 0.0
      %v2682 = vmax.f32 %v2594, 0.0
      %v2683 = vmax.f32 %v2599, 0.0
      %v2684 = vmax.f32 %v2602, 0.0
      %v2685 = vmax.f32 %v2607, 0.0
      %v2686 = vmax.f32 %v2610, 0.0
      %v2687 = vmax.f32 %v2615, 0.0
      %v2688 = vmax.f32 %v2618, 0.0
      %v2689 = vmax.f32 %v2623, 0.0
      %v2690 = vmax.f32 %v2626, 0.0
      %v2691 = vmax.f32 %v2631, 0.0
      %v2692 = vmax.f32 %v2634, 0.0
      %v2693 = vmax.f32 %v2639, 0.0
      %v2694 = vmax.f32 %v2642, 0.0
      %v2695 = vmax.f32 %v2647, 0.0
      %v2696 = vmax.f32 %v2650, 0.0
      %v2697 = vmax.f32 %v2655, 0.0
      %v2698 = vmax.f32 %v2658, 0.0
      %vm2737 = vcmask 1042432
      %v2738 = vrot.slane %v2661, 5
      %v2739 = vrot.slane %v2662, 5
      %v2740 = vsel %vm2737, %v2738, %v2739
      %v2741 = vrot.slane %v2663, 5
      %v2742 = vsel %vm2737, %v2739, %v2741
      %v2743 = vrot.slane %v2664, 5
      %v2744 = vsel %vm2737, %v2741, %v2743
      %v2745 = vrot.slane %v2665, 5
      %v2746 = vsel %vm2737, %v2743, %v2745
      %v2747 = vrot.slane %v2666, 5
      %v2748 = vsel %vm2737, %v2745, %v2747
      %v2749 = vrot.slane %v2667, 5
      %v2750 = vsel %vm2737, %v2747, %v2749
      %v2751 = vrot.slane %v2668, 5
      %v2752 = vsel %vm2737, %v2749, %v2751
      %v2753 = vrot.slane %v2669, 5
      %v2754 = vsel %vm2737, %v2751, %v2753
      %v2755 = vrot.slane %v2670, 5
      %v2756 = vsel %vm2737, %v2753, %v2755
      %v2757 = vrot.slane %v2671, 5
      %v2758 = vsel %vm2737, %v2755, %v2757
      %v2759 = vrot.slane %v2672, 5
      %v2760 = vsel %vm2737, %v2757, %v2759
      %v2761 = vrot.slane %v2673, 5
      %v2762 = vsel %vm2737, %v2759, %v2761
      %v2763 = vrot.slane %v2674, 5
      %v2764 = vsel %vm2737, %v2761, %v2763
      %v2765 = vrot.slane %v2675, 5
      %v2766 = vsel %vm2737, %v2763, %v2765
      %v2767 = vrot.slane %v2676, 5
      %v2768 = vsel %vm2737, %v2765, %v2767
      %v2769 = vrot.slane %v2677, 5
      %v2770 = vsel %vm2737, %v2767, %v2769
      %v2771 = vrot.slane %v2678, 5
      %v2772 = vsel %vm2737, %v2769, %v2771
      %v2773 = vrot.slane %v2679, 5
      %v2774 = vsel %vm2737, %v2771, %v2773
      %v2775 = vrot.slane %v2680, 5
      %v2776 = vsel %vm2737, %v2773, %v2775
      %v2777 = vrot.slane %v2681, 5
      %v2778 = vsel %vm2737, %v2775, %v2777
      %v2779 = vrot.slane %v2682, 5
      %v2780 = vsel %vm2737, %v2777, %v2779
      %v2781 = vrot.slane %v2683, 5
      %v2782 = vsel %vm2737, %v2779, %v2781
      %v2783 = vrot.slane %v2684, 5
      %v2784 = vsel %vm2737, %v2781, %v2783
      %v2785 = vrot.slane %v2685, 5
      %v2786 = vsel %vm2737, %v2783, %v2785
      %v2787 = vrot.slane %v2686, 5
      %v2788 = vsel %vm2737, %v2785, %v2787
      %v2789 = vrot.slane %v2687, 5
      %v2790 = vsel %vm2737, %v2787, %v2789
      %v2791 = vrot.slane %v2688, 5
      %v2792 = vsel %vm2737, %v2789, %v2791
      %v2793 = vrot.slane %v2689, 5
      %v2794 = vsel %vm2737, %v2791, %v2793
      %v2795 = vrot.slane %v2690, 5
      %v2796 = vsel %vm2737, %v2793, %v2795
      %v2797 = vrot.slane %v2691, 5
      %v2798 = vsel %vm2737, %v2795, %v2797
      %v2799 = vrot.slane %v2692, 5
      %v2800 = vsel %vm2737, %v2797, %v2799
      %v2801 = vrot.slane %v2693, 5
      %v2802 = vsel %vm2737, %v2799, %v2801
      %v2803 = vrot.slane %v2694, 5
      %v2804 = vsel %vm2737, %v2801, %v2803
      %v2805 = vrot.slane %v2695, 5
      %v2806 = vsel %vm2737, %v2803, %v2805
      %v2807 = vrot.slane %v2696, 5
      %v2808 = vsel %vm2737, %v2805, %v2807
      %v2809 = vrot.slane %v2697, 5
      %v2810 = vsel %vm2737, %v2807, %v2809
      %v2811 = vrot.slane %v2698, 5
      %v2812 = vsel %vm2737, %v2809, %v2811
      %v2851 = vsel %vm2737, 0.0, %v2738
      %vm2852 = vcmask 1044480
      %v2853 = vsel %vm2852, %v2812, 0.0
      %v2854 = vmul.f32 %v521, 0.0
      %v2855 = vmul.f32 %v526, 0.0
      %v2856 = vmul.f32 %v2851, %v531
      %v2857 = vmul.f32 %v2740, %v536
      %v2858 = vmul.f32 %v2742, %v541
      %v2859 = vmul.f32 %v2744, %v546
      %v2860 = vmul.f32 %v2746, %v551
      %v2861 = vmul.f32 %v2748, %v556
      %v2862 = vmul.f32 %v2750, %v561
      %v2863 = vmul.f32 %v2752, %v566
      %v2864 = vmul.f32 %v2754, %v571
      %v2865 = vmul.f32 %v2756, %v576
      %v2866 = vmul.f32 %v2758, %v581
      %v2867 = vmul.f32 %v2760, %v586
      %v2868 = vmul.f32 %v2762, %v591
      %v2869 = vmul.f32 %v2764, %v596
      %v2870 = vmul.f32 %v2766, %v601
      %v2871 = vmul.f32 %v2768, %v606
      %v2872 = vmul.f32 %v2770, %v611
      %v2873 = vmul.f32 %v2772, %v616
      %v2874 = vmul.f32 %v2774, %v621
      %v2875 = vmul.f32 %v2776, %v626
      %v2876 = vmul.f32 %v2778, %v631
      %v2877 = vmul.f32 %v2780, %v636
      %v2878 = vmul.f32 %v2782, %v641
      %v2879 = vmul.f32 %v2784, %v646
      %v2880 = vmul.f32 %v2786, %v651
      %v2881 = vmul.f32 %v2788, %v656
      %v2882 = vmul.f32 %v2790, %v661
      %v2883 = vmul.f32 %v2792, %v666
      %v2884 = vmul.f32 %v2794, %v671
      %v2885 = vmul.f32 %v2796, %v676
      %v2886 = vmul.f32 %v2798, %v681
      %v2887 = vmul.f32 %v2800, %v686
      %v2888 = vmul.f32 %v2802, %v691
      %v2889 = vmul.f32 %v2804, %v696
      %v2890 = vmul.f32 %v2806, %v701
      %v2891 = vmul.f32 %v2808, %v706
      %v2892 = vmul.f32 %v2810, %v711
      %v2893 = vmul.f32 %v2853, %v716
      %v2894 = vmul.f32 %v721, 0.0
      %v2895 = vmul.f32 %v726, 0.0
      %v2896 = vpack.c.bf16 %v2855, %v2854
      %v2897 = vpack.c.bf16 %v2857, %v2856
      %v2898 = vpack.c.bf16 %v2859, %v2858
      %v2899 = vpack.c.bf16 %v2861, %v2860
      %v2900 = vpack.c.bf16 %v2863, %v2862
      %v2901 = vpack.c.bf16 %v2865, %v2864
      %v2902 = vpack.c.bf16 %v2867, %v2866
      %v2903 = vpack.c.bf16 %v2869, %v2868
      %v2904 = vpack.c.bf16 %v2871, %v2870
      %v2905 = vpack.c.bf16 %v2873, %v2872
      %v2906 = vpack.c.bf16 %v2875, %v2874
      %v2907 = vpack.c.bf16 %v2877, %v2876
      %v2908 = vpack.c.bf16 %v2879, %v2878
      %v2909 = vpack.c.bf16 %v2881, %v2880
      %v2910 = vpack.c.bf16 %v2883, %v2882
      %v2911 = vpack.c.bf16 %v2885, %v2884
      %v2912 = vpack.c.bf16 %v2887, %v2886
      %v2913 = vpack.c.bf16 %v2889, %v2888
      %v2914 = vpack.c.bf16 %v2891, %v2890
      %v2915 = vpack.c.bf16 %v2893, %v2892
      %v2916 = vpack.c.bf16 %v2895, %v2894
      %v2938 = vunpack.c.l.b16 %v2896
      %v2939 = vunpack.c.h.b16 %v2896
      %v2940 = vunpack.c.l.b16 %v2897
      %v2941 = vunpack.c.h.b16 %v2897
      %v2942 = vunpack.c.l.b16 %v2898
      %v2943 = vunpack.c.h.b16 %v2898
      %v2944 = vunpack.c.l.b16 %v2899
      %v2945 = vunpack.c.h.b16 %v2899
      %v2946 = vunpack.c.l.b16 %v2900
      %v2947 = vunpack.c.h.b16 %v2900
      %v2948 = vunpack.c.l.b16 %v2901
      %v2949 = vunpack.c.h.b16 %v2901
      %v2950 = vunpack.c.l.b16 %v2902
      %v2951 = vunpack.c.h.b16 %v2902
      %v2952 = vunpack.c.l.b16 %v2903
      %v2953 = vunpack.c.h.b16 %v2903
      %v2954 = vunpack.c.l.b16 %v2904
      %v2955 = vunpack.c.h.b16 %v2904
      %v2956 = vunpack.c.l.b16 %v2905
      %v2957 = vunpack.c.h.b16 %v2905
      %v2958 = vunpack.c.l.b16 %v2906
      %v2959 = vunpack.c.h.b16 %v2906
      %v2960 = vunpack.c.l.b16 %v2907
      %v2961 = vunpack.c.h.b16 %v2907
      %v2962 = vunpack.c.l.b16 %v2908
      %v2963 = vunpack.c.h.b16 %v2908
      %v2964 = vunpack.c.l.b16 %v2909
      %v2965 = vunpack.c.h.b16 %v2909
      %v2966 = vunpack.c.l.b16 %v2910
      %v2967 = vunpack.c.h.b16 %v2910
      %v2968 = vunpack.c.l.b16 %v2911
      %v2969 = vunpack.c.h.b16 %v2911
      %v2970 = vunpack.c.l.b16 %v2912
      %v2971 = vunpack.c.h.b16 %v2912
      %v2972 = vunpack.c.l.b16 %v2913
      %v2973 = vunpack.c.h.b16 %v2913
      %v2974 = vunpack.c.l.b16 %v2914
      %v2975 = vunpack.c.h.b16 %v2914
      %v2976 = vunpack.c.l.b16 %v2915
      %v2977 = vunpack.c.h.b16 %v2915
      %v2978 = vunpack.c.l.b16 %v2916
      %v2979 = vunpack.c.h.b16 %v2916
      %v2980 = vpack.c.b16 %v2938, %v2938
      %v2981 = vpack.c.b16 %v2939, %v2939
      %v2982 = vpack.c.b16 %v2940, %v2940
      %v2983 = vpack.c.b16 %v2941, %v2941
      %v2984 = vpack.c.b16 %v2942, %v2942
      %v2985 = vpack.c.b16 %v2943, %v2943
      %v2986 = vpack.c.b16 %v2944, %v2944
      %v2987 = vpack.c.b16 %v2945, %v2945
      %v2988 = vpack.c.b16 %v2946, %v2946
      %v2989 = vpack.c.b16 %v2947, %v2947
      %v2990 = vpack.c.b16 %v2948, %v2948
      %v2991 = vpack.c.b16 %v2949, %v2949
      %v2992 = vpack.c.b16 %v2950, %v2950
      %v2993 = vpack.c.b16 %v2951, %v2951
      %v2994 = vpack.c.b16 %v2952, %v2952
      %v2995 = vpack.c.b16 %v2953, %v2953
      %v2996 = vpack.c.b16 %v2954, %v2954
      %v2997 = vpack.c.b16 %v2955, %v2955
      %v2998 = vpack.c.b16 %v2956, %v2956
      %v2999 = vpack.c.b16 %v2957, %v2957
      %v3000 = vpack.c.b16 %v2958, %v2958
      %v3001 = vpack.c.b16 %v2959, %v2959
      %v3002 = vpack.c.b16 %v2960, %v2960
      %v3003 = vpack.c.b16 %v2961, %v2961
      %v3004 = vpack.c.b16 %v2962, %v2962
      %v3005 = vpack.c.b16 %v2963, %v2963
      %v3006 = vpack.c.b16 %v2964, %v2964
      %v3007 = vpack.c.b16 %v2965, %v2965
      %v3008 = vpack.c.b16 %v2966, %v2966
      %v3009 = vpack.c.b16 %v2967, %v2967
      %v3010 = vpack.c.b16 %v2968, %v2968
      %v3011 = vpack.c.b16 %v2969, %v2969
      %v3012 = vpack.c.b16 %v2970, %v2970
      %v3013 = vpack.c.b16 %v2971, %v2971
      %v3014 = vpack.c.b16 %v2972, %v2972
      %v3015 = vpack.c.b16 %v2973, %v2973
      %v3016 = vpack.c.b16 %v2974, %v2974
      %v3017 = vpack.c.b16 %v2975, %v2975
      %v3018 = vpack.c.b16 %v2976, %v2976
      %v3019 = vpack.c.b16 %v2977, %v2977
      %v3020 = vpack.c.b16 %v2978, %v2978
      %v3021 = vpack.c.b16 %v2979, %v2979
      %vm3064 = vcmask 519168
      %3065 = vst.msk [vmem:[%s287] sm:$0xf] %vm3064, %v2980
      %3066 = vst.msk [vmem:[%s287 + $0x4] sm:$0xf] %vm3064, %v2981
      %3067 = vst.msk [vmem:[%s287 + $0x8] sm:$0xf] %vm3064, %v2982
      %3068 = vst.msk [vmem:[%s287 + $0xc] sm:$0xf] %vm3064, %v2983
      %3069 = vst.msk [vmem:[%s287 + $0x10] sm:$0xf] %vm3064, %v2984
      %3070 = vst.msk [vmem:[%s287 + $0x14] sm:$0xf] %vm3064, %v2985
      %3071 = vst.msk [vmem:[%s287 + $0x18] sm:$0xf] %vm3064, %v2986
      %3072 = vst.msk [vmem:[%s287 + $0x1c] sm:$0xf] %vm3064, %v2987
      %3073 = vst.msk [vmem:[%s287 + $0x20] sm:$0xf] %vm3064, %v2988
      %3074 = vst.msk [vmem:[%s287 + $0x24] sm:$0xf] %vm3064, %v2989
      %3075 = vst.msk [vmem:[%s287 + $0x28] sm:$0xf] %vm3064, %v2990
      %3076 = vst.msk [vmem:[%s287 + $0x2c] sm:$0xf] %vm3064, %v2991
      %3077 = vst.msk [vmem:[%s287 + $0x30] sm:$0xf] %vm3064, %v2992
      %3078 = vst.msk [vmem:[%s287 + $0x34] sm:$0xf] %vm3064, %v2993
      %3079 = vst.msk [vmem:[%s287 + $0x38] sm:$0xf] %vm3064, %v2994
      %3080 = vst.msk [vmem:[%s287 + $0x3c] sm:$0xf] %vm3064, %v2995
      %3081 = vst.msk [vmem:[%s287 + $0x40] sm:$0xf] %vm3064, %v2996
      %3082 = vst.msk [vmem:[%s287 + $0x44] sm:$0xf] %vm3064, %v2997
      %3083 = vst.msk [vmem:[%s287 + $0x48] sm:$0xf] %vm3064, %v2998
      %3084 = vst.msk [vmem:[%s287 + $0x4c] sm:$0xf] %vm3064, %v2999
      %3085 = vst.msk [vmem:[%s287 + $0x50] sm:$0xf] %vm3064, %v3000
      %3086 = vst.msk [vmem:[%s287 + $0x54] sm:$0xf] %vm3064, %v3001
      %3087 = vst.msk [vmem:[%s287 + $0x58] sm:$0xf] %vm3064, %v3002
      %3088 = vst.msk [vmem:[%s287 + $0x5c] sm:$0xf] %vm3064, %v3003
      %3089 = vst.msk [vmem:[%s287 + $0x60] sm:$0xf] %vm3064, %v3004
      %3090 = vst.msk [vmem:[%s287 + $0x64] sm:$0xf] %vm3064, %v3005
      %3091 = vst.msk [vmem:[%s287 + $0x68] sm:$0xf] %vm3064, %v3006
      %3092 = vst.msk [vmem:[%s287 + $0x6c] sm:$0xf] %vm3064, %v3007
      %3093 = vst.msk [vmem:[%s287 + $0x70] sm:$0xf] %vm3064, %v3008
      %3094 = vst.msk [vmem:[%s287 + $0x74] sm:$0xf] %vm3064, %v3009
      %3095 = vst.msk [vmem:[%s287 + $0x78] sm:$0xf] %vm3064, %v3010
      %3096 = vst.msk [vmem:[%s287 + $0x7c] sm:$0xf] %vm3064, %v3011
      %3097 = vst.msk [vmem:[%s287 + $0x80] sm:$0xf] %vm3064, %v3012
      %3098 = vst.msk [vmem:[%s287 + $0x84] sm:$0xf] %vm3064, %v3013
      %3099 = vst.msk [vmem:[%s287 + $0x88] sm:$0xf] %vm3064, %v3014
      %3100 = vst.msk [vmem:[%s287 + $0x8c] sm:$0xf] %vm3064, %v3015
      %3101 = vst.msk [vmem:[%s287 + $0x90] sm:$0xf] %vm3064, %v3016
      %3102 = vst.msk [vmem:[%s287 + $0x94] sm:$0xf] %vm3064, %v3017
      %3103 = vst.msk [vmem:[%s287 + $0x98] sm:$0xf] %vm3064, %v3018
      %3104 = vst.msk [vmem:[%s287 + $0x9c] sm:$0xf] %vm3064, %v3019
      %3105 = vst.msk [vmem:[%s287 + $0xa0] sm:$0xf] %vm3064, %v3020
      %3106 = vst.msk [vmem:[%s287 + $0xa4] sm:$0xf] %vm3064, %v3021
      %v3107 = vunpack.c.l.bf16 %v2896
      %v3108 = vunpack.c.h.bf16 %v2896
      %v3109 = vunpack.c.l.bf16 %v2897
      %v3110 = vunpack.c.h.bf16 %v2897
      %v3111 = vunpack.c.l.bf16 %v2898
      %v3112 = vunpack.c.h.bf16 %v2898
      %v3113 = vunpack.c.l.bf16 %v2899
      %v3114 = vunpack.c.h.bf16 %v2899
      %v3115 = vunpack.c.l.bf16 %v2900
      %v3116 = vunpack.c.h.bf16 %v2900
      %v3117 = vunpack.c.l.bf16 %v2901
      %v3118 = vunpack.c.h.bf16 %v2901
      %v3119 = vunpack.c.l.bf16 %v2902
      %v3120 = vunpack.c.h.bf16 %v2902
      %v3121 = vunpack.c.l.bf16 %v2903
      %v3122 = vunpack.c.h.bf16 %v2903
      %v3123 = vunpack.c.l.bf16 %v2904
      %v3124 = vunpack.c.h.bf16 %v2904
      %v3125 = vunpack.c.l.bf16 %v2905
      %v3126 = vunpack.c.h.bf16 %v2905
      %v3127 = vunpack.c.l.bf16 %v2906
      %v3128 = vunpack.c.h.bf16 %v2906
      %v3129 = vunpack.c.l.bf16 %v2907
      %v3130 = vunpack.c.h.bf16 %v2907
      %v3131 = vunpack.c.l.bf16 %v2908
      %v3132 = vunpack.c.h.bf16 %v2908
      %v3133 = vunpack.c.l.bf16 %v2909
      %v3134 = vunpack.c.h.bf16 %v2909
      %v3135 = vunpack.c.l.bf16 %v2910
      %v3136 = vunpack.c.h.bf16 %v2910
      %v3137 = vunpack.c.l.bf16 %v2911
      %v3138 = vunpack.c.h.bf16 %v2911
      %v3139 = vunpack.c.l.bf16 %v2912
      %v3140 = vunpack.c.h.bf16 %v2912
      %v3141 = vunpack.c.l.bf16 %v2913
      %v3142 = vunpack.c.h.bf16 %v2913
      %v3143 = vunpack.c.l.bf16 %v2914
      %v3144 = vunpack.c.h.bf16 %v2914
      %v3145 = vunpack.c.l.bf16 %v2915
      %v3146 = vunpack.c.h.bf16 %v2915
      %v3147 = vunpack.c.l.bf16 %v2916
      %v3148 = vunpack.c.h.bf16 %v2916
      %v3149 = vsel %vm770, %v3107, 0.0
      %v3150 = vsel %vm770, %v3108, 0.0
      %v3151 = vadd.f32 %v3149, %v3150
      %v3152 = vsel %vm770, %v3109, 0.0
      %v3153 = vadd.f32 %v3151, %v3152
      %v3154 = vsel %vm770, %v3110, 0.0
      %v3155 = vadd.f32 %v3153, %v3154
      %v3156 = vsel %vm770, %v3111, 0.0
      %v3157 = vadd.f32 %v3155, %v3156
      %v3158 = vsel %vm770, %v3112, 0.0
      %v3159 = vadd.f32 %v3157, %v3158
      %v3160 = vsel %vm770, %v3113, 0.0
      %v3161 = vadd.f32 %v3159, %v3160
      %v3162 = vsel %vm770, %v3114, 0.0
      %v3163 = vadd.f32 %v3161, %v3162
      %v3164 = vsel %vm770, %v3115, 0.0
      %v3165 = vadd.f32 %v3163, %v3164
      %v3166 = vsel %vm770, %v3116, 0.0
      %v3167 = vadd.f32 %v3165, %v3166
      %v3168 = vsel %vm770, %v3117, 0.0
      %v3169 = vadd.f32 %v3167, %v3168
      %v3170 = vsel %vm770, %v3118, 0.0
      %v3171 = vadd.f32 %v3169, %v3170
      %v3172 = vsel %vm770, %v3119, 0.0
      %v3173 = vadd.f32 %v3171, %v3172
      %v3174 = vsel %vm770, %v3120, 0.0
      %v3175 = vadd.f32 %v3173, %v3174
      %v3176 = vsel %vm770, %v3121, 0.0
      %v3177 = vadd.f32 %v3175, %v3176
      %v3178 = vsel %vm770, %v3122, 0.0
      %v3179 = vadd.f32 %v3177, %v3178
      %v3180 = vsel %vm770, %v3123, 0.0
      %v3181 = vadd.f32 %v3179, %v3180
      %v3182 = vsel %vm770, %v3124, 0.0
      %v3183 = vadd.f32 %v3181, %v3182
      %v3184 = vsel %vm770, %v3125, 0.0
      %v3185 = vadd.f32 %v3183, %v3184
      %v3186 = vsel %vm770, %v3126, 0.0
      %v3187 = vadd.f32 %v3185, %v3186
      %v3188 = vsel %vm770, %v3127, 0.0
      %v3189 = vadd.f32 %v3187, %v3188
      %v3190 = vsel %vm770, %v3128, 0.0
      %v3191 = vadd.f32 %v3189, %v3190
      %v3192 = vsel %vm770, %v3129, 0.0
      %v3193 = vadd.f32 %v3191, %v3192
      %v3194 = vsel %vm770, %v3130, 0.0
      %v3195 = vadd.f32 %v3193, %v3194
      %v3196 = vsel %vm770, %v3131, 0.0
      %v3197 = vadd.f32 %v3195, %v3196
      %v3198 = vsel %vm770, %v3132, 0.0
      %v3199 = vadd.f32 %v3197, %v3198
      %v3200 = vsel %vm770, %v3133, 0.0
      %v3201 = vadd.f32 %v3199, %v3200
      %v3202 = vsel %vm770, %v3134, 0.0
      %v3203 = vadd.f32 %v3201, %v3202
      %v3204 = vsel %vm770, %v3135, 0.0
      %v3205 = vadd.f32 %v3203, %v3204
      %v3206 = vsel %vm770, %v3136, 0.0
      %v3207 = vadd.f32 %v3205, %v3206
      %v3208 = vsel %vm770, %v3137, 0.0
      %v3209 = vadd.f32 %v3207, %v3208
      %v3210 = vsel %vm770, %v3138, 0.0
      %v3211 = vadd.f32 %v3209, %v3210
      %v3212 = vsel %vm770, %v3139, 0.0
      %v3213 = vadd.f32 %v3211, %v3212
      %v3214 = vsel %vm770, %v3140, 0.0
      %v3215 = vadd.f32 %v3213, %v3214
      %v3216 = vsel %vm770, %v3141, 0.0
      %v3217 = vadd.f32 %v3215, %v3216
      %v3218 = vsel %vm770, %v3142, 0.0
      %v3219 = vadd.f32 %v3217, %v3218
      %v3220 = vsel %vm770, %v3143, 0.0
      %v3221 = vadd.f32 %v3219, %v3220
      %v3222 = vsel %vm770, %v3144, 0.0
      %v3223 = vadd.f32 %v3221, %v3222
      %v3224 = vsel %vm770, %v3145, 0.0
      %v3225 = vadd.f32 %v3223, %v3224
      %v3226 = vsel %vm770, %v3146, 0.0
      %v3227 = vadd.f32 %v3225, %v3226
      %v3228 = vsel %vm770, %v3147, 0.0
      %v3229 = vadd.f32 %v3227, %v3228
      %v3230 = vsel %vm770, %v3148, 0.0
      %v3231 = vadd.f32 %v3229, %v3230
      %v3232 = vrot.slane %v3231, 4
      %v3233 = vadd.f32 %v3231, %v3232
      %v3234 = vrot.slane %v3233, 2
      %v3235 = vadd.f32 %v3233, %v3234
      %v3236 = vrot.slane %v3235, 1
      %v3237 = vadd.f32 %v3235, %v3236
      %v3238 = vmul.f32 %v3107, %v3107
      %v3239 = vmul.f32 %v3108, %v3108
      %v3240 = vmul.f32 %v3109, %v3109
      %v3241 = vmul.f32 %v3110, %v3110
      %v3242 = vmul.f32 %v3111, %v3111
      %v3243 = vmul.f32 %v3112, %v3112
      %v3244 = vmul.f32 %v3113, %v3113
      %v3245 = vmul.f32 %v3114, %v3114
      %v3246 = vmul.f32 %v3115, %v3115
      %v3247 = vmul.f32 %v3116, %v3116
      %v3248 = vmul.f32 %v3117, %v3117
      %v3249 = vmul.f32 %v3118, %v3118
      %v3250 = vmul.f32 %v3119, %v3119
      %v3251 = vmul.f32 %v3120, %v3120
      %v3252 = vmul.f32 %v3121, %v3121
      %v3253 = vmul.f32 %v3122, %v3122
      %v3254 = vmul.f32 %v3123, %v3123
      %v3255 = vmul.f32 %v3124, %v3124
      %v3256 = vmul.f32 %v3125, %v3125
      %v3257 = vmul.f32 %v3126, %v3126
      %v3258 = vmul.f32 %v3127, %v3127
      %v3259 = vmul.f32 %v3128, %v3128
      %v3260 = vmul.f32 %v3129, %v3129
      %v3261 = vmul.f32 %v3130, %v3130
      %v3262 = vmul.f32 %v3131, %v3131
      %v3263 = vmul.f32 %v3132, %v3132
      %v3264 = vmul.f32 %v3133, %v3133
      %v3265 = vmul.f32 %v3134, %v3134
      %v3266 = vmul.f32 %v3135, %v3135
      %v3267 = vmul.f32 %v3136, %v3136
      %v3268 = vmul.f32 %v3137, %v3137
      %v3269 = vmul.f32 %v3138, %v3138
      %v3270 = vmul.f32 %v3139, %v3139
      %v3271 = vmul.f32 %v3140, %v3140
      %v3272 = vmul.f32 %v3141, %v3141
      %v3273 = vmul.f32 %v3142, %v3142
      %v3274 = vmul.f32 %v3143, %v3143
      %v3275 = vmul.f32 %v3144, %v3144
      %v3276 = vmul.f32 %v3145, %v3145
      %v3277 = vmul.f32 %v3146, %v3146
      %v3278 = vmul.f32 %v3147, %v3147
      %v3279 = vmul.f32 %v3148, %v3148
      %v3280 = vsel %vm770, %v3238, 0.0
      %v3281 = vsel %vm770, %v3239, 0.0
      %v3282 = vadd.f32 %v3280, %v3281
      %v3283 = vsel %vm770, %v3240, 0.0
      %v3284 = vadd.f32 %v3282, %v3283
      %v3285 = vsel %vm770, %v3241, 0.0
      %v3286 = vadd.f32 %v3284, %v3285
      %v3287 = vsel %vm770, %v3242, 0.0
      %v3288 = vadd.f32 %v3286, %v3287
      %v3289 = vsel %vm770, %v3243, 0.0
      %v3290 = vadd.f32 %v3288, %v3289
      %v3291 = vsel %vm770, %v3244, 0.0
      %v3292 = vadd.f32 %v3290, %v3291
      %v3293 = vsel %vm770, %v3245, 0.0
      %v3294 = vadd.f32 %v3292, %v3293
      %v3295 = vsel %vm770, %v3246, 0.0
      %v3296 = vadd.f32 %v3294, %v3295
      %v3297 = vsel %vm770, %v3247, 0.0
      %v3298 = vadd.f32 %v3296, %v3297
      %v3299 = vsel %vm770, %v3248, 0.0
      %v3300 = vadd.f32 %v3298, %v3299
      %v3301 = vsel %vm770, %v3249, 0.0
      %v3302 = vadd.f32 %v3300, %v3301
      %v3303 = vsel %vm770, %v3250, 0.0
      %v3304 = vadd.f32 %v3302, %v3303
      %v3305 = vsel %vm770, %v3251, 0.0
      %v3306 = vadd.f32 %v3304, %v3305
      %v3307 = vsel %vm770, %v3252, 0.0
      %v3308 = vadd.f32 %v3306, %v3307
      %v3309 = vsel %vm770, %v3253, 0.0
      %v3310 = vadd.f32 %v3308, %v3309
      %v3311 = vsel %vm770, %v3254, 0.0
      %v3312 = vadd.f32 %v3310, %v3311
      %v3313 = vsel %vm770, %v3255, 0.0
      %v3314 = vadd.f32 %v3312, %v3313
      %v3315 = vsel %vm770, %v3256, 0.0
      %v3316 = vadd.f32 %v3314, %v3315
      %v3317 = vsel %vm770, %v3257, 0.0
      %v3318 = vadd.f32 %v3316, %v3317
      %v3319 = vsel %vm770, %v3258, 0.0
      %v3320 = vadd.f32 %v3318, %v3319
      %v3321 = vsel %vm770, %v3259, 0.0
      %v3322 = vadd.f32 %v3320, %v3321
      %v3323 = vsel %vm770, %v3260, 0.0
      %v3324 = vadd.f32 %v3322, %v3323
      %v3325 = vsel %vm770, %v3261, 0.0
      %v3326 = vadd.f32 %v3324, %v3325
      %v3327 = vsel %vm770, %v3262, 0.0
      %v3328 = vadd.f32 %v3326, %v3327
      %v3329 = vsel %vm770, %v3263, 0.0
      %v3330 = vadd.f32 %v3328, %v3329
      %v3331 = vsel %vm770, %v3264, 0.0
      %v3332 = vadd.f32 %v3330, %v3331
      %v3333 = vsel %vm770, %v3265, 0.0
      %v3334 = vadd.f32 %v3332, %v3333
      %v3335 = vsel %vm770, %v3266, 0.0
      %v3336 = vadd.f32 %v3334, %v3335
      %v3337 = vsel %vm770, %v3267, 0.0
      %v3338 = vadd.f32 %v3336, %v3337
      %v3339 = vsel %vm770, %v3268, 0.0
      %v3340 = vadd.f32 %v3338, %v3339
      %v3341 = vsel %vm770, %v3269, 0.0
      %v3342 = vadd.f32 %v3340, %v3341
      %v3343 = vsel %vm770, %v3270, 0.0
      %v3344 = vadd.f32 %v3342, %v3343
      %v3345 = vsel %vm770, %v3271, 0.0
      %v3346 = vadd.f32 %v3344, %v3345
      %v3347 = vsel %vm770, %v3272, 0.0
      %v3348 = vadd.f32 %v3346, %v3347
      %v3349 = vsel %vm770, %v3273, 0.0
      %v3350 = vadd.f32 %v3348, %v3349
      %v3351 = vsel %vm770, %v3274, 0.0
      %v3352 = vadd.f32 %v3350, %v3351
      %v3353 = vsel %vm770, %v3275, 0.0
      %v3354 = vadd.f32 %v3352, %v3353
      %v3355 = vsel %vm770, %v3276, 0.0
      %v3356 = vadd.f32 %v3354, %v3355
      %v3357 = vsel %vm770, %v3277, 0.0
      %v3358 = vadd.f32 %v3356, %v3357
      %v3359 = vsel %vm770, %v3278, 0.0
      %v3360 = vadd.f32 %v3358, %v3359
      %v3361 = vsel %vm770, %v3279, 0.0
      %v3362 = vadd.f32 %v3360, %v3361
      %v3363 = vrot.slane %v3362, 4
      %v3364 = vadd.f32 %v3362, %v3363
      %v3365 = vrot.slane %v3364, 2
      %v3366 = vadd.f32 %v3364, %v3365
      %v3367 = vrot.slane %v3366, 1
      %v3368 = vadd.f32 %v3366, %v3367
      %vm3369 = vcmask 1040384
      %v3370 = vsel %vm3369, %v3237, %v3368
      %vm3371 = vcmask 517120
      %3372 = vst.msk [vmem:[%s292] sm:$0x3] %vm3371, %v3370
      %s3373 = smul.u32 42, %s19
      %p3374 = scmp.lt.s32.totalorder %s3373, 83
      %s3375 = scalar_select %p3374, %s3373, 83
      %s3376 = smul.addr %s3375, 4
      %s3377 = scalar_lea.vmem %s6, %s3376
      %p3378 = scmp.lt.s32.totalorder %s19, 1
      %s3379 = scalar_select %p3378, %s19, 1
      %s3380 = smul.addr %s3379, 2
      %s3381 = scalar_lea.vmem %s7, %s3380
      // Predicated region
      $region45: #{decoder_forward.4} parent=43 // pred_check
        %p3382 = pneg %p168
      $region46: #{decoder_forward.4} parent=43 // pred_check_branch
        %3384 = sbr.rel (%p3382) target = $region48
      $region47: #{decoder_forward.4} parent=43 // pred_region
        %s3385 = smul.u32 42, %s19
      $region48: #{decoder_forward.4} parent=43 // pred_fallthru
        _
      // Predicated region
      $region49: #{decoder_forward.4} parent=43 // pred_check
        %p3386 = pneg %p194
      $region50: #{decoder_forward.4} parent=43 // pred_check_branch
        %3388 = sbr.rel (%p3386) target = $region52
      $region51: #{decoder_forward.4} parent=43 // pred_region
        _
      $region52: #{decoder_forward.4} parent=43 // pred_fallthru
        _
    $region44: #{decoder_forward.4} parent=5 // pred_fallthru
      _
    %p3389 = scmp.le.s32.totalorder 2, %s14
    // Predicated region
    $region53: #{decoder_forward.4} parent=5 // pred_check
      %p3390 = pneg %p3389
    $region54: #{decoder_forward.4} parent=5 // pred_check_branch
      %3392 = sbr.rel (%p3390) target = $region56
    $region55: #{decoder_forward.4} parent=5 // pred_region
      %s3393 = ssub.s32 %s14, 2
      // Predicated region
      $region57: #{decoder_forward.4} parent=55 // pred_check
        %p3394 = pneg %p174
      $region58: #{decoder_forward.4} parent=55 // pred_check_branch
        %3396 = sbr.rel (%p3394) target = $region60
      $region59: #{decoder_forward.4} parent=55 // pred_region
        %s3397 = smul.u32 42, %s20
        %p3398 = scmp.lt.s32.totalorder %s3397, 83
        %s3399 = scalar_select %p3398, %s3397, 83
        %s3400 = smul.addr %s3399, 4
        %s3401 = scalar_lea.vmem %s6, %s3400
      $region60: #{decoder_forward.4} parent=55 // pred_fallthru
        _
      // Predicated region
      $region61: #{decoder_forward.4} parent=55 // pred_check
        %p3402 = pneg %p200
      $region62: #{decoder_forward.4} parent=55 // pred_check_branch
        %3404 = sbr.rel (%p3402) target = $region64
      $region63: #{decoder_forward.4} parent=55 // pred_region
        %p3405 = scmp.lt.s32.totalorder %s20, 1
        %s3406 = scalar_select %p3405, %s20, 1
        %s3407 = smul.addr %s3406, 2
        %s3408 = scalar_lea.vmem %s7, %s3407
      $region64: #{decoder_forward.4} parent=55 // pred_fallthru
        _
    $region56: #{decoder_forward.4} parent=5 // pred_fallthru
      _
  $region6: #{decoder_forward.4} parent=0 // loop_footer
    %s18 = sadd.s32 1, %s14
  $region7: #{decoder_forward.4} parent=0 // loop_footer_branch
    %13 = sbr.rel target = $region3
  $region8: #{decoder_forward.4} parent=0 // loop_exit
    _

// kernel: decoder_forward.5
$region0: #{decoder_forward.5}
  #allocation0 [shape = 'u32[]', space=smem, size = 0x4, offset = 0x4, fixed_abs, tag = 'smem constant byte address 0x4 - core index']
  #allocation1 [shape = 'u32[144,128]{1,0:T(1,128)}', space=vmem, size = 0x12000, scoped, tag = 'internal scratch']
  #allocation2 [shape = 'f32[336,64]{1,0:T(8,128)}', space=vmem, size = 0x2a000, scoped, tag = 'scratch operand']
  %s0 = inlined_call_operand.vmem [shape: f32[336,1], index: 0, kind: input, shape index: {}]
  %s1 = inlined_call_operand.vmem [shape: bf16[672,64], index: 1, kind: input, shape index: {}]
  %s2 = inlined_call_operand.vmem [shape: f32[1,64], index: 2, kind: input, shape index: {}]
  %s3 = inlined_call_operand.vmem [shape: f32[1,64], index: 3, kind: input, shape index: {}]
  %s4 = inlined_call_operand.vmem [shape: bf16[576,128], index: 4, kind: input, shape index: {}]
  %s5 = inlined_call_operand.vmem [shape: f32[1,128], index: 5, kind: input, shape index: {}]
  %s6 = inlined_call_operand.vmem [shape: f32[672,1], index: 6, kind: output, shape index: {}]
  %s7 = sld [smem:[#allocation0]]
  $region57: #{decoder_forward.5} parent=0
    _
  %s9 = ssub.s32 1, %s7
  %s10 = scalar_select 0, %s9, %s7
  loop: start=0, step=1, limit=4
  $region2: #{decoder_forward.5} parent=0 // loop_pre_header
    _
  $region3: #{decoder_forward.5} parent=0 // loop_header
    %s12 = sphi 0, %s16
    %p13 = scmp.ge.s32.totalorder %s12, 4
    %s20 = sphi 0, %s20
    %s22 = sphi 0, %s20
    %s23 = sphi 0, %s22
    %s37 = sphi 0, %s23
    %s43 = sphi 0, %s45
    %s46 = sphi 0, %s43
    %s47 = sphi 0, %s46
    %s63 = sphi 0, %s47
    %s67 = sphi 0, %s67
    %s69 = sphi 0, %s67
    %s70 = sphi 0, %s69
    %s84 = sphi 0, %s70
    %s88 = sphi 0, %s88
    %s90 = sphi 0, %s88
    %s91 = sphi 0, %s90
    %s105 = sphi 0, %s91
    %s109 = sphi 0, %s109
    %s111 = sphi 0, %s109
    %s112 = sphi 0, %s111
    %s126 = sphi 0, %s112
    %s130 = sphi 0, %s130
    %s132 = sphi 0, %s130
    %s133 = sphi 0, %s132
    %s147 = sphi 0, %s133
    %s153 = sphi 0, %s155
    %s156 = sphi 0, %s153
    %s157 = sphi 0, %s156
    %s173 = sphi 0, %s157
  $region4: #{decoder_forward.5} parent=0 // loop_header_branch
    %15 = sbr.rel (%p13) target = $region8
  $region5: #{decoder_forward.5} parent=0 // loop_body
    %s17 = ssub.s32 %s12, 1
    %s18 = ssub.s32 %s12, 2
    %s19 = sadd.s32 %s12, 1
    %s21 = sadd.s32 %s20, 1
    %p24 = scmp.eq.s32.totalorder %s12, 1
    %p25 = scmp.ne.s32.totalorder %s20, %s22
    %p26 = scmp.eq.s32.totalorder %s12, 0
    %p27 = por %p25, %p26
    %p28 = scmp.ne.s32.totalorder %s20, %s22
    %p29 = scmp.eq.s32.totalorder %s17, 1
    %p30 = por %p28, %p29
    %p31 = scmp.ne.s32.totalorder %s22, %s23
    %p32 = scmp.eq.s32.totalorder %s17, 0
    %p33 = por %p31, %p32
    %p34 = scmp.ne.s32.totalorder %s22, %s23
    %p35 = scmp.eq.s32.totalorder %s18, 1
    %p36 = por %p34, %p35
    %p38 = scmp.ne.s32.totalorder %s23, %s37
    %p39 = scmp.eq.s32.totalorder %s18, 0
    %p40 = por %p38, %p39
    %s41 = ssub.s32 %s12, %s19
    %p42 = scmp.eq.s32.totalorder %s41, 0
    %s44 = sadd.s32 %s43, 1
    %s45 = scalar_select %p42, %s43, %s44
    %p48 = pneg %p42
    %p49 = scmp.eq.s32.totalorder %s12, 1
    %p50 = por %p48, %p49
    %p51 = scmp.ne.s32.totalorder %s43, %s46
    %p52 = scmp.eq.s32.totalorder %s12, 0
    %p53 = por %p51, %p52
    %p54 = scmp.ne.s32.totalorder %s43, %s46
    %p55 = scmp.eq.s32.totalorder %s17, 1
    %p56 = por %p54, %p55
    %p57 = scmp.ne.s32.totalorder %s46, %s47
    %p58 = scmp.eq.s32.totalorder %s17, 0
    %p59 = por %p57, %p58
    %p60 = scmp.ne.s32.totalorder %s46, %s47
    %p61 = scmp.eq.s32.totalorder %s18, 1
    %p62 = por %p60, %p61
    %p64 = scmp.ne.s32.totalorder %s47, %s63
    %p65 = scmp.eq.s32.totalorder %s18, 0
    %p66 = por %p64, %p65
    %s68 = sadd.s32 %s67, 1
    %p71 = scmp.eq.s32.totalorder %s12, 1
    %p72 = scmp.ne.s32.totalorder %s67, %s69
    %p73 = scmp.eq.s32.totalorder %s12, 0
    %p74 = por %p72, %p73
    %p75 = scmp.ne.s32.totalorder %s67, %s69
    %p76 = scmp.eq.s32.totalorder %s17, 1
    %p77 = por %p75, %p76
    %p78 = scmp.ne.s32.totalorder %s69, %s70
    %p79 = scmp.eq.s32.totalorder %s17, 0
    %p80 = por %p78, %p79
    %p81 = scmp.ne.s32.totalorder %s69, %s70
    %p82 = scmp.eq.s32.totalorder %s18, 1
    %p83 = por %p81, %p82
    %p85 = scmp.ne.s32.totalorder %s70, %s84
    %p86 = scmp.eq.s32.totalorder %s18, 0
    %p87 = por %p85, %p86
    %s89 = sadd.s32 %s88, 1
    %p92 = scmp.eq.s32.totalorder %s12, 1
    %p93 = scmp.ne.s32.totalorder %s88, %s90
    %p94 = scmp.eq.s32.totalorder %s12, 0
    %p95 = por %p93, %p94
    %p96 = scmp.ne.s32.totalorder %s88, %s90
    %p97 = scmp.eq.s32.totalorder %s17, 1
    %p98 = por %p96, %p97
    %p99 = scmp.ne.s32.totalorder %s90, %s91
    %p100 = scmp.eq.s32.totalorder %s17, 0
    %p101 = por %p99, %p100
    %p102 = scmp.ne.s32.totalorder %s90, %s91
    %p103 = scmp.eq.s32.totalorder %s18, 1
    %p104 = por %p102, %p103
    %p106 = scmp.ne.s32.totalorder %s91, %s105
    %p107 = scmp.eq.s32.totalorder %s18, 0
    %p108 = por %p106, %p107
    %s110 = sadd.s32 %s109, 1
    %p113 = scmp.eq.s32.totalorder %s12, 1
    %p114 = scmp.ne.s32.totalorder %s109, %s111
    %p115 = scmp.eq.s32.totalorder %s12, 0
    %p116 = por %p114, %p115
    %p117 = scmp.ne.s32.totalorder %s109, %s111
    %p118 = scmp.eq.s32.totalorder %s17, 1
    %p119 = por %p117, %p118
    %p120 = scmp.ne.s32.totalorder %s111, %s112
    %p121 = scmp.eq.s32.totalorder %s17, 0
    %p122 = por %p120, %p121
    %p123 = scmp.ne.s32.totalorder %s111, %s112
    %p124 = scmp.eq.s32.totalorder %s18, 1
    %p125 = por %p123, %p124
    %p127 = scmp.ne.s32.totalorder %s112, %s126
    %p128 = scmp.eq.s32.totalorder %s18, 0
    %p129 = por %p127, %p128
    %s131 = sadd.s32 %s130, 1
    %p134 = scmp.eq.s32.totalorder %s12, 1
    %p135 = scmp.ne.s32.totalorder %s130, %s132
    %p136 = scmp.eq.s32.totalorder %s12, 0
    %p137 = por %p135, %p136
    %p138 = scmp.ne.s32.totalorder %s130, %s132
    %p139 = scmp.eq.s32.totalorder %s17, 1
    %p140 = por %p138, %p139
    %p141 = scmp.ne.s32.totalorder %s132, %s133
    %p142 = scmp.eq.s32.totalorder %s17, 0
    %p143 = por %p141, %p142
    %p144 = scmp.ne.s32.totalorder %s132, %s133
    %p145 = scmp.eq.s32.totalorder %s18, 1
    %p146 = por %p144, %p145
    %p148 = scmp.ne.s32.totalorder %s133, %s147
    %p149 = scmp.eq.s32.totalorder %s18, 0
    %p150 = por %p148, %p149
    %s151 = ssub.s32 %s12, %s19
    %p152 = scmp.eq.s32.totalorder %s151, 0
    %s154 = sadd.s32 %s153, 1
    %s155 = scalar_select %p152, %s153, %s154
    %p158 = pneg %p152
    %p159 = scmp.eq.s32.totalorder %s12, 1
    %p160 = por %p158, %p159
    %p161 = scmp.ne.s32.totalorder %s153, %s156
    %p162 = scmp.eq.s32.totalorder %s12, 0
    %p163 = por %p161, %p162
    %p164 = scmp.ne.s32.totalorder %s153, %s156
    %p165 = scmp.eq.s32.totalorder %s17, 1
    %p166 = por %p164, %p165
    %p167 = scmp.ne.s32.totalorder %s156, %s157
    %p168 = scmp.eq.s32.totalorder %s17, 0
    %p169 = por %p167, %p168
    %p170 = scmp.ne.s32.totalorder %s156, %s157
    %p171 = scmp.eq.s32.totalorder %s18, 1
    %p172 = por %p170, %p171
    %p174 = scmp.ne.s32.totalorder %s157, %s173
    %p175 = scmp.eq.s32.totalorder %s18, 0
    %p176 = por %p174, %p175
    %p177 = scmp.le.s32.totalorder 1, %s12
    %p178 = scmp.lt.s32.totalorder %s12, 3
    %p179 = pnand %p177, %p178
    %p180 = pneg %p179
    // Predicated region
    $region9: #{decoder_forward.5} parent=5 // pred_check
      _
    $region10: #{decoder_forward.5} parent=5 // pred_check_branch
      %182 = sbr.rel (%p179) target = $region12
    $region11: #{decoder_forward.5} parent=5 // pred_region
      %s183 = ssub.s32 %s12, 1
      // Predicated region
      $region13: #{decoder_forward.5} parent=11 // pred_check
        %p184 = pneg %p33
      $region14: #{decoder_forward.5} parent=11 // pred_check_branch
        %186 = sbr.rel (%p184) target = $region16
      $region15: #{decoder_forward.5} parent=11 // pred_region
        _
      $region16: #{decoder_forward.5} parent=11 // pred_fallthru
        _
      // Predicated region
      $region17: #{decoder_forward.5} parent=11 // pred_check
        %p187 = pneg %p80
      $region18: #{decoder_forward.5} parent=11 // pred_check_branch
        %189 = sbr.rel (%p187) target = $region20
      $region19: #{decoder_forward.5} parent=11 // pred_region
        _
      $region20: #{decoder_forward.5} parent=11 // pred_fallthru
        _
      // Predicated region
      $region21: #{decoder_forward.5} parent=11 // pred_check
        %p190 = pneg %p101
      $region22: #{decoder_forward.5} parent=11 // pred_check_branch
        %192 = sbr.rel (%p190) target = $region24
      $region23: #{decoder_forward.5} parent=11 // pred_region
        _
      $region24: #{decoder_forward.5} parent=11 // pred_fallthru
        _
      // Predicated region
      $region25: #{decoder_forward.5} parent=11 // pred_check
        %p193 = pneg %p122
      $region26: #{decoder_forward.5} parent=11 // pred_check_branch
        %195 = sbr.rel (%p193) target = $region28
      $region27: #{decoder_forward.5} parent=11 // pred_region
        _
      $region28: #{decoder_forward.5} parent=11 // pred_fallthru
        _
      // Predicated region
      $region29: #{decoder_forward.5} parent=11 // pred_check
        %p196 = pneg %p143
      $region30: #{decoder_forward.5} parent=11 // pred_check_branch
        %198 = sbr.rel (%p196) target = $region32
      $region31: #{decoder_forward.5} parent=11 // pred_region
        _
      $region32: #{decoder_forward.5} parent=11 // pred_fallthru
        _
    $region12: #{decoder_forward.5} parent=5 // pred_fallthru
      _
    %p199 = scmp.lt.s32.totalorder %s12, 2
    // Predicated region
    $region33: #{decoder_forward.5} parent=5 // pred_check
      %p200 = pneg %p199
    $region34: #{decoder_forward.5} parent=5 // pred_check_branch
      %202 = sbr.rel (%p200) target = $region36
    $region35: #{decoder_forward.5} parent=5 // pred_region
      // Predicated region
      $region37: #{decoder_forward.5} parent=35 // pred_check
        %p203 = pneg %p53
      $region38: #{decoder_forward.5} parent=35 // pred_check_branch
        %205 = sbr.rel (%p203) target = $region40
      $region39: #{decoder_forward.5} parent=35 // pred_region
        %s206 = smul.u32 42, %s12
        %p207 = scmp.lt.s32.totalorder %s206, 83
        %s208 = scalar_select %p207, %s206, 83
        %s209 = smul.addr %s208, 4
        %s210 = scalar_lea.vmem %s1, %s209
        %s211 = smul.u32 42, %s12
      $region40: #{decoder_forward.5} parent=35 // pred_fallthru
        _
    $region36: #{decoder_forward.5} parent=5 // pred_fallthru
      _
    %p212 = scmp.le.s32.totalorder 1, %s12
    %p213 = scmp.lt.s32.totalorder %s12, 3
    %p214 = pnand %p212, %p213
    %p215 = pneg %p214
    // Predicated region
    $region41: #{decoder_forward.5} parent=5 // pred_check
      _
    $region42: #{decoder_forward.5} parent=5 // pred_check_branch
      %217 = sbr.rel (%p214) target = $region44
    $region43: #{decoder_forward.5} parent=5 // pred_region
      %s218 = ssub.s32 %s12, 1
      %p219 = pneg %p33
      %p220 = pneg %p30
      %s221 = smul.u32 42, %s17
      %p222 = scmp.lt.s32.totalorder %s221, 83
      %s223 = scalar_select %p222, %s221, 83
      %s224 = smul.addr %s223, 4
      %s225 = scalar_lea.vmem %s1, %s224
      %p226 = pneg %p59
      %p227 = pneg %p56
      %p228 = pneg %p80
      %p229 = pneg %p77
      %p230 = pneg %p101
      %p231 = pneg %p98
      %p232 = pneg %p122
      %p233 = pneg %p119
      %p234 = pneg %p143
      %p235 = pneg %p140
      %p236 = pneg %p169
      %p237 = pneg %p166
      %s238 = smul.u32 42, %s17
      %p239 = scmp.lt.s32.totalorder %s238, 83
      %s240 = scalar_select %p239, %s238, 83
      %s241 = smul.addr %s240, 8
      %s242 = scalar_lea.vmem %s6, %s241
      %s243 = smul.u32 42, %s17
      %p244 = scmp.lt.s32.totalorder %s243, 83
      %s245 = scalar_select %p244, %s243, 83
      %s246 = smul.addr %s245, 4
      %s247 = scalar_lea.vmem %s1, %s246
      %s248 = smul.u32 42, %s17
      %s249 = smul.u32 42, %s17
      %p250 = scmp.lt.s32.totalorder %s249, 83
      %s251 = scalar_select %p250, %s249, 83
      %s252 = smul.addr %s251, 8
      %s253 = scalar_lea.vmem %s6, %s252
      %s254 = smul.u32 42, %s17
      %v256 = vld [vmem:[%s0] sm:$0xff]
      %v257 = vld [vmem:[%s0 + $0x8] sm:$0xff]
      %v258 = vld [vmem:[%s0 + $0x10] sm:$0xff]
      %v259 = vld [vmem:[%s0 + $0x18] sm:$0xff]
      %v260 = vld [vmem:[%s0 + $0x20] sm:$0xff]
      %v261 = vld [vmem:[%s0 + $0x28] sm:$0xff]
      %v262 = vld [vmem:[%s0 + $0x30] sm:$0xff]
      %v263 = vld [vmem:[%s0 + $0x38] sm:$0xff]
      %v264 = vld [vmem:[%s0 + $0x40] sm:$0xff]
      %v265 = vld [vmem:[%s0 + $0x48] sm:$0xff]
      %v266 = vld [vmem:[%s0 + $0x50] sm:$0xff]
      %v267 = vld [vmem:[%s0 + $0x58] sm:$0xff]
      %v268 = vld [vmem:[%s0 + $0x60] sm:$0xff]
      %v269 = vld [vmem:[%s0 + $0x68] sm:$0xff]
      %v270 = vld [vmem:[%s0 + $0x70] sm:$0xff]
      %v271 = vld [vmem:[%s0 + $0x78] sm:$0xff]
      %v272 = vld [vmem:[%s0 + $0x80] sm:$0xff]
      %v273 = vld [vmem:[%s0 + $0x88] sm:$0xff]
      %v274 = vld [vmem:[%s0 + $0x90] sm:$0xff]
      %v275 = vld [vmem:[%s0 + $0x98] sm:$0xff]
      %v276 = vld [vmem:[%s0 + $0xa0] sm:$0xff]
      %v277 = vld [vmem:[%s0 + $0xa8] sm:$0xff]
      %v278 = vld [vmem:[%s0 + $0xb0] sm:$0xff]
      %v279 = vld [vmem:[%s0 + $0xb8] sm:$0xff]
      %v280 = vld [vmem:[%s0 + $0xc0] sm:$0xff]
      %v281 = vld [vmem:[%s0 + $0xc8] sm:$0xff]
      %v282 = vld [vmem:[%s0 + $0xd0] sm:$0xff]
      %v283 = vld [vmem:[%s0 + $0xd8] sm:$0xff]
      %v284 = vld [vmem:[%s0 + $0xe0] sm:$0xff]
      %v285 = vld [vmem:[%s0 + $0xe8] sm:$0xff]
      %v286 = vld [vmem:[%s0 + $0xf0] sm:$0xff]
      %v287 = vld [vmem:[%s0 + $0xf8] sm:$0xff]
      %v288 = vld [vmem:[%s0 + $0x100] sm:$0xff]
      %v289 = vld [vmem:[%s0 + $0x108] sm:$0xff]
      %v290 = vld [vmem:[%s0 + $0x110] sm:$0xff]
      %v291 = vld [vmem:[%s0 + $0x118] sm:$0xff]
      %v292 = vld [vmem:[%s0 + $0x120] sm:$0xff]
      %v293 = vld [vmem:[%s0 + $0x128] sm:$0xff]
      %v294 = vld [vmem:[%s0 + $0x130] sm:$0xff]
      %v295 = vld [vmem:[%s0 + $0x138] sm:$0xff]
      %v296 = vld [vmem:[%s0 + $0x140] sm:$0xff]
      %v297 = vld [vmem:[%s0 + $0x148] sm:$0xff]
      %v298 = vld [vmem:[%s247] sm:$0xf]
      %v299 = vld [vmem:[%s247 + $0x4] sm:$0xf]
      %v300 = vld [vmem:[%s247 + $0x8] sm:$0xf]
      %v301 = vld [vmem:[%s247 + $0xc] sm:$0xf]
      %v302 = vld [vmem:[%s247 + $0x10] sm:$0xf]
      %v303 = vld [vmem:[%s247 + $0x14] sm:$0xf]
      %v304 = vld [vmem:[%s247 + $0x18] sm:$0xf]
      %v305 = vld [vmem:[%s247 + $0x1c] sm:$0xf]
      %v306 = vld [vmem:[%s247 + $0x20] sm:$0xf]
      %v307 = vld [vmem:[%s247 + $0x24] sm:$0xf]
      %v308 = vld [vmem:[%s247 + $0x28] sm:$0xf]
      %v309 = vld [vmem:[%s247 + $0x2c] sm:$0xf]
      %v310 = vld [vmem:[%s247 + $0x30] sm:$0xf]
      %v311 = vld [vmem:[%s247 + $0x34] sm:$0xf]
      %v312 = vld [vmem:[%s247 + $0x38] sm:$0xf]
      %v313 = vld [vmem:[%s247 + $0x3c] sm:$0xf]
      %v314 = vld [vmem:[%s247 + $0x40] sm:$0xf]
      %v315 = vld [vmem:[%s247 + $0x44] sm:$0xf]
      %v316 = vld [vmem:[%s247 + $0x48] sm:$0xf]
      %v317 = vld [vmem:[%s247 + $0x4c] sm:$0xf]
      %v318 = vld [vmem:[%s247 + $0x50] sm:$0xf]
      %v319 = vld [vmem:[%s247 + $0x54] sm:$0xf]
      %v320 = vld [vmem:[%s247 + $0x58] sm:$0xf]
      %v321 = vld [vmem:[%s247 + $0x5c] sm:$0xf]
      %v322 = vld [vmem:[%s247 + $0x60] sm:$0xf]
      %v323 = vld [vmem:[%s247 + $0x64] sm:$0xf]
      %v324 = vld [vmem:[%s247 + $0x68] sm:$0xf]
      %v325 = vld [vmem:[%s247 + $0x6c] sm:$0xf]
      %v326 = vld [vmem:[%s247 + $0x70] sm:$0xf]
      %v327 = vld [vmem:[%s247 + $0x74] sm:$0xf]
      %v328 = vld [vmem:[%s247 + $0x78] sm:$0xf]
      %v329 = vld [vmem:[%s247 + $0x7c] sm:$0xf]
      %v330 = vld [vmem:[%s247 + $0x80] sm:$0xf]
      %v331 = vld [vmem:[%s247 + $0x84] sm:$0xf]
      %v332 = vld [vmem:[%s247 + $0x88] sm:$0xf]
      %v333 = vld [vmem:[%s247 + $0x8c] sm:$0xf]
      %v334 = vld [vmem:[%s247 + $0x90] sm:$0xf]
      %v335 = vld [vmem:[%s247 + $0x94] sm:$0xf]
      %v336 = vld [vmem:[%s247 + $0x98] sm:$0xf]
      %v337 = vld [vmem:[%s247 + $0x9c] sm:$0xf]
      %v338 = vld [vmem:[%s247 + $0xa0] sm:$0xf]
      %v339 = vld [vmem:[%s247 + $0xa4] sm:$0xf]
      %v340 = vunpack.c.l.bf16 %v298
      %v341 = vunpack.c.l.bf16 %v299
      %v342 = vunpack.c.l.bf16 %v300
      %v343 = vunpack.c.l.bf16 %v301
      %v344 = vunpack.c.l.bf16 %v302
      %v345 = vunpack.c.l.bf16 %v303
      %v346 = vunpack.c.l.bf16 %v304
      %v347 = vunpack.c.l.bf16 %v305
      %v348 = vunpack.c.l.bf16 %v306
      %v349 = vunpack.c.l.bf16 %v307
      %v350 = vunpack.c.l.bf16 %v308
      %v351 = vunpack.c.l.bf16 %v309
      %v352 = vunpack.c.l.bf16 %v310
      %v353 = vunpack.c.l.bf16 %v311
      %v354 = vunpack.c.l.bf16 %v312
      %v355 = vunpack.c.l.bf16 %v313
      %v356 = vunpack.c.l.bf16 %v314
      %v357 = vunpack.c.l.bf16 %v315
      %v358 = vunpack.c.l.bf16 %v316
      %v359 = vunpack.c.l.bf16 %v317
      %v360 = vunpack.c.l.bf16 %v318
      %v361 = vunpack.c.l.bf16 %v319
      %v362 = vunpack.c.l.bf16 %v320
      %v363 = vunpack.c.l.bf16 %v321
      %v364 = vunpack.c.l.bf16 %v322
      %v365 = vunpack.c.l.bf16 %v323
      %v366 = vunpack.c.l.bf16 %v324
      %v367 = vunpack.c.l.bf16 %v325
      %v368 = vunpack.c.l.bf16 %v326
      %v369 = vunpack.c.l.bf16 %v327
      %v370 = vunpack.c.l.bf16 %v328
      %v371 = vunpack.c.l.bf16 %v329
      %v372 = vunpack.c.l.bf16 %v330
      %v373 = vunpack.c.l.bf16 %v331
      %v374 = vunpack.c.l.bf16 %v332
      %v375 = vunpack.c.l.bf16 %v333
      %v376 = vunpack.c.l.bf16 %v334
      %v377 = vunpack.c.l.bf16 %v335
      %v378 = vunpack.c.l.bf16 %v336
      %v379 = vunpack.c.l.bf16 %v337
      %v380 = vunpack.c.l.bf16 %v338
      %v381 = vunpack.c.l.bf16 %v339
      %v382 = vld [vmem:[%s2] sm:$0x1]
      %v384 = vlaneseq
      %v385 = vshrl.u32 %v384, 7
      %v386 = vsub.s32 0, %v385
      %v387 = vrot.slane %v382, %v386
      %v389 = vmul.f32 %v340, %v387
      %v390 = vmul.f32 %v341, %v387
      %v391 = vmul.f32 %v342, %v387
      %v392 = vmul.f32 %v343, %v387
      %v393 = vmul.f32 %v344, %v387
      %v394 = vmul.f32 %v345, %v387
      %v395 = vmul.f32 %v346, %v387
      %v396 = vmul.f32 %v347, %v387
      %v397 = vmul.f32 %v348, %v387
      %v398 = vmul.f32 %v349, %v387
      %v399 = vmul.f32 %v350, %v387
      %v400 = vmul.f32 %v351, %v387
      %v401 = vmul.f32 %v352, %v387
      %v402 = vmul.f32 %v353, %v387
      %v403 = vmul.f32 %v354, %v387
      %v404 = vmul.f32 %v355, %v387
      %v405 = vmul.f32 %v356, %v387
      %v406 = vmul.f32 %v357, %v387
      %v407 = vmul.f32 %v358, %v387
      %v408 = vmul.f32 %v359, %v387
      %v409 = vmul.f32 %v360, %v387
      %v410 = vmul.f32 %v361, %v387
      %v411 = vmul.f32 %v362, %v387
      %v412 = vmul.f32 %v363, %v387
      %v413 = vmul.f32 %v364, %v387
      %v414 = vmul.f32 %v365, %v387
      %v415 = vmul.f32 %v366, %v387
      %v416 = vmul.f32 %v367, %v387
      %v417 = vmul.f32 %v368, %v387
      %v418 = vmul.f32 %v369, %v387
      %v419 = vmul.f32 %v370, %v387
      %v420 = vmul.f32 %v371, %v387
      %v421 = vmul.f32 %v372, %v387
      %v422 = vmul.f32 %v373, %v387
      %v423 = vmul.f32 %v374, %v387
      %v424 = vmul.f32 %v375, %v387
      %v425 = vmul.f32 %v376, %v387
      %v426 = vmul.f32 %v377, %v387
      %v427 = vmul.f32 %v378, %v387
      %v428 = vmul.f32 %v379, %v387
      %v429 = vmul.f32 %v380, %v387
      %v430 = vmul.f32 %v381, %v387
      %v431 = vld [vmem:[%s3] sm:$0x1]
      %v433 = vlaneseq
      %v434 = vshrl.u32 %v433, 7
      %v435 = vsub.s32 0, %v434
      %v436 = vrot.slane %v431, %v435
      %v438 = vadd.f32 %v389, %v436
      %v439 = vadd.f32 %v390, %v436
      %v440 = vadd.f32 %v391, %v436
      %v441 = vadd.f32 %v392, %v436
      %v442 = vadd.f32 %v393, %v436
      %v443 = vadd.f32 %v394, %v436
      %v444 = vadd.f32 %v395, %v436
      %v445 = vadd.f32 %v396, %v436
      %v446 = vadd.f32 %v397, %v436
      %v447 = vadd.f32 %v398, %v436
      %v448 = vadd.f32 %v399, %v436
      %v449 = vadd.f32 %v400, %v436
      %v450 = vadd.f32 %v401, %v436
      %v451 = vadd.f32 %v402, %v436
      %v452 = vadd.f32 %v403, %v436
      %v453 = vadd.f32 %v404, %v436
      %v454 = vadd.f32 %v405, %v436
      %v455 = vadd.f32 %v406, %v436
      %v456 = vadd.f32 %v407, %v436
      %v457 = vadd.f32 %v408, %v436
      %v458 = vadd.f32 %v409, %v436
      %v459 = vadd.f32 %v410, %v436
      %v460 = vadd.f32 %v411, %v436
      %v461 = vadd.f32 %v412, %v436
      %v462 = vadd.f32 %v413, %v436
      %v463 = vadd.f32 %v414, %v436
      %v464 = vadd.f32 %v415, %v436
      %v465 = vadd.f32 %v416, %v436
      %v466 = vadd.f32 %v417, %v436
      %v467 = vadd.f32 %v418, %v436
      %v468 = vadd.f32 %v419, %v436
      %v469 = vadd.f32 %v420, %v436
      %v470 = vadd.f32 %v421, %v436
      %v471 = vadd.f32 %v422, %v436
      %v472 = vadd.f32 %v423, %v436
      %v473 = vadd.f32 %v424, %v436
      %v474 = vadd.f32 %v425, %v436
      %v475 = vadd.f32 %v426, %v436
      %v476 = vadd.f32 %v427, %v436
      %v477 = vadd.f32 %v428, %v436
      %v478 = vadd.f32 %v429, %v436
      %v479 = vadd.f32 %v430, %v436
      %481 = vset.pattern.permute.xlu0 0
      %482 = vperm.xlu0 %481, %v256
      %v483 = vpop.permute.xlu0 %482
      %486 = vset.pattern.permute.xlu0 0
      %487 = vperm.xlu0 %486, %v257
      %v488 = vpop.permute.xlu0 %487
      %491 = vset.pattern.permute.xlu0 0
      %492 = vperm.xlu0 %491, %v258
      %v493 = vpop.permute.xlu0 %492
      %496 = vset.pattern.permute.xlu0 0
      %497 = vperm.xlu0 %496, %v259
      %v498 = vpop.permute.xlu0 %497
      %501 = vset.pattern.permute.xlu0 0
      %502 = vperm.xlu0 %501, %v260
      %v503 = vpop.permute.xlu0 %502
      %506 = vset.pattern.permute.xlu0 0
      %507 = vperm.xlu0 %506, %v261
      %v508 = vpop.permute.xlu0 %507
      %511 = vset.pattern.permute.xlu0 0
      %512 = vperm.xlu0 %511, %v262
      %v513 = vpop.permute.xlu0 %512
      %516 = vset.pattern.permute.xlu0 0
      %517 = vperm.xlu0 %516, %v263
      %v518 = vpop.permute.xlu0 %517
      %521 = vset.pattern.permute.xlu0 0
      %522 = vperm.xlu0 %521, %v264
      %v523 = vpop.permute.xlu0 %522
      %526 = vset.pattern.permute.xlu0 0
      %527 = vperm.xlu0 %526, %v265
      %v528 = vpop.permute.xlu0 %527
      %531 = vset.pattern.permute.xlu0 0
      %532 = vperm.xlu0 %531, %v266
      %v533 = vpop.permute.xlu0 %532
      %536 = vset.pattern.permute.xlu0 0
      %537 = vperm.xlu0 %536, %v267
      %v538 = vpop.permute.xlu0 %537
      %541 = vset.pattern.permute.xlu0 0
      %542 = vperm.xlu0 %541, %v268
      %v543 = vpop.permute.xlu0 %542
      %546 = vset.pattern.permute.xlu0 0
      %547 = vperm.xlu0 %546, %v269
      %v548 = vpop.permute.xlu0 %547
      %551 = vset.pattern.permute.xlu0 0
      %552 = vperm.xlu0 %551, %v270
      %v553 = vpop.permute.xlu0 %552
      %556 = vset.pattern.permute.xlu0 0
      %557 = vperm.xlu0 %556, %v271
      %v558 = vpop.permute.xlu0 %557
      %561 = vset.pattern.permute.xlu0 0
      %562 = vperm.xlu0 %561, %v272
      %v563 = vpop.permute.xlu0 %562
      %566 = vset.pattern.permute.xlu0 0
      %567 = vperm.xlu0 %566, %v273
      %v568 = vpop.permute.xlu0 %567
      %571 = vset.pattern.permute.xlu0 0
      %572 = vperm.xlu0 %571, %v274
      %v573 = vpop.permute.xlu0 %572
      %576 = vset.pattern.permute.xlu0 0
      %577 = vperm.xlu0 %576, %v275
      %v578 = vpop.permute.xlu0 %577
      %581 = vset.pattern.permute.xlu0 0
      %582 = vperm.xlu0 %581, %v276
      %v583 = vpop.permute.xlu0 %582
      %586 = vset.pattern.permute.xlu0 0
      %587 = vperm.xlu0 %586, %v277
      %v588 = vpop.permute.xlu0 %587
      %591 = vset.pattern.permute.xlu0 0
      %592 = vperm.xlu0 %591, %v278
      %v593 = vpop.permute.xlu0 %592
      %596 = vset.pattern.permute.xlu0 0
      %597 = vperm.xlu0 %596, %v279
      %v598 = vpop.permute.xlu0 %597
      %601 = vset.pattern.permute.xlu0 0
      %602 = vperm.xlu0 %601, %v280
      %v603 = vpop.permute.xlu0 %602
      %606 = vset.pattern.permute.xlu0 0
      %607 = vperm.xlu0 %606, %v281
      %v608 = vpop.permute.xlu0 %607
      %611 = vset.pattern.permute.xlu0 0
      %612 = vperm.xlu0 %611, %v282
      %v613 = vpop.permute.xlu0 %612
      %616 = vset.pattern.permute.xlu0 0
      %617 = vperm.xlu0 %616, %v283
      %v618 = vpop.permute.xlu0 %617
      %621 = vset.pattern.permute.xlu0 0
      %622 = vperm.xlu0 %621, %v284
      %v623 = vpop.permute.xlu0 %622
      %626 = vset.pattern.permute.xlu0 0
      %627 = vperm.xlu0 %626, %v285
      %v628 = vpop.permute.xlu0 %627
      %631 = vset.pattern.permute.xlu0 0
      %632 = vperm.xlu0 %631, %v286
      %v633 = vpop.permute.xlu0 %632
      %636 = vset.pattern.permute.xlu0 0
      %637 = vperm.xlu0 %636, %v287
      %v638 = vpop.permute.xlu0 %637
      %641 = vset.pattern.permute.xlu0 0
      %642 = vperm.xlu0 %641, %v288
      %v643 = vpop.permute.xlu0 %642
      %646 = vset.pattern.permute.xlu0 0
      %647 = vperm.xlu0 %646, %v289
      %v648 = vpop.permute.xlu0 %647
      %651 = vset.pattern.permute.xlu0 0
      %652 = vperm.xlu0 %651, %v290
      %v653 = vpop.permute.xlu0 %652
      %656 = vset.pattern.permute.xlu0 0
      %657 = vperm.xlu0 %656, %v291
      %v658 = vpop.permute.xlu0 %657
      %661 = vset.pattern.permute.xlu0 0
      %662 = vperm.xlu0 %661, %v292
      %v663 = vpop.permute.xlu0 %662
      %666 = vset.pattern.permute.xlu0 0
      %667 = vperm.xlu0 %666, %v293
      %v668 = vpop.permute.xlu0 %667
      %671 = vset.pattern.permute.xlu0 0
      %672 = vperm.xlu0 %671, %v294
      %v673 = vpop.permute.xlu0 %672
      %676 = vset.pattern.permute.xlu0 0
      %677 = vperm.xlu0 %676, %v295
      %v678 = vpop.permute.xlu0 %677
      %681 = vset.pattern.permute.xlu0 0
      %682 = vperm.xlu0 %681, %v296
      %v683 = vpop.permute.xlu0 %682
      %686 = vset.pattern.permute.xlu0 0
      %687 = vperm.xlu0 %686, %v297
      %v688 = vpop.permute.xlu0 %687
      %v690 = vmul.f32 %v438, %v483
      %v691 = vmul.f32 %v439, %v488
      %v692 = vmul.f32 %v440, %v493
      %v693 = vmul.f32 %v441, %v498
      %v694 = vmul.f32 %v442, %v503
      %v695 = vmul.f32 %v443, %v508
      %v696 = vmul.f32 %v444, %v513
      %v697 = vmul.f32 %v445, %v518
      %v698 = vmul.f32 %v446, %v523
      %v699 = vmul.f32 %v447, %v528
      %v700 = vmul.f32 %v448, %v533
      %v701 = vmul.f32 %v449, %v538
      %v702 = vmul.f32 %v450, %v543
      %v703 = vmul.f32 %v451, %v548
      %v704 = vmul.f32 %v452, %v553
      %v705 = vmul.f32 %v453, %v558
      %v706 = vmul.f32 %v454, %v563
      %v707 = vmul.f32 %v455, %v568
      %v708 = vmul.f32 %v456, %v573
      %v709 = vmul.f32 %v457, %v578
      %v710 = vmul.f32 %v458, %v583
      %v711 = vmul.f32 %v459, %v588
      %v712 = vmul.f32 %v460, %v593
      %v713 = vmul.f32 %v461, %v598
      %v714 = vmul.f32 %v462, %v603
      %v715 = vmul.f32 %v463, %v608
      %v716 = vmul.f32 %v464, %v613
      %v717 = vmul.f32 %v465, %v618
      %v718 = vmul.f32 %v466, %v623
      %v719 = vmul.f32 %v467, %v628
      %v720 = vmul.f32 %v468, %v633
      %v721 = vmul.f32 %v469, %v638
      %v722 = vmul.f32 %v470, %v643
      %v723 = vmul.f32 %v471, %v648
      %v724 = vmul.f32 %v472, %v653
      %v725 = vmul.f32 %v473, %v658
      %v726 = vmul.f32 %v474, %v663
      %v727 = vmul.f32 %v475, %v668
      %v728 = vmul.f32 %v476, %v673
      %v729 = vmul.f32 %v477, %v678
      %v730 = vmul.f32 %v478, %v683
      %v731 = vmul.f32 %v479, %v688
      %vm732 = vcmask 523264
      %733 = vst.msk [vmem:[#allocation2] sm:$0xff] %vm732, %v690
      %734 = vst.msk [vmem:[#allocation2 + $0x8] sm:$0xff] %vm732, %v691
      %735 = vst.msk [vmem:[#allocation2 + $0x10] sm:$0xff] %vm732, %v692
      %736 = vst.msk [vmem:[#allocation2 + $0x18] sm:$0xff] %vm732, %v693
      %737 = vst.msk [vmem:[#allocation2 + $0x20] sm:$0xff] %vm732, %v694
      %738 = vst.msk [vmem:[#allocation2 + $0x28] sm:$0xff] %vm732, %v695
      %739 = vst.msk [vmem:[#allocation2 + $0x30] sm:$0xff] %vm732, %v696
      %740 = vst.msk [vmem:[#allocation2 + $0x38] sm:$0xff] %vm732, %v697
      %741 = vst.msk [vmem:[#allocation2 + $0x40] sm:$0xff] %vm732, %v698
      %742 = vst.msk [vmem:[#allocation2 + $0x48] sm:$0xff] %vm732, %v699
      %743 = vst.msk [vmem:[#allocation2 + $0x50] sm:$0xff] %vm732, %v700
      %744 = vst.msk [vmem:[#allocation2 + $0x58] sm:$0xff] %vm732, %v701
      %745 = vst.msk [vmem:[#allocation2 + $0x60] sm:$0xff] %vm732, %v702
      %746 = vst.msk [vmem:[#allocation2 + $0x68] sm:$0xff] %vm732, %v703
      %747 = vst.msk [vmem:[#allocation2 + $0x70] sm:$0xff] %vm732, %v704
      %748 = vst.msk [vmem:[#allocation2 + $0x78] sm:$0xff] %vm732, %v705
      %749 = vst.msk [vmem:[#allocation2 + $0x80] sm:$0xff] %vm732, %v706
      %750 = vst.msk [vmem:[#allocation2 + $0x88] sm:$0xff] %vm732, %v707
      %751 = vst.msk [vmem:[#allocation2 + $0x90] sm:$0xff] %vm732, %v708
      %752 = vst.msk [vmem:[#allocation2 + $0x98] sm:$0xff] %vm732, %v709
      %753 = vst.msk [vmem:[#allocation2 + $0xa0] sm:$0xff] %vm732, %v710
      %754 = vst.msk [vmem:[#allocation2 + $0xa8] sm:$0xff] %vm732, %v711
      %755 = vst.msk [vmem:[#allocation2 + $0xb0] sm:$0xff] %vm732, %v712
      %756 = vst.msk [vmem:[#allocation2 + $0xb8] sm:$0xff] %vm732, %v713
      %757 = vst.msk [vmem:[#allocation2 + $0xc0] sm:$0xff] %vm732, %v714
      %758 = vst.msk [vmem:[#allocation2 + $0xc8] sm:$0xff] %vm732, %v715
      %759 = vst.msk [vmem:[#allocation2 + $0xd0] sm:$0xff] %vm732, %v716
      %760 = vst.msk [vmem:[#allocation2 + $0xd8] sm:$0xff] %vm732, %v717
      %761 = vst.msk [vmem:[#allocation2 + $0xe0] sm:$0xff] %vm732, %v718
      %762 = vst.msk [vmem:[#allocation2 + $0xe8] sm:$0xff] %vm732, %v719
      %763 = vst.msk [vmem:[#allocation2 + $0xf0] sm:$0xff] %vm732, %v720
      %764 = vst.msk [vmem:[#allocation2 + $0xf8] sm:$0xff] %vm732, %v721
      %765 = vst.msk [vmem:[#allocation2 + $0x100] sm:$0xff] %vm732, %v722
      %766 = vst.msk [vmem:[#allocation2 + $0x108] sm:$0xff] %vm732, %v723
      %767 = vst.msk [vmem:[#allocation2 + $0x110] sm:$0xff] %vm732, %v724
      %768 = vst.msk [vmem:[#allocation2 + $0x118] sm:$0xff] %vm732, %v725
      %769 = vst.msk [vmem:[#allocation2 + $0x120] sm:$0xff] %vm732, %v726
      %770 = vst.msk [vmem:[#allocation2 + $0x128] sm:$0xff] %vm732, %v727
      %771 = vst.msk [vmem:[#allocation2 + $0x130] sm:$0xff] %vm732, %v728
      %772 = vst.msk [vmem:[#allocation2 + $0x138] sm:$0xff] %vm732, %v729
      %773 = vst.msk [vmem:[#allocation2 + $0x140] sm:$0xff] %vm732, %v730
      %774 = vst.msk [vmem:[#allocation2 + $0x148] sm:$0xff] %vm732, %v731
      %v775 = vld [vmem:[#allocation2] sm:$0xff]
      %v776 = vld [vmem:[#allocation2 + $0x8] sm:$0xff]
      %v777 = vld [vmem:[#allocation2 + $0x10] sm:$0xff]
      %v778 = vld [vmem:[#allocation2 + $0x18] sm:$0xff]
      %v779 = vld [vmem:[#allocation2 + $0x20] sm:$0xff]
      %v780 = vld [vmem:[#allocation2 + $0x28] sm:$0xff]
      %v781 = vld [vmem:[#allocation2 + $0x30] sm:$0xff]
      %v782 = vld [vmem:[#allocation2 + $0x38] sm:$0xff]
      %v783 = vld [vmem:[#allocation2 + $0x40] sm:$0xff]
      %v784 = vld [vmem:[#allocation2 + $0x48] sm:$0xff]
      %v785 = vld [vmem:[#allocation2 + $0x50] sm:$0xff]
      %v786 = vld [vmem:[#allocation2 + $0x58] sm:$0xff]
      %v787 = vld [vmem:[#allocation2 + $0x60] sm:$0xff]
      %v788 = vld [vmem:[#allocation2 + $0x68] sm:$0xff]
      %v789 = vld [vmem:[#allocation2 + $0x70] sm:$0xff]
      %v790 = vld [vmem:[#allocation2 + $0x78] sm:$0xff]
      %v791 = vld [vmem:[#allocation2 + $0x80] sm:$0xff]
      %v792 = vld [vmem:[#allocation2 + $0x88] sm:$0xff]
      %v793 = vld [vmem:[#allocation2 + $0x90] sm:$0xff]
      %v794 = vld [vmem:[#allocation2 + $0x98] sm:$0xff]
      %v795 = vld [vmem:[#allocation2 + $0xa0] sm:$0xff]
      %v796 = vld [vmem:[#allocation2 + $0xa8] sm:$0xff]
      %v797 = vld [vmem:[#allocation2 + $0xb0] sm:$0xff]
      %v798 = vld [vmem:[#allocation2 + $0xb8] sm:$0xff]
      %v799 = vld [vmem:[#allocation2 + $0xc0] sm:$0xff]
      %v800 = vld [vmem:[#allocation2 + $0xc8] sm:$0xff]
      %v801 = vld [vmem:[#allocation2 + $0xd0] sm:$0xff]
      %v802 = vld [vmem:[#allocation2 + $0xd8] sm:$0xff]
      %v803 = vld [vmem:[#allocation2 + $0xe0] sm:$0xff]
      %v804 = vld [vmem:[#allocation2 + $0xe8] sm:$0xff]
      %v805 = vld [vmem:[#allocation2 + $0xf0] sm:$0xff]
      %v806 = vld [vmem:[#allocation2 + $0xf8] sm:$0xff]
      %v807 = vld [vmem:[#allocation2 + $0x100] sm:$0xff]
      %v808 = vld [vmem:[#allocation2 + $0x108] sm:$0xff]
      %v809 = vld [vmem:[#allocation2 + $0x110] sm:$0xff]
      %v810 = vld [vmem:[#allocation2 + $0x118] sm:$0xff]
      %v811 = vld [vmem:[#allocation2 + $0x120] sm:$0xff]
      %v812 = vld [vmem:[#allocation2 + $0x128] sm:$0x3]
      %v813 = vpack.c.bf16 %v776, %v775
      %v814 = vpack.c.bf16 %v778, %v777
      %v815 = vpack.c.bf16 %v780, %v779
      %v816 = vpack.c.bf16 %v782, %v781
      %v817 = vpack.c.bf16 %v784, %v783
      %v818 = vpack.c.bf16 %v786, %v785
      %v819 = vpack.c.bf16 %v788, %v787
      %v820 = vpack.c.bf16 %v790, %v789
      %v821 = vpack.c.bf16 %v792, %v791
      %v822 = vpack.c.bf16 %v794, %v793
      %v823 = vpack.c.bf16 %v796, %v795
      %v824 = vpack.c.bf16 %v798, %v797
      %v825 = vpack.c.bf16 %v800, %v799
      %v826 = vpack.c.bf16 %v802, %v801
      %v827 = vpack.c.bf16 %v804, %v803
      %v828 = vpack.c.bf16 %v806, %v805
      %v829 = vpack.c.bf16 %v808, %v807
      %v830 = vpack.c.bf16 %v810, %v809
      %v831 = vpack.c.bf16 %v812, %v811
      %v832 = vld [vmem:[#allocation2 + $0x1] sm:$0xff]
      %v833 = vld [vmem:[#allocation2 + $0x9] sm:$0xff]
      %v834 = vld [vmem:[#allocation2 + $0x11] sm:$0xff]
      %v835 = vld [vmem:[#allocation2 + $0x19] sm:$0xff]
      %v836 = vld [vmem:[#allocation2 + $0x21] sm:$0xff]
      %v837 = vld [vmem:[#allocation2 + $0x29] sm:$0xff]
      %v838 = vld [vmem:[#allocation2 + $0x31] sm:$0xff]
      %v839 = vld [vmem:[#allocation2 + $0x39] sm:$0xff]
      %v840 = vld [vmem:[#allocation2 + $0x41] sm:$0xff]
      %v841 = vld [vmem:[#allocation2 + $0x49] sm:$0xff]
      %v842 = vld [vmem:[#allocation2 + $0x51] sm:$0xff]
      %v843 = vld [vmem:[#allocation2 + $0x59] sm:$0xff]
      %v844 = vld [vmem:[#allocation2 + $0x61] sm:$0xff]
      %v845 = vld [vmem:[#allocation2 + $0x69] sm:$0xff]
      %v846 = vld [vmem:[#allocation2 + $0x71] sm:$0xff]
      %v847 = vld [vmem:[#allocation2 + $0x79] sm:$0xff]
      %v848 = vld [vmem:[#allocation2 + $0x81] sm:$0xff]
      %v849 = vld [vmem:[#allocation2 + $0x89] sm:$0xff]
      %v850 = vld [vmem:[#allocation2 + $0x91] sm:$0xff]
      %v851 = vld [vmem:[#allocation2 + $0x99] sm:$0xff]
      %v852 = vld [vmem:[#allocation2 + $0xa1] sm:$0xff]
      %v853 = vld [vmem:[#allocation2 + $0xa9] sm:$0xff]
      %v854 = vld [vmem:[#allocation2 + $0xb1] sm:$0xff]
      %v855 = vld [vmem:[#allocation2 + $0xb9] sm:$0xff]
      %v856 = vld [vmem:[#allocation2 + $0xc1] sm:$0xff]
      %v857 = vld [vmem:[#allocation2 + $0xc9] sm:$0xff]
      %v858 = vld [vmem:[#allocation2 + $0xd1] sm:$0xff]
      %v859 = vld [vmem:[#allocation2 + $0xd9] sm:$0xff]
      %v860 = vld [vmem:[#allocation2 + $0xe1] sm:$0xff]
      %v861 = vld [vmem:[#allocation2 + $0xe9] sm:$0xff]
      %v862 = vld [vmem:[#allocation2 + $0xf1] sm:$0xff]
      %v863 = vld [vmem:[#allocation2 + $0xf9] sm:$0xff]
      %v864 = vld [vmem:[#allocation2 + $0x101] sm:$0xff]
      %v865 = vld [vmem:[#allocation2 + $0x109] sm:$0xff]
      %v866 = vld [vmem:[#allocation2 + $0x111] sm:$0xff]
      %v867 = vld [vmem:[#allocation2 + $0x119] sm:$0xff]
      %v868 = vld [vmem:[#allocation2 + $0x121] sm:$0xff]
      %v869 = vld [vmem:[#allocation2 + $0x129] sm:$0x3]
      %v870 = vpack.c.bf16 %v833, %v832
      %v871 = vpack.c.bf16 %v835, %v834
      %v872 = vpack.c.bf16 %v837, %v836
      %v873 = vpack.c.bf16 %v839, %v838
      %v874 = vpack.c.bf16 %v841, %v840
      %v875 = vpack.c.bf16 %v843, %v842
      %v876 = vpack.c.bf16 %v845, %v844
      %v877 = vpack.c.bf16 %v847, %v846
      %v878 = vpack.c.bf16 %v849, %v848
      %v879 = vpack.c.bf16 %v851, %v850
      %v880 = vpack.c.bf16 %v853, %v852
      %v881 = vpack.c.bf16 %v855, %v854
      %v882 = vpack.c.bf16 %v857, %v856
      %v883 = vpack.c.bf16 %v859, %v858
      %v884 = vpack.c.bf16 %v861, %v860
      %v885 = vpack.c.bf16 %v863, %v862
      %v886 = vpack.c.bf16 %v865, %v864
      %v887 = vpack.c.bf16 %v867, %v866
      %v888 = vpack.c.bf16 %v869, %v868
      %v889 = vld [vmem:[#allocation2 + $0x2] sm:$0xff]
      %v890 = vld [vmem:[#allocation2 + $0xa] sm:$0xff]
      %v891 = vld [vmem:[#allocation2 + $0x12] sm:$0xff]
      %v892 = vld [vmem:[#allocation2 + $0x1a] sm:$0xff]
      %v893 = vld [vmem:[#allocation2 + $0x22] sm:$0xff]
      %v894 = vld [vmem:[#allocation2 + $0x2a] sm:$0xff]
      %v895 = vld [vmem:[#allocation2 + $0x32] sm:$0xff]
      %v896 = vld [vmem:[#allocation2 + $0x3a] sm:$0xff]
      %v897 = vld [vmem:[#allocation2 + $0x42] sm:$0xff]
      %v898 = vld [vmem:[#allocation2 + $0x4a] sm:$0xff]
      %v899 = vld [vmem:[#allocation2 + $0x52] sm:$0xff]
      %v900 = vld [vmem:[#allocation2 + $0x5a] sm:$0xff]
      %v901 = vld [vmem:[#allocation2 + $0x62] sm:$0xff]
      %v902 = vld [vmem:[#allocation2 + $0x6a] sm:$0xff]
      %v903 = vld [vmem:[#allocation2 + $0x72] sm:$0xff]
      %v904 = vld [vmem:[#allocation2 + $0x7a] sm:$0xff]
      %v905 = vld [vmem:[#allocation2 + $0x82] sm:$0xff]
      %v906 = vld [vmem:[#allocation2 + $0x8a] sm:$0xff]
      %v907 = vld [vmem:[#allocation2 + $0x92] sm:$0xff]
      %v908 = vld [vmem:[#allocation2 + $0x9a] sm:$0xff]
      %v909 = vld [vmem:[#allocation2 + $0xa2] sm:$0xff]
      %v910 = vld [vmem:[#allocation2 + $0xaa] sm:$0xff]
      %v911 = vld [vmem:[#allocation2 + $0xb2] sm:$0xff]
      %v912 = vld [vmem:[#allocation2 + $0xba] sm:$0xff]
      %v913 = vld [vmem:[#allocation2 + $0xc2] sm:$0xff]
      %v914 = vld [vmem:[#allocation2 + $0xca] sm:$0xff]
      %v915 = vld [vmem:[#allocation2 + $0xd2] sm:$0xff]
      %v916 = vld [vmem:[#allocation2 + $0xda] sm:$0xff]
      %v917 = vld [vmem:[#allocation2 + $0xe2] sm:$0xff]
      %v918 = vld [vmem:[#allocation2 + $0xea] sm:$0xff]
      %v919 = vld [vmem:[#allocation2 + $0xf2] sm:$0xff]
      %v920 = vld [vmem:[#allocation2 + $0xfa] sm:$0xff]
      %v921 = vld [vmem:[#allocation2 + $0x102] sm:$0xff]
      %v922 = vld [vmem:[#allocation2 + $0x10a] sm:$0xff]
      %v923 = vld [vmem:[#allocation2 + $0x112] sm:$0xff]
      %v924 = vld [vmem:[#allocation2 + $0x11a] sm:$0xff]
      %v925 = vld [vmem:[#allocation2 + $0x122] sm:$0xff]
      %v926 = vld [vmem:[#allocation2 + $0x12a] sm:$0x3]
      %v927 = vpack.c.bf16 %v890, %v889
      %v928 = vpack.c.bf16 %v892, %v891
      %v929 = vpack.c.bf16 %v894, %v893
      %v930 = vpack.c.bf16 %v896, %v895
      %v931 = vpack.c.bf16 %v898, %v897
      %v932 = vpack.c.bf16 %v900, %v899
      %v933 = vpack.c.bf16 %v902, %v901
      %v934 = vpack.c.bf16 %v904, %v903
      %v935 = vpack.c.bf16 %v906, %v905
      %v936 = vpack.c.bf16 %v908, %v907
      %v937 = vpack.c.bf16 %v910, %v909
      %v938 = vpack.c.bf16 %v912, %v911
      %v939 = vpack.c.bf16 %v914, %v913
      %v940 = vpack.c.bf16 %v916, %v915
      %v941 = vpack.c.bf16 %v918, %v917
      %v942 = vpack.c.bf16 %v920, %v919
      %v943 = vpack.c.bf16 %v922, %v921
      %v944 = vpack.c.bf16 %v924, %v923
      %v945 = vpack.c.bf16 %v926, %v925
      %v946 = vld [vmem:[#allocation2 + $0x12a] sm:$0xff]
      %v947 = vld [vmem:[#allocation2 + $0x132] sm:$0xff]
      %v948 = vld [vmem:[#allocation2 + $0x13a] sm:$0x3]
      %v949 = vpack.c.bf16 %v946, %v925
      %v950 = vpack.c.bf16 %v948, %v947
      %v951 = vld [vmem:[#allocation2 + $0x13] sm:$0xff]
      %v952 = vld [vmem:[#allocation2 + $0x1b] sm:$0xff]
      %v953 = vld [vmem:[#allocation2 + $0x23] sm:$0xff]
      %v954 = vld [vmem:[#allocation2 + $0x2b] sm:$0xff]
      %v955 = vld [vmem:[#allocation2 + $0x33] sm:$0xff]
      %v956 = vld [vmem:[#allocation2 + $0x3b] sm:$0xff]
      %v957 = vld [vmem:[#allocation2 + $0x43] sm:$0xff]
      %v958 = vld [vmem:[#allocation2 + $0x4b] sm:$0xff]
      %v959 = vld [vmem:[#allocation2 + $0x53] sm:$0xff]
      %v960 = vld [vmem:[#allocation2 + $0x5b] sm:$0xff]
      %v961 = vld [vmem:[#allocation2 + $0x63] sm:$0xff]
      %v962 = vld [vmem:[#allocation2 + $0x6b] sm:$0xff]
      %v963 = vld [vmem:[#allocation2 + $0x73] sm:$0xff]
      %v964 = vld [vmem:[#allocation2 + $0x7b] sm:$0xff]
      %v965 = vld [vmem:[#allocation2 + $0x83] sm:$0xff]
      %v966 = vld [vmem:[#allocation2 + $0x8b] sm:$0xff]
      %v967 = vld [vmem:[#allocation2 + $0x93] sm:$0xff]
      %v968 = vld [vmem:[#allocation2 + $0x9b] sm:$0xff]
      %v969 = vld [vmem:[#allocation2 + $0xa3] sm:$0xff]
      %v970 = vld [vmem:[#allocation2 + $0xab] sm:$0xff]
      %v971 = vld [vmem:[#allocation2 + $0xb3] sm:$0xff]
      %v972 = vld [vmem:[#allocation2 + $0xbb] sm:$0xff]
      %v973 = vld [vmem:[#allocation2 + $0xc3] sm:$0xff]
      %v974 = vld [vmem:[#allocation2 + $0xcb] sm:$0xff]
      %v975 = vld [vmem:[#allocation2 + $0xd3] sm:$0xff]
      %v976 = vld [vmem:[#allocation2 + $0xdb] sm:$0xff]
      %v977 = vld [vmem:[#allocation2 + $0xe3] sm:$0xff]
      %v978 = vld [vmem:[#allocation2 + $0xeb] sm:$0xff]
      %v979 = vld [vmem:[#allocation2 + $0xf3] sm:$0xff]
      %v980 = vld [vmem:[#allocation2 + $0xfb] sm:$0xff]
      %v981 = vld [vmem:[#allocation2 + $0x103] sm:$0xff]
      %v982 = vld [vmem:[#allocation2 + $0x10b] sm:$0xff]
      %v983 = vld [vmem:[#allocation2 + $0x113] sm:$0xff]
      %v984 = vld [vmem:[#allocation2 + $0x11b] sm:$0xff]
      %v985 = vld [vmem:[#allocation2 + $0x123] sm:$0xff]
      %v986 = vld [vmem:[#allocation2 + $0x12b] sm:$0xff]
      %v987 = vld [vmem:[#allocation2 + $0x133] sm:$0xff]
      %v988 = vld [vmem:[#allocation2 + $0x13b] sm:$0x3]
      %v989 = vpack.c.bf16 %v952, %v951
      %v990 = vpack.c.bf16 %v954, %v953
      %v991 = vpack.c.bf16 %v956, %v955
      %v992 = vpack.c.bf16 %v958, %v957
      %v993 = vpack.c.bf16 %v960, %v959
      %v994 = vpack.c.bf16 %v962, %v961
      %v995 = vpack.c.bf16 %v964, %v963
      %v996 = vpack.c.bf16 %v966, %v965
      %v997 = vpack.c.bf16 %v968, %v967
      %v998 = vpack.c.bf16 %v970, %v969
      %v999 = vpack.c.bf16 %v972, %v971
      %v1000 = vpack.c.bf16 %v974, %v973
      %v1001 = vpack.c.bf16 %v976, %v975
      %v1002 = vpack.c.bf16 %v978, %v977
      %v1003 = vpack.c.bf16 %v980, %v979
      %v1004 = vpack.c.bf16 %v982, %v981
      %v1005 = vpack.c.bf16 %v984, %v983
      %v1006 = vpack.c.bf16 %v986, %v985
      %v1007 = vpack.c.bf16 %v988, %v987
      %v1008 = vld [vmem:[#allocation2 + $0x14] sm:$0xff]
      %v1009 = vld [vmem:[#allocation2 + $0x1c] sm:$0xff]
      %v1010 = vld [vmem:[#allocation2 + $0x24] sm:$0xff]
      %v1011 = vld [vmem:[#allocation2 + $0x2c] sm:$0xff]
      %v1012 = vld [vmem:[#allocation2 + $0x34] sm:$0xff]
      %v1013 = vld [vmem:[#allocation2 + $0x3c] sm:$0xff]
      %v1014 = vld [vmem:[#allocation2 + $0x44] sm:$0xff]
      %v1015 = vld [vmem:[#allocation2 + $0x4c] sm:$0xff]
      %v1016 = vld [vmem:[#allocation2 + $0x54] sm:$0xff]
      %v1017 = vld [vmem:[#allocation2 + $0x5c] sm:$0xff]
      %v1018 = vld [vmem:[#allocation2 + $0x64] sm:$0xff]
      %v1019 = vld [vmem:[#allocation2 + $0x6c] sm:$0xff]
      %v1020 = vld [vmem:[#allocation2 + $0x74] sm:$0xff]
      %v1021 = vld [vmem:[#allocation2 + $0x7c] sm:$0xff]
      %v1022 = vld [vmem:[#allocation2 + $0x84] sm:$0xff]
      %v1023 = vld [vmem:[#allocation2 + $0x8c] sm:$0xff]
      %v1024 = vld [vmem:[#allocation2 + $0x94] sm:$0xff]
      %v1025 = vld [vmem:[#allocation2 + $0x9c] sm:$0xff]
      %v1026 = vld [vmem:[#allocation2 + $0xa4] sm:$0xff]
      %v1027 = vld [vmem:[#allocation2 + $0xac] sm:$0xff]
      %v1028 = vld [vmem:[#allocation2 + $0xb4] sm:$0xff]
      %v1029 = vld [vmem:[#allocation2 + $0xbc] sm:$0xff]
      %v1030 = vld [vmem:[#allocation2 + $0xc4] sm:$0xff]
      %v1031 = vld [vmem:[#allocation2 + $0xcc] sm:$0xff]
      %v1032 = vld [vmem:[#allocation2 + $0xd4] sm:$0xff]
      %v1033 = vld [vmem:[#allocation2 + $0xdc] sm:$0xff]
      %v1034 = vld [vmem:[#allocation2 + $0xe4] sm:$0xff]
      %v1035 = vld [vmem:[#allocation2 + $0xec] sm:$0xff]
      %v1036 = vld [vmem:[#allocation2 + $0xf4] sm:$0xff]
      %v1037 = vld [vmem:[#allocation2 + $0xfc] sm:$0xff]
      %v1038 = vld [vmem:[#allocation2 + $0x104] sm:$0xff]
      %v1039 = vld [vmem:[#allocation2 + $0x10c] sm:$0xff]
      %v1040 = vld [vmem:[#allocation2 + $0x114] sm:$0xff]
      %v1041 = vld [vmem:[#allocation2 + $0x11c] sm:$0xff]
      %v1042 = vld [vmem:[#allocation2 + $0x124] sm:$0xff]
      %v1043 = vld [vmem:[#allocation2 + $0x12c] sm:$0xff]
      %v1044 = vld [vmem:[#allocation2 + $0x134] sm:$0xff]
      %v1045 = vld [vmem:[#allocation2 + $0x13c] sm:$0x3]
      %v1046 = vpack.c.bf16 %v1009, %v1008
      %v1047 = vpack.c.bf16 %v1011, %v1010
      %v1048 = vpack.c.bf16 %v1013, %v1012
      %v1049 = vpack.c.bf16 %v1015, %v1014
      %v1050 = vpack.c.bf16 %v1017, %v1016
      %v1051 = vpack.c.bf16 %v1019, %v1018
      %v1052 = vpack.c.bf16 %v1021, %v1020
      %v1053 = vpack.c.bf16 %v1023, %v1022
      %v1054 = vpack.c.bf16 %v1025, %v1024
      %v1055 = vpack.c.bf16 %v1027, %v1026
      %v1056 = vpack.c.bf16 %v1029, %v1028
      %v1057 = vpack.c.bf16 %v1031, %v1030
      %v1058 = vpack.c.bf16 %v1033, %v1032
      %v1059 = vpack.c.bf16 %v1035, %v1034
      %v1060 = vpack.c.bf16 %v1037, %v1036
      %v1061 = vpack.c.bf16 %v1039, %v1038
      %v1062 = vpack.c.bf16 %v1041, %v1040
      %v1063 = vpack.c.bf16 %v1043, %v1042
      %v1064 = vpack.c.bf16 %v1045, %v1044
      %v1065 = vld [vmem:[#allocation2 + $0x13c] sm:$0xff]
      %v1066 = vld [vmem:[#allocation2 + $0x144] sm:$0xff]
      %v1067 = vld [vmem:[#allocation2 + $0x14c] sm:$0x3]
      %v1068 = vpack.c.bf16 %v1065, %v1044
      %v1069 = vpack.c.bf16 %v1067, %v1066
      %v1070 = vld [vmem:[#allocation2 + $0x25] sm:$0xff]
      %v1071 = vld [vmem:[#allocation2 + $0x2d] sm:$0xff]
      %v1072 = vld [vmem:[#allocation2 + $0x35] sm:$0xff]
      %v1073 = vld [vmem:[#allocation2 + $0x3d] sm:$0xff]
      %v1074 = vld [vmem:[#allocation2 + $0x45] sm:$0xff]
      %v1075 = vld [vmem:[#allocation2 + $0x4d] sm:$0xff]
      %v1076 = vld [vmem:[#allocation2 + $0x55] sm:$0xff]
      %v1077 = vld [vmem:[#allocation2 + $0x5d] sm:$0xff]
      %v1078 = vld [vmem:[#allocation2 + $0x65] sm:$0xff]
      %v1079 = vld [vmem:[#allocation2 + $0x6d] sm:$0xff]
      %v1080 = vld [vmem:[#allocation2 + $0x75] sm:$0xff]
      %v1081 = vld [vmem:[#allocation2 + $0x7d] sm:$0xff]
      %v1082 = vld [vmem:[#allocation2 + $0x85] sm:$0xff]
      %v1083 = vld [vmem:[#allocation2 + $0x8d] sm:$0xff]
      %v1084 = vld [vmem:[#allocation2 + $0x95] sm:$0xff]
      %v1085 = vld [vmem:[#allocation2 + $0x9d] sm:$0xff]
      %v1086 = vld [vmem:[#allocation2 + $0xa5] sm:$0xff]
      %v1087 = vld [vmem:[#allocation2 + $0xad] sm:$0xff]
      %v1088 = vld [vmem:[#allocation2 + $0xb5] sm:$0xff]
      %v1089 = vld [vmem:[#allocation2 + $0xbd] sm:$0xff]
      %v1090 = vld [vmem:[#allocation2 + $0xc5] sm:$0xff]
      %v1091 = vld [vmem:[#allocation2 + $0xcd] sm:$0xff]
      %v1092 = vld [vmem:[#allocation2 + $0xd5] sm:$0xff]
      %v1093 = vld [vmem:[#allocation2 + $0xdd] sm:$0xff]
      %v1094 = vld [vmem:[#allocation2 + $0xe5] sm:$0xff]
      %v1095 = vld [vmem:[#allocation2 + $0xed] sm:$0xff]
      %v1096 = vld [vmem:[#allocation2 + $0xf5] sm:$0xff]
      %v1097 = vld [vmem:[#allocation2 + $0xfd] sm:$0xff]
      %v1098 = vld [vmem:[#allocation2 + $0x105] sm:$0xff]
      %v1099 = vld [vmem:[#allocation2 + $0x10d] sm:$0xff]
      %v1100 = vld [vmem:[#allocation2 + $0x115] sm:$0xff]
      %v1101 = vld [vmem:[#allocation2 + $0x11d] sm:$0xff]
      %v1102 = vld [vmem:[#allocation2 + $0x125] sm:$0xff]
      %v1103 = vld [vmem:[#allocation2 + $0x12d] sm:$0xff]
      %v1104 = vld [vmem:[#allocation2 + $0x135] sm:$0xff]
      %v1105 = vld [vmem:[#allocation2 + $0x13d] sm:$0xff]
      %v1106 = vld [vmem:[#allocation2 + $0x145] sm:$0xff]
      %v1107 = vld [vmem:[#allocation2 + $0x14d] sm:$0x3]
      %v1108 = vpack.c.bf16 %v1071, %v1070
      %v1109 = vpack.c.bf16 %v1073, %v1072
      %v1110 = vpack.c.bf16 %v1075, %v1074
      %v1111 = vpack.c.bf16 %v1077, %v1076
      %v1112 = vpack.c.bf16 %v1079, %v1078
      %v1113 = vpack.c.bf16 %v1081, %v1080
      %v1114 = vpack.c.bf16 %v1083, %v1082
      %v1115 = vpack.c.bf16 %v1085, %v1084
      %v1116 = vpack.c.bf16 %v1087, %v1086
      %v1117 = vpack.c.bf16 %v1089, %v1088
      %v1118 = vpack.c.bf16 %v1091, %v1090
      %v1119 = vpack.c.bf16 %v1093, %v1092
      %v1120 = vpack.c.bf16 %v1095, %v1094
      %v1121 = vpack.c.bf16 %v1097, %v1096
      %v1122 = vpack.c.bf16 %v1099, %v1098
      %v1123 = vpack.c.bf16 %v1101, %v1100
      %v1124 = vpack.c.bf16 %v1103, %v1102
      %v1125 = vpack.c.bf16 %v1105, %v1104
      %v1126 = vpack.c.bf16 %v1107, %v1106
      %v1127 = vld [vmem:[#allocation2 + $0x26] sm:$0xff]
      %v1128 = vld [vmem:[#allocation2 + $0x2e] sm:$0xff]
      %v1129 = vld [vmem:[#allocation2 + $0x36] sm:$0xff]
      %v1130 = vld [vmem:[#allocation2 + $0x3e] sm:$0xff]
      %v1131 = vld [vmem:[#allocation2 + $0x46] sm:$0xff]
      %v1132 = vld [vmem:[#allocation2 + $0x4e] sm:$0xff]
      %v1133 = vld [vmem:[#allocation2 + $0x56] sm:$0xff]
      %v1134 = vld [vmem:[#allocation2 + $0x5e] sm:$0xff]
      %v1135 = vld [vmem:[#allocation2 + $0x66] sm:$0xff]
      %v1136 = vld [vmem:[#allocation2 + $0x6e] sm:$0xff]
      %v1137 = vld [vmem:[#allocation2 + $0x76] sm:$0xff]
      %v1138 = vld [vmem:[#allocation2 + $0x7e] sm:$0xff]
      %v1139 = vld [vmem:[#allocation2 + $0x86] sm:$0xff]
      %v1140 = vld [vmem:[#allocation2 + $0x8e] sm:$0xff]
      %v1141 = vld [vmem:[#allocation2 + $0x96] sm:$0xff]
      %v1142 = vld [vmem:[#allocation2 + $0x9e] sm:$0xff]
      %v1143 = vld [vmem:[#allocation2 + $0xa6] sm:$0xff]
      %v1144 = vld [vmem:[#allocation2 + $0xae] sm:$0xff]
      %v1145 = vld [vmem:[#allocation2 + $0xb6] sm:$0xff]
      %v1146 = vld [vmem:[#allocation2 + $0xbe] sm:$0xff]
      %v1147 = vld [vmem:[#allocation2 + $0xc6] sm:$0xff]
      %v1148 = vld [vmem:[#allocation2 + $0xce] sm:$0xff]
      %v1149 = vld [vmem:[#allocation2 + $0xd6] sm:$0xff]
      %v1150 = vld [vmem:[#allocation2 + $0xde] sm:$0xff]
      %v1151 = vld [vmem:[#allocation2 + $0xe6] sm:$0xff]
      %v1152 = vld [vmem:[#allocation2 + $0xee] sm:$0xff]
      %v1153 = vld [vmem:[#allocation2 + $0xf6] sm:$0xff]
      %v1154 = vld [vmem:[#allocation2 + $0xfe] sm:$0xff]
      %v1155 = vld [vmem:[#allocation2 + $0x106] sm:$0xff]
      %v1156 = vld [vmem:[#allocation2 + $0x10e] sm:$0xff]
      %v1157 = vld [vmem:[#allocation2 + $0x116] sm:$0xff]
      %v1158 = vld [vmem:[#allocation2 + $0x11e] sm:$0xff]
      %v1159 = vld [vmem:[#allocation2 + $0x126] sm:$0xff]
      %v1160 = vld [vmem:[#allocation2 + $0x12e] sm:$0xff]
      %v1161 = vld [vmem:[#allocation2 + $0x136] sm:$0xff]
      %v1162 = vld [vmem:[#allocation2 + $0x13e] sm:$0xff]
      %v1163 = vld [vmem:[#allocation2 + $0x146] sm:$0xff]
      %v1164 = vld [vmem:[#allocation2 + $0x14e] sm:$0x3]
      %v1165 = vpack.c.bf16 %v1128, %v1127
      %v1166 = vpack.c.bf16 %v1130, %v1129
      %v1167 = vpack.c.bf16 %v1132, %v1131
      %v1168 = vpack.c.bf16 %v1134, %v1133
      %v1169 = vpack.c.bf16 %v1136, %v1135
      %v1170 = vpack.c.bf16 %v1138, %v1137
      %v1171 = vpack.c.bf16 %v1140, %v1139
      %v1172 = vpack.c.bf16 %v1142, %v1141
      %v1173 = vpack.c.bf16 %v1144, %v1143
      %v1174 = vpack.c.bf16 %v1146, %v1145
      %v1175 = vpack.c.bf16 %v1148, %v1147
      %v1176 = vpack.c.bf16 %v1150, %v1149
      %v1177 = vpack.c.bf16 %v1152, %v1151
      %v1178 = vpack.c.bf16 %v1154, %v1153
      %v1179 = vpack.c.bf16 %v1156, %v1155
      %v1180 = vpack.c.bf16 %v1158, %v1157
      %v1181 = vpack.c.bf16 %v1160, %v1159
      %v1182 = vpack.c.bf16 %v1162, %v1161
      %v1183 = vpack.c.bf16 %v1164, %v1163
      %1203 = vrot.lane.b32.xlu0 %v870, 64
      %v1204 = vpop.permute.xlu0 %1203
      %1205 = vrot.lane.b32.xlu0 %v871, 64
      %v1206 = vpop.permute.xlu0 %1205
      %1207 = vrot.lane.b32.xlu0 %v872, 64
      %v1208 = vpop.permute.xlu0 %1207
      %1209 = vrot.lane.b32.xlu0 %v873, 64
      %v1210 = vpop.permute.xlu0 %1209
      %1211 = vrot.lane.b32.xlu0 %v874, 64
      %v1212 = vpop.permute.xlu0 %1211
      %1213 = vrot.lane.b32.xlu0 %v875, 64
      %v1214 = vpop.permute.xlu0 %1213
      %1215 = vrot.lane.b32.xlu0 %v876, 64
      %v1216 = vpop.permute.xlu0 %1215
      %1217 = vrot.lane.b32.xlu0 %v877, 64
      %v1218 = vpop.permute.xlu0 %1217
      %1219 = vrot.lane.b32.xlu0 %v878, 64
      %v1220 = vpop.permute.xlu0 %1219
      %1221 = vrot.lane.b32.xlu0 %v879, 64
      %v1222 = vpop.permute.xlu0 %1221
      %1223 = vrot.lane.b32.xlu0 %v880, 64
      %v1224 = vpop.permute.xlu0 %1223
      %1225 = vrot.lane.b32.xlu0 %v881, 64
      %v1226 = vpop.permute.xlu0 %1225
      %1227 = vrot.lane.b32.xlu0 %v882, 64
      %v1228 = vpop.permute.xlu0 %1227
      %1229 = vrot.lane.b32.xlu0 %v883, 64
      %v1230 = vpop.permute.xlu0 %1229
      %1231 = vrot.lane.b32.xlu0 %v884, 64
      %v1232 = vpop.permute.xlu0 %1231
      %1233 = vrot.lane.b32.xlu0 %v885, 64
      %v1234 = vpop.permute.xlu0 %1233
      %1235 = vrot.lane.b32.xlu0 %v886, 64
      %v1236 = vpop.permute.xlu0 %1235
      %1237 = vrot.lane.b32.xlu0 %v887, 64
      %v1238 = vpop.permute.xlu0 %1237
      %1239 = vrot.lane.b32.xlu0 %v888, 64
      %v1240 = vpop.permute.xlu0 %1239
      %1260 = vrot.lane.b32.xlu0 %v928, 64
      %v1261 = vpop.permute.xlu0 %1260
      %1262 = vrot.lane.b32.xlu0 %v929, 64
      %v1263 = vpop.permute.xlu0 %1262
      %1264 = vrot.lane.b32.xlu0 %v930, 64
      %v1265 = vpop.permute.xlu0 %1264
      %1266 = vrot.lane.b32.xlu0 %v931, 64
      %v1267 = vpop.permute.xlu0 %1266
      %1268 = vrot.lane.b32.xlu0 %v932, 64
      %v1269 = vpop.permute.xlu0 %1268
      %1270 = vrot.lane.b32.xlu0 %v933, 64
      %v1271 = vpop.permute.xlu0 %1270
      %1272 = vrot.lane.b32.xlu0 %v934, 64
      %v1273 = vpop.permute.xlu0 %1272
      %1274 = vrot.lane.b32.xlu0 %v935, 64
      %v1275 = vpop.permute.xlu0 %1274
      %1276 = vrot.lane.b32.xlu0 %v936, 64
      %v1277 = vpop.permute.xlu0 %1276
      %1278 = vrot.lane.b32.xlu0 %v937, 64
      %v1279 = vpop.permute.xlu0 %1278
      %1280 = vrot.lane.b32.xlu0 %v938, 64
      %v1281 = vpop.permute.xlu0 %1280
      %1282 = vrot.lane.b32.xlu0 %v939, 64
      %v1283 = vpop.permute.xlu0 %1282
      %1284 = vrot.lane.b32.xlu0 %v940, 64
      %v1285 = vpop.permute.xlu0 %1284
      %1286 = vrot.lane.b32.xlu0 %v941, 64
      %v1287 = vpop.permute.xlu0 %1286
      %1288 = vrot.lane.b32.xlu0 %v942, 64
      %v1289 = vpop.permute.xlu0 %1288
      %1290 = vrot.lane.b32.xlu0 %v943, 64
      %v1291 = vpop.permute.xlu0 %1290
      %1292 = vrot.lane.b32.xlu0 %v944, 64
      %v1293 = vpop.permute.xlu0 %1292
      %1294 = vrot.lane.b32.xlu0 %v949, 64
      %v1295 = vpop.permute.xlu0 %1294
      %1296 = vrot.lane.b32.xlu0 %v950, 64
      %v1297 = vpop.permute.xlu0 %1296
      %1317 = vrot.lane.b32.xlu0 %v1046, 64
      %v1318 = vpop.permute.xlu0 %1317
      %1319 = vrot.lane.b32.xlu0 %v1047, 64
      %v1320 = vpop.permute.xlu0 %1319
      %1321 = vrot.lane.b32.xlu0 %v1048, 64
      %v1322 = vpop.permute.xlu0 %1321
      %1323 = vrot.lane.b32.xlu0 %v1049, 64
      %v1324 = vpop.permute.xlu0 %1323
      %1325 = vrot.lane.b32.xlu0 %v1050, 64
      %v1326 = vpop.permute.xlu0 %1325
      %1327 = vrot.lane.b32.xlu0 %v1051, 64
      %v1328 = vpop.permute.xlu0 %1327
      %1329 = vrot.lane.b32.xlu0 %v1052, 64
      %v1330 = vpop.permute.xlu0 %1329
      %1331 = vrot.lane.b32.xlu0 %v1053, 64
      %v1332 = vpop.permute.xlu0 %1331
      %1333 = vrot.lane.b32.xlu0 %v1054, 64
      %v1334 = vpop.permute.xlu0 %1333
      %1335 = vrot.lane.b32.xlu0 %v1055, 64
      %v1336 = vpop.permute.xlu0 %1335
      %1337 = vrot.lane.b32.xlu0 %v1056, 64
      %v1338 = vpop.permute.xlu0 %1337
      %1339 = vrot.lane.b32.xlu0 %v1057, 64
      %v1340 = vpop.permute.xlu0 %1339
      %1341 = vrot.lane.b32.xlu0 %v1058, 64
      %v1342 = vpop.permute.xlu0 %1341
      %1343 = vrot.lane.b32.xlu0 %v1059, 64
      %v1344 = vpop.permute.xlu0 %1343
      %1345 = vrot.lane.b32.xlu0 %v1060, 64
      %v1346 = vpop.permute.xlu0 %1345
      %1347 = vrot.lane.b32.xlu0 %v1061, 64
      %v1348 = vpop.permute.xlu0 %1347
      %1349 = vrot.lane.b32.xlu0 %v1062, 64
      %v1350 = vpop.permute.xlu0 %1349
      %1351 = vrot.lane.b32.xlu0 %v1063, 64
      %v1352 = vpop.permute.xlu0 %1351
      %1353 = vrot.lane.b32.xlu0 %v1064, 64
      %v1354 = vpop.permute.xlu0 %1353
      %1374 = vrot.lane.b32.xlu0 %v1108, 64
      %v1375 = vpop.permute.xlu0 %1374
      %1376 = vrot.lane.b32.xlu0 %v1109, 64
      %v1377 = vpop.permute.xlu0 %1376
      %1378 = vrot.lane.b32.xlu0 %v1110, 64
      %v1379 = vpop.permute.xlu0 %1378
      %1380 = vrot.lane.b32.xlu0 %v1111, 64
      %v1381 = vpop.permute.xlu0 %1380
      %1382 = vrot.lane.b32.xlu0 %v1112, 64
      %v1383 = vpop.permute.xlu0 %1382
      %1384 = vrot.lane.b32.xlu0 %v1113, 64
      %v1385 = vpop.permute.xlu0 %1384
      %1386 = vrot.lane.b32.xlu0 %v1114, 64
      %v1387 = vpop.permute.xlu0 %1386
      %1388 = vrot.lane.b32.xlu0 %v1115, 64
      %v1389 = vpop.permute.xlu0 %1388
      %1390 = vrot.lane.b32.xlu0 %v1116, 64
      %v1391 = vpop.permute.xlu0 %1390
      %1392 = vrot.lane.b32.xlu0 %v1117, 64
      %v1393 = vpop.permute.xlu0 %1392
      %1394 = vrot.lane.b32.xlu0 %v1118, 64
      %v1395 = vpop.permute.xlu0 %1394
      %1396 = vrot.lane.b32.xlu0 %v1119, 64
      %v1397 = vpop.permute.xlu0 %1396
      %1398 = vrot.lane.b32.xlu0 %v1120, 64
      %v1399 = vpop.permute.xlu0 %1398
      %1400 = vrot.lane.b32.xlu0 %v1121, 64
      %v1401 = vpop.permute.xlu0 %1400
      %1402 = vrot.lane.b32.xlu0 %v1122, 64
      %v1403 = vpop.permute.xlu0 %1402
      %1404 = vrot.lane.b32.xlu0 %v1123, 64
      %v1405 = vpop.permute.xlu0 %1404
      %1406 = vrot.lane.b32.xlu0 %v1124, 64
      %v1407 = vpop.permute.xlu0 %1406
      %1408 = vrot.lane.b32.xlu0 %v1125, 64
      %v1409 = vpop.permute.xlu0 %1408
      %1410 = vrot.lane.b32.xlu0 %v1126, 64
      %v1411 = vpop.permute.xlu0 %1410
      %v1414 = vsel %vm732, %v813, %v1204
      %v1418 = vsel %vm732, %v814, %v1206
      %v1422 = vsel %vm732, %v815, %v1208
      %v1426 = vsel %vm732, %v816, %v1210
      %v1430 = vsel %vm732, %v817, %v1212
      %v1434 = vsel %vm732, %v818, %v1214
      %v1438 = vsel %vm732, %v819, %v1216
      %v1442 = vsel %vm732, %v820, %v1218
      %v1446 = vsel %vm732, %v821, %v1220
      %v1450 = vsel %vm732, %v822, %v1222
      %v1454 = vsel %vm732, %v823, %v1224
      %v1458 = vsel %vm732, %v824, %v1226
      %v1462 = vsel %vm732, %v825, %v1228
      %v1466 = vsel %vm732, %v826, %v1230
      %v1470 = vsel %vm732, %v827, %v1232
      %v1474 = vsel %vm732, %v828, %v1234
      %v1478 = vsel %vm732, %v829, %v1236
      %v1482 = vsel %vm732, %v830, %v1238
      %v1486 = vsel %vm732, %v831, %v1240
      %v1490 = vsel %vm732, %v927, %v1261
      %v1494 = vsel %vm732, %v928, %v1263
      %v1498 = vsel %vm732, %v929, %v1265
      %v1502 = vsel %vm732, %v930, %v1267
      %v1506 = vsel %vm732, %v931, %v1269
      %v1510 = vsel %vm732, %v932, %v1271
      %v1514 = vsel %vm732, %v933, %v1273
      %v1518 = vsel %vm732, %v934, %v1275
      %v1522 = vsel %vm732, %v935, %v1277
      %v1526 = vsel %vm732, %v936, %v1279
      %v1530 = vsel %vm732, %v937, %v1281
      %v1534 = vsel %vm732, %v938, %v1283
      %v1538 = vsel %vm732, %v939, %v1285
      %v1542 = vsel %vm732, %v940, %v1287
      %v1546 = vsel %vm732, %v941, %v1289
      %v1550 = vsel %vm732, %v942, %v1291
      %v1554 = vsel %vm732, %v943, %v1293
      %v1558 = vsel %vm732, %v944, %v1295
      %v1562 = vsel %vm732, %v945, %v1297
      %v1566 = vsel %vm732, %v989, %v1318
      %v1570 = vsel %vm732, %v990, %v1320
      %v1574 = vsel %vm732, %v991, %v1322
      %v1578 = vsel %vm732, %v992, %v1324
      %v1582 = vsel %vm732, %v993, %v1326
      %v1586 = vsel %vm732, %v994, %v1328
      %v1590 = vsel %vm732, %v995, %v1330
      %v1594 = vsel %vm732, %v996, %v1332
      %v1598 = vsel %vm732, %v997, %v1334
      %v1602 = vsel %vm732, %v998, %v1336
      %v1606 = vsel %vm732, %v999, %v1338
      %v1610 = vsel %vm732, %v1000, %v1340
      %v1614 = vsel %vm732, %v1001, %v1342
      %v1618 = vsel %vm732, %v1002, %v1344
      %v1622 = vsel %vm732, %v1003, %v1346
      %v1626 = vsel %vm732, %v1004, %v1348
      %v1630 = vsel %vm732, %v1005, %v1350
      %v1634 = vsel %vm732, %v1006, %v1352
      %v1638 = vsel %vm732, %v1007, %v1354
      %v1642 = vsel %vm732, %v1047, %v1375
      %v1646 = vsel %vm732, %v1048, %v1377
      %v1650 = vsel %vm732, %v1049, %v1379
      %v1654 = vsel %vm732, %v1050, %v1381
      %v1658 = vsel %vm732, %v1051, %v1383
      %v1662 = vsel %vm732, %v1052, %v1385
      %v1666 = vsel %vm732, %v1053, %v1387
      %v1670 = vsel %vm732, %v1054, %v1389
      %v1674 = vsel %vm732, %v1055, %v1391
      %v1678 = vsel %vm732, %v1056, %v1393
      %v1682 = vsel %vm732, %v1057, %v1395
      %v1686 = vsel %vm732, %v1058, %v1397
      %v1690 = vsel %vm732, %v1059, %v1399
      %v1694 = vsel %vm732, %v1060, %v1401
      %v1698 = vsel %vm732, %v1061, %v1403
      %v1702 = vsel %vm732, %v1062, %v1405
      %v1706 = vsel %vm732, %v1063, %v1407
      %v1710 = vsel %vm732, %v1068, %v1409
      %v1714 = vsel %vm732, %v1069, %v1411
      %v1716 = vld [vmem:[%s4] sm:$0xf]
      %v1717 = vld [vmem:[%s4 + $0x4] sm:$0xf]
      %v1718 = vld [vmem:[%s4 + $0x8] sm:$0xf]
      %v1719 = vld [vmem:[%s4 + $0xc] sm:$0xf]
      %v1720 = vld [vmem:[%s4 + $0x10] sm:$0xf]
      %v1721 = vld [vmem:[%s4 + $0x14] sm:$0xf]
      %v1722 = vld [vmem:[%s4 + $0x18] sm:$0xf]
      %v1723 = vld [vmem:[%s4 + $0x1c] sm:$0xf]
      %v1724 = vld [vmem:[%s4 + $0x20] sm:$0xf]
      %v1725 = vld [vmem:[%s4 + $0x24] sm:$0xf]
      %v1726 = vld [vmem:[%s4 + $0x28] sm:$0xf]
      %v1727 = vld [vmem:[%s4 + $0x2c] sm:$0xf]
      %v1728 = vld [vmem:[%s4 + $0x30] sm:$0xf]
      %v1729 = vld [vmem:[%s4 + $0x34] sm:$0xf]
      %v1730 = vld [vmem:[%s4 + $0x38] sm:$0xf]
      %v1731 = vld [vmem:[%s4 + $0x3c] sm:$0xf]
      %v1732 = vld [vmem:[%s4 + $0x40] sm:$0xf]
      %v1733 = vld [vmem:[%s4 + $0x44] sm:$0xf]
      %v1734 = vld [vmem:[%s4 + $0x48] sm:$0xf]
      %v1735 = vld [vmem:[%s4 + $0x4c] sm:$0xf]
      %v1736 = vld [vmem:[%s4 + $0x50] sm:$0xf]
      %v1737 = vld [vmem:[%s4 + $0x54] sm:$0xf]
      %v1738 = vld [vmem:[%s4 + $0x58] sm:$0xf]
      %v1739 = vld [vmem:[%s4 + $0x5c] sm:$0xf]
      %v1740 = vld [vmem:[%s4 + $0x60] sm:$0xf]
      %v1741 = vld [vmem:[%s4 + $0x64] sm:$0xf]
      %v1742 = vld [vmem:[%s4 + $0x68] sm:$0xf]
      %v1743 = vld [vmem:[%s4 + $0x6c] sm:$0xf]
      %v1744 = vld [vmem:[%s4 + $0x70] sm:$0xf]
      %v1745 = vld [vmem:[%s4 + $0x74] sm:$0xf]
      %v1746 = vld [vmem:[%s4 + $0x78] sm:$0xf]
      %v1747 = vld [vmem:[%s4 + $0x7c] sm:$0xf]
      %v1748 = vld [vmem:[%s4 + $0x80] sm:$0xf]
      %v1749 = vld [vmem:[%s4 + $0x84] sm:$0xf]
      %v1750 = vld [vmem:[%s4 + $0x88] sm:$0xf]
      %v1751 = vld [vmem:[%s4 + $0x8c] sm:$0xf]
      %v1752 = vld [vmem:[%s4 + $0x90] sm:$0xf]
      %v1753 = vld [vmem:[%s4 + $0x94] sm:$0xf]
      %v1754 = vld [vmem:[%s4 + $0x98] sm:$0xf]
      %v1755 = vld [vmem:[%s4 + $0x9c] sm:$0xf]
      %v1756 = vld [vmem:[%s4 + $0xa0] sm:$0xf]
      %v1757 = vld [vmem:[%s4 + $0xa4] sm:$0xf]
      %v1758 = vld [vmem:[%s4 + $0xa8] sm:$0xf]
      %v1759 = vld [vmem:[%s4 + $0xac] sm:$0xf]
      %v1760 = vld [vmem:[%s4 + $0xb0] sm:$0xf]
      %v1761 = vld [vmem:[%s4 + $0xb4] sm:$0xf]
      %v1762 = vld [vmem:[%s4 + $0xb8] sm:$0xf]
      %v1763 = vld [vmem:[%s4 + $0xbc] sm:$0xf]
      %v1764 = vld [vmem:[%s4 + $0xc0] sm:$0xf]
      %v1765 = vld [vmem:[%s4 + $0xc4] sm:$0xf]
      %v1766 = vld [vmem:[%s4 + $0xc8] sm:$0xf]
      %v1767 = vld [vmem:[%s4 + $0xcc] sm:$0xf]
      %v1768 = vld [vmem:[%s4 + $0xd0] sm:$0xf]
      %v1769 = vld [vmem:[%s4 + $0xd4] sm:$0xf]
      %v1770 = vld [vmem:[%s4 + $0xd8] sm:$0xf]
      %v1771 = vld [vmem:[%s4 + $0xdc] sm:$0xf]
      %v1772 = vld [vmem:[%s4 + $0xe0] sm:$0xf]
      %v1773 = vld [vmem:[%s4 + $0xe4] sm:$0xf]
      %v1774 = vld [vmem:[%s4 + $0xe8] sm:$0xf]
      %v1775 = vld [vmem:[%s4 + $0xec] sm:$0xf]
      %v1776 = vld [vmem:[%s4 + $0xf0] sm:$0xf]
      %v1777 = vld [vmem:[%s4 + $0xf4] sm:$0xf]
      %v1778 = vld [vmem:[%s4 + $0xf8] sm:$0xf]
      %v1779 = vld [vmem:[%s4 + $0xfc] sm:$0xf]
      %v1780 = vld [vmem:[%s4 + $0x100] sm:$0xf]
      %v1781 = vld [vmem:[%s4 + $0x104] sm:$0xf]
      %v1782 = vld [vmem:[%s4 + $0x108] sm:$0xf]
      %v1783 = vld [vmem:[%s4 + $0x10c] sm:$0xf]
      %v1784 = vld [vmem:[%s4 + $0x110] sm:$0xf]
      %v1785 = vld [vmem:[%s4 + $0x114] sm:$0xf]
      %v1786 = vld [vmem:[%s4 + $0x118] sm:$0xf]
      %v1787 = vld [vmem:[%s4 + $0x11c] sm:$0xf]
      %v1788 = vld [vmem:[%s5] sm:$0x1]
      %v1790 = vlaneseq
      %v1791 = vshrl.u32 %v1790, 7
      %v1792 = vsub.s32 0, %v1791
      %v1793 = vrot.slane %v1788, %v1792
      %v1867 = vunpack.c.l.b16 %v1716
      %v1868 = vunpack.c.l.b16 %v1717
      %v1869 = vunpack.c.l.b16 %v1718
      %v1870 = vunpack.c.l.b16 %v1719
      %v1871 = vunpack.c.l.b16 %v1720
      %v1872 = vunpack.c.l.b16 %v1721
      %v1873 = vunpack.c.l.b16 %v1722
      %v1874 = vunpack.c.l.b16 %v1723
      %v1875 = vunpack.c.l.b16 %v1724
      %v1876 = vunpack.c.l.b16 %v1725
      %v1877 = vunpack.c.l.b16 %v1726
      %v1878 = vunpack.c.l.b16 %v1727
      %v1879 = vunpack.c.l.b16 %v1728
      %v1880 = vunpack.c.l.b16 %v1729
      %v1881 = vunpack.c.l.b16 %v1730
      %v1882 = vunpack.c.l.b16 %v1731
      %v1883 = vunpack.c.l.b16 %v1732
      %v1884 = vunpack.c.l.b16 %v1733
      %v1885 = vunpack.c.l.b16 %v1734
      %v1886 = vunpack.c.l.b16 %v1735
      %v1887 = vunpack.c.l.b16 %v1736
      %v1888 = vunpack.c.l.b16 %v1737
      %v1889 = vunpack.c.l.b16 %v1738
      %v1890 = vunpack.c.l.b16 %v1739
      %v1891 = vunpack.c.l.b16 %v1740
      %v1892 = vunpack.c.l.b16 %v1741
      %v1893 = vunpack.c.l.b16 %v1742
      %v1894 = vunpack.c.l.b16 %v1743
      %v1895 = vunpack.c.l.b16 %v1744
      %v1896 = vunpack.c.l.b16 %v1745
      %v1897 = vunpack.c.l.b16 %v1746
      %v1898 = vunpack.c.l.b16 %v1747
      %v1899 = vunpack.c.l.b16 %v1748
      %v1900 = vunpack.c.l.b16 %v1749
      %v1901 = vunpack.c.l.b16 %v1750
      %v1902 = vunpack.c.l.b16 %v1751
      %v1903 = vunpack.c.l.b16 %v1752
      %v1904 = vunpack.c.l.b16 %v1753
      %v1905 = vunpack.c.l.b16 %v1754
      %v1906 = vunpack.c.l.b16 %v1755
      %v1907 = vunpack.c.l.b16 %v1756
      %v1908 = vunpack.c.l.b16 %v1757
      %v1909 = vunpack.c.l.b16 %v1758
      %v1910 = vunpack.c.l.b16 %v1759
      %v1911 = vunpack.c.l.b16 %v1760
      %v1912 = vunpack.c.l.b16 %v1761
      %v1913 = vunpack.c.l.b16 %v1762
      %v1914 = vunpack.c.l.b16 %v1763
      %v1915 = vunpack.c.l.b16 %v1764
      %v1916 = vunpack.c.l.b16 %v1765
      %v1917 = vunpack.c.l.b16 %v1766
      %v1918 = vunpack.c.l.b16 %v1767
      %v1919 = vunpack.c.l.b16 %v1768
      %v1920 = vunpack.c.l.b16 %v1769
      %v1921 = vunpack.c.l.b16 %v1770
      %v1922 = vunpack.c.l.b16 %v1771
      %v1923 = vunpack.c.l.b16 %v1772
      %v1924 = vunpack.c.l.b16 %v1773
      %v1925 = vunpack.c.l.b16 %v1774
      %v1926 = vunpack.c.l.b16 %v1775
      %v1927 = vunpack.c.l.b16 %v1776
      %v1928 = vunpack.c.l.b16 %v1777
      %v1929 = vunpack.c.l.b16 %v1778
      %v1930 = vunpack.c.l.b16 %v1779
      %v1931 = vunpack.c.l.b16 %v1780
      %v1932 = vunpack.c.l.b16 %v1781
      %v1933 = vunpack.c.l.b16 %v1782
      %v1934 = vunpack.c.l.b16 %v1783
      %v1935 = vunpack.c.l.b16 %v1784
      %v1936 = vunpack.c.l.b16 %v1785
      %v1937 = vunpack.c.l.b16 %v1786
      %v1938 = vunpack.c.l.b16 %v1787
      %v1939 = vpack.c.b16 %v1868, %v1867
      %v1940 = vpack.c.b16 %v1870, %v1869
      %v1941 = vpack.c.b16 %v1872, %v1871
      %v1942 = vpack.c.b16 %v1874, %v1873
      %v1943 = vpack.c.b16 %v1876, %v1875
      %v1944 = vpack.c.b16 %v1878, %v1877
      %v1945 = vpack.c.b16 %v1880, %v1879
      %v1946 = vpack.c.b16 %v1882, %v1881
      %v1947 = vpack.c.b16 %v1884, %v1883
      %v1948 = vpack.c.b16 %v1886, %v1885
      %v1949 = vpack.c.b16 %v1888, %v1887
      %v1950 = vpack.c.b16 %v1890, %v1889
      %v1951 = vpack.c.b16 %v1892, %v1891
      %v1952 = vpack.c.b16 %v1894, %v1893
      %v1953 = vpack.c.b16 %v1896, %v1895
      %v1954 = vpack.c.b16 %v1898, %v1897
      %v1955 = vpack.c.b16 %v1900, %v1899
      %v1956 = vpack.c.b16 %v1902, %v1901
      %v1957 = vpack.c.b16 %v1904, %v1903
      %v1958 = vpack.c.b16 %v1906, %v1905
      %v1959 = vpack.c.b16 %v1908, %v1907
      %v1960 = vpack.c.b16 %v1910, %v1909
      %v1961 = vpack.c.b16 %v1912, %v1911
      %v1962 = vpack.c.b16 %v1914, %v1913
      %v1963 = vpack.c.b16 %v1916, %v1915
      %v1964 = vpack.c.b16 %v1918, %v1917
      %v1965 = vpack.c.b16 %v1920, %v1919
      %v1966 = vpack.c.b16 %v1922, %v1921
      %v1967 = vpack.c.b16 %v1924, %v1923
      %v1968 = vpack.c.b16 %v1926, %v1925
      %v1969 = vpack.c.b16 %v1928, %v1927
      %v1970 = vpack.c.b16 %v1930, %v1929
      %v1971 = vpack.c.b16 %v1932, %v1931
      %v1972 = vpack.c.b16 %v1934, %v1933
      %v1973 = vpack.c.b16 %v1936, %v1935
      %v1974 = vpack.c.b16 %v1938, %v1937
      %v2012 = vsel %vm732, %v1165, 0
      %v2015 = vsel %vm732, %v1166, 0
      %v2018 = vsel %vm732, %v1167, 0
      %v2021 = vsel %vm732, %v1168, 0
      %v2024 = vsel %vm732, %v1169, 0
      %v2027 = vsel %vm732, %v1170, 0
      %v2030 = vsel %vm732, %v1171, 0
      %v2033 = vsel %vm732, %v1172, 0
      %v2036 = vsel %vm732, %v1173, 0
      %v2039 = vsel %vm732, %v1174, 0
      %v2042 = vsel %vm732, %v1175, 0
      %v2045 = vsel %vm732, %v1176, 0
      %v2048 = vsel %vm732, %v1177, 0
      %v2051 = vsel %vm732, %v1178, 0
      %v2054 = vsel %vm732, %v1179, 0
      %v2057 = vsel %vm732, %v1180, 0
      %v2060 = vsel %vm732, %v1181, 0
      %v2063 = vsel %vm732, %v1182, 0
      %v2066 = vsel %vm732, %v1183, 0
      %2068 = vmatprep.subr.bf16.mxu0 0
      %2069 = vmatpush1.bf16.msra.mxu0 %v1946
      %2070 = vmatprep.subr.bf16.mxu0 0
      %2071 = vmatpush1.bf16.msra.mxu0 %v1945
      %2072 = vmatprep.subr.bf16.mxu0 0
      %2073 = vmatpush1.bf16.msra.mxu0 %v1944
      %2074 = vmatprep.subr.bf16.mxu0 0
      %2075 = vmatpush1.bf16.msra.mxu0 %v1943
      %2076 = vmatprep.subr.bf16.mxu0 0
      %2077 = vmatpush1.bf16.msra.mxu0 %v1942
      %2078 = vmatprep.subr.bf16.mxu0 0
      %2079 = vmatpush1.bf16.msra.mxu0 %v1941
      %2080 = vmatprep.subr.bf16.mxu0 0
      %2081 = vmatpush1.bf16.msra.mxu0 %v1940
      %2082 = vmatprep.subr.bf16.mxu0 0
      %2083 = vmatpush1.bf16.msra.mxu0 %v1939
      %2084 = vmatprep.subr.bf16.mxu0 0
      %2085 = vmatpush2.bf16.msra.mxu0 %v1954
      %2086 = vmatprep.subr.bf16.mxu0 0
      %2087 = vmatpush2.bf16.msra.mxu0 %v1953
      %2088 = vmatprep.subr.bf16.mxu0 0
      %2089 = vmatpush2.bf16.msra.mxu0 %v1952
      %2090 = vmatprep.subr.bf16.mxu0 0
      %2091 = vmatpush2.bf16.msra.mxu0 %v1951
      %2092 = vmatprep.subr.bf16.mxu0 0
      %2093 = vmatpush2.bf16.msra.mxu0 %v1950
      %2094 = vmatprep.subr.bf16.mxu0 0
      %2095 = vmatpush2.bf16.msra.mxu0 %v1949
      %2096 = vmatprep.subr.bf16.mxu0 0
      %2097 = vmatpush2.bf16.msra.mxu0 %v1948
      %2098 = vmatprep.subr.bf16.mxu0 0
      %2099 = vmatpush2.bf16.msra.mxu0 %v1947
      %2100 = vmatprep.mubr.bf16.mxu0 %v1490
      %2101 = vmatmul.mubr.bf16.gmra.mxu0 %v1414
      %v2102 = vpop.f32.mrf.mxu0
      %v2103 = vadd.f32 %v1793, %v2102
      %v2104 = vpop.f32.mrf.mxu0
      %v2105 = vpop.f32.mrf.mxu0
      %v2106 = vadd.f32 %v1793, %v2105
      %v2107 = vpop.f32.mrf.mxu0
      %2108 = vmatprep.mubr.bf16.mxu0 %v1494
      %2109 = vmatmul.mubr.bf16.gmra.mxu0 %v1418
      %v2110 = vpop.f32.mrf.mxu0
      %v2111 = vadd.f32 %v1793, %v2110
      %v2112 = vpop.f32.mrf.mxu0
      %v2113 = vpop.f32.mrf.mxu0
      %v2114 = vadd.f32 %v1793, %v2113
      %v2115 = vpop.f32.mrf.mxu0
      %2116 = vmatprep.mubr.bf16.mxu0 %v1498
      %2117 = vmatmul.mubr.bf16.gmra.mxu0 %v1422
      %v2118 = vpop.f32.mrf.mxu0
      %v2119 = vadd.f32 %v1793, %v2118
      %v2120 = vpop.f32.mrf.mxu0
      %v2121 = vpop.f32.mrf.mxu0
      %v2122 = vadd.f32 %v1793, %v2121
      %v2123 = vpop.f32.mrf.mxu0
      %2124 = vmatprep.mubr.bf16.mxu0 %v1502
      %2125 = vmatmul.mubr.bf16.gmra.mxu0 %v1426
      %v2126 = vpop.f32.mrf.mxu0
      %v2127 = vadd.f32 %v1793, %v2126
      %v2128 = vpop.f32.mrf.mxu0
      %v2129 = vpop.f32.mrf.mxu0
      %v2130 = vadd.f32 %v1793, %v2129
      %v2131 = vpop.f32.mrf.mxu0
      %2132 = vmatprep.mubr.bf16.mxu0 %v1506
      %2133 = vmatmul.mubr.bf16.gmra.mxu0 %v1430
      %v2134 = vpop.f32.mrf.mxu0
      %v2135 = vadd.f32 %v1793, %v2134
      %v2136 = vpop.f32.mrf.mxu0
      %v2137 = vpop.f32.mrf.mxu0
      %v2138 = vadd.f32 %v1793, %v2137
      %v2139 = vpop.f32.mrf.mxu0
      %2140 = vmatprep.mubr.bf16.mxu0 %v1510
      %2141 = vmatmul.mubr.bf16.gmra.mxu0 %v1434
      %v2142 = vpop.f32.mrf.mxu0
      %v2143 = vadd.f32 %v1793, %v2142
      %v2144 = vpop.f32.mrf.mxu0
      %v2145 = vpop.f32.mrf.mxu0
      %v2146 = vadd.f32 %v1793, %v2145
      %v2147 = vpop.f32.mrf.mxu0
      %2148 = vmatprep.mubr.bf16.mxu0 %v1514
      %2149 = vmatmul.mubr.bf16.gmra.mxu0 %v1438
      %v2150 = vpop.f32.mrf.mxu0
      %v2151 = vadd.f32 %v1793, %v2150
      %v2152 = vpop.f32.mrf.mxu0
      %v2153 = vpop.f32.mrf.mxu0
      %v2154 = vadd.f32 %v1793, %v2153
      %v2155 = vpop.f32.mrf.mxu0
      %2156 = vmatprep.mubr.bf16.mxu0 %v1518
      %2157 = vmatmul.mubr.bf16.gmra.mxu0 %v1442
      %v2158 = vpop.f32.mrf.mxu0
      %v2159 = vadd.f32 %v1793, %v2158
      %v2160 = vpop.f32.mrf.mxu0
      %v2161 = vpop.f32.mrf.mxu0
      %v2162 = vadd.f32 %v1793, %v2161
      %v2163 = vpop.f32.mrf.mxu0
      %2164 = vmatprep.mubr.bf16.mxu0 %v1522
      %2165 = vmatmul.mubr.bf16.gmra.mxu0 %v1446
      %v2166 = vpop.f32.mrf.mxu0
      %v2167 = vadd.f32 %v1793, %v2166
      %v2168 = vpop.f32.mrf.mxu0
      %v2169 = vpop.f32.mrf.mxu0
      %v2170 = vadd.f32 %v1793, %v2169
      %v2171 = vpop.f32.mrf.mxu0
      %2172 = vmatprep.mubr.bf16.mxu0 %v1526
      %2173 = vmatmul.mubr.bf16.gmra.mxu0 %v1450
      %v2174 = vpop.f32.mrf.mxu0
      %v2175 = vadd.f32 %v1793, %v2174
      %v2176 = vpop.f32.mrf.mxu0
      %v2177 = vpop.f32.mrf.mxu0
      %v2178 = vadd.f32 %v1793, %v2177
      %v2179 = vpop.f32.mrf.mxu0
      %2180 = vmatprep.mubr.bf16.mxu0 %v1530
      %2181 = vmatmul.mubr.bf16.gmra.mxu0 %v1454
      %v2182 = vpop.f32.mrf.mxu0
      %v2183 = vadd.f32 %v1793, %v2182
      %v2184 = vpop.f32.mrf.mxu0
      %v2185 = vpop.f32.mrf.mxu0
      %v2186 = vadd.f32 %v1793, %v2185
      %v2187 = vpop.f32.mrf.mxu0
      %2188 = vmatprep.mubr.bf16.mxu0 %v1534
      %2189 = vmatmul.mubr.bf16.gmra.mxu0 %v1458
      %v2190 = vpop.f32.mrf.mxu0
      %v2191 = vadd.f32 %v1793, %v2190
      %v2192 = vpop.f32.mrf.mxu0
      %v2193 = vpop.f32.mrf.mxu0
      %v2194 = vadd.f32 %v1793, %v2193
      %v2195 = vpop.f32.mrf.mxu0
      %2196 = vmatprep.mubr.bf16.mxu0 %v1538
      %2197 = vmatmul.mubr.bf16.gmra.mxu0 %v1462
      %v2198 = vpop.f32.mrf.mxu0
      %v2199 = vadd.f32 %v1793, %v2198
      %v2200 = vpop.f32.mrf.mxu0
      %v2201 = vpop.f32.mrf.mxu0
      %v2202 = vadd.f32 %v1793, %v2201
      %v2203 = vpop.f32.mrf.mxu0
      %2204 = vmatprep.mubr.bf16.mxu0 %v1542
      %2205 = vmatmul.mubr.bf16.gmra.mxu0 %v1466
      %v2206 = vpop.f32.mrf.mxu0
      %v2207 = vadd.f32 %v1793, %v2206
      %v2208 = vpop.f32.mrf.mxu0
      %v2209 = vpop.f32.mrf.mxu0
      %v2210 = vadd.f32 %v1793, %v2209
      %v2211 = vpop.f32.mrf.mxu0
      %2212 = vmatprep.mubr.bf16.mxu0 %v1546
      %2213 = vmatmul.mubr.bf16.gmra.mxu0 %v1470
      %v2214 = vpop.f32.mrf.mxu0
      %v2215 = vadd.f32 %v1793, %v2214
      %v2216 = vpop.f32.mrf.mxu0
      %v2217 = vpop.f32.mrf.mxu0
      %v2218 = vadd.f32 %v1793, %v2217
      %v2219 = vpop.f32.mrf.mxu0
      %2220 = vmatprep.mubr.bf16.mxu0 %v1550
      %2221 = vmatmul.mubr.bf16.gmra.mxu0 %v1474
      %v2222 = vpop.f32.mrf.mxu0
      %v2223 = vadd.f32 %v1793, %v2222
      %v2224 = vpop.f32.mrf.mxu0
      %v2225 = vpop.f32.mrf.mxu0
      %v2226 = vadd.f32 %v1793, %v2225
      %v2227 = vpop.f32.mrf.mxu0
      %2228 = vmatprep.mubr.bf16.mxu0 %v1554
      %2229 = vmatmul.mubr.bf16.gmra.mxu0 %v1478
      %v2230 = vpop.f32.mrf.mxu0
      %v2231 = vadd.f32 %v1793, %v2230
      %v2232 = vpop.f32.mrf.mxu0
      %v2233 = vpop.f32.mrf.mxu0
      %v2234 = vadd.f32 %v1793, %v2233
      %v2235 = vpop.f32.mrf.mxu0
      %2236 = vmatprep.mubr.bf16.mxu0 %v1558
      %2237 = vmatmul.mubr.bf16.gmra.mxu0 %v1482
      %v2238 = vpop.f32.mrf.mxu0
      %v2239 = vadd.f32 %v1793, %v2238
      %v2240 = vpop.f32.mrf.mxu0
      %v2241 = vpop.f32.mrf.mxu0
      %v2242 = vadd.f32 %v1793, %v2241
      %v2243 = vpop.f32.mrf.mxu0
      %2244 = vmatprep.mubr.bf16.mxu0 %v1562
      %2245 = vmatmul.mubr.bf16.gmra.mxu0 %v1486
      %v2246 = vpop.f32.mrf.mxu0
      %v2247 = vadd.f32 %v1793, %v2246
      %v2248 = vpop.f32.mrf.mxu0
      %v2249 = vpop.f32.mrf.mxu0
      %v2250 = vadd.f32 %v1793, %v2249
      %v2251 = vpop.f32.mrf.mxu0
      %2252 = vdwg.mxu0
      %2253 = vmatprep.subr.bf16.mxu0 0
      %2254 = vmatpush1.bf16.msra.mxu0 %v1962
      %2255 = vmatprep.subr.bf16.mxu0 0
      %2256 = vmatpush1.bf16.msra.mxu0 %v1961
      %2257 = vmatprep.subr.bf16.mxu0 0
      %2258 = vmatpush1.bf16.msra.mxu0 %v1960
      %2259 = vmatprep.subr.bf16.mxu0 0
      %2260 = vmatpush1.bf16.msra.mxu0 %v1959
      %2261 = vmatprep.subr.bf16.mxu0 0
      %2262 = vmatpush1.bf16.msra.mxu0 %v1958
      %2263 = vmatprep.subr.bf16.mxu0 0
      %2264 = vmatpush1.bf16.msra.mxu0 %v1957
      %2265 = vmatprep.subr.bf16.mxu0 0
      %2266 = vmatpush1.bf16.msra.mxu0 %v1956
      %2267 = vmatprep.subr.bf16.mxu0 0
      %2268 = vmatpush1.bf16.msra.mxu0 %v1955
      %2269 = vmatprep.subr.bf16.mxu0 0
      %2270 = vmatpush2.bf16.msra.mxu0 %v1970
      %2271 = vmatprep.subr.bf16.mxu0 0
      %2272 = vmatpush2.bf16.msra.mxu0 %v1969
      %2273 = vmatprep.subr.bf16.mxu0 0
      %2274 = vmatpush2.bf16.msra.mxu0 %v1968
      %2275 = vmatprep.subr.bf16.mxu0 0
      %2276 = vmatpush2.bf16.msra.mxu0 %v1967
      %2277 = vmatprep.subr.bf16.mxu0 0
      %2278 = vmatpush2.bf16.msra.mxu0 %v1966
      %2279 = vmatprep.subr.bf16.mxu0 0
      %2280 = vmatpush2.bf16.msra.mxu0 %v1965
      %2281 = vmatprep.subr.bf16.mxu0 0
      %2282 = vmatpush2.bf16.msra.mxu0 %v1964
      %2283 = vmatprep.subr.bf16.mxu0 0
      %2284 = vmatpush2.bf16.msra.mxu0 %v1963
      %2285 = vmatprep.mubr.bf16.mxu0 %v1642
      %2286 = vmatmul.mubr.bf16.gmra.mxu0 %v1566
      %v2287 = vpop.f32.mrf.mxu0
      %v2288 = vadd.f32 %v2103, %v2287
      %v2289 = vpop.f32.mrf.mxu0
      %v2290 = vpop.f32.mrf.mxu0
      %v2291 = vadd.f32 %v2106, %v2290
      %v2292 = vpop.f32.mrf.mxu0
      %2293 = vmatprep.mubr.bf16.mxu0 %v1646
      %2294 = vmatmul.mubr.bf16.gmra.mxu0 %v1570
      %v2295 = vpop.f32.mrf.mxu0
      %v2296 = vadd.f32 %v2111, %v2295
      %v2297 = vpop.f32.mrf.mxu0
      %v2298 = vpop.f32.mrf.mxu0
      %v2299 = vadd.f32 %v2114, %v2298
      %v2300 = vpop.f32.mrf.mxu0
      %2301 = vmatprep.mubr.bf16.mxu0 %v1650
      %2302 = vmatmul.mubr.bf16.gmra.mxu0 %v1574
      %v2303 = vpop.f32.mrf.mxu0
      %v2304 = vadd.f32 %v2119, %v2303
      %v2305 = vpop.f32.mrf.mxu0
      %v2306 = vpop.f32.mrf.mxu0
      %v2307 = vadd.f32 %v2122, %v2306
      %v2308 = vpop.f32.mrf.mxu0
      %2309 = vmatprep.mubr.bf16.mxu0 %v1654
      %2310 = vmatmul.mubr.bf16.gmra.mxu0 %v1578
      %v2311 = vpop.f32.mrf.mxu0
      %v2312 = vadd.f32 %v2127, %v2311
      %v2313 = vpop.f32.mrf.mxu0
      %v2314 = vpop.f32.mrf.mxu0
      %v2315 = vadd.f32 %v2130, %v2314
      %v2316 = vpop.f32.mrf.mxu0
      %2317 = vmatprep.mubr.bf16.mxu0 %v1658
      %2318 = vmatmul.mubr.bf16.gmra.mxu0 %v1582
      %v2319 = vpop.f32.mrf.mxu0
      %v2320 = vadd.f32 %v2135, %v2319
      %v2321 = vpop.f32.mrf.mxu0
      %v2322 = vpop.f32.mrf.mxu0
      %v2323 = vadd.f32 %v2138, %v2322
      %v2324 = vpop.f32.mrf.mxu0
      %2325 = vmatprep.mubr.bf16.mxu0 %v1662
      %2326 = vmatmul.mubr.bf16.gmra.mxu0 %v1586
      %v2327 = vpop.f32.mrf.mxu0
      %v2328 = vadd.f32 %v2143, %v2327
      %v2329 = vpop.f32.mrf.mxu0
      %v2330 = vpop.f32.mrf.mxu0
      %v2331 = vadd.f32 %v2146, %v2330
      %v2332 = vpop.f32.mrf.mxu0
      %2333 = vmatprep.mubr.bf16.mxu0 %v1666
      %2334 = vmatmul.mubr.bf16.gmra.mxu0 %v1590
      %v2335 = vpop.f32.mrf.mxu0
      %v2336 = vadd.f32 %v2151, %v2335
      %v2337 = vpop.f32.mrf.mxu0
      %v2338 = vpop.f32.mrf.mxu0
      %v2339 = vadd.f32 %v2154, %v2338
      %v2340 = vpop.f32.mrf.mxu0
      %2341 = vmatprep.mubr.bf16.mxu0 %v1670
      %2342 = vmatmul.mubr.bf16.gmra.mxu0 %v1594
      %v2343 = vpop.f32.mrf.mxu0
      %v2344 = vadd.f32 %v2159, %v2343
      %v2345 = vpop.f32.mrf.mxu0
      %v2346 = vpop.f32.mrf.mxu0
      %v2347 = vadd.f32 %v2162, %v2346
      %v2348 = vpop.f32.mrf.mxu0
      %2349 = vmatprep.mubr.bf16.mxu0 %v1674
      %2350 = vmatmul.mubr.bf16.gmra.mxu0 %v1598
      %v2351 = vpop.f32.mrf.mxu0
      %v2352 = vadd.f32 %v2167, %v2351
      %v2353 = vpop.f32.mrf.mxu0
      %v2354 = vpop.f32.mrf.mxu0
      %v2355 = vadd.f32 %v2170, %v2354
      %v2356 = vpop.f32.mrf.mxu0
      %2357 = vmatprep.mubr.bf16.mxu0 %v1678
      %2358 = vmatmul.mubr.bf16.gmra.mxu0 %v1602
      %v2359 = vpop.f32.mrf.mxu0
      %v2360 = vadd.f32 %v2175, %v2359
      %v2361 = vpop.f32.mrf.mxu0
      %v2362 = vpop.f32.mrf.mxu0
      %v2363 = vadd.f32 %v2178, %v2362
      %v2364 = vpop.f32.mrf.mxu0
      %2365 = vmatprep.mubr.bf16.mxu0 %v1682
      %2366 = vmatmul.mubr.bf16.gmra.mxu0 %v1606
      %v2367 = vpop.f32.mrf.mxu0
      %v2368 = vadd.f32 %v2183, %v2367
      %v2369 = vpop.f32.mrf.mxu0
      %v2370 = vpop.f32.mrf.mxu0
      %v2371 = vadd.f32 %v2186, %v2370
      %v2372 = vpop.f32.mrf.mxu0
      %2373 = vmatprep.mubr.bf16.mxu0 %v1686
      %2374 = vmatmul.mubr.bf16.gmra.mxu0 %v1610
      %v2375 = vpop.f32.mrf.mxu0
      %v2376 = vadd.f32 %v2191, %v2375
      %v2377 = vpop.f32.mrf.mxu0
      %v2378 = vpop.f32.mrf.mxu0
      %v2379 = vadd.f32 %v2194, %v2378
      %v2380 = vpop.f32.mrf.mxu0
      %2381 = vmatprep.mubr.bf16.mxu0 %v1690
      %2382 = vmatmul.mubr.bf16.gmra.mxu0 %v1614
      %v2383 = vpop.f32.mrf.mxu0
      %v2384 = vadd.f32 %v2199, %v2383
      %v2385 = vpop.f32.mrf.mxu0
      %v2386 = vpop.f32.mrf.mxu0
      %v2387 = vadd.f32 %v2202, %v2386
      %v2388 = vpop.f32.mrf.mxu0
      %2389 = vmatprep.mubr.bf16.mxu0 %v1694
      %2390 = vmatmul.mubr.bf16.gmra.mxu0 %v1618
      %v2391 = vpop.f32.mrf.mxu0
      %v2392 = vadd.f32 %v2207, %v2391
      %v2393 = vpop.f32.mrf.mxu0
      %v2394 = vpop.f32.mrf.mxu0
      %v2395 = vadd.f32 %v2210, %v2394
      %v2396 = vpop.f32.mrf.mxu0
      %2397 = vmatprep.mubr.bf16.mxu0 %v1698
      %2398 = vmatmul.mubr.bf16.gmra.mxu0 %v1622
      %v2399 = vpop.f32.mrf.mxu0
      %v2400 = vadd.f32 %v2215, %v2399
      %v2401 = vpop.f32.mrf.mxu0
      %v2402 = vpop.f32.mrf.mxu0
      %v2403 = vadd.f32 %v2218, %v2402
      %v2404 = vpop.f32.mrf.mxu0
      %2405 = vmatprep.mubr.bf16.mxu0 %v1702
      %2406 = vmatmul.mubr.bf16.gmra.mxu0 %v1626
      %v2407 = vpop.f32.mrf.mxu0
      %v2408 = vadd.f32 %v2223, %v2407
      %v2409 = vpop.f32.mrf.mxu0
      %v2410 = vpop.f32.mrf.mxu0
      %v2411 = vadd.f32 %v2226, %v2410
      %v2412 = vpop.f32.mrf.mxu0
      %2413 = vmatprep.mubr.bf16.mxu0 %v1706
      %2414 = vmatmul.mubr.bf16.gmra.mxu0 %v1630
      %v2415 = vpop.f32.mrf.mxu0
      %v2416 = vadd.f32 %v2231, %v2415
      %v2417 = vpop.f32.mrf.mxu0
      %v2418 = vpop.f32.mrf.mxu0
      %v2419 = vadd.f32 %v2234, %v2418
      %v2420 = vpop.f32.mrf.mxu0
      %2421 = vmatprep.mubr.bf16.mxu0 %v1710
      %2422 = vmatmul.mubr.bf16.gmra.mxu0 %v1634
      %v2423 = vpop.f32.mrf.mxu0
      %v2424 = vadd.f32 %v2239, %v2423
      %v2425 = vpop.f32.mrf.mxu0
      %v2426 = vpop.f32.mrf.mxu0
      %v2427 = vadd.f32 %v2242, %v2426
      %v2428 = vpop.f32.mrf.mxu0
      %2429 = vmatprep.mubr.bf16.mxu0 %v1714
      %2430 = vmatmul.mubr.bf16.gmra.mxu0 %v1638
      %v2431 = vpop.f32.mrf.mxu0
      %v2432 = vadd.f32 %v2247, %v2431
      %v2433 = vpop.f32.mrf.mxu0
      %v2434 = vpop.f32.mrf.mxu0
      %v2435 = vadd.f32 %v2250, %v2434
      %v2436 = vpop.f32.mrf.mxu0
      %2437 = vdwg.mxu0
      %2438 = vmatprep.subr.bf16.mxu0 0
      %2439 = vmatpush1.bf16.msra.mxu0 0
      %2440 = vmatprep.subr.bf16.mxu0 0
      %2441 = vmatpush1.bf16.msra.mxu0 0
      %2442 = vmatprep.subr.bf16.mxu0 0
      %2443 = vmatpush1.bf16.msra.mxu0 0
      %2444 = vmatprep.subr.bf16.mxu0 0
      %2445 = vmatpush1.bf16.msra.mxu0 0
      %2446 = vmatprep.subr.bf16.mxu0 0
      %2447 = vmatpush1.bf16.msra.mxu0 %v1974
      %2448 = vmatprep.subr.bf16.mxu0 0
      %2449 = vmatpush1.bf16.msra.mxu0 %v1973
      %2450 = vmatprep.subr.bf16.mxu0 0
      %2451 = vmatpush1.bf16.msra.mxu0 %v1972
      %2452 = vmatprep.subr.bf16.mxu0 0
      %2453 = vmatpush1.bf16.msra.mxu0 %v1971
      %2454 = vmatprep.subr.bf16.mxu0 0
      %2455 = vmatpush2.bf16.msra.mxu0 0
      %2456 = vmatprep.subr.bf16.mxu0 0
      %2457 = vmatpush2.bf16.msra.mxu0 0
      %2458 = vmatprep.subr.bf16.mxu0 0
      %2459 = vmatpush2.bf16.msra.mxu0 0
      %2460 = vmatprep.subr.bf16.mxu0 0
      %2461 = vmatpush2.bf16.msra.mxu0 0
      %2462 = vmatprep.subr.bf16.mxu0 0
      %2463 = vmatpush2.bf16.msra.mxu0 0
      %2464 = vmatprep.subr.bf16.mxu0 0
      %2465 = vmatpush2.bf16.msra.mxu0 0
      %2466 = vmatprep.subr.bf16.mxu0 0
      %2467 = vmatpush2.bf16.msra.mxu0 0
      %2468 = vmatprep.subr.bf16.mxu0 0
      %2469 = vmatpush2.bf16.msra.mxu0 0
      %2470 = vmatprep.mubr.bf16.mxu0 0
      %2471 = vmatmul.mubr.bf16.gmra.mxu0 %v2012
      %v2472 = vpop.f32.mrf.mxu0
      %v2473 = vadd.f32 %v2288, %v2472
      %v2474 = vpop.f32.mrf.mxu0
      %v2475 = vpop.f32.mrf.mxu0
      %v2476 = vadd.f32 %v2291, %v2475
      %v2477 = vpop.f32.mrf.mxu0
      %2478 = vmatprep.mubr.bf16.mxu0 0
      %2479 = vmatmul.mubr.bf16.gmra.mxu0 %v2015
      %v2480 = vpop.f32.mrf.mxu0
      %v2481 = vadd.f32 %v2296, %v2480
      %v2482 = vpop.f32.mrf.mxu0
      %v2483 = vpop.f32.mrf.mxu0
      %v2484 = vadd.f32 %v2299, %v2483
      %v2485 = vpop.f32.mrf.mxu0
      %2486 = vmatprep.mubr.bf16.mxu0 0
      %2487 = vmatmul.mubr.bf16.gmra.mxu0 %v2018
      %v2488 = vpop.f32.mrf.mxu0
      %v2489 = vadd.f32 %v2304, %v2488
      %v2490 = vpop.f32.mrf.mxu0
      %v2491 = vpop.f32.mrf.mxu0
      %v2492 = vadd.f32 %v2307, %v2491
      %v2493 = vpop.f32.mrf.mxu0
      %2494 = vmatprep.mubr.bf16.mxu0 0
      %2495 = vmatmul.mubr.bf16.gmra.mxu0 %v2021
      %v2496 = vpop.f32.mrf.mxu0
      %v2497 = vadd.f32 %v2312, %v2496
      %v2498 = vpop.f32.mrf.mxu0
      %v2499 = vpop.f32.mrf.mxu0
      %v2500 = vadd.f32 %v2315, %v2499
      %v2501 = vpop.f32.mrf.mxu0
      %2502 = vmatprep.mubr.bf16.mxu0 0
      %2503 = vmatmul.mubr.bf16.gmra.mxu0 %v2024
      %v2504 = vpop.f32.mrf.mxu0
      %v2505 = vadd.f32 %v2320, %v2504
      %v2506 = vpop.f32.mrf.mxu0
      %v2507 = vpop.f32.mrf.mxu0
      %v2508 = vadd.f32 %v2323, %v2507
      %v2509 = vpop.f32.mrf.mxu0
      %2510 = vmatprep.mubr.bf16.mxu0 0
      %2511 = vmatmul.mubr.bf16.gmra.mxu0 %v2027
      %v2512 = vpop.f32.mrf.mxu0
      %v2513 = vadd.f32 %v2328, %v2512
      %v2514 = vpop.f32.mrf.mxu0
      %v2515 = vpop.f32.mrf.mxu0
      %v2516 = vadd.f32 %v2331, %v2515
      %v2517 = vpop.f32.mrf.mxu0
      %2518 = vmatprep.mubr.bf16.mxu0 0
      %2519 = vmatmul.mubr.bf16.gmra.mxu0 %v2030
      %v2520 = vpop.f32.mrf.mxu0
      %v2521 = vadd.f32 %v2336, %v2520
      %v2522 = vpop.f32.mrf.mxu0
      %v2523 = vpop.f32.mrf.mxu0
      %v2524 = vadd.f32 %v2339, %v2523
      %v2525 = vpop.f32.mrf.mxu0
      %2526 = vmatprep.mubr.bf16.mxu0 0
      %2527 = vmatmul.mubr.bf16.gmra.mxu0 %v2033
      %v2528 = vpop.f32.mrf.mxu0
      %v2529 = vadd.f32 %v2344, %v2528
      %v2530 = vpop.f32.mrf.mxu0
      %v2531 = vpop.f32.mrf.mxu0
      %v2532 = vadd.f32 %v2347, %v2531
      %v2533 = vpop.f32.mrf.mxu0
      %2534 = vmatprep.mubr.bf16.mxu0 0
      %2535 = vmatmul.mubr.bf16.gmra.mxu0 %v2036
      %v2536 = vpop.f32.mrf.mxu0
      %v2537 = vadd.f32 %v2352, %v2536
      %v2538 = vpop.f32.mrf.mxu0
      %v2539 = vpop.f32.mrf.mxu0
      %v2540 = vadd.f32 %v2355, %v2539
      %v2541 = vpop.f32.mrf.mxu0
      %2542 = vmatprep.mubr.bf16.mxu0 0
      %2543 = vmatmul.mubr.bf16.gmra.mxu0 %v2039
      %v2544 = vpop.f32.mrf.mxu0
      %v2545 = vadd.f32 %v2360, %v2544
      %v2546 = vpop.f32.mrf.mxu0
      %v2547 = vpop.f32.mrf.mxu0
      %v2548 = vadd.f32 %v2363, %v2547
      %v2549 = vpop.f32.mrf.mxu0
      %2550 = vmatprep.mubr.bf16.mxu0 0
      %2551 = vmatmul.mubr.bf16.gmra.mxu0 %v2042
      %v2552 = vpop.f32.mrf.mxu0
      %v2553 = vadd.f32 %v2368, %v2552
      %v2554 = vpop.f32.mrf.mxu0
      %v2555 = vpop.f32.mrf.mxu0
      %v2556 = vadd.f32 %v2371, %v2555
      %v2557 = vpop.f32.mrf.mxu0
      %2558 = vmatprep.mubr.bf16.mxu0 0
      %2559 = vmatmul.mubr.bf16.gmra.mxu0 %v2045
      %v2560 = vpop.f32.mrf.mxu0
      %v2561 = vadd.f32 %v2376, %v2560
      %v2562 = vpop.f32.mrf.mxu0
      %v2563 = vpop.f32.mrf.mxu0
      %v2564 = vadd.f32 %v2379, %v2563
      %v2565 = vpop.f32.mrf.mxu0
      %2566 = vmatprep.mubr.bf16.mxu0 0
      %2567 = vmatmul.mubr.bf16.gmra.mxu0 %v2048
      %v2568 = vpop.f32.mrf.mxu0
      %v2569 = vadd.f32 %v2384, %v2568
      %v2570 = vpop.f32.mrf.mxu0
      %v2571 = vpop.f32.mrf.mxu0
      %v2572 = vadd.f32 %v2387, %v2571
      %v2573 = vpop.f32.mrf.mxu0
      %2574 = vmatprep.mubr.bf16.mxu0 0
      %2575 = vmatmul.mubr.bf16.gmra.mxu0 %v2051
      %v2576 = vpop.f32.mrf.mxu0
      %v2577 = vadd.f32 %v2392, %v2576
      %v2578 = vpop.f32.mrf.mxu0
      %v2579 = vpop.f32.mrf.mxu0
      %v2580 = vadd.f32 %v2395, %v2579
      %v2581 = vpop.f32.mrf.mxu0
      %2582 = vmatprep.mubr.bf16.mxu0 0
      %2583 = vmatmul.mubr.bf16.gmra.mxu0 %v2054
      %v2584 = vpop.f32.mrf.mxu0
      %v2585 = vadd.f32 %v2400, %v2584
      %v2586 = vpop.f32.mrf.mxu0
      %v2587 = vpop.f32.mrf.mxu0
      %v2588 = vadd.f32 %v2403, %v2587
      %v2589 = vpop.f32.mrf.mxu0
      %2590 = vmatprep.mubr.bf16.mxu0 0
      %2591 = vmatmul.mubr.bf16.gmra.mxu0 %v2057
      %v2592 = vpop.f32.mrf.mxu0
      %v2593 = vadd.f32 %v2408, %v2592
      %v2594 = vpop.f32.mrf.mxu0
      %v2595 = vpop.f32.mrf.mxu0
      %v2596 = vadd.f32 %v2411, %v2595
      %v2597 = vpop.f32.mrf.mxu0
      %2598 = vmatprep.mubr.bf16.mxu0 0
      %2599 = vmatmul.mubr.bf16.gmra.mxu0 %v2060
      %v2600 = vpop.f32.mrf.mxu0
      %v2601 = vadd.f32 %v2416, %v2600
      %v2602 = vpop.f32.mrf.mxu0
      %v2603 = vpop.f32.mrf.mxu0
      %v2604 = vadd.f32 %v2419, %v2603
      %v2605 = vpop.f32.mrf.mxu0
      %2606 = vmatprep.mubr.bf16.mxu0 0
      %2607 = vmatmul.mubr.bf16.gmra.mxu0 %v2063
      %v2608 = vpop.f32.mrf.mxu0
      %v2609 = vadd.f32 %v2424, %v2608
      %v2610 = vpop.f32.mrf.mxu0
      %v2611 = vpop.f32.mrf.mxu0
      %v2612 = vadd.f32 %v2427, %v2611
      %v2613 = vpop.f32.mrf.mxu0
      %2614 = vmatprep.mubr.bf16.mxu0 0
      %2615 = vmatmul.mubr.bf16.gmra.mxu0 %v2066
      %v2616 = vpop.f32.mrf.mxu0
      %v2617 = vadd.f32 %v2432, %v2616
      %v2618 = vpop.f32.mrf.mxu0
      %v2619 = vpop.f32.mrf.mxu0
      %v2620 = vadd.f32 %v2435, %v2619
      %v2621 = vpop.f32.mrf.mxu0
      %2622 = vdwg.mxu0
      %v2623 = vmax.f32 %v2473, 0.0
      %v2624 = vmax.f32 %v2476, 0.0
      %v2625 = vmax.f32 %v2481, 0.0
      %v2626 = vmax.f32 %v2484, 0.0
      %v2627 = vmax.f32 %v2489, 0.0
      %v2628 = vmax.f32 %v2492, 0.0
      %v2629 = vmax.f32 %v2497, 0.0
      %v2630 = vmax.f32 %v2500, 0.0
      %v2631 = vmax.f32 %v2505, 0.0
      %v2632 = vmax.f32 %v2508, 0.0
      %v2633 = vmax.f32 %v2513, 0.0
      %v2634 = vmax.f32 %v2516, 0.0
      %v2635 = vmax.f32 %v2521, 0.0
      %v2636 = vmax.f32 %v2524, 0.0
      %v2637 = vmax.f32 %v2529, 0.0
      %v2638 = vmax.f32 %v2532, 0.0
      %v2639 = vmax.f32 %v2537, 0.0
      %v2640 = vmax.f32 %v2540, 0.0
      %v2641 = vmax.f32 %v2545, 0.0
      %v2642 = vmax.f32 %v2548, 0.0
      %v2643 = vmax.f32 %v2553, 0.0
      %v2644 = vmax.f32 %v2556, 0.0
      %v2645 = vmax.f32 %v2561, 0.0
      %v2646 = vmax.f32 %v2564, 0.0
      %v2647 = vmax.f32 %v2569, 0.0
      %v2648 = vmax.f32 %v2572, 0.0
      %v2649 = vmax.f32 %v2577, 0.0
      %v2650 = vmax.f32 %v2580, 0.0
      %v2651 = vmax.f32 %v2585, 0.0
      %v2652 = vmax.f32 %v2588, 0.0
      %v2653 = vmax.f32 %v2593, 0.0
      %v2654 = vmax.f32 %v2596, 0.0
      %v2655 = vmax.f32 %v2601, 0.0
      %v2656 = vmax.f32 %v2604, 0.0
      %v2657 = vmax.f32 %v2609, 0.0
      %v2658 = vmax.f32 %v2612, 0.0
      %v2659 = vmax.f32 %v2617, 0.0
      %v2660 = vmax.f32 %v2620, 0.0
      %vm2699 = vcmask 1042432
      %v2700 = vrot.slane %v2623, 5
      %v2701 = vrot.slane %v2624, 5
      %v2702 = vsel %vm2699, %v2700, %v2701
      %v2703 = vrot.slane %v2625, 5
      %v2704 = vsel %vm2699, %v2701, %v2703
      %v2705 = vrot.slane %v2626, 5
      %v2706 = vsel %vm2699, %v2703, %v2705
      %v2707 = vrot.slane %v2627, 5
      %v2708 = vsel %vm2699, %v2705, %v2707
      %v2709 = vrot.slane %v2628, 5
      %v2710 = vsel %vm2699, %v2707, %v2709
      %v2711 = vrot.slane %v2629, 5
      %v2712 = vsel %vm2699, %v2709, %v2711
      %v2713 = vrot.slane %v2630, 5
      %v2714 = vsel %vm2699, %v2711, %v2713
      %v2715 = vrot.slane %v2631, 5
      %v2716 = vsel %vm2699, %v2713, %v2715
      %v2717 = vrot.slane %v2632, 5
      %v2718 = vsel %vm2699, %v2715, %v2717
      %v2719 = vrot.slane %v2633, 5
      %v2720 = vsel %vm2699, %v2717, %v2719
      %v2721 = vrot.slane %v2634, 5
      %v2722 = vsel %vm2699, %v2719, %v2721
      %v2723 = vrot.slane %v2635, 5
      %v2724 = vsel %vm2699, %v2721, %v2723
      %v2725 = vrot.slane %v2636, 5
      %v2726 = vsel %vm2699, %v2723, %v2725
      %v2727 = vrot.slane %v2637, 5
      %v2728 = vsel %vm2699, %v2725, %v2727
      %v2729 = vrot.slane %v2638, 5
      %v2730 = vsel %vm2699, %v2727, %v2729
      %v2731 = vrot.slane %v2639, 5
      %v2732 = vsel %vm2699, %v2729, %v2731
      %v2733 = vrot.slane %v2640, 5
      %v2734 = vsel %vm2699, %v2731, %v2733
      %v2735 = vrot.slane %v2641, 5
      %v2736 = vsel %vm2699, %v2733, %v2735
      %v2737 = vrot.slane %v2642, 5
      %v2738 = vsel %vm2699, %v2735, %v2737
      %v2739 = vrot.slane %v2643, 5
      %v2740 = vsel %vm2699, %v2737, %v2739
      %v2741 = vrot.slane %v2644, 5
      %v2742 = vsel %vm2699, %v2739, %v2741
      %v2743 = vrot.slane %v2645, 5
      %v2744 = vsel %vm2699, %v2741, %v2743
      %v2745 = vrot.slane %v2646, 5
      %v2746 = vsel %vm2699, %v2743, %v2745
      %v2747 = vrot.slane %v2647, 5
      %v2748 = vsel %vm2699, %v2745, %v2747
      %v2749 = vrot.slane %v2648, 5
      %v2750 = vsel %vm2699, %v2747, %v2749
      %v2751 = vrot.slane %v2649, 5
      %v2752 = vsel %vm2699, %v2749, %v2751
      %v2753 = vrot.slane %v2650, 5
      %v2754 = vsel %vm2699, %v2751, %v2753
      %v2755 = vrot.slane %v2651, 5
      %v2756 = vsel %vm2699, %v2753, %v2755
      %v2757 = vrot.slane %v2652, 5
      %v2758 = vsel %vm2699, %v2755, %v2757
      %v2759 = vrot.slane %v2653, 5
      %v2760 = vsel %vm2699, %v2757, %v2759
      %v2761 = vrot.slane %v2654, 5
      %v2762 = vsel %vm2699, %v2759, %v2761
      %v2763 = vrot.slane %v2655, 5
      %v2764 = vsel %vm2699, %v2761, %v2763
      %v2765 = vrot.slane %v2656, 5
      %v2766 = vsel %vm2699, %v2763, %v2765
      %v2767 = vrot.slane %v2657, 5
      %v2768 = vsel %vm2699, %v2765, %v2767
      %v2769 = vrot.slane %v2658, 5
      %v2770 = vsel %vm2699, %v2767, %v2769
      %v2771 = vrot.slane %v2659, 5
      %v2772 = vsel %vm2699, %v2769, %v2771
      %v2773 = vrot.slane %v2660, 5
      %v2774 = vsel %vm2699, %v2771, %v2773
      %v2813 = vsel %vm2699, 0.0, %v2700
      %vm2814 = vcmask 1044480
      %v2815 = vsel %vm2814, %v2774, 0.0
      %vm2816 = vcmask 7168
      %2817 = vst.msk [vmem:[%s253] sm:$0xff] %vm2816, 0.0
      %2818 = vst.msk [vmem:[%s253 + $0x8] sm:$0xff] %vm2816, 0.0
      %2819 = vst.msk [vmem:[%s253 + $0x10] sm:$0xff] %vm2816, %v2813
      %2820 = vst.msk [vmem:[%s253 + $0x18] sm:$0xff] %vm2816, %v2702
      %2821 = vst.msk [vmem:[%s253 + $0x20] sm:$0xff] %vm2816, %v2704
      %2822 = vst.msk [vmem:[%s253 + $0x28] sm:$0xff] %vm2816, %v2706
      %2823 = vst.msk [vmem:[%s253 + $0x30] sm:$0xff] %vm2816, %v2708
      %2824 = vst.msk [vmem:[%s253 + $0x38] sm:$0xff] %vm2816, %v2710
      %2825 = vst.msk [vmem:[%s253 + $0x40] sm:$0xff] %vm2816, %v2712
      %2826 = vst.msk [vmem:[%s253 + $0x48] sm:$0xff] %vm2816, %v2714
      %2827 = vst.msk [vmem:[%s253 + $0x50] sm:$0xff] %vm2816, %v2716
      %2828 = vst.msk [vmem:[%s253 + $0x58] sm:$0xff] %vm2816, %v2718
      %2829 = vst.msk [vmem:[%s253 + $0x60] sm:$0xff] %vm2816, %v2720
      %2830 = vst.msk [vmem:[%s253 + $0x68] sm:$0xff] %vm2816, %v2722
      %2831 = vst.msk [vmem:[%s253 + $0x70] sm:$0xff] %vm2816, %v2724
      %2832 = vst.msk [vmem:[%s253 + $0x78] sm:$0xff] %vm2816, %v2726
      %2833 = vst.msk [vmem:[%s253 + $0x80] sm:$0xff] %vm2816, %v2728
      %2834 = vst.msk [vmem:[%s253 + $0x88] sm:$0xff] %vm2816, %v2730
      %2835 = vst.msk [vmem:[%s253 + $0x90] sm:$0xff] %vm2816, %v2732
      %2836 = vst.msk [vmem:[%s253 + $0x98] sm:$0xff] %vm2816, %v2734
      %2837 = vst.msk [vmem:[%s253 + $0xa0] sm:$0xff] %vm2816, %v2736
      %2838 = vst.msk [vmem:[%s253 + $0xa8] sm:$0xff] %vm2816, %v2738
      %2839 = vst.msk [vmem:[%s253 + $0xb0] sm:$0xff] %vm2816, %v2740
      %2840 = vst.msk [vmem:[%s253 + $0xb8] sm:$0xff] %vm2816, %v2742
      %2841 = vst.msk [vmem:[%s253 + $0xc0] sm:$0xff] %vm2816, %v2744
      %2842 = vst.msk [vmem:[%s253 + $0xc8] sm:$0xff] %vm2816, %v2746
      %2843 = vst.msk [vmem:[%s253 + $0xd0] sm:$0xff] %vm2816, %v2748
      %2844 = vst.msk [vmem:[%s253 + $0xd8] sm:$0xff] %vm2816, %v2750
      %2845 = vst.msk [vmem:[%s253 + $0xe0] sm:$0xff] %vm2816, %v2752
      %2846 = vst.msk [vmem:[%s253 + $0xe8] sm:$0xff] %vm2816, %v2754
      %2847 = vst.msk [vmem:[%s253 + $0xf0] sm:$0xff] %vm2816, %v2756
      %2848 = vst.msk [vmem:[%s253 + $0xf8] sm:$0xff] %vm2816, %v2758
      %2849 = vst.msk [vmem:[%s253 + $0x100] sm:$0xff] %vm2816, %v2760
      %2850 = vst.msk [vmem:[%s253 + $0x108] sm:$0xff] %vm2816, %v2762
      %2851 = vst.msk [vmem:[%s253 + $0x110] sm:$0xff] %vm2816, %v2764
      %2852 = vst.msk [vmem:[%s253 + $0x118] sm:$0xff] %vm2816, %v2766
      %2853 = vst.msk [vmem:[%s253 + $0x120] sm:$0xff] %vm2816, %v2768
      %2854 = vst.msk [vmem:[%s253 + $0x128] sm:$0xff] %vm2816, %v2770
      %2855 = vst.msk [vmem:[%s253 + $0x130] sm:$0xff] %vm2816, %v2772
      %2856 = vst.msk [vmem:[%s253 + $0x138] sm:$0xff] %vm2816, %v2815
      %2857 = vst.msk [vmem:[%s253 + $0x140] sm:$0xff] %vm2816, 0.0
      %2858 = vst.msk [vmem:[%s253 + $0x148] sm:$0xff] %vm2816, 0.0
      %s2859 = smul.u32 42, %s17
      %p2860 = scmp.lt.s32.totalorder %s2859, 83
      %s2861 = scalar_select %p2860, %s2859, 83
      %s2862 = smul.addr %s2861, 8
      %s2863 = scalar_lea.vmem %s6, %s2862
      // Predicated region
      $region45: #{decoder_forward.5} parent=43 // pred_check
        %p2864 = pneg %p166
      $region46: #{decoder_forward.5} parent=43 // pred_check_branch
        %2866 = sbr.rel (%p2864) target = $region48
      $region47: #{decoder_forward.5} parent=43 // pred_region
        %s2867 = smul.u32 42, %s17
      $region48: #{decoder_forward.5} parent=43 // pred_fallthru
        _
    $region44: #{decoder_forward.5} parent=5 // pred_fallthru
      _
    %p2868 = scmp.le.s32.totalorder 2, %s12
    // Predicated region
    $region49: #{decoder_forward.5} parent=5 // pred_check
      %p2869 = pneg %p2868
    $region50: #{decoder_forward.5} parent=5 // pred_check_branch
      %2871 = sbr.rel (%p2869) target = $region52
    $region51: #{decoder_forward.5} parent=5 // pred_region
      %s2872 = ssub.s32 %s12, 2
      // Predicated region
      $region53: #{decoder_forward.5} parent=51 // pred_check
        %p2873 = pneg %p172
      $region54: #{decoder_forward.5} parent=51 // pred_check_branch
        %2875 = sbr.rel (%p2873) target = $region56
      $region55: #{decoder_forward.5} parent=51 // pred_region
        %s2876 = smul.u32 42, %s18
        %p2877 = scmp.lt.s32.totalorder %s2876, 83
        %s2878 = scalar_select %p2877, %s2876, 83
        %s2879 = smul.addr %s2878, 8
        %s2880 = scalar_lea.vmem %s6, %s2879
      $region56: #{decoder_forward.5} parent=51 // pred_fallthru
        _
    $region52: #{decoder_forward.5} parent=5 // pred_fallthru
      _
  $region6: #{decoder_forward.5} parent=0 // loop_footer
    %s16 = sadd.s32 1, %s12
  $region7: #{decoder_forward.5} parent=0 // loop_footer_branch
    %11 = sbr.rel target = $region3
  $region8: #{decoder_forward.5} parent=0 // loop_exit
    _

</llo_original>
